<compile_context>
chip_gen: v7x
topology: tpu7x:2x2x1
jax: 0.10.0
libtpu: 0.0.40
codegen_flags: <defaults>
</compile_context>

<pallas_src>
import functools

import jax
import jax.numpy as jnp
from jax.experimental import pallas as pl
from jax.experimental.pallas import tpu as pltpu


# ----------------------------------------------------------------------------
# small helpers
# ----------------------------------------------------------------------------
def _cparams():
    return pltpu.CompilerParams(
        dimension_semantics=("parallel", "parallel"),
        vmem_limit_bytes=32 * 1024 * 1024,
    )


def _cost(flops, bytes_accessed):
    return pl.CostEstimate(flops=int(flops), transcendentals=0,
                           bytes_accessed=int(bytes_accessed))


def _pick_tile_rows(h, cap):
    """Largest divisor of h that is <= cap (rows per grid step)."""
    th = 1
    for d in range(1, h + 1):
        if h % d == 0 and d <= cap:
            th = d
    return th


def _row_bands(xp, th, halo):
    """(B, H+halo, Wp, C) -> (B, nT, th+halo, Wp, C) overlapping row bands."""
    _, hp, _, _ = xp.shape
    n_t = (hp - halo) // th
    idx = jnp.arange(n_t)[:, None] * th + jnp.arange(th + halo)[None, :]
    return xp[:, idx]


# ----------------------------------------------------------------------------
# Pallas kernels
# ----------------------------------------------------------------------------
def _conv3x3_relu_kernel(x_ref, w_ref, b_ref, o_ref):
    # x_ref: (th+2, W+2, Cin) bf16 band, w_ref: (3, 3*Cin, Cout) bf16,
    # b_ref: (1, Cout) f32, o_ref: (th, W, Cout) bf16
    th, w_out, cout = o_ref.shape
    cin = x_ref.shape[-1]
    acc = jnp.zeros((th * w_out, cout), jnp.float32)
    for ky in range(3):
        rows = x_ref[ky:ky + th, :, :]
        win = jnp.concatenate(
            [rows[:, 0:w_out, :], rows[:, 1:w_out + 1, :],
             rows[:, 2:w_out + 2, :]], axis=-1)
        acc = acc + jnp.dot(win.reshape(th * w_out, 3 * cin), w_ref[ky],
                            preferred_element_type=jnp.float32)
    out = jnp.maximum(acc.reshape(th, w_out, cout) + b_ref[...], 0.0)
    o_ref[...] = out.astype(o_ref.dtype)


def _resblock_kernel(h_img, x_ref, w1_ref, b1_ref, w2_ref, b2_ref, o_ref):
    # Fused ResBlock: conv1 + ReLU + conv2 + residual add, one HBM round trip.
    # x_ref: (th+4, W+4, C) bf16 (2-halo band of the zero-padded input)
    # w*_ref: (3, 3*C, C) bf16, b*_ref: (1, C) f32, o_ref: (th, W, C) bf16
    th, w_img, c = o_ref.shape
    t2, w2 = th + 2, w_img + 2
    # conv1 (+ReLU) on the extended band -> t_ext covering rows [-1, th].
    acc1 = jnp.zeros((t2 * w2, c), jnp.float32)
    for ky in range(3):
        rows = x_ref[ky:ky + t2, :, :]
        win = jnp.concatenate(
            [rows[:, 0:w2, :], rows[:, 1:w2 + 1, :], rows[:, 2:w2 + 2, :]],
            axis=-1)
        acc1 = acc1 + jnp.dot(win.reshape(t2 * w2, 3 * c), w1_ref[ky],
                              preferred_element_type=jnp.float32)
    t = jnp.maximum(acc1.reshape(t2, w2, c) + b1_ref[...], 0.0)
    # The ring of t_ext that lies outside the image is conv2's zero padding,
    # not a conv1 output -> mask it to zero.
    r0 = pl.program_id(1) * th
    row_g = r0 - 1 + jax.lax.broadcasted_iota(jnp.int32, (t2, w2, 1), 0)
    col_g = -1 + jax.lax.broadcasted_iota(jnp.int32, (t2, w2, 1), 1)
    valid = (row_g >= 0) & (row_g < h_img) & (col_g >= 0) & (col_g < w_img)
    t = jnp.where(valid, t, 0.0).astype(jnp.bfloat16)
    # conv2 + residual add.
    acc2 = jnp.zeros((th * w_img, c), jnp.float32)
    for ky in range(3):
        rows = t[ky:ky + th, :, :]
        win = jnp.concatenate(
            [rows[:, 0:w_img, :], rows[:, 1:w_img + 1, :],
             rows[:, 2:w_img + 2, :]], axis=-1)
        acc2 = acc2 + jnp.dot(win.reshape(th * w_img, 3 * c), w2_ref[ky],
                              preferred_element_type=jnp.float32)
    skip = x_ref[2:th + 2, 2:w_img + 2, :].astype(jnp.float32)
    out = acc2.reshape(th, w_img, c) + b2_ref[...] + skip
    o_ref[...] = out.astype(o_ref.dtype)


def _deconv_x2_kernel(x_ref, w_ref, b_ref, o_ref):
    # Sub-pixel ConvTranspose2d(k=3, s=2, p=1, op=1) + ReLU.
    # x_ref: (th+1, W+1, C) bf16 (input + 1 bottom/right zero row/col)
    # w_ref: (4*C, 4*Cout) bf16  -- rows (dy, dx, ci), cols (p, q, co)
    # b_ref: (1, 4*Cout) f32     -- bias tiled over the 4 phases
    # o_ref: (2*th, W, 2*Cout) bf16 -- rows = 2*m + p, lanes = (q, co)
    th = o_ref.shape[0] // 2
    w_lr = o_ref.shape[1]
    two_cout = o_ref.shape[2]
    c = x_ref.shape[-1]
    r0 = x_ref[0:th, :, :]
    r1 = x_ref[1:th + 1, :, :]
    win = jnp.concatenate(
        [r0[:, 0:w_lr, :], r0[:, 1:w_lr + 1, :],
         r1[:, 0:w_lr, :], r1[:, 1:w_lr + 1, :]], axis=-1)      # (th, W, 4C)
    acc = jnp.dot(win.reshape(th * w_lr, 4 * c), w_ref[...],
                  preferred_element_type=jnp.float32)           # (th*W, 4Cout)
    acc = jnp.maximum(acc + b_ref[...], 0.0)
    # columns are ordered (p, q, co): slice the two row-phases (128-aligned),
    # keep (q, co) packed in lanes, interleave row phases via a leading stack.
    row_p0 = acc[:, 0:two_cout].reshape(th, w_lr, two_cout)
    row_p1 = acc[:, two_cout:2 * two_cout].reshape(th, w_lr, two_cout)
    out = jnp.stack([row_p0, row_p1], axis=1).reshape(2 * th, w_lr, two_cout)
    o_ref[...] = out.astype(o_ref.dtype)


def _conv3x3_skip_kernel(x_ref, w_ref, b_ref, hx_ref, o_ref):
    # Final 3x3 conv (Cout=3) with the bilinear skip add fused in.
    # x_ref: (th+2, W+2, C) bf16, w_ref: (3, 3*C, 3) bf16, b_ref: (1, 3) f32
    # hx_ref / o_ref: (th, W, 3) f32
    th, w_out, cout = o_ref.shape
    cin = x_ref.shape[-1]
    acc = jnp.zeros((th * w_out, cout), jnp.float32)
    for ky in range(3):
        rows = x_ref[ky:ky + th, :, :]
        win = jnp.concatenate(
            [rows[:, 0:w_out, :], rows[:, 1:w_out + 1, :],
             rows[:, 2:w_out + 2, :]], axis=-1)
        acc = acc + jnp.dot(win.reshape(th * w_out, 3 * cin), w_ref[ky],
                            preferred_element_type=jnp.float32)
    out = acc.reshape(th, w_out, cout) + b_ref[...] + hx_ref[...]
    o_ref[...] = out.astype(o_ref.dtype)


# ----------------------------------------------------------------------------
# layer launchers (row-tiled pallas_call wrappers)
# ----------------------------------------------------------------------------
def conv3x3_relu(x, w, b, tile_rows):
    bsz, h, wid, cin = x.shape
    cout = w.shape[-1]
    th = _pick_tile_rows(h, tile_rows)
    n_t = h // th
    xp = jnp.pad(x, ((0, 0), (1, 1), (1, 1), (0, 0)))
    bands = _row_bands(xp, th, 2)
    out = pl.pallas_call(
        _conv3x3_relu_kernel,
        grid=(bsz, n_t),
        in_specs=[
            pl.BlockSpec((None, None, th + 2, wid + 2, cin),
                         lambda i, j: (i, j, 0, 0, 0)),
            pl.BlockSpec((3, 3 * cin, cout), lambda i, j: (0, 0, 0)),
            pl.BlockSpec((1, cout), lambda i, j: (0, 0)),
        ],
        out_specs=pl.BlockSpec((None, None, th, wid, cout),
                               lambda i, j: (i, j, 0, 0, 0)),
        out_shape=jax.ShapeDtypeStruct((bsz, n_t, th, wid, cout), jnp.bfloat16),
        compiler_params=_cparams(),
        cost_estimate=_cost(2 * bsz * h * wid * 9 * cin * cout,
                            bands.size * 2 + w.size * 2 + bsz * h * wid * cout * 2),
    )(bands, w, b)
    return out.reshape(bsz, h, wid, cout)


def resblock(x, w1, b1, w2, b2, tile_rows):
    bsz, h, wid, c = x.shape
    th = _pick_tile_rows(h, tile_rows)
    n_t = h // th
    xp = jnp.pad(x, ((0, 0), (2, 2), (2, 2), (0, 0)))
    bands = _row_bands(xp, th, 4)
    out = pl.pallas_call(
        functools.partial(_resblock_kernel, h),
        grid=(bsz, n_t),
        in_specs=[
            pl.BlockSpec((None, None, th + 4, wid + 4, c),
                         lambda i, j: (i, j, 0, 0, 0)),
            pl.BlockSpec((3, 3 * c, c), lambda i, j: (0, 0, 0)),
            pl.BlockSpec((1, c), lambda i, j: (0, 0)),
            pl.BlockSpec((3, 3 * c, c), lambda i, j: (0, 0, 0)),
            pl.BlockSpec((1, c), lambda i, j: (0, 0)),
        ],
        out_specs=pl.BlockSpec((None, None, th, wid, c),
                               lambda i, j: (i, j, 0, 0, 0)),
        out_shape=jax.ShapeDtypeStruct((bsz, n_t, th, wid, c), jnp.bfloat16),
        compiler_params=_cparams(),
        cost_estimate=_cost(2 * 2 * bsz * h * wid * 9 * c * c,
                            bands.size * 2 + 2 * 9 * c * c * 2
                            + bsz * h * wid * c * 2),
    )(bands, w1, b1, w2, b2)
    return out.reshape(bsz, h, wid, c)


def deconv_x2(x, wd, b4, tile_rows):
    bsz, h, wid, c = x.shape
    cout = wd.shape[-1] // 4
    th = _pick_tile_rows(h, tile_rows)
    n_t = h // th
    xp = jnp.pad(x, ((0, 0), (0, 1), (0, 1), (0, 0)))   # bottom/right halo only
    bands = _row_bands(xp, th, 1)
    out = pl.pallas_call(
        _deconv_x2_kernel,
        grid=(bsz, n_t),
        in_specs=[
            pl.BlockSpec((None, None, th + 1, wid + 1, c),
                         lambda i, j: (i, j, 0, 0, 0)),
            pl.BlockSpec((4 * c, 4 * cout), lambda i, j: (0, 0)),
            pl.BlockSpec((1, 4 * cout), lambda i, j: (0, 0)),
        ],
        out_specs=pl.BlockSpec((None, None, 2 * th, wid, 2 * cout),
                               lambda i, j: (i, j, 0, 0, 0)),
        out_shape=jax.ShapeDtypeStruct((bsz, n_t, 2 * th, wid, 2 * cout),
                                       jnp.bfloat16),
        compiler_params=_cparams(),
        cost_estimate=_cost(2 * bsz * h * wid * (4 * c) * (4 * cout),
                            bands.size * 2 + wd.size * 2
                            + bsz * 4 * h * wid * cout * 2),
    )(bands, wd, b4)
    # (b, tile, 2*m+p, n, (q, co)) reshapes for free to the interleaved image.
    return out.reshape(bsz, 2 * h, 2 * wid, cout)


def conv3x3_skip(x, w, b, hx, tile_rows):
    bsz, h, wid, cin = x.shape
    cout = w.shape[-1]
    th = _pick_tile_rows(h, tile_rows)
    n_t = h // th
    xp = jnp.pad(x, ((0, 0), (1, 1), (1, 1), (0, 0)))
    bands = _row_bands(xp, th, 2)
    hx_t = hx.reshape(bsz, n_t, th, wid, cout)
    out = pl.pallas_call(
        _conv3x3_skip_kernel,
        grid=(bsz, n_t),
        in_specs=[
            pl.BlockSpec((None, None, th + 2, wid + 2, cin),
                         lambda i, j: (i, j, 0, 0, 0)),
            pl.BlockSpec((3, 3 * cin, cout), lambda i, j: (0, 0, 0)),
            pl.BlockSpec((1, cout), lambda i, j: (0, 0)),
            pl.BlockSpec((None, None, th, wid, cout),
                         lambda i, j: (i, j, 0, 0, 0)),
        ],
        out_specs=pl.BlockSpec((None, None, th, wid, cout),
                               lambda i, j: (i, j, 0, 0, 0)),
        out_shape=jax.ShapeDtypeStruct((bsz, n_t, th, wid, cout), jnp.float32),
        compiler_params=_cparams(),
        cost_estimate=_cost(2 * bsz * h * wid * 9 * cin * cout,
                            bands.size * 2 + 2 * bsz * h * wid * cout * 4),
    )(bands, w, b, hx_t)
    return out.reshape(bsz, h, wid, cout)


# ----------------------------------------------------------------------------
# parameter setup (PyTorch layouts) + packing into kernel layouts
# ----------------------------------------------------------------------------
def _bilinear_matrix(n_in, scale):
    # PyTorch F.interpolate(mode='bilinear', align_corners=False) semantics.
    n_out = n_in * scale
    o = jnp.arange(n_out, dtype=jnp.float32)
    src = jnp.maximum((o + 0.5) / scale - 0.5, 0.0)
    i0 = jnp.minimum(jnp.floor(src).astype(jnp.int32), n_in - 1)
    i1 = jnp.minimum(i0 + 1, n_in - 1)
    frac = src - i0.astype(jnp.float32)
    a = jnp.zeros((n_out, n_in), jnp.float32)
    a = a.at[jnp.arange(n_out), i0].add(1.0 - frac)
    a = a.at[jnp.arange(n_out), i1].add(frac)
    return a


def _pack_conv(w_oihw, b):
    # PyTorch Conv2d OIHW -> HWIO -> (3, 3*Cin, Cout) ((kx, ci)-major rows).
    cout, cin = w_oihw.shape[0], w_oihw.shape[1]
    w = jnp.transpose(w_oihw, (2, 3, 1, 0)).reshape(3, 3 * cin, cout)
    return w.astype(jnp.bfloat16), b.reshape(1, cout).astype(jnp.float32)


def _pack_deconv(wt, b):
    # Sub-pixel (phase) weight for ConvTranspose2d(k=3, s=2, p=1, op=1):
    # out[2m+p, 2n+q, co] = sum_{dy,dx,ci} x[m+dy, n+dx, ci] * Wd[(dy,dx,ci),(p,q,co)]
    cin, cout = wt.shape[0], wt.shape[1]
    ky_sel = ((1, None), (2, 0))   # [p][dy] -> kernel row (None = unused tap)
    kx_sel = ((1, None), (2, 0))   # [q][dx] -> kernel col
    row_blocks = []
    for dy in range(2):
        for dx in range(2):
            cols = []
            for p in range(2):
                for q in range(2):
                    ky, kx = ky_sel[p][dy], kx_sel[q][dx]
                    if ky is None or kx is None:
                        cols.append(jnp.zeros((cin, cout), wt.dtype))
                    else:
                        cols.append(wt[:, :, ky, kx])
            row_blocks.append(jnp.concatenate(cols, axis=1))     # (Cin, 4*Cout)
    wd = jnp.concatenate(row_blocks, axis=0)                      # (4Cin, 4Cout)
    b4 = jnp.tile(b, 4).reshape(1, 4 * cout)
    return wd.astype(jnp.bfloat16), b4.astype(jnp.float32)


def init_params(key, input_nc, sr_factor, channel_num, resblock_num):
    """Random parameters with the same layouts as the PyTorch module."""
    in_ch = input_nc + input_nc * sr_factor * sr_factor
    keys = jax.random.split(key, 4 + 2 * resblock_num)
    ki = iter(keys)

    def bias(c):
        return 0.01 * jnp.cos(jnp.arange(c, dtype=jnp.float32))

    def conv(k, cout, cin):          # Conv2d: OIHW
        return 0.05 * jax.random.normal(k, (cout, cin, 3, 3), jnp.float32), bias(cout)

    def deconv(k, cin, cout):        # ConvTranspose2d: (Cin, Cout, kH, kW)
        return 0.05 * jax.random.normal(k, (cin, cout, 3, 3), jnp.float32), bias(cout)

    p = {}
    p["w_in"], p["b_in"] = conv(next(ki), channel_num, in_ch)
    p["res"] = []
    for _ in range(resblock_num):
        w1, b1 = conv(next(ki), channel_num, channel_num)
        w2, b2 = conv(next(ki), channel_num, channel_num)
        p["res"].append((w1, b1, w2, b2))
    p["wt1"], p["bt1"] = deconv(next(ki), channel_num, channel_num)
    p["wt2"], p["bt2"] = deconv(next(ki), channel_num, channel_num)
    p["w_out"], p["b_out"] = conv(next(ki), input_nc, channel_num)
    return p


def prepare_params(p):
    pp = {}
    pp["w_in"], pp["b_in"] = _pack_conv(p["w_in"], p["b_in"])
    pp["res"] = [(_pack_conv(w1, b1) + _pack_conv(w2, b2))
                 for (w1, b1, w2, b2) in p["res"]]
    pp["wt1"], pp["bt1"] = _pack_deconv(p["wt1"], p["bt1"])
    pp["wt2"], pp["bt2"] = _pack_deconv(p["wt2"], p["bt2"])
    pp["w_out"], pp["b_out"] = _pack_conv(p["w_out"], p["b_out"])
    return pp


# ----------------------------------------------------------------------------
# full forward pass
# ----------------------------------------------------------------------------
def frvsr_sr_forward(x_nchw, params, sr_factor=4, tile_rows=32):
    # x_nchw: (B, input_nc * (1 + SR^2), H, W) float32 (NCHW like PyTorch).
    # tile_rows: rows per grid step; use smaller values on v7x (64 MiB VMEM).
    pp = prepare_params(params)
    x = jnp.transpose(x_nchw, (0, 2, 3, 1)).astype(jnp.float32)   # NHWC
    bsz, h, wid, _ = x.shape

    # Bilinear x SR skip of the first 3 channels (small side path, plain JAX).
    ah = _bilinear_matrix(h, sr_factor)
    aw = _bilinear_matrix(wid, sr_factor)
    hx = jnp.einsum("oh,bhwc,pw->bopc", ah, x[..., 0:3], aw)      # f32

    xb = x.astype(jnp.bfloat16)
    feat = conv3x3_relu(xb, pp["w_in"], pp["b_in"], tile_rows)
    for (w1, b1, w2, b2) in pp["res"]:
        feat = resblock(feat, w1, b1, w2, b2, tile_rows)
    feat = deconv_x2(feat, pp["wt1"], pp["bt1"], tile_rows)       # 2x
    feat = deconv_x2(feat, pp["wt2"], pp["bt2"], tile_rows)       # 4x
    out = conv3x3_skip(feat, pp["w_out"], pp["b_out"], hx, tile_rows)
    return jnp.transpose(out, (0, 3, 1, 2))                       # NCHW f32


if __name__ == "__main__":
    key = jax.random.PRNGKey(0)
    k_x, k_p = jax.random.split(key)

    B = 2
    input_nc = 3
    sr_factor = 4          # matches the two stride-2 transposed convs (x4)
    resblock_num = 2
    channel_num = 64       # fixed in the PyTorch module
    H = W = 8
    in_ch = input_nc + input_nc * sr_factor * sr_factor   # 51

    x = jax.random.normal(k_x, (B, in_ch, H, W), jnp.float32)
    params = init_params(k_p, input_nc, sr_factor, channel_num, resblock_num)

    # tile_rows=4 deliberately exercises the multi-tile (halo / mask) paths at
    # this small test size; realistic sizes would use 32-64 (less on v7x).
    fwd = jax.jit(functools.partial(frvsr_sr_forward,
                                    sr_factor=sr_factor, tile_rows=4))
    y = fwd(x, params)
    jax.block_until_ready(y)

    assert y.shape == (B, input_nc, H * sr_factor, W * sr_factor), y.shape
    assert y.dtype == jnp.float32
    assert bool(jnp.all(jnp.isfinite(y)))
    print("KERNEL_OK")
</pallas_src>

<mosaic_0001>
module attributes {stable_mosaic.version = 11 : i64} {
  func.func private @main(%arg0: i32) attributes {dimension_semantics = [#tpu.dimension_semantics<core_parallel>], iteration_bounds = array<i64: 2>, tpu.core_type = #tpu.core_type<sc_scalar_subcore>, window_params = []} {
    return
  }
}

module attributes {stable_mosaic.version = 11 : i64} {
  func.func private @main(%arg0: i32) attributes {dimension_semantics = [#tpu.dimension_semantics<core_parallel>], iteration_bounds = array<i64: 2>, tpu.core_type = #tpu.core_type<sc_scalar_subcore>, window_params = []} {
    return
  }
}

module attributes {stable_mosaic.version = 11 : i64} {
  func.func @_conv3x3_relu_kernel(%arg0: i32, %arg1: i32, %arg2: memref<1x1x6x10x51xbf16, #tpu.memory_space<vmem>>, %arg3: memref<3x153x64xbf16, #tpu.memory_space<vmem>>, %arg4: memref<1x64xf32, #tpu.memory_space<vmem>>, %arg5: memref<1x1x4x8x64xbf16, #tpu.memory_space<vmem>>) attributes {dimension_semantics = [#tpu.dimension_semantics<parallel>, #tpu.dimension_semantics<parallel>], iteration_bounds = array<i64: 2, 2>, scalar_prefetch = 0 : i64, scratch_operands = 0 : i64, tpu.core_type = #tpu.core_type<tc>, window_params = [{transform_indices = @transform_0, window_bounds = array<i64: 1, 1, 6, 10, 51>}, {pipeline_mode = #tpu.pipeline_mode<synchronous>, transform_indices = @transform_1, window_bounds = array<i64: 3, 153, 64>}, {pipeline_mode = #tpu.pipeline_mode<synchronous>, transform_indices = @transform_2, window_bounds = array<i64: 1, 64>}, {transform_indices = @transform_3, window_bounds = array<i64: 1, 1, 4, 8, 64>}]} {
    %cst = arith.constant 0.000000e+00 : f32
    %0 = vector.broadcast %cst : f32 to vector<32x64xf32>
    %c0 = arith.constant 0 : index
    %c0_0 = arith.constant 0 : index
    %c0_1 = arith.constant 0 : index
    %c0_2 = arith.constant 0 : index
    %c0_3 = arith.constant 0 : index
    %1 = vector.load %arg2[%c0, %c0_0, %c0_1, %c0_2, %c0_3] : memref<1x1x6x10x51xbf16, #tpu.memory_space<vmem>>, vector<1x1x4x10x51xbf16>
    %2 = vector.shape_cast %1 : vector<1x1x4x10x51xbf16> to vector<4x10x51xbf16>
    %3 = vector.extract_strided_slice %2 {offsets = [0, 0, 0], sizes = [4, 8, 51], strides = [1, 1, 1]} : vector<4x10x51xbf16> to vector<4x8x51xbf16>
    %4 = vector.extract_strided_slice %2 {offsets = [0, 1, 0], sizes = [4, 8, 51], strides = [1, 1, 1]} : vector<4x10x51xbf16> to vector<4x8x51xbf16>
    %5 = vector.extract_strided_slice %2 {offsets = [0, 2, 0], sizes = [4, 8, 51], strides = [1, 1, 1]} : vector<4x10x51xbf16> to vector<4x8x51xbf16>
    %6 = tpu.concatenate %3, %4, %5 in 2 : vector<4x8x51xbf16>, vector<4x8x51xbf16>, vector<4x8x51xbf16> -> vector<4x8x153xbf16>
    %7 = vector.shape_cast %6 : vector<4x8x153xbf16> to vector<32x153xbf16>
    %c0_4 = arith.constant 0 : index
    %c0_5 = arith.constant 0 : index
    %c0_6 = arith.constant 0 : index
    %8 = vector.load %arg3[%c0_4, %c0_5, %c0_6] : memref<3x153x64xbf16, #tpu.memory_space<vmem>>, vector<1x153x64xbf16>
    %9 = vector.shape_cast %8 : vector<1x153x64xbf16> to vector<153x64xbf16>
    %cst_7 = arith.constant dense<0.000000e+00> : vector<32x64xf32>
    %10 = tpu.matmul %7, %9, %cst_7 {dimension_numbers = #tpu.dot_dimension_numbers<[1], [0], [0], [1], [0, 0, 1, 1], [], []>} : vector<32x153xbf16>, vector<153x64xbf16>, vector<32x64xf32> -> vector<32x64xf32>
    %11 = arith.addf %0, %10 : vector<32x64xf32>
    %c0_8 = arith.constant 0 : index
    %c0_9 = arith.constant 0 : index
    %c1 = arith.constant 1 : index
    %c0_10 = arith.constant 0 : index
    %c0_11 = arith.constant 0 : index
    %12 = vector.load %arg2[%c0_8, %c0_9, %c1, %c0_10, %c0_11] : memref<1x1x6x10x51xbf16, #tpu.memory_space<vmem>>, vector<1x1x4x10x51xbf16>
    %13 = vector.shape_cast %12 : vector<1x1x4x10x51xbf16> to vector<4x10x51xbf16>
    %14 = vector.extract_strided_slice %13 {offsets = [0, 0, 0], sizes = [4, 8, 51], strides = [1, 1, 1]} : vector<4x10x51xbf16> to vector<4x8x51xbf16>
    %15 = vector.extract_strided_slice %13 {offsets = [0, 1, 0], sizes = [4, 8, 51], strides = [1, 1, 1]} : vector<4x10x51xbf16> to vector<4x8x51xbf16>
    %16 = vector.extract_strided_slice %13 {offsets = [0, 2, 0], sizes = [4, 8, 51], strides = [1, 1, 1]} : vector<4x10x51xbf16> to vector<4x8x51xbf16>
    %17 = tpu.concatenate %14, %15, %16 in 2 : vector<4x8x51xbf16>, vector<4x8x51xbf16>, vector<4x8x51xbf16> -> vector<4x8x153xbf16>
    %18 = vector.shape_cast %17 : vector<4x8x153xbf16> to vector<32x153xbf16>
    %c1_12 = arith.constant 1 : index
    %c0_13 = arith.constant 0 : index
    %c0_14 = arith.constant 0 : index
    %19 = vector.load %arg3[%c1_12, %c0_13, %c0_14] : memref<3x153x64xbf16, #tpu.memory_space<vmem>>, vector<1x153x64xbf16>
    %20 = vector.shape_cast %19 : vector<1x153x64xbf16> to vector<153x64xbf16>
    %cst_15 = arith.constant dense<0.000000e+00> : vector<32x64xf32>
    %21 = tpu.matmul %18, %20, %cst_15 {dimension_numbers = #tpu.dot_dimension_numbers<[1], [0], [0], [1], [0, 0, 1, 1], [], []>} : vector<32x153xbf16>, vector<153x64xbf16>, vector<32x64xf32> -> vector<32x64xf32>
    %22 = arith.addf %11, %21 : vector<32x64xf32>
    %c0_16 = arith.constant 0 : index
    %c0_17 = arith.constant 0 : index
    %c2 = arith.constant 2 : index
    %c0_18 = arith.constant 0 : index
    %c0_19 = arith.constant 0 : index
    %23 = vector.load %arg2[%c0_16, %c0_17, %c2, %c0_18, %c0_19] : memref<1x1x6x10x51xbf16, #tpu.memory_space<vmem>>, vector<1x1x4x10x51xbf16>
    %24 = vector.shape_cast %23 : vector<1x1x4x10x51xbf16> to vector<4x10x51xbf16>
    %25 = vector.extract_strided_slice %24 {offsets = [0, 0, 0], sizes = [4, 8, 51], strides = [1, 1, 1]} : vector<4x10x51xbf16> to vector<4x8x51xbf16>
    %26 = vector.extract_strided_slice %24 {offsets = [0, 1, 0], sizes = [4, 8, 51], strides = [1, 1, 1]} : vector<4x10x51xbf16> to vector<4x8x51xbf16>
    %27 = vector.extract_strided_slice %24 {offsets = [0, 2, 0], sizes = [4, 8, 51], strides = [1, 1, 1]} : vector<4x10x51xbf16> to vector<4x8x51xbf16>
    %28 = tpu.concatenate %25, %26, %27 in 2 : vector<4x8x51xbf16>, vector<4x8x51xbf16>, vector<4x8x51xbf16> -> vector<4x8x153xbf16>
    %29 = vector.shape_cast %28 : vector<4x8x153xbf16> to vector<32x153xbf16>
    %c2_20 = arith.constant 2 : index
    %c0_21 = arith.constant 0 : index
    %c0_22 = arith.constant 0 : index
    %30 = vector.load %arg3[%c2_20, %c0_21, %c0_22] : memref<3x153x64xbf16, #tpu.memory_space<vmem>>, vector<1x153x64xbf16>
    %31 = vector.shape_cast %30 : vector<1x153x64xbf16> to vector<153x64xbf16>
    %cst_23 = arith.constant dense<0.000000e+00> : vector<32x64xf32>
    %32 = tpu.matmul %29, %31, %cst_23 {dimension_numbers = #tpu.dot_dimension_numbers<[1], [0], [0], [1], [0, 0, 1, 1], [], []>} : vector<32x153xbf16>, vector<153x64xbf16>, vector<32x64xf32> -> vector<32x64xf32>
    %33 = arith.addf %22, %32 : vector<32x64xf32>
    %34 = vector.shape_cast %33 : vector<32x64xf32> to vector<4x8x64xf32>
    %c0_24 = arith.constant 0 : index
    %c0_25 = arith.constant 0 : index
    %35 = vector.load %arg4[%c0_24, %c0_25] : memref<1x64xf32, #tpu.memory_space<vmem>>, vector<1x64xf32>
    %36 = vector.shape_cast %35 : vector<1x64xf32> to vector<1x1x64xf32>
    %37 = vector.broadcast %36 : vector<1x1x64xf32> to vector<4x8x64xf32>
    %38 = arith.addf %34, %37 : vector<4x8x64xf32>
    %cst_26 = arith.constant 0.000000e+00 : f32
    %39 = vector.broadcast %cst_26 : f32 to vector<4x8x64xf32>
    %40 = arith.maximumf %38, %39 : vector<4x8x64xf32>
    %41 = arith.truncf %40 : vector<4x8x64xf32> to vector<4x8x64xbf16>
    %c0_27 = arith.constant 0 : index
    %c0_28 = arith.constant 0 : index
    %c0_29 = arith.constant 0 : index
    %c0_30 = arith.constant 0 : index
    %c0_31 = arith.constant 0 : index
    %42 = vector.load %arg5[%c0_27, %c0_28, %c0_29, %c0_30, %c0_31] : memref<1x1x4x8x64xbf16, #tpu.memory_space<vmem>>, vector<1x1x4x8x64xbf16>
    %43 = vector.shape_cast %42 : vector<1x1x4x8x64xbf16> to vector<4x8x64xbf16>
    %44 = vector.shape_cast %41 : vector<4x8x64xbf16> to vector<1x1x4x8x64xbf16>
    tpu.vector_store %arg5[%c0_27, %c0_28, %c0_29, %c0_30, %c0_31], %44 {strides = array<i32>} : memref<1x1x4x8x64xbf16, #tpu.memory_space<vmem>>, vector<1x1x4x8x64xbf16>,
    return
  }
  func.func @transform_0(%arg0: i32, %arg1: i32) -> (i32, i32, i32, i32, i32) {
    %c0_i32 = arith.constant 0 : i32
    %c0_i32_0 = arith.constant 0 : i32
    %c0_i32_1 = arith.constant 0 : i32
    %c0_i32_2 = arith.constant 0 : i32
    return %arg0, %arg1, %c0_i32, %c0_i32_0, %c0_i32_1 : i32, i32, i32, i32, i32
  }
  func.func @transform_1(%arg0: i32, %arg1: i32) -> (i32, i32, i32) {
    %c0_i32 = arith.constant 0 : i32
    %c0_i32_0 = arith.constant 0 : i32
    %c0_i32_1 = arith.constant 0 : i32
    %c0_i32_2 = arith.constant 0 : i32
    return %c0_i32, %c0_i32_0, %c0_i32_1 : i32, i32, i32
  }
  func.func @transform_2(%arg0: i32, %arg1: i32) -> (i32, i32) {
    %c0_i32 = arith.constant 0 : i32
    %c0_i32_0 = arith.constant 0 : i32
    %c0_i32_1 = arith.constant 0 : i32
    return %c0_i32, %c0_i32_0 : i32, i32
  }
  func.func @transform_3(%arg0: i32, %arg1: i32) -> (i32, i32, i32, i32, i32) {
    %c0_i32 = arith.constant 0 : i32
    %c0_i32_0 = arith.constant 0 : i32
    %c0_i32_1 = arith.constant 0 : i32
    %c0_i32_2 = arith.constant 0 : i32
    return %arg0, %arg1, %c0_i32, %c0_i32_0, %c0_i32_1 : i32, i32, i32, i32, i32
  }
}

module attributes {stable_mosaic.version = 11 : i64} {
  func.func @_resblock_kernel(%arg0: i32, %arg1: i32, %arg2: memref<1x1x8x12x64xbf16, #tpu.memory_space<vmem>>, %arg3: memref<3x192x64xbf16, #tpu.memory_space<vmem>>, %arg4: memref<1x64xf32, #tpu.memory_space<vmem>>, %arg5: memref<3x192x64xbf16, #tpu.memory_space<vmem>>, %arg6: memref<1x64xf32, #tpu.memory_space<vmem>>, %arg7: memref<1x1x4x8x64xbf16, #tpu.memory_space<vmem>>) attributes {dimension_semantics = [#tpu.dimension_semantics<parallel>, #tpu.dimension_semantics<parallel>], iteration_bounds = array<i64: 2, 2>, scalar_prefetch = 0 : i64, scratch_operands = 0 : i64, tpu.core_type = #tpu.core_type<tc>, window_params = [{transform_indices = @transform_0, window_bounds = array<i64: 1, 1, 8, 12, 64>}, {pipeline_mode = #tpu.pipeline_mode<synchronous>, transform_indices = @transform_1, window_bounds = array<i64: 3, 192, 64>}, {pipeline_mode = #tpu.pipeline_mode<synchronous>, transform_indices = @transform_2, window_bounds = array<i64: 1, 64>}, {pipeline_mode = #tpu.pipeline_mode<synchronous>, transform_indices = @transform_3, window_bounds = array<i64: 3, 192, 64>}, {pipeline_mode = #tpu.pipeline_mode<synchronous>, transform_indices = @transform_4, window_bounds = array<i64: 1, 64>}, {transform_indices = @transform_5, window_bounds = array<i64: 1, 1, 4, 8, 64>}]} {
    %cst = arith.constant 0.000000e+00 : f32
    %0 = vector.broadcast %cst : f32 to vector<60x64xf32>
    %c0 = arith.constant 0 : index
    %c0_0 = arith.constant 0 : index
    %c0_1 = arith.constant 0 : index
    %c0_2 = arith.constant 0 : index
    %c0_3 = arith.constant 0 : index
    %1 = vector.load %arg2[%c0, %c0_0, %c0_1, %c0_2, %c0_3] : memref<1x1x8x12x64xbf16, #tpu.memory_space<vmem>>, vector<1x1x6x12x64xbf16>
    %2 = vector.shape_cast %1 : vector<1x1x6x12x64xbf16> to vector<6x12x64xbf16>
    %3 = vector.extract_strided_slice %2 {offsets = [0, 0, 0], sizes = [6, 10, 64], strides = [1, 1, 1]} : vector<6x12x64xbf16> to vector<6x10x64xbf16>
    %4 = vector.extract_strided_slice %2 {offsets = [0, 1, 0], sizes = [6, 10, 64], strides = [1, 1, 1]} : vector<6x12x64xbf16> to vector<6x10x64xbf16>
    %5 = vector.extract_strided_slice %2 {offsets = [0, 2, 0], sizes = [6, 10, 64], strides = [1, 1, 1]} : vector<6x12x64xbf16> to vector<6x10x64xbf16>
    %6 = tpu.concatenate %3, %4, %5 in 2 : vector<6x10x64xbf16>, vector<6x10x64xbf16>, vector<6x10x64xbf16> -> vector<6x10x192xbf16>
    %7 = vector.shape_cast %6 : vector<6x10x192xbf16> to vector<60x192xbf16>
    %c0_4 = arith.constant 0 : index
    %c0_5 = arith.constant 0 : index
    %c0_6 = arith.constant 0 : index
    %8 = vector.load %arg3[%c0_4, %c0_5, %c0_6] : memref<3x192x64xbf16, #tpu.memory_space<vmem>>, vector<1x192x64xbf16>
    %9 = vector.shape_cast %8 : vector<1x192x64xbf16> to vector<192x64xbf16>
    %cst_7 = arith.constant dense<0.000000e+00> : vector<60x64xf32>
    %10 = tpu.matmul %7, %9, %cst_7 {dimension_numbers = #tpu.dot_dimension_numbers<[1], [0], [0], [1], [0, 0, 1, 1], [], []>} : vector<60x192xbf16>, vector<192x64xbf16>, vector<60x64xf32> -> vector<60x64xf32>
    %11 = arith.addf %0, %10 : vector<60x64xf32>
    %c0_8 = arith.constant 0 : index
    %c0_9 = arith.constant 0 : index
    %c1 = arith.constant 1 : index
    %c0_10 = arith.constant 0 : index
    %c0_11 = arith.constant 0 : index
    %12 = vector.load %arg2[%c0_8, %c0_9, %c1, %c0_10, %c0_11] : memref<1x1x8x12x64xbf16, #tpu.memory_space<vmem>>, vector<1x1x6x12x64xbf16>
    %13 = vector.shape_cast %12 : vector<1x1x6x12x64xbf16> to vector<6x12x64xbf16>
    %14 = vector.extract_strided_slice %13 {offsets = [0, 0, 0], sizes = [6, 10, 64], strides = [1, 1, 1]} : vector<6x12x64xbf16> to vector<6x10x64xbf16>
    %15 = vector.extract_strided_slice %13 {offsets = [0, 1, 0], sizes = [6, 10, 64], strides = [1, 1, 1]} : vector<6x12x64xbf16> to vector<6x10x64xbf16>
    %16 = vector.extract_strided_slice %13 {offsets = [0, 2, 0], sizes = [6, 10, 64], strides = [1, 1, 1]} : vector<6x12x64xbf16> to vector<6x10x64xbf16>
    %17 = tpu.concatenate %14, %15, %16 in 2 : vector<6x10x64xbf16>, vector<6x10x64xbf16>, vector<6x10x64xbf16> -> vector<6x10x192xbf16>
    %18 = vector.shape_cast %17 : vector<6x10x192xbf16> to vector<60x192xbf16>
    %c1_12 = arith.constant 1 : index
    %c0_13 = arith.constant 0 : index
    %c0_14 = arith.constant 0 : index
    %19 = vector.load %arg3[%c1_12, %c0_13, %c0_14] : memref<3x192x64xbf16, #tpu.memory_space<vmem>>, vector<1x192x64xbf16>
    %20 = vector.shape_cast %19 : vector<1x192x64xbf16> to vector<192x64xbf16>
    %cst_15 = arith.constant dense<0.000000e+00> : vector<60x64xf32>
    %21 = tpu.matmul %18, %20, %cst_15 {dimension_numbers = #tpu.dot_dimension_numbers<[1], [0], [0], [1], [0, 0, 1, 1], [], []>} : vector<60x192xbf16>, vector<192x64xbf16>, vector<60x64xf32> -> vector<60x64xf32>
    %22 = arith.addf %11, %21 : vector<60x64xf32>
    %c0_16 = arith.constant 0 : index
    %c0_17 = arith.constant 0 : index
    %c2 = arith.constant 2 : index
    %c0_18 = arith.constant 0 : index
    %c0_19 = arith.constant 0 : index
    %23 = vector.load %arg2[%c0_16, %c0_17, %c2, %c0_18, %c0_19] : memref<1x1x8x12x64xbf16, #tpu.memory_space<vmem>>, vector<1x1x6x12x64xbf16>
    %24 = vector.shape_cast %23 : vector<1x1x6x12x64xbf16> to vector<6x12x64xbf16>
    %25 = vector.extract_strided_slice %24 {offsets = [0, 0, 0], sizes = [6, 10, 64], strides = [1, 1, 1]} : vector<6x12x64xbf16> to vector<6x10x64xbf16>
    %26 = vector.extract_strided_slice %24 {offsets = [0, 1, 0], sizes = [6, 10, 64], strides = [1, 1, 1]} : vector<6x12x64xbf16> to vector<6x10x64xbf16>
    %27 = vector.extract_strided_slice %24 {offsets = [0, 2, 0], sizes = [6, 10, 64], strides = [1, 1, 1]} : vector<6x12x64xbf16> to vector<6x10x64xbf16>
    %28 = tpu.concatenate %25, %26, %27 in 2 : vector<6x10x64xbf16>, vector<6x10x64xbf16>, vector<6x10x64xbf16> -> vector<6x10x192xbf16>
    %29 = vector.shape_cast %28 : vector<6x10x192xbf16> to vector<60x192xbf16>
    %c2_20 = arith.constant 2 : index
    %c0_21 = arith.constant 0 : index
    %c0_22 = arith.constant 0 : index
    %30 = vector.load %arg3[%c2_20, %c0_21, %c0_22] : memref<3x192x64xbf16, #tpu.memory_space<vmem>>, vector<1x192x64xbf16>
    %31 = vector.shape_cast %30 : vector<1x192x64xbf16> to vector<192x64xbf16>
    %cst_23 = arith.constant dense<0.000000e+00> : vector<60x64xf32>
    %32 = tpu.matmul %29, %31, %cst_23 {dimension_numbers = #tpu.dot_dimension_numbers<[1], [0], [0], [1], [0, 0, 1, 1], [], []>} : vector<60x192xbf16>, vector<192x64xbf16>, vector<60x64xf32> -> vector<60x64xf32>
    %33 = arith.addf %22, %32 : vector<60x64xf32>
    %34 = vector.shape_cast %33 : vector<60x64xf32> to vector<6x10x64xf32>
    %c0_24 = arith.constant 0 : index
    %c0_25 = arith.constant 0 : index
    %35 = vector.load %arg4[%c0_24, %c0_25] : memref<1x64xf32, #tpu.memory_space<vmem>>, vector<1x64xf32>
    %36 = vector.shape_cast %35 : vector<1x64xf32> to vector<1x1x64xf32>
    %37 = vector.broadcast %36 : vector<1x1x64xf32> to vector<6x10x64xf32>
    %38 = arith.addf %34, %37 : vector<6x10x64xf32>
    %cst_26 = arith.constant 0.000000e+00 : f32
    %39 = vector.broadcast %cst_26 : f32 to vector<6x10x64xf32>
    %40 = arith.maximumf %38, %39 : vector<6x10x64xf32>
    %c4_i32 = arith.constant 4 : i32
    %41 = arith.muli %arg1, %c4_i32 : i32
    %c1_i32 = arith.constant 1 : i32
    %42 = arith.subi %41, %c1_i32 : i32
    %43 = tpu.iota {dimensions = array<i32: 0>} : vector<6x10x1xi32>
    %44 = vector.broadcast %42 : i32 to vector<6x10x1xi32>
    %45 = arith.addi %44, %43 : vector<6x10x1xi32>
    %46 = tpu.iota {dimensions = array<i32: 1>} : vector<6x10x1xi32>
    %c-1_i32 = arith.constant -1 : i32
    %47 = vector.broadcast %c-1_i32 : i32 to vector<6x10x1xi32>
    %48 = arith.addi %47, %46 : vector<6x10x1xi32>
    %c0_i32 = arith.constant 0 : i32
    %49 = vector.broadcast %c0_i32 : i32 to vector<6x10x1xi32>
    %50 = arith.cmpi sge, %45, %49 : vector<6x10x1xi32>
    %c8_i32 = arith.constant 8 : i32
    %51 = vector.broadcast %c8_i32 : i32 to vector<6x10x1xi32>
    %52 = arith.cmpi slt, %45, %51 : vector<6x10x1xi32>
    %53 = arith.andi %50, %52 : vector<6x10x1xi1>
    %c0_i32_27 = arith.constant 0 : i32
    %54 = vector.broadcast %c0_i32_27 : i32 to vector<6x10x1xi32>
    %55 = arith.cmpi sge, %48, %54 : vector<6x10x1xi32>
    %56 = arith.andi %53, %55 : vector<6x10x1xi1>
    %c8_i32_28 = arith.constant 8 : i32
    %57 = vector.broadcast %c8_i32_28 : i32 to vector<6x10x1xi32>
    %58 = arith.cmpi slt, %48, %57 : vector<6x10x1xi32>
    %59 = arith.andi %56, %58 : vector<6x10x1xi1>
    %cst_29 = arith.constant 0.000000e+00 : f32
    %60 = vector.shape_cast %59 : vector<6x10x1xi1> to vector<6x10x1xi1>
    %61 = vector.broadcast %60 : vector<6x10x1xi1> to vector<6x10x64xi1>
    %62 = vector.broadcast %cst_29 : f32 to vector<6x10x64xf32>
    %63 = arith.select %61, %40, %62 : vector<6x10x64xi1>, vector<6x10x64xf32>
    %64 = arith.truncf %63 : vector<6x10x64xf32> to vector<6x10x64xbf16>
    %cst_30 = arith.constant 0.000000e+00 : f32
    %65 = vector.broadcast %cst_30 : f32 to vector<32x64xf32>
    %66 = vector.extract_strided_slice %64 {offsets = [0, 0, 0], sizes = [4, 10, 64], strides = [1, 1, 1]} : vector<6x10x64xbf16> to vector<4x10x64xbf16>
    %67 = vector.extract_strided_slice %66 {offsets = [0, 0, 0], sizes = [4, 8, 64], strides = [1, 1, 1]} : vector<4x10x64xbf16> to vector<4x8x64xbf16>
    %68 = vector.extract_strided_slice %66 {offsets = [0, 1, 0], sizes = [4, 8, 64], strides = [1, 1, 1]} : vector<4x10x64xbf16> to vector<4x8x64xbf16>
    %69 = vector.extract_strided_slice %66 {offsets = [0, 2, 0], sizes = [4, 8, 64], strides = [1, 1, 1]} : vector<4x10x64xbf16> to vector<4x8x64xbf16>
    %70 = tpu.concatenate %67, %68, %69 in 2 : vector<4x8x64xbf16>, vector<4x8x64xbf16>, vector<4x8x64xbf16> -> vector<4x8x192xbf16>
    %71 = vector.shape_cast %70 : vector<4x8x192xbf16> to vector<32x192xbf16>
    %c0_31 = arith.constant 0 : index
    %c0_32 = arith.constant 0 : index
    %c0_33 = arith.constant 0 : index
    %72 = vector.load %arg5[%c0_31, %c0_32, %c0_33] : memref<3x192x64xbf16, #tpu.memory_space<vmem>>, vector<1x192x64xbf16>
    %73 = vector.shape_cast %72 : vector<1x192x64xbf16> to vector<192x64xbf16>
    %cst_34 = arith.constant dense<0.000000e+00> : vector<32x64xf32>
    %74 = tpu.matmul %71, %73, %cst_34 {dimension_numbers = #tpu.dot_dimension_numbers<[1], [0], [0], [1], [0, 0, 1, 1], [], []>} : vector<32x192xbf16>, vector<192x64xbf16>, vector<32x64xf32> -> vector<32x64xf32>
    %75 = arith.addf %65, %74 : vector<32x64xf32>
    %76 = vector.extract_strided_slice %64 {offsets = [1, 0, 0], sizes = [4, 10, 64], strides = [1, 1, 1]} : vector<6x10x64xbf16> to vector<4x10x64xbf16>
    %77 = vector.extract_strided_slice %76 {offsets = [0, 0, 0], sizes = [4, 8, 64], strides = [1, 1, 1]} : vector<4x10x64xbf16> to vector<4x8x64xbf16>
    %78 = vector.extract_strided_slice %76 {offsets = [0, 1, 0], sizes = [4, 8, 64], strides = [1, 1, 1]} : vector<4x10x64xbf16> to vector<4x8x64xbf16>
    %79 = vector.extract_strided_slice %76 {offsets = [0, 2, 0], sizes = [4, 8, 64], strides = [1, 1, 1]} : vector<4x10x64xbf16> to vector<4x8x64xbf16>
    %80 = tpu.concatenate %77, %78, %79 in 2 : vector<4x8x64xbf16>, vector<4x8x64xbf16>, vector<4x8x64xbf16> -> vector<4x8x192xbf16>
    %81 = vector.shape_cast %80 : vector<4x8x192xbf16> to vector<32x192xbf16>
    %c1_35 = arith.constant 1 : index
    %c0_36 = arith.constant 0 : index
    %c0_37 = arith.constant 0 : index
    %82 = vector.load %arg5[%c1_35, %c0_36, %c0_37] : memref<3x192x64xbf16, #tpu.memory_space<vmem>>, vector<1x192x64xbf16>
    %83 = vector.shape_cast %82 : vector<1x192x64xbf16> to vector<192x64xbf16>
    %cst_38 = arith.constant dense<0.000000e+00> : vector<32x64xf32>
    %84 = tpu.matmul %81, %83, %cst_38 {dimension_numbers = #tpu.dot_dimension_numbers<[1], [0], [0], [1], [0, 0, 1, 1], [], []>} : vector<32x192xbf16>, vector<192x64xbf16>, vector<32x64xf32> -> vector<32x64xf32>
    %85 = arith.addf %75, %84 : vector<32x64xf32>
    %86 = vector.extract_strided_slice %64 {offsets = [2, 0, 0], sizes = [4, 10, 64], strides = [1, 1, 1]} : vector<6x10x64xbf16> to vector<4x10x64xbf16>
    %87 = vector.extract_strided_slice %86 {offsets = [0, 0, 0], sizes = [4, 8, 64], strides = [1, 1, 1]} : vector<4x10x64xbf16> to vector<4x8x64xbf16>
    %88 = vector.extract_strided_slice %86 {offsets = [0, 1, 0], sizes = [4, 8, 64], strides = [1, 1, 1]} : vector<4x10x64xbf16> to vector<4x8x64xbf16>
    %89 = vector.extract_strided_slice %86 {offsets = [0, 2, 0], sizes = [4, 8, 64], strides = [1, 1, 1]} : vector<4x10x64xbf16> to vector<4x8x64xbf16>
    %90 = tpu.concatenate %87, %88, %89 in 2 : vector<4x8x64xbf16>, vector<4x8x64xbf16>, vector<4x8x64xbf16> -> vector<4x8x192xbf16>
    %91 = vector.shape_cast %90 : vector<4x8x192xbf16> to vector<32x192xbf16>
    %c2_39 = arith.constant 2 : index
    %c0_40 = arith.constant 0 : index
    %c0_41 = arith.constant 0 : index
    %92 = vector.load %arg5[%c2_39, %c0_40, %c0_41] : memref<3x192x64xbf16, #tpu.memory_space<vmem>>, vector<1x192x64xbf16>
    %93 = vector.shape_cast %92 : vector<1x192x64xbf16> to vector<192x64xbf16>
    %cst_42 = arith.constant dense<0.000000e+00> : vector<32x64xf32>
    %94 = tpu.matmul %91, %93, %cst_42 {dimension_numbers = #tpu.dot_dimension_numbers<[1], [0], [0], [1], [0, 0, 1, 1], [], []>} : vector<32x192xbf16>, vector<192x64xbf16>, vector<32x64xf32> -> vector<32x64xf32>
    %95 = arith.addf %85, %94 : vector<32x64xf32>
    %c0_43 = arith.constant 0 : index
    %c0_44 = arith.constant 0 : index
    %c2_45 = arith.constant 2 : index
    %c2_46 = arith.constant 2 : index
    %c0_47 = arith.constant 0 : index
    %96 = vector.load %arg2[%c0_43, %c0_44, %c2_45, %c2_46, %c0_47] : memref<1x1x8x12x64xbf16, #tpu.memory_space<vmem>>, vector<1x1x4x8x64xbf16>
    %97 = vector.shape_cast %96 : vector<1x1x4x8x64xbf16> to vector<4x8x64xbf16>
    %98 = arith.extf %97 : vector<4x8x64xbf16> to vector<4x8x64xf32>
    %99 = vector.shape_cast %95 : vector<32x64xf32> to vector<4x8x64xf32>
    %c0_48 = arith.constant 0 : index
    %c0_49 = arith.constant 0 : index
    %100 = vector.load %arg6[%c0_48, %c0_49] : memref<1x64xf32, #tpu.memory_space<vmem>>, vector<1x64xf32>
    %101 = vector.shape_cast %100 : vector<1x64xf32> to vector<1x1x64xf32>
    %102 = vector.broadcast %101 : vector<1x1x64xf32> to vector<4x8x64xf32>
    %103 = arith.addf %99, %102 : vector<4x8x64xf32>
    %104 = arith.addf %103, %98 : vector<4x8x64xf32>
    %105 = arith.truncf %104 : vector<4x8x64xf32> to vector<4x8x64xbf16>
    %c0_50 = arith.constant 0 : index
    %c0_51 = arith.constant 0 : index
    %c0_52 = arith.constant 0 : index
    %c0_53 = arith.constant 0 : index
    %c0_54 = arith.constant 0 : index
    %106 = vector.load %arg7[%c0_50, %c0_51, %c0_52, %c0_53, %c0_54] : memref<1x1x4x8x64xbf16, #tpu.memory_space<vmem>>, vector<1x1x4x8x64xbf16>
    %107 = vector.shape_cast %106 : vector<1x1x4x8x64xbf16> to vector<4x8x64xbf16>
    %108 = vector.shape_cast %105 : vector<4x8x64xbf16> to vector<1x1x4x8x64xbf16>
    tpu.vector_store %arg7[%c0_50, %c0_51, %c0_52, %c0_53, %c0_54], %108 {strides = array<i32>} : memref<1x1x4x8x64xbf16, #tpu.memory_space<vmem>>, vector<1x1x4x8x64xbf16>,
    return
  }
  func.func @transform_0(%arg0: i32, %arg1: i32) -> (i32, i32, i32, i32, i32) {
    %c0_i32 = arith.constant 0 : i32
    %c0_i32_0 = arith.constant 0 : i32
    %c0_i32_1 = arith.constant 0 : i32
    %c0_i32_2 = arith.constant 0 : i32
    return %arg0, %arg1, %c0_i32, %c0_i32_0, %c0_i32_1 : i32, i32, i32, i32, i32
  }
  func.func @transform_1(%arg0: i32, %arg1: i32) -> (i32, i32, i32) {
    %c0_i32 = arith.constant 0 : i32
    %c0_i32_0 = arith.constant 0 : i32
    %c0_i32_1 = arith.constant 0 : i32
    %c0_i32_2 = arith.constant 0 : i32
    return %c0_i32, %c0_i32_0, %c0_i32_1 : i32, i32, i32
  }
  func.func @transform_2(%arg0: i32, %arg1: i32) -> (i32, i32) {
    %c0_i32 = arith.constant 0 : i32
    %c0_i32_0 = arith.constant 0 : i32
    %c0_i32_1 = arith.constant 0 : i32
    return %c0_i32, %c0_i32_0 : i32, i32
  }
  func.func @transform_3(%arg0: i32, %arg1: i32) -> (i32, i32, i32) {
    %c0_i32 = arith.constant 0 : i32
    %c0_i32_0 = arith.constant 0 : i32
    %c0_i32_1 = arith.constant 0 : i32
    %c0_i32_2 = arith.constant 0 : i32
    return %c0_i32, %c0_i32_0, %c0_i32_1 : i32, i32, i32
  }
  func.func @transform_4(%arg0: i32, %arg1: i32) -> (i32, i32) {
    %c0_i32 = arith.constant 0 : i32
    %c0_i32_0 = arith.constant 0 : i32
    %c0_i32_1 = arith.constant 0 : i32
    return %c0_i32, %c0_i32_0 : i32, i32
  }
  func.func @transform_5(%arg0: i32, %arg1: i32) -> (i32, i32, i32, i32, i32) {
    %c0_i32 = arith.constant 0 : i32
    %c0_i32_0 = arith.constant 0 : i32
    %c0_i32_1 = arith.constant 0 : i32
    %c0_i32_2 = arith.constant 0 : i32
    return %arg0, %arg1, %c0_i32, %c0_i32_0, %c0_i32_1 : i32, i32, i32, i32, i32
  }
}

module attributes {stable_mosaic.version = 11 : i64} {
  func.func @_deconv_x2_kernel(%arg0: i32, %arg1: i32, %arg2: memref<1x1x5x9x64xbf16, #tpu.memory_space<vmem>>, %arg3: memref<256x256xbf16, #tpu.memory_space<vmem>>, %arg4: memref<1x256xf32, #tpu.memory_space<vmem>>, %arg5: memref<1x1x8x8x128xbf16, #tpu.memory_space<vmem>>) attributes {dimension_semantics = [#tpu.dimension_semantics<parallel>, #tpu.dimension_semantics<parallel>], iteration_bounds = array<i64: 2, 2>, scalar_prefetch = 0 : i64, scratch_operands = 0 : i64, tpu.core_type = #tpu.core_type<tc>, window_params = [{transform_indices = @transform_0, window_bounds = array<i64: 1, 1, 5, 9, 64>}, {pipeline_mode = #tpu.pipeline_mode<synchronous>, transform_indices = @transform_1, window_bounds = array<i64: 256, 256>}, {pipeline_mode = #tpu.pipeline_mode<synchronous>, transform_indices = @transform_2, window_bounds = array<i64: 1, 256>}, {transform_indices = @transform_3, window_bounds = array<i64: 1, 1, 8, 8, 128>}]} {
    %c0 = arith.constant 0 : index
    %c0_0 = arith.constant 0 : index
    %c0_1 = arith.constant 0 : index
    %c0_2 = arith.constant 0 : index
    %c0_3 = arith.constant 0 : index
    %0 = vector.load %arg2[%c0, %c0_0, %c0_1, %c0_2, %c0_3] : memref<1x1x5x9x64xbf16, #tpu.memory_space<vmem>>, vector<1x1x4x9x64xbf16>
    %1 = vector.shape_cast %0 : vector<1x1x4x9x64xbf16> to vector<4x9x64xbf16>
    %c0_4 = arith.constant 0 : index
    %c0_5 = arith.constant 0 : index
    %c1 = arith.constant 1 : index
    %c0_6 = arith.constant 0 : index
    %c0_7 = arith.constant 0 : index
    %2 = vector.load %arg2[%c0_4, %c0_5, %c1, %c0_6, %c0_7] : memref<1x1x5x9x64xbf16, #tpu.memory_space<vmem>>, vector<1x1x4x9x64xbf16>
    %3 = vector.shape_cast %2 : vector<1x1x4x9x64xbf16> to vector<4x9x64xbf16>
    %4 = vector.extract_strided_slice %1 {offsets = [0, 0, 0], sizes = [4, 8, 64], strides = [1, 1, 1]} : vector<4x9x64xbf16> to vector<4x8x64xbf16>
    %5 = vector.extract_strided_slice %1 {offsets = [0, 1, 0], sizes = [4, 8, 64], strides = [1, 1, 1]} : vector<4x9x64xbf16> to vector<4x8x64xbf16>
    %6 = vector.extract_strided_slice %3 {offsets = [0, 0, 0], sizes = [4, 8, 64], strides = [1, 1, 1]} : vector<4x9x64xbf16> to vector<4x8x64xbf16>
    %7 = vector.extract_strided_slice %3 {offsets = [0, 1, 0], sizes = [4, 8, 64], strides = [1, 1, 1]} : vector<4x9x64xbf16> to vector<4x8x64xbf16>
    %8 = tpu.concatenate %4, %5, %6, %7 in 2 : vector<4x8x64xbf16>, vector<4x8x64xbf16>, vector<4x8x64xbf16>, vector<4x8x64xbf16> -> vector<4x8x256xbf16>
    %9 = vector.shape_cast %8 : vector<4x8x256xbf16> to vector<32x256xbf16>
    %c0_8 = arith.constant 0 : index
    %c0_9 = arith.constant 0 : index
    %10 = vector.load %arg3[%c0_8, %c0_9] : memref<256x256xbf16, #tpu.memory_space<vmem>>, vector<256x256xbf16>
    %cst = arith.constant dense<0.000000e+00> : vector<32x256xf32>
    %11 = tpu.matmul %9, %10, %cst {dimension_numbers = #tpu.dot_dimension_numbers<[1], [0], [0], [1], [0, 0, 1, 1], [], []>} : vector<32x256xbf16>, vector<256x256xbf16>, vector<32x256xf32> -> vector<32x256xf32>
    %c0_10 = arith.constant 0 : index
    %c0_11 = arith.constant 0 : index
    %12 = vector.load %arg4[%c0_10, %c0_11] : memref<1x256xf32, #tpu.memory_space<vmem>>, vector<1x256xf32>
    %13 = vector.broadcast %12 : vector<1x256xf32> to vector<32x256xf32>
    %14 = arith.addf %11, %13 : vector<32x256xf32>
    %cst_12 = arith.constant 0.000000e+00 : f32
    %15 = vector.broadcast %cst_12 : f32 to vector<32x256xf32>
    %16 = arith.maximumf %14, %15 : vector<32x256xf32>
    %17 = vector.extract_strided_slice %16 {offsets = [0, 0], sizes = [32, 128], strides = [1, 1]} : vector<32x256xf32> to vector<32x128xf32>
    %18 = vector.shape_cast %17 : vector<32x128xf32> to vector<4x8x128xf32>
    %19 = vector.extract_strided_slice %16 {offsets = [0, 128], sizes = [32, 128], strides = [1, 1]} : vector<32x256xf32> to vector<32x128xf32>
    %20 = vector.shape_cast %19 : vector<32x128xf32> to vector<4x8x128xf32>
    %21 = vector.shape_cast %18 : vector<4x8x128xf32> to vector<4x1x8x128xf32>
    %22 = vector.shape_cast %20 : vector<4x8x128xf32> to vector<4x1x8x128xf32>
    %23 = tpu.concatenate %21, %22 in 1 : vector<4x1x8x128xf32>, vector<4x1x8x128xf32> -> vector<4x2x8x128xf32>
    %24 = vector.shape_cast %23 : vector<4x2x8x128xf32> to vector<8x8x128xf32>
    %25 = arith.truncf %24 : vector<8x8x128xf32> to vector<8x8x128xbf16>
    %c0_13 = arith.constant 0 : index
    %c0_14 = arith.constant 0 : index
    %c0_15 = arith.constant 0 : index
    %c0_16 = arith.constant 0 : index
    %c0_17 = arith.constant 0 : index
    %26 = vector.load %arg5[%c0_13, %c0_14, %c0_15, %c0_16, %c0_17] : memref<1x1x8x8x128xbf16, #tpu.memory_space<vmem>>, vector<1x1x8x8x128xbf16>
    %27 = vector.shape_cast %26 : vector<1x1x8x8x128xbf16> to vector<8x8x128xbf16>
    %28 = vector.shape_cast %25 : vector<8x8x128xbf16> to vector<1x1x8x8x128xbf16>
    tpu.vector_store %arg5[%c0_13, %c0_14, %c0_15, %c0_16, %c0_17], %28 {strides = array<i32>} : memref<1x1x8x8x128xbf16, #tpu.memory_space<vmem>>, vector<1x1x8x8x128xbf16>,
    return
  }
  func.func @transform_0(%arg0: i32, %arg1: i32) -> (i32, i32, i32, i32, i32) {
    %c0_i32 = arith.constant 0 : i32
    %c0_i32_0 = arith.constant 0 : i32
    %c0_i32_1 = arith.constant 0 : i32
    %c0_i32_2 = arith.constant 0 : i32
    return %arg0, %arg1, %c0_i32, %c0_i32_0, %c0_i32_1 : i32, i32, i32, i32, i32
  }
  func.func @transform_1(%arg0: i32, %arg1: i32) -> (i32, i32) {
    %c0_i32 = arith.constant 0 : i32
    %c0_i32_0 = arith.constant 0 : i32
    %c0_i32_1 = arith.constant 0 : i32
    return %c0_i32, %c0_i32_0 : i32, i32
  }
  func.func @transform_2(%arg0: i32, %arg1: i32) -> (i32, i32) {
    %c0_i32 = arith.constant 0 : i32
    %c0_i32_0 = arith.constant 0 : i32
    %c0_i32_1 = arith.constant 0 : i32
    return %c0_i32, %c0_i32_0 : i32, i32
  }
  func.func @transform_3(%arg0: i32, %arg1: i32) -> (i32, i32, i32, i32, i32) {
    %c0_i32 = arith.constant 0 : i32
    %c0_i32_0 = arith.constant 0 : i32
    %c0_i32_1 = arith.constant 0 : i32
    %c0_i32_2 = arith.constant 0 : i32
    return %arg0, %arg1, %c0_i32, %c0_i32_0, %c0_i32_1 : i32, i32, i32, i32, i32
  }
}

module attributes {stable_mosaic.version = 11 : i64} {
  func.func @_deconv_x2_kernel(%arg0: i32, %arg1: i32, %arg2: memref<1x1x5x17x64xbf16, #tpu.memory_space<vmem>>, %arg3: memref<256x256xbf16, #tpu.memory_space<vmem>>, %arg4: memref<1x256xf32, #tpu.memory_space<vmem>>, %arg5: memref<1x1x8x16x128xbf16, #tpu.memory_space<vmem>>) attributes {dimension_semantics = [#tpu.dimension_semantics<parallel>, #tpu.dimension_semantics<parallel>], iteration_bounds = array<i64: 2, 4>, scalar_prefetch = 0 : i64, scratch_operands = 0 : i64, tpu.core_type = #tpu.core_type<tc>, window_params = [{transform_indices = @transform_0, window_bounds = array<i64: 1, 1, 5, 17, 64>}, {pipeline_mode = #tpu.pipeline_mode<synchronous>, transform_indices = @transform_1, window_bounds = array<i64: 256, 256>}, {pipeline_mode = #tpu.pipeline_mode<synchronous>, transform_indices = @transform_2, window_bounds = array<i64: 1, 256>}, {transform_indices = @transform_3, window_bounds = array<i64: 1, 1, 8, 16, 128>}]} {
    %c0 = arith.constant 0 : index
    %c0_0 = arith.constant 0 : index
    %c0_1 = arith.constant 0 : index
    %c0_2 = arith.constant 0 : index
    %c0_3 = arith.constant 0 : index
    %0 = vector.load %arg2[%c0, %c0_0, %c0_1, %c0_2, %c0_3] : memref<1x1x5x17x64xbf16, #tpu.memory_space<vmem>>, vector<1x1x4x17x64xbf16>
    %1 = vector.shape_cast %0 : vector<1x1x4x17x64xbf16> to vector<4x17x64xbf16>
    %c0_4 = arith.constant 0 : index
    %c0_5 = arith.constant 0 : index
    %c1 = arith.constant 1 : index
    %c0_6 = arith.constant 0 : index
    %c0_7 = arith.constant 0 : index
    %2 = vector.load %arg2[%c0_4, %c0_5, %c1, %c0_6, %c0_7] : memref<1x1x5x17x64xbf16, #tpu.memory_space<vmem>>, vector<1x1x4x17x64xbf16>
    %3 = vector.shape_cast %2 : vector<1x1x4x17x64xbf16> to vector<4x17x64xbf16>
    %4 = vector.extract_strided_slice %1 {offsets = [0, 0, 0], sizes = [4, 16, 64], strides = [1, 1, 1]} : vector<4x17x64xbf16> to vector<4x16x64xbf16>
    %5 = vector.extract_strided_slice %1 {offsets = [0, 1, 0], sizes = [4, 16, 64], strides = [1, 1, 1]} : vector<4x17x64xbf16> to vector<4x16x64xbf16>
    %6 = vector.extract_strided_slice %3 {offsets = [0, 0, 0], sizes = [4, 16, 64], strides = [1, 1, 1]} : vector<4x17x64xbf16> to vector<4x16x64xbf16>
    %7 = vector.extract_strided_slice %3 {offsets = [0, 1, 0], sizes = [4, 16, 64], strides = [1, 1, 1]} : vector<4x17x64xbf16> to vector<4x16x64xbf16>
    %8 = tpu.concatenate %4, %5, %6, %7 in 2 : vector<4x16x64xbf16>, vector<4x16x64xbf16>, vector<4x16x64xbf16>, vector<4x16x64xbf16> -> vector<4x16x256xbf16>
    %9 = vector.shape_cast %8 : vector<4x16x256xbf16> to vector<64x256xbf16>
    %c0_8 = arith.constant 0 : index
    %c0_9 = arith.constant 0 : index
    %10 = vector.load %arg3[%c0_8, %c0_9] : memref<256x256xbf16, #tpu.memory_space<vmem>>, vector<256x256xbf16>
    %cst = arith.constant dense<0.000000e+00> : vector<64x256xf32>
    %11 = tpu.matmul %9, %10, %cst {dimension_numbers = #tpu.dot_dimension_numbers<[1], [0], [0], [1], [0, 0, 1, 1], [], []>} : vector<64x256xbf16>, vector<256x256xbf16>, vector<64x256xf32> -> vector<64x256xf32>
    %c0_10 = arith.constant 0 : index
    %c0_11 = arith.constant 0 : index
    %12 = vector.load %arg4[%c0_10, %c0_11] : memref<1x256xf32, #tpu.memory_space<vmem>>, vector<1x256xf32>
    %13 = vector.broadcast %12 : vector<1x256xf32> to vector<64x256xf32>
    %14 = arith.addf %11, %13 : vector<64x256xf32>
    %cst_12 = arith.constant 0.000000e+00 : f32
    %15 = vector.broadcast %cst_12 : f32 to vector<64x256xf32>
    %16 = arith.maximumf %14, %15 : vector<64x256xf32>
    %17 = vector.extract_strided_slice %16 {offsets = [0, 0], sizes = [64, 128], strides = [1, 1]} : vector<64x256xf32> to vector<64x128xf32>
    %18 = vector.shape_cast %17 : vector<64x128xf32> to vector<4x16x128xf32>
    %19 = vector.extract_strided_slice %16 {offsets = [0, 128], sizes = [64, 128], strides = [1, 1]} : vector<64x256xf32> to vector<64x128xf32>
    %20 = vector.shape_cast %19 : vector<64x128xf32> to vector<4x16x128xf32>
    %21 = vector.shape_cast %18 : vector<4x16x128xf32> to vector<4x1x16x128xf32>
    %22 = vector.shape_cast %20 : vector<4x16x128xf32> to vector<4x1x16x128xf32>
    %23 = tpu.concatenate %21, %22 in 1 : vector<4x1x16x128xf32>, vector<4x1x16x128xf32> -> vector<4x2x16x128xf32>
    %24 = vector.shape_cast %23 : vector<4x2x16x128xf32> to vector<8x16x128xf32>
    %25 = arith.truncf %24 : vector<8x16x128xf32> to vector<8x16x128xbf16>
    %c0_13 = arith.constant 0 : index
    %c0_14 = arith.constant 0 : index
    %c0_15 = arith.constant 0 : index
    %c0_16 = arith.constant 0 : index
    %c0_17 = arith.constant 0 : index
    %26 = vector.load %arg5[%c0_13, %c0_14, %c0_15, %c0_16, %c0_17] : memref<1x1x8x16x128xbf16, #tpu.memory_space<vmem>>, vector<1x1x8x16x128xbf16>
    %27 = vector.shape_cast %26 : vector<1x1x8x16x128xbf16> to vector<8x16x128xbf16>
    %28 = vector.shape_cast %25 : vector<8x16x128xbf16> to vector<1x1x8x16x128xbf16>
    tpu.vector_store %arg5[%c0_13, %c0_14, %c0_15, %c0_16, %c0_17], %28 {strides = array<i32>} : memref<1x1x8x16x128xbf16, #tpu.memory_space<vmem>>, vector<1x1x8x16x128xbf16>,
    return
  }
  func.func @transform_0(%arg0: i32, %arg1: i32) -> (i32, i32, i32, i32, i32) {
    %c0_i32 = arith.constant 0 : i32
    %c0_i32_0 = arith.constant 0 : i32
    %c0_i32_1 = arith.constant 0 : i32
    %c0_i32_2 = arith.constant 0 : i32
    return %arg0, %arg1, %c0_i32, %c0_i32_0, %c0_i32_1 : i32, i32, i32, i32, i32
  }
  func.func @transform_1(%arg0: i32, %arg1: i32) -> (i32, i32) {
    %c0_i32 = arith.constant 0 : i32
    %c0_i32_0 = arith.constant 0 : i32
    %c0_i32_1 = arith.constant 0 : i32
    return %c0_i32, %c0_i32_0 : i32, i32
  }
  func.func @transform_2(%arg0: i32, %arg1: i32) -> (i32, i32) {
    %c0_i32 = arith.constant 0 : i32
    %c0_i32_0 = arith.constant 0 : i32
    %c0_i32_1 = arith.constant 0 : i32
    return %c0_i32, %c0_i32_0 : i32, i32
  }
  func.func @transform_3(%arg0: i32, %arg1: i32) -> (i32, i32, i32, i32, i32) {
    %c0_i32 = arith.constant 0 : i32
    %c0_i32_0 = arith.constant 0 : i32
    %c0_i32_1 = arith.constant 0 : i32
    %c0_i32_2 = arith.constant 0 : i32
    return %arg0, %arg1, %c0_i32, %c0_i32_0, %c0_i32_1 : i32, i32, i32, i32, i32
  }
}

module attributes {stable_mosaic.version = 11 : i64} {
  func.func @_conv3x3_skip_kernel(%arg0: i32, %arg1: i32, %arg2: memref<1x1x6x34x64xbf16, #tpu.memory_space<vmem>>, %arg3: memref<3x192x3xbf16, #tpu.memory_space<vmem>>, %arg4: memref<1x3xf32, #tpu.memory_space<vmem>>, %arg5: memref<1x1x4x32x3xf32, #tpu.memory_space<vmem>>, %arg6: memref<1x1x4x32x3xf32, #tpu.memory_space<vmem>>) attributes {dimension_semantics = [#tpu.dimension_semantics<parallel>, #tpu.dimension_semantics<parallel>], iteration_bounds = array<i64: 2, 8>, scalar_prefetch = 0 : i64, scratch_operands = 0 : i64, tpu.core_type = #tpu.core_type<tc>, window_params = [{transform_indices = @transform_0, window_bounds = array<i64: 1, 1, 6, 34, 64>}, {pipeline_mode = #tpu.pipeline_mode<synchronous>, transform_indices = @transform_1, window_bounds = array<i64: 3, 192, 3>}, {pipeline_mode = #tpu.pipeline_mode<synchronous>, transform_indices = @transform_2, window_bounds = array<i64: 1, 3>}, {transform_indices = @transform_3, window_bounds = array<i64: 1, 1, 4, 32, 3>}, {transform_indices = @transform_4, window_bounds = array<i64: 1, 1, 4, 32, 3>}]} {
    %cst = arith.constant 0.000000e+00 : f32
    %0 = vector.broadcast %cst : f32 to vector<128x3xf32>
    %c0 = arith.constant 0 : index
    %c0_0 = arith.constant 0 : index
    %c0_1 = arith.constant 0 : index
    %c0_2 = arith.constant 0 : index
    %c0_3 = arith.constant 0 : index
    %1 = vector.load %arg2[%c0, %c0_0, %c0_1, %c0_2, %c0_3] : memref<1x1x6x34x64xbf16, #tpu.memory_space<vmem>>, vector<1x1x4x34x64xbf16>
    %2 = vector.shape_cast %1 : vector<1x1x4x34x64xbf16> to vector<4x34x64xbf16>
    %3 = vector.extract_strided_slice %2 {offsets = [0, 0, 0], sizes = [4, 32, 64], strides = [1, 1, 1]} : vector<4x34x64xbf16> to vector<4x32x64xbf16>
    %4 = vector.extract_strided_slice %2 {offsets = [0, 1, 0], sizes = [4, 32, 64], strides = [1, 1, 1]} : vector<4x34x64xbf16> to vector<4x32x64xbf16>
    %5 = vector.extract_strided_slice %2 {offsets = [0, 2, 0], sizes = [4, 32, 64], strides = [1, 1, 1]} : vector<4x34x64xbf16> to vector<4x32x64xbf16>
    %6 = tpu.concatenate %3, %4, %5 in 2 : vector<4x32x64xbf16>, vector<4x32x64xbf16>, vector<4x32x64xbf16> -> vector<4x32x192xbf16>
    %7 = vector.shape_cast %6 : vector<4x32x192xbf16> to vector<128x192xbf16>
    %c0_4 = arith.constant 0 : index
    %c0_5 = arith.constant 0 : index
    %c0_6 = arith.constant 0 : index
    %8 = vector.load %arg3[%c0_4, %c0_5, %c0_6] : memref<3x192x3xbf16, #tpu.memory_space<vmem>>, vector<1x192x3xbf16>
    %9 = vector.shape_cast %8 : vector<1x192x3xbf16> to vector<192x3xbf16>
    %cst_7 = arith.constant dense<0.000000e+00> : vector<128x3xf32>
    %10 = tpu.matmul %7, %9, %cst_7 {dimension_numbers = #tpu.dot_dimension_numbers<[1], [0], [0], [1], [0, 0, 1, 1], [], []>} : vector<128x192xbf16>, vector<192x3xbf16>, vector<128x3xf32> -> vector<128x3xf32>
    %11 = arith.addf %0, %10 : vector<128x3xf32>
    %c0_8 = arith.constant 0 : index
    %c0_9 = arith.constant 0 : index
    %c1 = arith.constant 1 : index
    %c0_10 = arith.constant 0 : index
    %c0_11 = arith.constant 0 : index
    %12 = vector.load %arg2[%c0_8, %c0_9, %c1, %c0_10, %c0_11] : memref<1x1x6x34x64xbf16, #tpu.memory_space<vmem>>, vector<1x1x4x34x64xbf16>
    %13 = vector.shape_cast %12 : vector<1x1x4x34x64xbf16> to vector<4x34x64xbf16>
    %14 = vector.extract_strided_slice %13 {offsets = [0, 0, 0], sizes = [4, 32, 64], strides = [1, 1, 1]} : vector<4x34x64xbf16> to vector<4x32x64xbf16>
    %15 = vector.extract_strided_slice %13 {offsets = [0, 1, 0], sizes = [4, 32, 64], strides = [1, 1, 1]} : vector<4x34x64xbf16> to vector<4x32x64xbf16>
    %16 = vector.extract_strided_slice %13 {offsets = [0, 2, 0], sizes = [4, 32, 64], strides = [1, 1, 1]} : vector<4x34x64xbf16> to vector<4x32x64xbf16>
    %17 = tpu.concatenate %14, %15, %16 in 2 : vector<4x32x64xbf16>, vector<4x32x64xbf16>, vector<4x32x64xbf16> -> vector<4x32x192xbf16>
    %18 = vector.shape_cast %17 : vector<4x32x192xbf16> to vector<128x192xbf16>
    %c1_12 = arith.constant 1 : index
    %c0_13 = arith.constant 0 : index
    %c0_14 = arith.constant 0 : index
    %19 = vector.load %arg3[%c1_12, %c0_13, %c0_14] : memref<3x192x3xbf16, #tpu.memory_space<vmem>>, vector<1x192x3xbf16>
    %20 = vector.shape_cast %19 : vector<1x192x3xbf16> to vector<192x3xbf16>
    %cst_15 = arith.constant dense<0.000000e+00> : vector<128x3xf32>
    %21 = tpu.matmul %18, %20, %cst_15 {dimension_numbers = #tpu.dot_dimension_numbers<[1], [0], [0], [1], [0, 0, 1, 1], [], []>} : vector<128x192xbf16>, vector<192x3xbf16>, vector<128x3xf32> -> vector<128x3xf32>
    %22 = arith.addf %11, %21 : vector<128x3xf32>
    %c0_16 = arith.constant 0 : index
    %c0_17 = arith.constant 0 : index
    %c2 = arith.constant 2 : index
    %c0_18 = arith.constant 0 : index
    %c0_19 = arith.constant 0 : index
    %23 = vector.load %arg2[%c0_16, %c0_17, %c2, %c0_18, %c0_19] : memref<1x1x6x34x64xbf16, #tpu.memory_space<vmem>>, vector<1x1x4x34x64xbf16>
    %24 = vector.shape_cast %23 : vector<1x1x4x34x64xbf16> to vector<4x34x64xbf16>
    %25 = vector.extract_strided_slice %24 {offsets = [0, 0, 0], sizes = [4, 32, 64], strides = [1, 1, 1]} : vector<4x34x64xbf16> to vector<4x32x64xbf16>
    %26 = vector.extract_strided_slice %24 {offsets = [0, 1, 0], sizes = [4, 32, 64], strides = [1, 1, 1]} : vector<4x34x64xbf16> to vector<4x32x64xbf16>
    %27 = vector.extract_strided_slice %24 {offsets = [0, 2, 0], sizes = [4, 32, 64], strides = [1, 1, 1]} : vector<4x34x64xbf16> to vector<4x32x64xbf16>
    %28 = tpu.concatenate %25, %26, %27 in 2 : vector<4x32x64xbf16>, vector<4x32x64xbf16>, vector<4x32x64xbf16> -> vector<4x32x192xbf16>
    %29 = vector.shape_cast %28 : vector<4x32x192xbf16> to vector<128x192xbf16>
    %c2_20 = arith.constant 2 : index
    %c0_21 = arith.constant 0 : index
    %c0_22 = arith.constant 0 : index
    %30 = vector.load %arg3[%c2_20, %c0_21, %c0_22] : memref<3x192x3xbf16, #tpu.memory_space<vmem>>, vector<1x192x3xbf16>
    %31 = vector.shape_cast %30 : vector<1x192x3xbf16> to vector<192x3xbf16>
    %cst_23 = arith.constant dense<0.000000e+00> : vector<128x3xf32>
    %32 = tpu.matmul %29, %31, %cst_23 {dimension_numbers = #tpu.dot_dimension_numbers<[1], [0], [0], [1], [0, 0, 1, 1], [], []>} : vector<128x192xbf16>, vector<192x3xbf16>, vector<128x3xf32> -> vector<128x3xf32>
    %33 = arith.addf %22, %32 : vector<128x3xf32>
    %34 = vector.shape_cast %33 : vector<128x3xf32> to vector<4x32x3xf32>
    %c0_24 = arith.constant 0 : index
    %c0_25 = arith.constant 0 : index
    %35 = vector.load %arg4[%c0_24, %c0_25] : memref<1x3xf32, #tpu.memory_space<vmem>>, vector<1x3xf32>
    %36 = vector.shape_cast %35 : vector<1x3xf32> to vector<1x1x3xf32>
    %37 = vector.broadcast %36 : vector<1x1x3xf32> to vector<4x32x3xf32>
    %38 = arith.addf %34, %37 : vector<4x32x3xf32>
    %c0_26 = arith.constant 0 : index
    %c0_27 = arith.constant 0 : index
    %c0_28 = arith.constant 0 : index
    %c0_29 = arith.constant 0 : index
    %c0_30 = arith.constant 0 : index
    %39 = vector.load %arg5[%c0_26, %c0_27, %c0_28, %c0_29, %c0_30] : memref<1x1x4x32x3xf32, #tpu.memory_space<vmem>>, vector<1x1x4x32x3xf32>
    %40 = vector.shape_cast %39 : vector<1x1x4x32x3xf32> to vector<4x32x3xf32>
    %41 = arith.addf %38, %40 : vector<4x32x3xf32>
    %c0_31 = arith.constant 0 : index
    %c0_32 = arith.constant 0 : index
    %c0_33 = arith.constant 0 : index
    %c0_34 = arith.constant 0 : index
    %c0_35 = arith.constant 0 : index
    %42 = vector.load %arg6[%c0_31, %c0_32, %c0_33, %c0_34, %c0_35] : memref<1x1x4x32x3xf32, #tpu.memory_space<vmem>>, vector<1x1x4x32x3xf32>
    %43 = vector.shape_cast %42 : vector<1x1x4x32x3xf32> to vector<4x32x3xf32>
    %44 = vector.shape_cast %41 : vector<4x32x3xf32> to vector<1x1x4x32x3xf32>
    tpu.vector_store %arg6[%c0_31, %c0_32, %c0_33, %c0_34, %c0_35], %44 {strides = array<i32>} : memref<1x1x4x32x3xf32, #tpu.memory_space<vmem>>, vector<1x1x4x32x3xf32>,
    return
  }
  func.func @transform_0(%arg0: i32, %arg1: i32) -> (i32, i32, i32, i32, i32) {
    %c0_i32 = arith.constant 0 : i32
    %c0_i32_0 = arith.constant 0 : i32
    %c0_i32_1 = arith.constant 0 : i32
    %c0_i32_2 = arith.constant 0 : i32
    return %arg0, %arg1, %c0_i32, %c0_i32_0, %c0_i32_1 : i32, i32, i32, i32, i32
  }
  func.func @transform_1(%arg0: i32, %arg1: i32) -> (i32, i32, i32) {
    %c0_i32 = arith.constant 0 : i32
    %c0_i32_0 = arith.constant 0 : i32
    %c0_i32_1 = arith.constant 0 : i32
    %c0_i32_2 = arith.constant 0 : i32
    return %c0_i32, %c0_i32_0, %c0_i32_1 : i32, i32, i32
  }
  func.func @transform_2(%arg0: i32, %arg1: i32) -> (i32, i32) {
    %c0_i32 = arith.constant 0 : i32
    %c0_i32_0 = arith.constant 0 : i32
    %c0_i32_1 = arith.constant 0 : i32
    return %c0_i32, %c0_i32_0 : i32, i32
  }
  func.func @transform_3(%arg0: i32, %arg1: i32) -> (i32, i32, i32, i32, i32) {
    %c0_i32 = arith.constant 0 : i32
    %c0_i32_0 = arith.constant 0 : i32
    %c0_i32_1 = arith.constant 0 : i32
    %c0_i32_2 = arith.constant 0 : i32
    return %arg0, %arg1, %c0_i32, %c0_i32_0, %c0_i32_1 : i32, i32, i32, i32, i32
  }
  func.func @transform_4(%arg0: i32, %arg1: i32) -> (i32, i32, i32, i32, i32) {
    %c0_i32 = arith.constant 0 : i32
    %c0_i32_0 = arith.constant 0 : i32
    %c0_i32_1 = arith.constant 0 : i32
    %c0_i32_2 = arith.constant 0 : i32
    return %arg0, %arg1, %c0_i32, %c0_i32_0, %c0_i32_1 : i32, i32, i32, i32, i32
  }
}

</mosaic_0001>

<llo_original>
// kernel: tile.13
$region0: #{tile.13}
  #allocation0 [shape = 's32[1]{0}', space=sflag, size = 0x4, scoped, tag = 'scoped memory for tile.13']
  %s0 = inlined_call_operand.vmem [shape: f32[64], index: 0, kind: input, shape index: {}]
  %s1 = inlined_call_operand.vmem [shape: f32[4,64], index: 1, kind: output, shape index: {}]
  // Predicated region
  $region2: #{tile.13} parent=0 // pred_check
    _
  $region3: #{tile.13} parent=0 // pred_check_branch
    %3 = sbr.rel (0) target = $region5
  $region4: #{tile.13} parent=0 // pred_region
    _
  $region5: #{tile.13} parent=0 // pred_fallthru
    _
  %v4 = vld [vmem:[%s0] ss:$0 sm:$0xff]
  %5 = vst [vmem:[%s1] sm:$0xf] %v4

// kernel: tile.14
$region0: #{tile.14}
  %s0 = inlined_call_operand.vmem [shape: f32[4,64], index: 0, kind: input, shape index: {}]
  %s1 = inlined_call_operand.vmem [shape: f32[1,256], index: 1, kind: output, shape index: {}]
  $region1: #{tile.14} parent=0
    #allocation0 [shape = 'u8[8192]{0}', space=vmem, size = 0x2000, scoped, tag = 'scoped mem for output reshape']
    #allocation1 [shape = 'u8[4096]{0}', space=vmem, size = 0x1000, scoped, tag = 'scoped mem for input reshape']
    %s3 = sshllo.u32 0, 4
    %v4 = vld [vmem:[%s0] sm:%s3]
    %5 = vst [vmem:[#allocation1] sm:%s3] %v4
    %s6 = smov 3
    %v7 = vld [vmem:[#allocation1] ss:$2 sm:%s6]
    %vm8 = vcmask 523264
    %9 = vst.msk [vmem:[#allocation0] ss:$8 sm:$0x3] %vm8, %v7
    %s10 = scalar_lea.vmem [#allocation1], 1
    %s11 = smov 3
    %v12 = vld [vmem:[%s10] ss:$2 sm:%s11]
    %13 = vrot.lane.b32.xlu0 %v12, 64
    %v14 = vpop.permute.xlu0 %13
    %vm15 = vcmask 1048064
    %16 = vst.msk [vmem:[#allocation0] ss:$8 sm:$0x3] %vm15, %v14
    %s18 = sshllo.u32 0, 1
    %v20 = vld [vmem:[#allocation0] sm:%s18]
    %s21 = sshllo.u32 0, 1
    %22 = vst [vmem:[%s1] sm:%s21] %v20
    %s23 = scalar_lea.vmem [#allocation0], 8
    %v24 = vld [vmem:[%s23] sm:%s18]
    %s25 = sshllo.u32 0, 1
    %s26 = scalar_lea.vmem %s1, 1
    %27 = vst [vmem:[%s26] sm:%s25] %v24

// kernel: frvsr_sr_forward.6
$region0: #{frvsr_sr_forward.6}
  #allocation0 [shape = 'u32[]', space=smem, size = 0x4, offset = 0x4, fixed_abs, tag = 'smem constant byte address 0x4 - core index']
  #allocation1 [shape = 'u32[144,128]{1,0:T(1,128)}', space=vmem, size = 0x12000, scoped, tag = 'internal scratch']
  %s0 = inlined_call_operand.vmem [shape: bf16[2,2,6,10,51], index: 0, kind: input, shape index: {}]
  %s1 = inlined_call_operand.vmem [shape: bf16[3,153,64], index: 1, kind: input, shape index: {}]
  %s2 = inlined_call_operand.vmem [shape: f32[1,64], index: 2, kind: input, shape index: {}]
  %s3 = inlined_call_operand.vmem [shape: bf16[2,2,4,8,64], index: 3, kind: output, shape index: {}]
  %s4 = sld [smem:[#allocation0]]
  $region45: #{frvsr_sr_forward.6} parent=0
    _
  %s6 = ssub.s32 1, %s4
  %s7 = scalar_select 0, %s6, %s4
  loop: start=0, step=1, limit=6
  $region2: #{frvsr_sr_forward.6} parent=0 // loop_pre_header
    _
  $region3: #{frvsr_sr_forward.6} parent=0 // loop_header
    %s9 = sphi 0, %s13
    %p10 = scmp.ge.s32.totalorder %s9, 6
    %s16 = sphi 0, %s28
    %s17 = sphi 0, %s24
    %s18 = sphi 0, %s16
    %s19 = sphi 0, %s17
    %s20 = sphi 0, %s18
    %s21 = sphi 0, %s19
    %s33 = sphi 0, %s35
    %s36 = sphi 0, %s33
    %s37 = sphi 0, %s36
    %s53 = sphi 0, %s37
    %s57 = sphi 0, %s57
    %s59 = sphi 0, %s57
    %s60 = sphi 0, %s59
    %s74 = sphi 0, %s60
    %s78 = sphi 0, %s78
    %s80 = sphi 0, %s78
    %s81 = sphi 0, %s80
    %s95 = sphi 0, %s81
    %s103 = sphi 0, %s105
    %s106 = sphi 0, %s103
    %s107 = sphi 0, %s106
    %s123 = sphi 0, %s107
  $region4: #{frvsr_sr_forward.6} parent=0 // loop_header_branch
    %12 = sbr.rel (%p10) target = $region8
  $region5: #{frvsr_sr_forward.6} parent=0 // loop_body
    %s14 = ssub.s32 %s9, 1
    %s15 = ssub.s32 %s9, 2
    %s22 = sadd.s32 1, %s17
    %p23 = scmp.ge.s32.totalorder %s22, 2
    %s24 = scalar_select %p23, 0, %s22
    %s25 = sadd.s32 1, %s16
    %s26 = scalar_select %p23, %s25, %s16
    %p27 = scmp.ge.s32.totalorder %s26, 2
    %s28 = scalar_select %p27, 0, %s26
    %s29 = ssub.s32 %s16, %s28
    %s30 = ssub.s32 %s17, %s24
    %s31 = sor.u32 %s29, %s30
    %p32 = scmp.eq.s32.totalorder %s31, 0
    %s34 = sadd.s32 %s33, 1
    %s35 = scalar_select %p32, %s33, %s34
    %p38 = pneg %p32
    %p39 = scmp.eq.s32.totalorder %s9, 3
    %p40 = por %p38, %p39
    %p41 = scmp.ne.s32.totalorder %s33, %s36
    %p42 = scmp.eq.s32.totalorder %s9, 0
    %p43 = por %p41, %p42
    %p44 = scmp.ne.s32.totalorder %s33, %s36
    %p45 = scmp.eq.s32.totalorder %s14, 3
    %p46 = por %p44, %p45
    %p47 = scmp.ne.s32.totalorder %s36, %s37
    %p48 = scmp.eq.s32.totalorder %s14, 0
    %p49 = por %p47, %p48
    %p50 = scmp.ne.s32.totalorder %s36, %s37
    %p51 = scmp.eq.s32.totalorder %s15, 3
    %p52 = por %p50, %p51
    %p54 = scmp.ne.s32.totalorder %s37, %s53
    %p55 = scmp.eq.s32.totalorder %s15, 0
    %p56 = por %p54, %p55
    %s58 = sadd.s32 %s57, 1
    %p61 = scmp.eq.s32.totalorder %s9, 3
    %p62 = scmp.ne.s32.totalorder %s57, %s59
    %p63 = scmp.eq.s32.totalorder %s9, 0
    %p64 = por %p62, %p63
    %p65 = scmp.ne.s32.totalorder %s57, %s59
    %p66 = scmp.eq.s32.totalorder %s14, 3
    %p67 = por %p65, %p66
    %p68 = scmp.ne.s32.totalorder %s59, %s60
    %p69 = scmp.eq.s32.totalorder %s14, 0
    %p70 = por %p68, %p69
    %p71 = scmp.ne.s32.totalorder %s59, %s60
    %p72 = scmp.eq.s32.totalorder %s15, 3
    %p73 = por %p71, %p72
    %p75 = scmp.ne.s32.totalorder %s60, %s74
    %p76 = scmp.eq.s32.totalorder %s15, 0
    %p77 = por %p75, %p76
    %s79 = sadd.s32 %s78, 1
    %p82 = scmp.eq.s32.totalorder %s9, 3
    %p83 = scmp.ne.s32.totalorder %s78, %s80
    %p84 = scmp.eq.s32.totalorder %s9, 0
    %p85 = por %p83, %p84
    %p86 = scmp.ne.s32.totalorder %s78, %s80
    %p87 = scmp.eq.s32.totalorder %s14, 3
    %p88 = por %p86, %p87
    %p89 = scmp.ne.s32.totalorder %s80, %s81
    %p90 = scmp.eq.s32.totalorder %s14, 0
    %p91 = por %p89, %p90
    %p92 = scmp.ne.s32.totalorder %s80, %s81
    %p93 = scmp.eq.s32.totalorder %s15, 3
    %p94 = por %p92, %p93
    %p96 = scmp.ne.s32.totalorder %s81, %s95
    %p97 = scmp.eq.s32.totalorder %s15, 0
    %p98 = por %p96, %p97
    %s99 = ssub.s32 %s16, %s28
    %s100 = ssub.s32 %s17, %s24
    %s101 = sor.u32 %s99, %s100
    %p102 = scmp.eq.s32.totalorder %s101, 0
    %s104 = sadd.s32 %s103, 1
    %s105 = scalar_select %p102, %s103, %s104
    %p108 = pneg %p102
    %p109 = scmp.eq.s32.totalorder %s9, 3
    %p110 = por %p108, %p109
    %p111 = scmp.ne.s32.totalorder %s103, %s106
    %p112 = scmp.eq.s32.totalorder %s9, 0
    %p113 = por %p111, %p112
    %p114 = scmp.ne.s32.totalorder %s103, %s106
    %p115 = scmp.eq.s32.totalorder %s14, 3
    %p116 = por %p114, %p115
    %p117 = scmp.ne.s32.totalorder %s106, %s107
    %p118 = scmp.eq.s32.totalorder %s14, 0
    %p119 = por %p117, %p118
    %p120 = scmp.ne.s32.totalorder %s106, %s107
    %p121 = scmp.eq.s32.totalorder %s15, 3
    %p122 = por %p120, %p121
    %p124 = scmp.ne.s32.totalorder %s107, %s123
    %p125 = scmp.eq.s32.totalorder %s15, 0
    %p126 = por %p124, %p125
    %p127 = scmp.le.s32.totalorder 1, %s9
    %p128 = scmp.lt.s32.totalorder %s9, 5
    %p129 = pnand %p127, %p128
    %p130 = pneg %p129
    // Predicated region
    $region9: #{frvsr_sr_forward.6} parent=5 // pred_check
      _
    $region10: #{frvsr_sr_forward.6} parent=5 // pred_check_branch
      %132 = sbr.rel (%p129) target = $region12
    $region11: #{frvsr_sr_forward.6} parent=5 // pred_region
      %s133 = ssub.s32 %s9, 1
      // Predicated region
      $region13: #{frvsr_sr_forward.6} parent=11 // pred_check
        %p134 = pneg %p70
      $region14: #{frvsr_sr_forward.6} parent=11 // pred_check_branch
        %136 = sbr.rel (%p134) target = $region16
      $region15: #{frvsr_sr_forward.6} parent=11 // pred_region
        _
      $region16: #{frvsr_sr_forward.6} parent=11 // pred_fallthru
        _
      // Predicated region
      $region17: #{frvsr_sr_forward.6} parent=11 // pred_check
        %p137 = pneg %p91
      $region18: #{frvsr_sr_forward.6} parent=11 // pred_check_branch
        %139 = sbr.rel (%p137) target = $region20
      $region19: #{frvsr_sr_forward.6} parent=11 // pred_region
        _
      $region20: #{frvsr_sr_forward.6} parent=11 // pred_fallthru
        _
    $region12: #{frvsr_sr_forward.6} parent=5 // pred_fallthru
      _
    %p140 = scmp.lt.s32.totalorder %s9, 4
    // Predicated region
    $region21: #{frvsr_sr_forward.6} parent=5 // pred_check
      %p141 = pneg %p140
    $region22: #{frvsr_sr_forward.6} parent=5 // pred_check_branch
      %143 = sbr.rel (%p141) target = $region24
    $region23: #{frvsr_sr_forward.6} parent=5 // pred_region
      // Predicated region
      $region25: #{frvsr_sr_forward.6} parent=23 // pred_check
        %p144 = pneg %p43
      $region26: #{frvsr_sr_forward.6} parent=23 // pred_check_branch
        %146 = sbr.rel (%p144) target = $region28
      $region27: #{frvsr_sr_forward.6} parent=23 // pred_region
        %p147 = scmp.lt.s32.totalorder %s16, 1
        %s148 = scalar_select %p147, %s16, 1
        %p149 = scmp.lt.s32.totalorder %s17, 1
        %s150 = scalar_select %p149, %s17, 1
        %s151 = smul.addr %s150, 12
        %s152 = smul.addr %s148, 24
        %s153 = sadd.s32 %s151, %s152
        %s154 = smul.addr %s153, 4
        %s155 = scalar_lea.vmem %s0, %s154
      $region28: #{frvsr_sr_forward.6} parent=23 // pred_fallthru
        _
    $region24: #{frvsr_sr_forward.6} parent=5 // pred_fallthru
      _
    %p156 = scmp.le.s32.totalorder 1, %s9
    %p157 = scmp.lt.s32.totalorder %s9, 5
    %p158 = pnand %p156, %p157
    %p159 = pneg %p158
    // Predicated region
    $region29: #{frvsr_sr_forward.6} parent=5 // pred_check
      _
    $region30: #{frvsr_sr_forward.6} parent=5 // pred_check_branch
      %161 = sbr.rel (%p158) target = $region32
    $region31: #{frvsr_sr_forward.6} parent=5 // pred_region
      %s162 = ssub.s32 %s9, 1
      %p163 = scmp.lt.s32.totalorder %s18, 1
      %s164 = scalar_select %p163, %s18, 1
      %p165 = scmp.lt.s32.totalorder %s19, 1
      %s166 = scalar_select %p165, %s19, 1
      %s167 = smul.addr %s166, 12
      %s168 = smul.addr %s164, 24
      %s169 = sadd.s32 %s167, %s168
      %s170 = smul.addr %s169, 4
      %s171 = scalar_lea.vmem %s0, %s170
      %p172 = pneg %p49
      %p173 = pneg %p46
      %p174 = pneg %p70
      %p175 = pneg %p67
      %p176 = pneg %p91
      %p177 = pneg %p88
      %p178 = pneg %p119
      %p179 = pneg %p116
      %p180 = scmp.lt.s32.totalorder %s18, 1
      %s181 = scalar_select %p180, %s18, 1
      %p182 = scmp.lt.s32.totalorder %s19, 1
      %s183 = scalar_select %p182, %s19, 1
      %s184 = smul.addr %s183, 4
      %s185 = smul.addr %s181, 8
      %s186 = sadd.s32 %s184, %s185
      %s187 = smul.addr %s186, 4
      %s188 = scalar_lea.vmem %s3, %s187
      %p189 = scmp.lt.s32.totalorder %s18, 1
      %s190 = scalar_select %p189, %s18, 1
      %p191 = scmp.lt.s32.totalorder %s19, 1
      %s192 = scalar_select %p191, %s19, 1
      %s193 = smul.addr %s192, 12
      %s194 = smul.addr %s190, 24
      %s195 = sadd.s32 %s193, %s194
      %s196 = smul.addr %s195, 4
      %s197 = scalar_lea.vmem %s0, %s196
      %p198 = scmp.lt.s32.totalorder %s18, 1
      %s199 = scalar_select %p198, %s18, 1
      %p200 = scmp.lt.s32.totalorder %s19, 1
      %s201 = scalar_select %p200, %s19, 1
      %s202 = smul.addr %s201, 4
      %s203 = smul.addr %s199, 8
      %s204 = sadd.s32 %s202, %s203
      %s205 = smul.addr %s204, 4
      %s206 = scalar_lea.vmem %s3, %s205
      %v208 = vld [vmem:[%s197] sm:$0xf]
      %v209 = vld [vmem:[%s197 + $0x4] sm:$0x1]
      %v210 = vld [vmem:[%s197 + $0x8] sm:$0xf]
      %v211 = vld [vmem:[%s197 + $0xc] sm:$0x1]
      %v212 = vld [vmem:[%s197 + $0x10] sm:$0xf]
      %v213 = vld [vmem:[%s197 + $0x14] sm:$0x1]
      %v214 = vld [vmem:[%s197 + $0x18] sm:$0xf]
      %v215 = vld [vmem:[%s197 + $0x1c] sm:$0x1]
      %v224 = vunpack.c.l.b16 %v208
      %v225 = vunpack.c.l.b16 %v209
      %v226 = vunpack.c.l.b16 %v210
      %v227 = vunpack.c.l.b16 %v211
      %v228 = vunpack.c.l.b16 %v212
      %v229 = vunpack.c.l.b16 %v213
      %v230 = vunpack.c.l.b16 %v214
      %v231 = vunpack.c.l.b16 %v215
      %v232 = vpack.c.b16 %v225, %v224
      %v233 = vpack.c.b16 %v227, %v226
      %v234 = vpack.c.b16 %v229, %v228
      %v235 = vpack.c.b16 %v231, %v230
      %v237 = vshrl.u32 %v232, 16
      %v239 = vshll.u32 %v232, 16
      %v241 = vrot.slane %v239, 1
      %v242 = vor.u32 %v237, %v241
      %v244 = vshrl.u32 %v233, 16
      %v246 = vshll.u32 %v233, 16
      %v248 = vrot.slane %v246, 1
      %v249 = vor.u32 %v244, %v248
      %v251 = vshrl.u32 %v234, 16
      %v253 = vshll.u32 %v234, 16
      %v255 = vrot.slane %v253, 1
      %v256 = vor.u32 %v251, %v255
      %v258 = vshrl.u32 %v235, 16
      %v260 = vshll.u32 %v235, 16
      %v262 = vrot.slane %v260, 1
      %v263 = vor.u32 %v258, %v262
      %264 = vrot.lane.b32.xlu0 %v242, 51
      %v265 = vpop.permute.xlu0 %264
      %266 = vrot.lane.b32.xlu0 %v249, 51
      %v267 = vpop.permute.xlu0 %266
      %268 = vrot.lane.b32.xlu0 %v256, 51
      %v269 = vpop.permute.xlu0 %268
      %270 = vrot.lane.b32.xlu0 %v263, 51
      %v271 = vpop.permute.xlu0 %270
      %v272 = vrot.slane %v232, 1
      %v273 = vrot.slane %v233, 1
      %v274 = vrot.slane %v234, 1
      %v275 = vrot.slane %v235, 1
      %276 = vrot.lane.b32.xlu0 %v272, 102
      %v277 = vpop.permute.xlu0 %276
      %278 = vrot.lane.b32.xlu0 %v273, 102
      %v279 = vpop.permute.xlu0 %278
      %280 = vrot.lane.b32.xlu0 %v274, 102
      %v281 = vpop.permute.xlu0 %280
      %282 = vrot.lane.b32.xlu0 %v275, 102
      %v283 = vpop.permute.xlu0 %282
      %vm284 = vcmask 416768
      %v287 = vsel %vm284, %v208, %v265
      %v290 = vsel %vm284, %v210, %v267
      %v293 = vsel %vm284, %v212, %v269
      %v296 = vsel %vm284, %v214, %v271
      %vm297 = vcmask 834560
      %v299 = vsel %vm297, %v287, %v277
      %v301 = vsel %vm297, %v290, %v279
      %v303 = vsel %vm297, %v293, %v281
      %v305 = vsel %vm297, %v296, %v283
      %v310 = vunpack.c.l.b16 %v299
      %v311 = vunpack.c.l.b16 %v277
      %v312 = vunpack.c.l.b16 %v301
      %v313 = vunpack.c.l.b16 %v279
      %v314 = vunpack.c.l.b16 %v303
      %v315 = vunpack.c.l.b16 %v281
      %v316 = vunpack.c.l.b16 %v305
      %v317 = vunpack.c.l.b16 %v283
      %v318 = vld [vmem:[%s1] sm:$0xf]
      %v319 = vld [vmem:[%s1 + $0x4] sm:$0xf]
      %v320 = vld [vmem:[%s1 + $0x8] sm:$0xf]
      %v321 = vld [vmem:[%s1 + $0xc] sm:$0xf]
      %v322 = vld [vmem:[%s1 + $0x10] sm:$0xf]
      %v323 = vld [vmem:[%s1 + $0x14] sm:$0xf]
      %v324 = vld [vmem:[%s1 + $0x18] sm:$0xf]
      %v325 = vld [vmem:[%s1 + $0x1c] sm:$0xf]
      %v326 = vld [vmem:[%s1 + $0x20] sm:$0xf]
      %v327 = vld [vmem:[%s1 + $0x24] sm:$0xf]
      %v328 = vld [vmem:[%s1 + $0x28] sm:$0xf]
      %v329 = vld [vmem:[%s1 + $0x2c] sm:$0xf]
      %v330 = vld [vmem:[%s1 + $0x30] sm:$0xf]
      %v331 = vld [vmem:[%s1 + $0x34] sm:$0xf]
      %v332 = vld [vmem:[%s1 + $0x38] sm:$0xf]
      %v333 = vld [vmem:[%s1 + $0x3c] sm:$0xf]
      %v334 = vld [vmem:[%s1 + $0x40] sm:$0xf]
      %v335 = vld [vmem:[%s1 + $0x44] sm:$0xf]
      %v336 = vld [vmem:[%s1 + $0x48] sm:$0xf]
      %v337 = vld [vmem:[%s1 + $0x4c] sm:$0x1]
      %s338 = scalar_lea.vmem %s197, 8
      %v339 = vld [vmem:[%s338] sm:$0xf]
      %v340 = vld [vmem:[%s338 + $0x4] sm:$0x1]
      %v341 = vld [vmem:[%s338 + $0x8] sm:$0xf]
      %v342 = vld [vmem:[%s338 + $0xc] sm:$0x1]
      %v343 = vld [vmem:[%s338 + $0x10] sm:$0xf]
      %v344 = vld [vmem:[%s338 + $0x14] sm:$0x1]
      %v345 = vld [vmem:[%s338 + $0x18] sm:$0xf]
      %v346 = vld [vmem:[%s338 + $0x1c] sm:$0x1]
      %v355 = vunpack.c.l.b16 %v339
      %v356 = vunpack.c.l.b16 %v340
      %v357 = vunpack.c.l.b16 %v341
      %v358 = vunpack.c.l.b16 %v342
      %v359 = vunpack.c.l.b16 %v343
      %v360 = vunpack.c.l.b16 %v344
      %v361 = vunpack.c.l.b16 %v345
      %v362 = vunpack.c.l.b16 %v346
      %v363 = vpack.c.b16 %v356, %v355
      %v364 = vpack.c.b16 %v358, %v357
      %v365 = vpack.c.b16 %v360, %v359
      %v366 = vpack.c.b16 %v362, %v361
      %v368 = vshrl.u32 %v363, 16
      %v370 = vshll.u32 %v363, 16
      %v372 = vrot.slane %v370, 1
      %v373 = vor.u32 %v368, %v372
      %v375 = vshrl.u32 %v364, 16
      %v377 = vshll.u32 %v364, 16
      %v379 = vrot.slane %v377, 1
      %v380 = vor.u32 %v375, %v379
      %v382 = vshrl.u32 %v365, 16
      %v384 = vshll.u32 %v365, 16
      %v386 = vrot.slane %v384, 1
      %v387 = vor.u32 %v382, %v386
      %v389 = vshrl.u32 %v366, 16
      %v391 = vshll.u32 %v366, 16
      %v393 = vrot.slane %v391, 1
      %v394 = vor.u32 %v389, %v393
      %395 = vrot.lane.b32.xlu0 %v373, 51
      %v396 = vpop.permute.xlu0 %395
      %397 = vrot.lane.b32.xlu0 %v380, 51
      %v398 = vpop.permute.xlu0 %397
      %399 = vrot.lane.b32.xlu0 %v387, 51
      %v400 = vpop.permute.xlu0 %399
      %401 = vrot.lane.b32.xlu0 %v394, 51
      %v402 = vpop.permute.xlu0 %401
      %v403 = vrot.slane %v363, 1
      %v404 = vrot.slane %v364, 1
      %v405 = vrot.slane %v365, 1
      %v406 = vrot.slane %v366, 1
      %407 = vrot.lane.b32.xlu0 %v403, 102
      %v408 = vpop.permute.xlu0 %407
      %409 = vrot.lane.b32.xlu0 %v404, 102
      %v410 = vpop.permute.xlu0 %409
      %411 = vrot.lane.b32.xlu0 %v405, 102
      %v412 = vpop.permute.xlu0 %411
      %413 = vrot.lane.b32.xlu0 %v406, 102
      %v414 = vpop.permute.xlu0 %413
      %v417 = vsel %vm284, %v339, %v396
      %v420 = vsel %vm284, %v341, %v398
      %v423 = vsel %vm284, %v343, %v400
      %v426 = vsel %vm284, %v345, %v402
      %v428 = vsel %vm297, %v417, %v408
      %v430 = vsel %vm297, %v420, %v410
      %v432 = vsel %vm297, %v423, %v412
      %v434 = vsel %vm297, %v426, %v414
      %v439 = vunpack.c.l.b16 %v428
      %v440 = vunpack.c.l.b16 %v408
      %v441 = vunpack.c.l.b16 %v430
      %v442 = vunpack.c.l.b16 %v410
      %v443 = vunpack.c.l.b16 %v432
      %v444 = vunpack.c.l.b16 %v412
      %v445 = vunpack.c.l.b16 %v434
      %v446 = vunpack.c.l.b16 %v414
      %s447 = scalar_lea.vmem %s1, 80
      %v448 = vld [vmem:[%s447] sm:$0xf]
      %v449 = vld [vmem:[%s447 + $0x4] sm:$0xf]
      %v450 = vld [vmem:[%s447 + $0x8] sm:$0xf]
      %v451 = vld [vmem:[%s447 + $0xc] sm:$0xf]
      %v452 = vld [vmem:[%s447 + $0x10] sm:$0xf]
      %v453 = vld [vmem:[%s447 + $0x14] sm:$0xf]
      %v454 = vld [vmem:[%s447 + $0x18] sm:$0xf]
      %v455 = vld [vmem:[%s447 + $0x1c] sm:$0xf]
      %v456 = vld [vmem:[%s447 + $0x20] sm:$0xf]
      %v457 = vld [vmem:[%s447 + $0x24] sm:$0xf]
      %v458 = vld [vmem:[%s447 + $0x28] sm:$0xf]
      %v459 = vld [vmem:[%s447 + $0x2c] sm:$0xf]
      %v460 = vld [vmem:[%s447 + $0x30] sm:$0xf]
      %v461 = vld [vmem:[%s447 + $0x34] sm:$0xf]
      %v462 = vld [vmem:[%s447 + $0x38] sm:$0xf]
      %v463 = vld [vmem:[%s447 + $0x3c] sm:$0xf]
      %v464 = vld [vmem:[%s447 + $0x40] sm:$0xf]
      %v465 = vld [vmem:[%s447 + $0x44] sm:$0xf]
      %v466 = vld [vmem:[%s447 + $0x48] sm:$0xf]
      %v467 = vld [vmem:[%s447 + $0x4c] sm:$0x1]
      %v468 = vpack.c.b16 %v441, %v439
      %v469 = vpack.c.b16 %v442, %v440
      %v470 = vpack.c.b16 %v445, %v443
      %v471 = vpack.c.b16 %v446, %v444
      %v494 = vunpack.c.l.b16 %v448
      %v495 = vunpack.c.l.b16 %v449
      %v496 = vunpack.c.l.b16 %v450
      %v497 = vunpack.c.l.b16 %v451
      %v498 = vunpack.c.l.b16 %v452
      %v499 = vunpack.c.l.b16 %v453
      %v500 = vunpack.c.l.b16 %v454
      %v501 = vunpack.c.l.b16 %v455
      %v502 = vunpack.c.l.b16 %v456
      %v503 = vunpack.c.l.b16 %v457
      %v504 = vunpack.c.l.b16 %v458
      %v505 = vunpack.c.l.b16 %v459
      %v506 = vunpack.c.l.b16 %v460
      %v507 = vunpack.c.l.b16 %v461
      %v508 = vunpack.c.l.b16 %v462
      %v509 = vunpack.c.l.b16 %v463
      %v510 = vunpack.c.l.b16 %v464
      %v511 = vunpack.c.l.b16 %v465
      %v512 = vunpack.c.l.b16 %v466
      %v513 = vunpack.c.l.b16 %v467
      %v514 = vpack.c.b16 %v495, %v494
      %v515 = vpack.c.b16 %v497, %v496
      %v516 = vpack.c.b16 %v499, %v498
      %v517 = vpack.c.b16 %v501, %v500
      %v518 = vpack.c.b16 %v503, %v502
      %v519 = vpack.c.b16 %v505, %v504
      %v520 = vpack.c.b16 %v507, %v506
      %v521 = vpack.c.b16 %v509, %v508
      %v522 = vpack.c.b16 %v511, %v510
      %v523 = vpack.c.b16 %v513, %v512
      %vm533 = vcmask 203776
      %v535 = vsel %vm533, %v469, 0
      %v538 = vsel %vm533, %v471, 0
      %vm540 = vcmask 1043456
      %vm541 = vcmask 1044480
      %v542 = vsel %vm540, 4294967295, 65535
      %v543 = vsel %vm541, %v542, 0
      %v545 = vand.u32 %v523, %v543
      %547 = vmatprep.subr.bf16.mxu0 0
      %548 = vmatpush1.bf16.msra.mxu0 %v514
      %549 = vmatprep.subr.bf16.mxu0 0
      %550 = vmatpush1.bf16.msra.mxu0 %v515
      %551 = vmatprep.subr.bf16.mxu0 0
      %552 = vmatpush1.bf16.msra.mxu0 %v516
      %553 = vmatprep.subr.bf16.mxu0 0
      %554 = vmatpush1.bf16.msra.mxu0 %v517
      %555 = vmatprep.subr.bf16.mxu0 0
      %556 = vmatpush1.bf16.msra.mxu0 %v518
      %557 = vmatprep.subr.bf16.mxu0 0
      %558 = vmatpush1.bf16.msra.mxu0 %v519
      %559 = vmatprep.subr.bf16.mxu0 0
      %560 = vmatpush1.bf16.msra.mxu0 %v520
      %561 = vmatprep.subr.bf16.mxu0 0
      %562 = vmatpush1.bf16.msra.mxu0 %v521
      %563 = vmatprep.subr.bf16.mxu0 0
      %564 = vmatpush1.bf16.msra.mxu0 %v522
      %565 = vmatprep.subr.bf16.mxu0 0
      %566 = vmatpush1.bf16.msra.mxu0 %v545
      %567 = vmatprep.subr.bf16.mxu0 0
      %568 = vmatpush1.bf16.msra.mxu0 0
      %569 = vmatprep.subr.bf16.mxu0 0
      %570 = vmatpush1.bf16.msra.mxu0 0
      %571 = vmatprep.subr.bf16.mxu0 0
      %572 = vmatpush1.bf16.msra.mxu0 0
      %573 = vmatprep.subr.bf16.mxu0 0
      %574 = vmatpush1.bf16.msra.mxu0 0
      %575 = vmatprep.subr.bf16.mxu0 0
      %576 = vmatpush1.bf16.msra.mxu0 0
      %577 = vmatprep.subr.bf16.mxu0 0
      %578 = vmatpush1.bf16.msra.mxu0 0
      %579 = vmatprep.mubr.bf16.mxu0 %v535
      %580 = vmatmul.mubr.bf16.gmra.mrb[0].mxu0 %v468
      %v581 = vpop.f32.mrb[0].mxu0
      %v582 = vadd.f32 0.0, %v581
      %v583 = vpop.f32.mrb[0].mxu0
      %v584 = vpop.f32.mrb[0].mxu0
      %v585 = vadd.f32 0.0, %v584
      %v586 = vpop.f32.mrb[0].mxu0
      %587 = vmatprep.mubr.bf16.mxu0 %v538
      %588 = vmatmul.mubr.bf16.gmra.mrb[0].mxu0 %v470
      %v589 = vpop.f32.mrb[0].mxu0
      %v590 = vadd.f32 0.0, %v589
      %v591 = vpop.f32.mrb[0].mxu0
      %v592 = vpop.f32.mrb[0].mxu0
      %v593 = vadd.f32 0.0, %v592
      %v594 = vpop.f32.mrb[0].mxu0
      %595 = vdwg.mxu0
      %v596 = vpack.c.b16 %v312, %v310
      %v597 = vpack.c.b16 %v313, %v311
      %v598 = vpack.c.b16 %v316, %v314
      %v599 = vpack.c.b16 %v317, %v315
      %v622 = vunpack.c.l.b16 %v318
      %v623 = vunpack.c.l.b16 %v319
      %v624 = vunpack.c.l.b16 %v320
      %v625 = vunpack.c.l.b16 %v321
      %v626 = vunpack.c.l.b16 %v322
      %v627 = vunpack.c.l.b16 %v323
      %v628 = vunpack.c.l.b16 %v324
      %v629 = vunpack.c.l.b16 %v325
      %v630 = vunpack.c.l.b16 %v326
      %v631 = vunpack.c.l.b16 %v327
      %v632 = vunpack.c.l.b16 %v328
      %v633 = vunpack.c.l.b16 %v329
      %v634 = vunpack.c.l.b16 %v330
      %v635 = vunpack.c.l.b16 %v331
      %v636 = vunpack.c.l.b16 %v332
      %v637 = vunpack.c.l.b16 %v333
      %v638 = vunpack.c.l.b16 %v334
      %v639 = vunpack.c.l.b16 %v335
      %v640 = vunpack.c.l.b16 %v336
      %v641 = vunpack.c.l.b16 %v337
      %v642 = vpack.c.b16 %v623, %v622
      %v643 = vpack.c.b16 %v625, %v624
      %v644 = vpack.c.b16 %v627, %v626
      %v645 = vpack.c.b16 %v629, %v628
      %v646 = vpack.c.b16 %v631, %v630
      %v647 = vpack.c.b16 %v633, %v632
      %v648 = vpack.c.b16 %v635, %v634
      %v649 = vpack.c.b16 %v637, %v636
      %v650 = vpack.c.b16 %v639, %v638
      %v651 = vpack.c.b16 %v641, %v640
      %v662 = vsel %vm533, %v597, 0
      %v665 = vsel %vm533, %v599, 0
      %v668 = vand.u32 %v651, %v543
      %670 = vmatprep.subr.bf16.mxu0 0
      %671 = vmatpush1.bf16.msra.mxu0 %v642
      %672 = vmatprep.subr.bf16.mxu0 0
      %673 = vmatpush1.bf16.msra.mxu0 %v643
      %674 = vmatprep.subr.bf16.mxu0 0
      %675 = vmatpush1.bf16.msra.mxu0 %v644
      %676 = vmatprep.subr.bf16.mxu0 0
      %677 = vmatpush1.bf16.msra.mxu0 %v645
      %678 = vmatprep.subr.bf16.mxu0 0
      %679 = vmatpush1.bf16.msra.mxu0 %v646
      %680 = vmatprep.subr.bf16.mxu0 0
      %681 = vmatpush1.bf16.msra.mxu0 %v647
      %682 = vmatprep.subr.bf16.mxu0 0
      %683 = vmatpush1.bf16.msra.mxu0 %v648
      %684 = vmatprep.subr.bf16.mxu0 0
      %685 = vmatpush1.bf16.msra.mxu0 %v649
      %686 = vmatprep.subr.bf16.mxu0 0
      %687 = vmatpush1.bf16.msra.mxu0 %v650
      %688 = vmatprep.subr.bf16.mxu0 0
      %689 = vmatpush1.bf16.msra.mxu0 %v668
      %690 = vmatprep.subr.bf16.mxu0 0
      %691 = vmatpush1.bf16.msra.mxu0 0
      %692 = vmatprep.subr.bf16.mxu0 0
      %693 = vmatpush1.bf16.msra.mxu0 0
      %694 = vmatprep.subr.bf16.mxu0 0
      %695 = vmatpush1.bf16.msra.mxu0 0
      %696 = vmatprep.subr.bf16.mxu0 0
      %697 = vmatpush1.bf16.msra.mxu0 0
      %698 = vmatprep.subr.bf16.mxu0 0
      %699 = vmatpush1.bf16.msra.mxu0 0
      %700 = vmatprep.subr.bf16.mxu0 0
      %701 = vmatpush1.bf16.msra.mxu0 0
      %702 = vmatprep.mubr.bf16.mxu0 %v662
      %703 = vmatmul.mubr.bf16.gmra.mrb[0].mxu0 %v596
      %v704 = vpop.f32.mrb[0].mxu0
      %v705 = vadd.f32 %v582, %v704
      %v706 = vpop.f32.mrb[0].mxu0
      %v707 = vpop.f32.mrb[0].mxu0
      %v708 = vadd.f32 %v585, %v707
      %v709 = vpop.f32.mrb[0].mxu0
      %710 = vmatprep.mubr.bf16.mxu0 %v665
      %711 = vmatmul.mubr.bf16.gmra.mrb[0].mxu0 %v598
      %v712 = vpop.f32.mrb[0].mxu0
      %v713 = vadd.f32 %v590, %v712
      %v714 = vpop.f32.mrb[0].mxu0
      %v715 = vpop.f32.mrb[0].mxu0
      %v716 = vadd.f32 %v593, %v715
      %v717 = vpop.f32.mrb[0].mxu0
      %718 = vdwg.mxu0
      %s719 = scalar_lea.vmem %s197, 16
      %v720 = vld [vmem:[%s719] sm:$0xf]
      %v721 = vld [vmem:[%s719 + $0x4] sm:$0x1]
      %v722 = vld [vmem:[%s719 + $0x8] sm:$0xf]
      %v723 = vld [vmem:[%s719 + $0xc] sm:$0x1]
      %v724 = vld [vmem:[%s719 + $0x10] sm:$0xf]
      %v725 = vld [vmem:[%s719 + $0x14] sm:$0x1]
      %v726 = vld [vmem:[%s719 + $0x18] sm:$0xf]
      %v727 = vld [vmem:[%s719 + $0x1c] sm:$0x1]
      %v736 = vunpack.c.l.b16 %v720
      %v737 = vunpack.c.l.b16 %v721
      %v738 = vunpack.c.l.b16 %v722
      %v739 = vunpack.c.l.b16 %v723
      %v740 = vunpack.c.l.b16 %v724
      %v741 = vunpack.c.l.b16 %v725
      %v742 = vunpack.c.l.b16 %v726
      %v743 = vunpack.c.l.b16 %v727
      %v744 = vpack.c.b16 %v737, %v736
      %v745 = vpack.c.b16 %v739, %v738
      %v746 = vpack.c.b16 %v741, %v740
      %v747 = vpack.c.b16 %v743, %v742
      %v749 = vshrl.u32 %v744, 16
      %v751 = vshll.u32 %v744, 16
      %v753 = vrot.slane %v751, 1
      %v754 = vor.u32 %v749, %v753
      %v756 = vshrl.u32 %v745, 16
      %v758 = vshll.u32 %v745, 16
      %v760 = vrot.slane %v758, 1
      %v761 = vor.u32 %v756, %v760
      %v763 = vshrl.u32 %v746, 16
      %v765 = vshll.u32 %v746, 16
      %v767 = vrot.slane %v765, 1
      %v768 = vor.u32 %v763, %v767
      %v770 = vshrl.u32 %v747, 16
      %v772 = vshll.u32 %v747, 16
      %v774 = vrot.slane %v772, 1
      %v775 = vor.u32 %v770, %v774
      %776 = vrot.lane.b32.xlu0 %v754, 51
      %v777 = vpop.permute.xlu0 %776
      %778 = vrot.lane.b32.xlu0 %v761, 51
      %v779 = vpop.permute.xlu0 %778
      %780 = vrot.lane.b32.xlu0 %v768, 51
      %v781 = vpop.permute.xlu0 %780
      %782 = vrot.lane.b32.xlu0 %v775, 51
      %v783 = vpop.permute.xlu0 %782
      %v784 = vrot.slane %v744, 1
      %v785 = vrot.slane %v745, 1
      %v786 = vrot.slane %v746, 1
      %v787 = vrot.slane %v747, 1
      %788 = vrot.lane.b32.xlu0 %v784, 102
      %v789 = vpop.permute.xlu0 %788
      %790 = vrot.lane.b32.xlu0 %v785, 102
      %v791 = vpop.permute.xlu0 %790
      %792 = vrot.lane.b32.xlu0 %v786, 102
      %v793 = vpop.permute.xlu0 %792
      %794 = vrot.lane.b32.xlu0 %v787, 102
      %v795 = vpop.permute.xlu0 %794
      %v798 = vsel %vm284, %v720, %v777
      %v801 = vsel %vm284, %v722, %v779
      %v804 = vsel %vm284, %v724, %v781
      %v807 = vsel %vm284, %v726, %v783
      %v809 = vsel %vm297, %v798, %v789
      %v811 = vsel %vm297, %v801, %v791
      %v813 = vsel %vm297, %v804, %v793
      %v815 = vsel %vm297, %v807, %v795
      %v820 = vunpack.c.l.b16 %v809
      %v821 = vunpack.c.l.b16 %v789
      %v822 = vunpack.c.l.b16 %v811
      %v823 = vunpack.c.l.b16 %v791
      %v824 = vunpack.c.l.b16 %v813
      %v825 = vunpack.c.l.b16 %v793
      %v826 = vunpack.c.l.b16 %v815
      %v827 = vunpack.c.l.b16 %v795
      %s828 = scalar_lea.vmem %s1, 160
      %v829 = vld [vmem:[%s828] sm:$0xf]
      %v830 = vld [vmem:[%s828 + $0x4] sm:$0xf]
      %v831 = vld [vmem:[%s828 + $0x8] sm:$0xf]
      %v832 = vld [vmem:[%s828 + $0xc] sm:$0xf]
      %v833 = vld [vmem:[%s828 + $0x10] sm:$0xf]
      %v834 = vld [vmem:[%s828 + $0x14] sm:$0xf]
      %v835 = vld [vmem:[%s828 + $0x18] sm:$0xf]
      %v836 = vld [vmem:[%s828 + $0x1c] sm:$0xf]
      %v837 = vld [vmem:[%s828 + $0x20] sm:$0xf]
      %v838 = vld [vmem:[%s828 + $0x24] sm:$0xf]
      %v839 = vld [vmem:[%s828 + $0x28] sm:$0xf]
      %v840 = vld [vmem:[%s828 + $0x2c] sm:$0xf]
      %v841 = vld [vmem:[%s828 + $0x30] sm:$0xf]
      %v842 = vld [vmem:[%s828 + $0x34] sm:$0xf]
      %v843 = vld [vmem:[%s828 + $0x38] sm:$0xf]
      %v844 = vld [vmem:[%s828 + $0x3c] sm:$0xf]
      %v845 = vld [vmem:[%s828 + $0x40] sm:$0xf]
      %v846 = vld [vmem:[%s828 + $0x44] sm:$0xf]
      %v847 = vld [vmem:[%s828 + $0x48] sm:$0xf]
      %v848 = vld [vmem:[%s828 + $0x4c] sm:$0x1]
      %v849 = vpack.c.b16 %v822, %v820
      %v850 = vpack.c.b16 %v823, %v821
      %v851 = vpack.c.b16 %v826, %v824
      %v852 = vpack.c.b16 %v827, %v825
      %v875 = vunpack.c.l.b16 %v829
      %v876 = vunpack.c.l.b16 %v830
      %v877 = vunpack.c.l.b16 %v831
      %v878 = vunpack.c.l.b16 %v832
      %v879 = vunpack.c.l.b16 %v833
      %v880 = vunpack.c.l.b16 %v834
      %v881 = vunpack.c.l.b16 %v835
      %v882 = vunpack.c.l.b16 %v836
      %v883 = vunpack.c.l.b16 %v837
      %v884 = vunpack.c.l.b16 %v838
      %v885 = vunpack.c.l.b16 %v839
      %v886 = vunpack.c.l.b16 %v840
      %v887 = vunpack.c.l.b16 %v841
      %v888 = vunpack.c.l.b16 %v842
      %v889 = vunpack.c.l.b16 %v843
      %v890 = vunpack.c.l.b16 %v844
      %v891 = vunpack.c.l.b16 %v845
      %v892 = vunpack.c.l.b16 %v846
      %v893 = vunpack.c.l.b16 %v847
      %v894 = vunpack.c.l.b16 %v848
      %v895 = vpack.c.b16 %v876, %v875
      %v896 = vpack.c.b16 %v878, %v877
      %v897 = vpack.c.b16 %v880, %v879
      %v898 = vpack.c.b16 %v882, %v881
      %v899 = vpack.c.b16 %v884, %v883
      %v900 = vpack.c.b16 %v886, %v885
      %v901 = vpack.c.b16 %v888, %v887
      %v902 = vpack.c.b16 %v890, %v889
      %v903 = vpack.c.b16 %v892, %v891
      %v904 = vpack.c.b16 %v894, %v893
      %v915 = vsel %vm533, %v850, 0
      %v918 = vsel %vm533, %v852, 0
      %v921 = vand.u32 %v904, %v543
      %923 = vmatprep.subr.bf16.mxu0 0
      %924 = vmatpush1.bf16.msra.mxu0 %v895
      %925 = vmatprep.subr.bf16.mxu0 0
      %926 = vmatpush1.bf16.msra.mxu0 %v896
      %927 = vmatprep.subr.bf16.mxu0 0
      %928 = vmatpush1.bf16.msra.mxu0 %v897
      %929 = vmatprep.subr.bf16.mxu0 0
      %930 = vmatpush1.bf16.msra.mxu0 %v898
      %931 = vmatprep.subr.bf16.mxu0 0
      %932 = vmatpush1.bf16.msra.mxu0 %v899
      %933 = vmatprep.subr.bf16.mxu0 0
      %934 = vmatpush1.bf16.msra.mxu0 %v900
      %935 = vmatprep.subr.bf16.mxu0 0
      %936 = vmatpush1.bf16.msra.mxu0 %v901
      %937 = vmatprep.subr.bf16.mxu0 0
      %938 = vmatpush1.bf16.msra.mxu0 %v902
      %939 = vmatprep.subr.bf16.mxu0 0
      %940 = vmatpush1.bf16.msra.mxu0 %v903
      %941 = vmatprep.subr.bf16.mxu0 0
      %942 = vmatpush1.bf16.msra.mxu0 %v921
      %943 = vmatprep.subr.bf16.mxu0 0
      %944 = vmatpush1.bf16.msra.mxu0 0
      %945 = vmatprep.subr.bf16.mxu0 0
      %946 = vmatpush1.bf16.msra.mxu0 0
      %947 = vmatprep.subr.bf16.mxu0 0
      %948 = vmatpush1.bf16.msra.mxu0 0
      %949 = vmatprep.subr.bf16.mxu0 0
      %950 = vmatpush1.bf16.msra.mxu0 0
      %951 = vmatprep.subr.bf16.mxu0 0
      %952 = vmatpush1.bf16.msra.mxu0 0
      %953 = vmatprep.subr.bf16.mxu0 0
      %954 = vmatpush1.bf16.msra.mxu0 0
      %955 = vmatprep.mubr.bf16.mxu0 %v915
      %956 = vmatmul.mubr.bf16.gmra.mrb[0].mxu0 %v849
      %v957 = vpop.f32.mrb[0].mxu0
      %v958 = vadd.f32 0.0, %v957
      %v959 = vpop.f32.mrb[0].mxu0
      %v960 = vpop.f32.mrb[0].mxu0
      %v961 = vadd.f32 0.0, %v960
      %v962 = vpop.f32.mrb[0].mxu0
      %963 = vmatprep.mubr.bf16.mxu0 %v918
      %964 = vmatmul.mubr.bf16.gmra.mrb[0].mxu0 %v851
      %v965 = vpop.f32.mrb[0].mxu0
      %v966 = vadd.f32 0.0, %v965
      %v967 = vpop.f32.mrb[0].mxu0
      %v968 = vpop.f32.mrb[0].mxu0
      %v969 = vadd.f32 0.0, %v968
      %v970 = vpop.f32.mrb[0].mxu0
      %971 = vdwg.mxu0
      %v972 = vadd.f32 %v705, %v958
      %v973 = vadd.f32 %v708, %v961
      %v974 = vadd.f32 %v713, %v966
      %v975 = vadd.f32 %v716, %v969
      %v976 = vld [vmem:[%s2] sm:$0x1]
      %v978 = vlaneseq
      %v979 = vshrl.u32 %v978, 7
      %v980 = vsub.s32 0, %v979
      %v981 = vrot.slane %v976, %v980
      %v983 = vadd.f32 %v972, %v981
      %v984 = vadd.f32 %v973, %v981
      %v985 = vadd.f32 %v974, %v981
      %v986 = vadd.f32 %v975, %v981
      %v987 = vmax.f32 %v983, 0.0
      %v988 = vmax.f32 %v984, 0.0
      %v989 = vmax.f32 %v985, 0.0
      %v990 = vmax.f32 %v986, 0.0
      %v991 = vpack.c.bf16 %v987, %v987
      %v992 = vpack.c.bf16 %v988, %v988
      %v993 = vpack.c.bf16 %v989, %v989
      %v994 = vpack.c.bf16 %v990, %v990
      %vm995 = vcmask 519168
      %996 = vst.msk [vmem:[%s206] sm:$0xf] %vm995, %v991
      %997 = vst.msk [vmem:[%s206 + $0x4] sm:$0xf] %vm995, %v992
      %998 = vst.msk [vmem:[%s206 + $0x8] sm:$0xf] %vm995, %v993
      %999 = vst.msk [vmem:[%s206 + $0xc] sm:$0xf] %vm995, %v994
      %p1000 = scmp.lt.s32.totalorder %s18, 1
      %s1001 = scalar_select %p1000, %s18, 1
      %p1002 = scmp.lt.s32.totalorder %s19, 1
      %s1003 = scalar_select %p1002, %s19, 1
      %s1004 = smul.addr %s1003, 4
      %s1005 = smul.addr %s1001, 8
      %s1006 = sadd.s32 %s1004, %s1005
      %s1007 = smul.addr %s1006, 4
      %s1008 = scalar_lea.vmem %s3, %s1007
      // Predicated region
      $region33: #{frvsr_sr_forward.6} parent=31 // pred_check
        %p1009 = pneg %p116
      $region34: #{frvsr_sr_forward.6} parent=31 // pred_check_branch
        %1011 = sbr.rel (%p1009) target = $region36
      $region35: #{frvsr_sr_forward.6} parent=31 // pred_region
        _
      $region36: #{frvsr_sr_forward.6} parent=31 // pred_fallthru
        _
    $region32: #{frvsr_sr_forward.6} parent=5 // pred_fallthru
      _
    %p1012 = scmp.le.s32.totalorder 2, %s9
    // Predicated region
    $region37: #{frvsr_sr_forward.6} parent=5 // pred_check
      %p1013 = pneg %p1012
    $region38: #{frvsr_sr_forward.6} parent=5 // pred_check_branch
      %1015 = sbr.rel (%p1013) target = $region40
    $region39: #{frvsr_sr_forward.6} parent=5 // pred_region
      %s1016 = ssub.s32 %s9, 2
      // Predicated region
      $region41: #{frvsr_sr_forward.6} parent=39 // pred_check
        %p1017 = pneg %p122
      $region42: #{frvsr_sr_forward.6} parent=39 // pred_check_branch
        %1019 = sbr.rel (%p1017) target = $region44
      $region43: #{frvsr_sr_forward.6} parent=39 // pred_region
        %p1020 = scmp.lt.s32.totalorder %s20, 1
        %s1021 = scalar_select %p1020, %s20, 1
        %p1022 = scmp.lt.s32.totalorder %s21, 1
        %s1023 = scalar_select %p1022, %s21, 1
        %s1024 = smul.addr %s1023, 4
        %s1025 = smul.addr %s1021, 8
        %s1026 = sadd.s32 %s1024, %s1025
        %s1027 = smul.addr %s1026, 4
        %s1028 = scalar_lea.vmem %s3, %s1027
      $region44: #{frvsr_sr_forward.6} parent=39 // pred_fallthru
        _
    $region40: #{frvsr_sr_forward.6} parent=5 // pred_fallthru
      _
  $region6: #{frvsr_sr_forward.6} parent=0 // loop_footer
    %s13 = sadd.s32 1, %s9
  $region7: #{frvsr_sr_forward.6} parent=0 // loop_footer_branch
    %8 = sbr.rel target = $region3
  $region8: #{frvsr_sr_forward.6} parent=0 // loop_exit
    _

// kernel: frvsr_sr_forward.9
$region0: #{frvsr_sr_forward.9}
  #allocation0 [shape = 'u32[]', space=smem, size = 0x4, offset = 0x4, fixed_abs, tag = 'smem constant byte address 0x4 - core index']
  #allocation1 [shape = 'u32[144,128]{1,0:T(1,128)}', space=vmem, size = 0x12000, scoped, tag = 'internal scratch']
  %s0 = inlined_call_operand.vmem [shape: bf16[2,2,5,9,64], index: 0, kind: input, shape index: {}]
  %s1 = inlined_call_operand.vmem [shape: bf16[256,256], index: 1, kind: input, shape index: {}]
  %s2 = inlined_call_operand.vmem [shape: f32[1,256], index: 2, kind: input, shape index: {}]
  %s3 = inlined_call_operand.vmem [shape: bf16[2,2,8,8,128], index: 3, kind: output, shape index: {}]
  %s4 = sld [smem:[#allocation0]]
  $region45: #{frvsr_sr_forward.9} parent=0
    _
  %s6 = ssub.s32 1, %s4
  %s7 = scalar_select 0, %s6, %s4
  loop: start=0, step=1, limit=6
  $region2: #{frvsr_sr_forward.9} parent=0 // loop_pre_header
    _
  $region3: #{frvsr_sr_forward.9} parent=0 // loop_header
    %s9 = sphi 0, %s13
    %p10 = scmp.ge.s32.totalorder %s9, 6
    %s16 = sphi 0, %s28
    %s17 = sphi 0, %s24
    %s18 = sphi 0, %s16
    %s19 = sphi 0, %s17
    %s20 = sphi 0, %s18
    %s21 = sphi 0, %s19
    %s33 = sphi 0, %s35
    %s36 = sphi 0, %s33
    %s37 = sphi 0, %s36
    %s53 = sphi 0, %s37
    %s57 = sphi 0, %s57
    %s59 = sphi 0, %s57
    %s60 = sphi 0, %s59
    %s74 = sphi 0, %s60
    %s78 = sphi 0, %s78
    %s80 = sphi 0, %s78
    %s81 = sphi 0, %s80
    %s95 = sphi 0, %s81
    %s103 = sphi 0, %s105
    %s106 = sphi 0, %s103
    %s107 = sphi 0, %s106
    %s123 = sphi 0, %s107
  $region4: #{frvsr_sr_forward.9} parent=0 // loop_header_branch
    %12 = sbr.rel (%p10) target = $region8
  $region5: #{frvsr_sr_forward.9} parent=0 // loop_body
    %s14 = ssub.s32 %s9, 1
    %s15 = ssub.s32 %s9, 2
    %s22 = sadd.s32 1, %s17
    %p23 = scmp.ge.s32.totalorder %s22, 2
    %s24 = scalar_select %p23, 0, %s22
    %s25 = sadd.s32 1, %s16
    %s26 = scalar_select %p23, %s25, %s16
    %p27 = scmp.ge.s32.totalorder %s26, 2
    %s28 = scalar_select %p27, 0, %s26
    %s29 = ssub.s32 %s16, %s28
    %s30 = ssub.s32 %s17, %s24
    %s31 = sor.u32 %s29, %s30
    %p32 = scmp.eq.s32.totalorder %s31, 0
    %s34 = sadd.s32 %s33, 1
    %s35 = scalar_select %p32, %s33, %s34
    %p38 = pneg %p32
    %p39 = scmp.eq.s32.totalorder %s9, 3
    %p40 = por %p38, %p39
    %p41 = scmp.ne.s32.totalorder %s33, %s36
    %p42 = scmp.eq.s32.totalorder %s9, 0
    %p43 = por %p41, %p42
    %p44 = scmp.ne.s32.totalorder %s33, %s36
    %p45 = scmp.eq.s32.totalorder %s14, 3
    %p46 = por %p44, %p45
    %p47 = scmp.ne.s32.totalorder %s36, %s37
    %p48 = scmp.eq.s32.totalorder %s14, 0
    %p49 = por %p47, %p48
    %p50 = scmp.ne.s32.totalorder %s36, %s37
    %p51 = scmp.eq.s32.totalorder %s15, 3
    %p52 = por %p50, %p51
    %p54 = scmp.ne.s32.totalorder %s37, %s53
    %p55 = scmp.eq.s32.totalorder %s15, 0
    %p56 = por %p54, %p55
    %s58 = sadd.s32 %s57, 1
    %p61 = scmp.eq.s32.totalorder %s9, 3
    %p62 = scmp.ne.s32.totalorder %s57, %s59
    %p63 = scmp.eq.s32.totalorder %s9, 0
    %p64 = por %p62, %p63
    %p65 = scmp.ne.s32.totalorder %s57, %s59
    %p66 = scmp.eq.s32.totalorder %s14, 3
    %p67 = por %p65, %p66
    %p68 = scmp.ne.s32.totalorder %s59, %s60
    %p69 = scmp.eq.s32.totalorder %s14, 0
    %p70 = por %p68, %p69
    %p71 = scmp.ne.s32.totalorder %s59, %s60
    %p72 = scmp.eq.s32.totalorder %s15, 3
    %p73 = por %p71, %p72
    %p75 = scmp.ne.s32.totalorder %s60, %s74
    %p76 = scmp.eq.s32.totalorder %s15, 0
    %p77 = por %p75, %p76
    %s79 = sadd.s32 %s78, 1
    %p82 = scmp.eq.s32.totalorder %s9, 3
    %p83 = scmp.ne.s32.totalorder %s78, %s80
    %p84 = scmp.eq.s32.totalorder %s9, 0
    %p85 = por %p83, %p84
    %p86 = scmp.ne.s32.totalorder %s78, %s80
    %p87 = scmp.eq.s32.totalorder %s14, 3
    %p88 = por %p86, %p87
    %p89 = scmp.ne.s32.totalorder %s80, %s81
    %p90 = scmp.eq.s32.totalorder %s14, 0
    %p91 = por %p89, %p90
    %p92 = scmp.ne.s32.totalorder %s80, %s81
    %p93 = scmp.eq.s32.totalorder %s15, 3
    %p94 = por %p92, %p93
    %p96 = scmp.ne.s32.totalorder %s81, %s95
    %p97 = scmp.eq.s32.totalorder %s15, 0
    %p98 = por %p96, %p97
    %s99 = ssub.s32 %s16, %s28
    %s100 = ssub.s32 %s17, %s24
    %s101 = sor.u32 %s99, %s100
    %p102 = scmp.eq.s32.totalorder %s101, 0
    %s104 = sadd.s32 %s103, 1
    %s105 = scalar_select %p102, %s103, %s104
    %p108 = pneg %p102
    %p109 = scmp.eq.s32.totalorder %s9, 3
    %p110 = por %p108, %p109
    %p111 = scmp.ne.s32.totalorder %s103, %s106
    %p112 = scmp.eq.s32.totalorder %s9, 0
    %p113 = por %p111, %p112
    %p114 = scmp.ne.s32.totalorder %s103, %s106
    %p115 = scmp.eq.s32.totalorder %s14, 3
    %p116 = por %p114, %p115
    %p117 = scmp.ne.s32.totalorder %s106, %s107
    %p118 = scmp.eq.s32.totalorder %s14, 0
    %p119 = por %p117, %p118
    %p120 = scmp.ne.s32.totalorder %s106, %s107
    %p121 = scmp.eq.s32.totalorder %s15, 3
    %p122 = por %p120, %p121
    %p124 = scmp.ne.s32.totalorder %s107, %s123
    %p125 = scmp.eq.s32.totalorder %s15, 0
    %p126 = por %p124, %p125
    %p127 = scmp.le.s32.totalorder 1, %s9
    %p128 = scmp.lt.s32.totalorder %s9, 5
    %p129 = pnand %p127, %p128
    %p130 = pneg %p129
    // Predicated region
    $region9: #{frvsr_sr_forward.9} parent=5 // pred_check
      _
    $region10: #{frvsr_sr_forward.9} parent=5 // pred_check_branch
      %132 = sbr.rel (%p129) target = $region12
    $region11: #{frvsr_sr_forward.9} parent=5 // pred_region
      %s133 = ssub.s32 %s9, 1
      // Predicated region
      $region13: #{frvsr_sr_forward.9} parent=11 // pred_check
        %p134 = pneg %p70
      $region14: #{frvsr_sr_forward.9} parent=11 // pred_check_branch
        %136 = sbr.rel (%p134) target = $region16
      $region15: #{frvsr_sr_forward.9} parent=11 // pred_region
        _
      $region16: #{frvsr_sr_forward.9} parent=11 // pred_fallthru
        _
      // Predicated region
      $region17: #{frvsr_sr_forward.9} parent=11 // pred_check
        %p137 = pneg %p91
      $region18: #{frvsr_sr_forward.9} parent=11 // pred_check_branch
        %139 = sbr.rel (%p137) target = $region20
      $region19: #{frvsr_sr_forward.9} parent=11 // pred_region
        _
      $region20: #{frvsr_sr_forward.9} parent=11 // pred_fallthru
        _
    $region12: #{frvsr_sr_forward.9} parent=5 // pred_fallthru
      _
    %p140 = scmp.lt.s32.totalorder %s9, 4
    // Predicated region
    $region21: #{frvsr_sr_forward.9} parent=5 // pred_check
      %p141 = pneg %p140
    $region22: #{frvsr_sr_forward.9} parent=5 // pred_check_branch
      %143 = sbr.rel (%p141) target = $region24
    $region23: #{frvsr_sr_forward.9} parent=5 // pred_region
      // Predicated region
      $region25: #{frvsr_sr_forward.9} parent=23 // pred_check
        %p144 = pneg %p43
      $region26: #{frvsr_sr_forward.9} parent=23 // pred_check_branch
        %146 = sbr.rel (%p144) target = $region28
      $region27: #{frvsr_sr_forward.9} parent=23 // pred_region
        %p147 = scmp.lt.s32.totalorder %s16, 1
        %s148 = scalar_select %p147, %s16, 1
        %p149 = scmp.lt.s32.totalorder %s17, 1
        %s150 = scalar_select %p149, %s17, 1
        %s151 = smul.addr %s150, 10
        %s152 = smul.addr %s148, 20
        %s153 = sadd.s32 %s151, %s152
        %s154 = smul.addr %s153, 4
        %s155 = scalar_lea.vmem %s0, %s154
      $region28: #{frvsr_sr_forward.9} parent=23 // pred_fallthru
        _
    $region24: #{frvsr_sr_forward.9} parent=5 // pred_fallthru
      _
    %p156 = scmp.le.s32.totalorder 1, %s9
    %p157 = scmp.lt.s32.totalorder %s9, 5
    %p158 = pnand %p156, %p157
    %p159 = pneg %p158
    // Predicated region
    $region29: #{frvsr_sr_forward.9} parent=5 // pred_check
      _
    $region30: #{frvsr_sr_forward.9} parent=5 // pred_check_branch
      %161 = sbr.rel (%p158) target = $region32
    $region31: #{frvsr_sr_forward.9} parent=5 // pred_region
      %s162 = ssub.s32 %s9, 1
      %p163 = scmp.lt.s32.totalorder %s18, 1
      %s164 = scalar_select %p163, %s18, 1
      %p165 = scmp.lt.s32.totalorder %s19, 1
      %s166 = scalar_select %p165, %s19, 1
      %s167 = smul.addr %s166, 10
      %s168 = smul.addr %s164, 20
      %s169 = sadd.s32 %s167, %s168
      %s170 = smul.addr %s169, 4
      %s171 = scalar_lea.vmem %s0, %s170
      %p172 = pneg %p49
      %p173 = pneg %p46
      %p174 = pneg %p70
      %p175 = pneg %p67
      %p176 = pneg %p91
      %p177 = pneg %p88
      %p178 = pneg %p119
      %p179 = pneg %p116
      %p180 = scmp.lt.s32.totalorder %s18, 1
      %s181 = scalar_select %p180, %s18, 1
      %p182 = scmp.lt.s32.totalorder %s19, 1
      %s183 = scalar_select %p182, %s19, 1
      %s184 = smul.addr %s183, 8
      %s185 = smul.addr %s181, 16
      %s186 = sadd.s32 %s184, %s185
      %s187 = smul.addr %s186, 4
      %s188 = scalar_lea.vmem %s3, %s187
      %p189 = scmp.lt.s32.totalorder %s18, 1
      %s190 = scalar_select %p189, %s18, 1
      %p191 = scmp.lt.s32.totalorder %s19, 1
      %s192 = scalar_select %p191, %s19, 1
      %s193 = smul.addr %s192, 10
      %s194 = smul.addr %s190, 20
      %s195 = sadd.s32 %s193, %s194
      %s196 = smul.addr %s195, 4
      %s197 = scalar_lea.vmem %s0, %s196
      %p198 = scmp.lt.s32.totalorder %s18, 1
      %s199 = scalar_select %p198, %s18, 1
      %p200 = scmp.lt.s32.totalorder %s19, 1
      %s201 = scalar_select %p200, %s19, 1
      %s202 = smul.addr %s201, 8
      %s203 = smul.addr %s199, 16
      %s204 = sadd.s32 %s202, %s203
      %s205 = smul.addr %s204, 4
      %s206 = scalar_lea.vmem %s3, %s205
      %v207 = vld [vmem:[%s197] sm:$0xf]
      %v208 = vld [vmem:[%s197 + $0x4] sm:$0x1]
      %v209 = vld [vmem:[%s197 + $0x8] sm:$0xf]
      %v210 = vld [vmem:[%s197 + $0xc] sm:$0x1]
      %v211 = vld [vmem:[%s197 + $0x10] sm:$0xf]
      %v212 = vld [vmem:[%s197 + $0x14] sm:$0x1]
      %v213 = vld [vmem:[%s197 + $0x18] sm:$0xf]
      %v214 = vld [vmem:[%s197 + $0x1c] sm:$0x1]
      %s215 = scalar_lea.vmem %s197, 8
      %v216 = vld [vmem:[%s215] sm:$0xf]
      %v217 = vld [vmem:[%s215 + $0x4] sm:$0x1]
      %v218 = vld [vmem:[%s215 + $0x8] sm:$0xf]
      %v219 = vld [vmem:[%s215 + $0xc] sm:$0x1]
      %v220 = vld [vmem:[%s215 + $0x10] sm:$0xf]
      %v221 = vld [vmem:[%s215 + $0x14] sm:$0x1]
      %v222 = vld [vmem:[%s215 + $0x18] sm:$0xf]
      %v223 = vld [vmem:[%s215 + $0x1c] sm:$0x1]
      %v232 = vunpack.c.l.b16 %v207
      %v233 = vunpack.c.l.b16 %v208
      %v234 = vunpack.c.l.b16 %v209
      %v235 = vunpack.c.l.b16 %v210
      %v236 = vunpack.c.l.b16 %v211
      %v237 = vunpack.c.l.b16 %v212
      %v238 = vunpack.c.l.b16 %v213
      %v239 = vunpack.c.l.b16 %v214
      %v240 = vpack.c.b16 %v233, %v232
      %v241 = vpack.c.b16 %v235, %v234
      %v242 = vpack.c.b16 %v237, %v236
      %v243 = vpack.c.b16 %v239, %v238
      %v245 = vshrl.u32 %v240, 16
      %v247 = vshll.u32 %v240, 16
      %v249 = vrot.slane %v247, 1
      %v250 = vor.u32 %v245, %v249
      %v252 = vshrl.u32 %v241, 16
      %v254 = vshll.u32 %v241, 16
      %v256 = vrot.slane %v254, 1
      %v257 = vor.u32 %v252, %v256
      %v259 = vshrl.u32 %v242, 16
      %v261 = vshll.u32 %v242, 16
      %v263 = vrot.slane %v261, 1
      %v264 = vor.u32 %v259, %v263
      %v266 = vshrl.u32 %v243, 16
      %v268 = vshll.u32 %v243, 16
      %v270 = vrot.slane %v268, 1
      %v271 = vor.u32 %v266, %v270
      %272 = vrot.lane.b32.xlu0 %v250, 64
      %v273 = vpop.permute.xlu0 %272
      %274 = vrot.lane.b32.xlu0 %v257, 64
      %v275 = vpop.permute.xlu0 %274
      %276 = vrot.lane.b32.xlu0 %v264, 64
      %v277 = vpop.permute.xlu0 %276
      %278 = vrot.lane.b32.xlu0 %v271, 64
      %v279 = vpop.permute.xlu0 %278
      %v288 = vunpack.c.l.b16 %v216
      %v289 = vunpack.c.l.b16 %v217
      %v290 = vunpack.c.l.b16 %v218
      %v291 = vunpack.c.l.b16 %v219
      %v292 = vunpack.c.l.b16 %v220
      %v293 = vunpack.c.l.b16 %v221
      %v294 = vunpack.c.l.b16 %v222
      %v295 = vunpack.c.l.b16 %v223
      %v296 = vpack.c.b16 %v289, %v288
      %v297 = vpack.c.b16 %v291, %v290
      %v298 = vpack.c.b16 %v293, %v292
      %v299 = vpack.c.b16 %v295, %v294
      %v301 = vshrl.u32 %v296, 16
      %v303 = vshll.u32 %v296, 16
      %v305 = vrot.slane %v303, 1
      %v306 = vor.u32 %v301, %v305
      %v308 = vshrl.u32 %v297, 16
      %v310 = vshll.u32 %v297, 16
      %v312 = vrot.slane %v310, 1
      %v313 = vor.u32 %v308, %v312
      %v315 = vshrl.u32 %v298, 16
      %v317 = vshll.u32 %v298, 16
      %v319 = vrot.slane %v317, 1
      %v320 = vor.u32 %v315, %v319
      %v322 = vshrl.u32 %v299, 16
      %v324 = vshll.u32 %v299, 16
      %v326 = vrot.slane %v324, 1
      %v327 = vor.u32 %v322, %v326
      %328 = vrot.lane.b32.xlu0 %v306, 64
      %v329 = vpop.permute.xlu0 %328
      %330 = vrot.lane.b32.xlu0 %v313, 64
      %v331 = vpop.permute.xlu0 %330
      %332 = vrot.lane.b32.xlu0 %v320, 64
      %v333 = vpop.permute.xlu0 %332
      %334 = vrot.lane.b32.xlu0 %v327, 64
      %v335 = vpop.permute.xlu0 %334
      %vm336 = vcmask 523264
      %v339 = vsel %vm336, %v207, %v273
      %v342 = vsel %vm336, %v209, %v275
      %v345 = vsel %vm336, %v211, %v277
      %v348 = vsel %vm336, %v213, %v279
      %v351 = vsel %vm336, %v216, %v329
      %v354 = vsel %vm336, %v218, %v331
      %v357 = vsel %vm336, %v220, %v333
      %v360 = vsel %vm336, %v222, %v335
      %v369 = vunpack.c.l.b16 %v339
      %v370 = vunpack.c.l.b16 %v351
      %v371 = vunpack.c.l.b16 %v342
      %v372 = vunpack.c.l.b16 %v354
      %v373 = vunpack.c.l.b16 %v345
      %v374 = vunpack.c.l.b16 %v357
      %v375 = vunpack.c.l.b16 %v348
      %v376 = vunpack.c.l.b16 %v360
      %v377 = vld [vmem:[%s1] sm:$0xff]
      %v378 = vld [vmem:[%s1 + $0x8] sm:$0xff]
      %v379 = vld [vmem:[%s1 + $0x10] sm:$0xff]
      %v380 = vld [vmem:[%s1 + $0x18] sm:$0xff]
      %v381 = vld [vmem:[%s1 + $0x20] sm:$0xff]
      %v382 = vld [vmem:[%s1 + $0x28] sm:$0xff]
      %v383 = vld [vmem:[%s1 + $0x30] sm:$0xff]
      %v384 = vld [vmem:[%s1 + $0x38] sm:$0xff]
      %v385 = vld [vmem:[%s1 + $0x40] sm:$0xff]
      %v386 = vld [vmem:[%s1 + $0x48] sm:$0xff]
      %v387 = vld [vmem:[%s1 + $0x50] sm:$0xff]
      %v388 = vld [vmem:[%s1 + $0x58] sm:$0xff]
      %v389 = vld [vmem:[%s1 + $0x60] sm:$0xff]
      %v390 = vld [vmem:[%s1 + $0x68] sm:$0xff]
      %v391 = vld [vmem:[%s1 + $0x70] sm:$0xff]
      %v392 = vld [vmem:[%s1 + $0x78] sm:$0xff]
      %v393 = vld [vmem:[%s1 + $0x80] sm:$0xff]
      %v394 = vld [vmem:[%s1 + $0x88] sm:$0xff]
      %v395 = vld [vmem:[%s1 + $0x90] sm:$0xff]
      %v396 = vld [vmem:[%s1 + $0x98] sm:$0xff]
      %v397 = vld [vmem:[%s1 + $0xa0] sm:$0xff]
      %v398 = vld [vmem:[%s1 + $0xa8] sm:$0xff]
      %v399 = vld [vmem:[%s1 + $0xb0] sm:$0xff]
      %v400 = vld [vmem:[%s1 + $0xb8] sm:$0xff]
      %v401 = vld [vmem:[%s1 + $0xc0] sm:$0xff]
      %v402 = vld [vmem:[%s1 + $0xc8] sm:$0xff]
      %v403 = vld [vmem:[%s1 + $0xd0] sm:$0xff]
      %v404 = vld [vmem:[%s1 + $0xd8] sm:$0xff]
      %v405 = vld [vmem:[%s1 + $0xe0] sm:$0xff]
      %v406 = vld [vmem:[%s1 + $0xe8] sm:$0xff]
      %v407 = vld [vmem:[%s1 + $0xf0] sm:$0xff]
      %v408 = vld [vmem:[%s1 + $0xf8] sm:$0xff]
      %v409 = vld [vmem:[%s2] sm:$0x3]
      %v411 = vlaneseq
      %v412 = vshrl.u32 %v411, 7
      %v413 = vsub.s32 0, %v412
      %v414 = vrot.slane %v409, %v413
      %v415 = vlaneseq
      %v416 = vshrl.u32 %v415, 7
      %v417 = vsub.s32 1, %v416
      %v418 = vrot.slane %v409, %v417
      %v421 = vpack.c.b16 %v371, %v369
      %v422 = vpack.c.b16 %v372, %v370
      %v423 = vpack.c.b16 %v375, %v373
      %v424 = vpack.c.b16 %v376, %v374
      %v461 = vunpack.c.l.b16 %v377
      %v462 = vunpack.c.h.b16 %v377
      %v463 = vunpack.c.l.b16 %v378
      %v464 = vunpack.c.h.b16 %v378
      %v465 = vunpack.c.l.b16 %v379
      %v466 = vunpack.c.h.b16 %v379
      %v467 = vunpack.c.l.b16 %v380
      %v468 = vunpack.c.h.b16 %v380
      %v469 = vunpack.c.l.b16 %v381
      %v470 = vunpack.c.h.b16 %v381
      %v471 = vunpack.c.l.b16 %v382
      %v472 = vunpack.c.h.b16 %v382
      %v473 = vunpack.c.l.b16 %v383
      %v474 = vunpack.c.h.b16 %v383
      %v475 = vunpack.c.l.b16 %v384
      %v476 = vunpack.c.h.b16 %v384
      %v477 = vunpack.c.l.b16 %v385
      %v478 = vunpack.c.h.b16 %v385
      %v479 = vunpack.c.l.b16 %v386
      %v480 = vunpack.c.h.b16 %v386
      %v481 = vunpack.c.l.b16 %v387
      %v482 = vunpack.c.h.b16 %v387
      %v483 = vunpack.c.l.b16 %v388
      %v484 = vunpack.c.h.b16 %v388
      %v485 = vunpack.c.l.b16 %v389
      %v486 = vunpack.c.h.b16 %v389
      %v487 = vunpack.c.l.b16 %v390
      %v488 = vunpack.c.h.b16 %v390
      %v489 = vunpack.c.l.b16 %v391
      %v490 = vunpack.c.h.b16 %v391
      %v491 = vunpack.c.l.b16 %v392
      %v492 = vunpack.c.h.b16 %v392
      %v493 = vunpack.c.l.b16 %v393
      %v494 = vunpack.c.h.b16 %v393
      %v495 = vunpack.c.l.b16 %v394
      %v496 = vunpack.c.h.b16 %v394
      %v497 = vunpack.c.l.b16 %v395
      %v498 = vunpack.c.h.b16 %v395
      %v499 = vunpack.c.l.b16 %v396
      %v500 = vunpack.c.h.b16 %v396
      %v501 = vunpack.c.l.b16 %v397
      %v502 = vunpack.c.h.b16 %v397
      %v503 = vunpack.c.l.b16 %v398
      %v504 = vunpack.c.h.b16 %v398
      %v505 = vunpack.c.l.b16 %v399
      %v506 = vunpack.c.h.b16 %v399
      %v507 = vunpack.c.l.b16 %v400
      %v508 = vunpack.c.h.b16 %v400
      %v509 = vunpack.c.l.b16 %v401
      %v510 = vunpack.c.h.b16 %v401
      %v511 = vunpack.c.l.b16 %v402
      %v512 = vunpack.c.h.b16 %v402
      %v513 = vunpack.c.l.b16 %v403
      %v514 = vunpack.c.h.b16 %v403
      %v515 = vunpack.c.l.b16 %v404
      %v516 = vunpack.c.h.b16 %v404
      %v517 = vunpack.c.l.b16 %v405
      %v518 = vunpack.c.h.b16 %v405
      %v519 = vunpack.c.l.b16 %v406
      %v520 = vunpack.c.h.b16 %v406
      %v521 = vunpack.c.l.b16 %v407
      %v522 = vunpack.c.h.b16 %v407
      %v523 = vunpack.c.l.b16 %v408
      %v524 = vunpack.c.h.b16 %v408
      %v525 = vpack.c.b16 %v463, %v461
      %v526 = vpack.c.b16 %v464, %v462
      %v527 = vpack.c.b16 %v467, %v465
      %v528 = vpack.c.b16 %v468, %v466
      %v529 = vpack.c.b16 %v471, %v469
      %v530 = vpack.c.b16 %v472, %v470
      %v531 = vpack.c.b16 %v475, %v473
      %v532 = vpack.c.b16 %v476, %v474
      %v533 = vpack.c.b16 %v479, %v477
      %v534 = vpack.c.b16 %v480, %v478
      %v535 = vpack.c.b16 %v483, %v481
      %v536 = vpack.c.b16 %v484, %v482
      %v537 = vpack.c.b16 %v487, %v485
      %v538 = vpack.c.b16 %v488, %v486
      %v539 = vpack.c.b16 %v491, %v489
      %v540 = vpack.c.b16 %v492, %v490
      %v541 = vpack.c.b16 %v495, %v493
      %v542 = vpack.c.b16 %v496, %v494
      %v543 = vpack.c.b16 %v499, %v497
      %v544 = vpack.c.b16 %v500, %v498
      %v545 = vpack.c.b16 %v503, %v501
      %v546 = vpack.c.b16 %v504, %v502
      %v547 = vpack.c.b16 %v507, %v505
      %v548 = vpack.c.b16 %v508, %v506
      %v549 = vpack.c.b16 %v511, %v509
      %v550 = vpack.c.b16 %v512, %v510
      %v551 = vpack.c.b16 %v515, %v513
      %v552 = vpack.c.b16 %v516, %v514
      %v553 = vpack.c.b16 %v519, %v517
      %v554 = vpack.c.b16 %v520, %v518
      %v555 = vpack.c.b16 %v523, %v521
      %v556 = vpack.c.b16 %v524, %v522
      %589 = vmatprep.subr.bf16.mxu0 %v526
      %590 = vmatpush1.bf16.msra.mxu0 %v525
      %591 = vmatprep.subr.bf16.mxu0 %v528
      %592 = vmatpush1.bf16.msra.mxu0 %v527
      %593 = vmatprep.subr.bf16.mxu0 %v530
      %594 = vmatpush1.bf16.msra.mxu0 %v529
      %595 = vmatprep.subr.bf16.mxu0 %v532
      %596 = vmatpush1.bf16.msra.mxu0 %v531
      %597 = vmatprep.subr.bf16.mxu0 %v534
      %598 = vmatpush1.bf16.msra.mxu0 %v533
      %599 = vmatprep.subr.bf16.mxu0 %v536
      %600 = vmatpush1.bf16.msra.mxu0 %v535
      %601 = vmatprep.subr.bf16.mxu0 %v538
      %602 = vmatpush1.bf16.msra.mxu0 %v537
      %603 = vmatprep.subr.bf16.mxu0 %v540
      %604 = vmatpush1.bf16.msra.mxu0 %v539
      %605 = vmatprep.subr.bf16.mxu0 %v542
      %606 = vmatpush1.bf16.msra.mxu0 %v541
      %607 = vmatprep.subr.bf16.mxu0 %v544
      %608 = vmatpush1.bf16.msra.mxu0 %v543
      %609 = vmatprep.subr.bf16.mxu0 %v546
      %610 = vmatpush1.bf16.msra.mxu0 %v545
      %611 = vmatprep.subr.bf16.mxu0 %v548
      %612 = vmatpush1.bf16.msra.mxu0 %v547
      %613 = vmatprep.subr.bf16.mxu0 %v550
      %614 = vmatpush1.bf16.msra.mxu0 %v549
      %615 = vmatprep.subr.bf16.mxu0 %v552
      %616 = vmatpush1.bf16.msra.mxu0 %v551
      %617 = vmatprep.subr.bf16.mxu0 %v554
      %618 = vmatpush1.bf16.msra.mxu0 %v553
      %619 = vmatprep.subr.bf16.mxu0 %v556
      %620 = vmatpush1.bf16.msra.mxu0 %v555
      %621 = vmatprep.mubr.bf16.mxu0 %v422
      %622 = vmatmul.mubr.bf16.gmra.mrb[0].mxu0 %v421
      %v623 = vpop.f32.mrb[0].mxu0
      %v624 = vadd.f32 %v414, %v623
      %v625 = vpop.f32.mrb[0].mxu0
      %v626 = vadd.f32 %v418, %v625
      %v627 = vpop.f32.mrb[0].mxu0
      %v628 = vadd.f32 %v414, %v627
      %v629 = vpop.f32.mrb[0].mxu0
      %v630 = vadd.f32 %v418, %v629
      %631 = vmatprep.mubr.bf16.mxu0 %v424
      %632 = vmatmul.mubr.bf16.gmra.mrb[0].mxu0 %v423
      %v633 = vpop.f32.mrb[0].mxu0
      %v634 = vadd.f32 %v414, %v633
      %v635 = vpop.f32.mrb[0].mxu0
      %v636 = vadd.f32 %v418, %v635
      %v637 = vpop.f32.mrb[0].mxu0
      %v638 = vadd.f32 %v414, %v637
      %v639 = vpop.f32.mrb[0].mxu0
      %v640 = vadd.f32 %v418, %v639
      %641 = vdwg.mxu0
      %v642 = vmax.f32 %v624, 0.0
      %v643 = vmax.f32 %v626, 0.0
      %v644 = vmax.f32 %v628, 0.0
      %v645 = vmax.f32 %v630, 0.0
      %v646 = vmax.f32 %v634, 0.0
      %v647 = vmax.f32 %v636, 0.0
      %v648 = vmax.f32 %v638, 0.0
      %v649 = vmax.f32 %v640, 0.0
      %v650 = vpack.c.bf16 %v642, %v642
      %v651 = vpack.c.bf16 %v643, %v643
      %v652 = vpack.c.bf16 %v644, %v644
      %v653 = vpack.c.bf16 %v645, %v645
      %v654 = vpack.c.bf16 %v646, %v646
      %v655 = vpack.c.bf16 %v647, %v647
      %v656 = vpack.c.bf16 %v648, %v648
      %v657 = vpack.c.bf16 %v649, %v649
      %658 = vst [vmem:[%s206] sm:$0xf] %v650
      %659 = vst [vmem:[%s206 + $0x4] sm:$0xf] %v651
      %660 = vst [vmem:[%s206 + $0x8] sm:$0xf] %v652
      %661 = vst [vmem:[%s206 + $0xc] sm:$0xf] %v653
      %662 = vst [vmem:[%s206 + $0x10] sm:$0xf] %v654
      %663 = vst [vmem:[%s206 + $0x14] sm:$0xf] %v655
      %664 = vst [vmem:[%s206 + $0x18] sm:$0xf] %v656
      %665 = vst [vmem:[%s206 + $0x1c] sm:$0xf] %v657
      %p666 = scmp.lt.s32.totalorder %s18, 1
      %s667 = scalar_select %p666, %s18, 1
      %p668 = scmp.lt.s32.totalorder %s19, 1
      %s669 = scalar_select %p668, %s19, 1
      %s670 = smul.addr %s669, 8
      %s671 = smul.addr %s667, 16
      %s672 = sadd.s32 %s670, %s671
      %s673 = smul.addr %s672, 4
      %s674 = scalar_lea.vmem %s3, %s673
      // Predicated region
      $region33: #{frvsr_sr_forward.9} parent=31 // pred_check
        %p675 = pneg %p116
      $region34: #{frvsr_sr_forward.9} parent=31 // pred_check_branch
        %677 = sbr.rel (%p675) target = $region36
      $region35: #{frvsr_sr_forward.9} parent=31 // pred_region
        _
      $region36: #{frvsr_sr_forward.9} parent=31 // pred_fallthru
        _
    $region32: #{frvsr_sr_forward.9} parent=5 // pred_fallthru
      _
    %p678 = scmp.le.s32.totalorder 2, %s9
    // Predicated region
    $region37: #{frvsr_sr_forward.9} parent=5 // pred_check
      %p679 = pneg %p678
    $region38: #{frvsr_sr_forward.9} parent=5 // pred_check_branch
      %681 = sbr.rel (%p679) target = $region40
    $region39: #{frvsr_sr_forward.9} parent=5 // pred_region
      %s682 = ssub.s32 %s9, 2
      // Predicated region
      $region41: #{frvsr_sr_forward.9} parent=39 // pred_check
        %p683 = pneg %p122
      $region42: #{frvsr_sr_forward.9} parent=39 // pred_check_branch
        %685 = sbr.rel (%p683) target = $region44
      $region43: #{frvsr_sr_forward.9} parent=39 // pred_region
        %p686 = scmp.lt.s32.totalorder %s20, 1
        %s687 = scalar_select %p686, %s20, 1
        %p688 = scmp.lt.s32.totalorder %s21, 1
        %s689 = scalar_select %p688, %s21, 1
        %s690 = smul.addr %s689, 8
        %s691 = smul.addr %s687, 16
        %s692 = sadd.s32 %s690, %s691
        %s693 = smul.addr %s692, 4
        %s694 = scalar_lea.vmem %s3, %s693
      $region44: #{frvsr_sr_forward.9} parent=39 // pred_fallthru
        _
    $region40: #{frvsr_sr_forward.9} parent=5 // pred_fallthru
      _
  $region6: #{frvsr_sr_forward.9} parent=0 // loop_footer
    %s13 = sadd.s32 1, %s9
  $region7: #{frvsr_sr_forward.9} parent=0 // loop_footer_branch
    %8 = sbr.rel target = $region3
  $region8: #{frvsr_sr_forward.9} parent=0 // loop_exit
    _

// kernel: frvsr_sr_forward.7
$region0: #{frvsr_sr_forward.7}
  #allocation0 [shape = 'u32[]', space=smem, size = 0x4, offset = 0x4, fixed_abs, tag = 'smem constant byte address 0x4 - core index']
  #allocation1 [shape = 'u32[144,128]{1,0:T(1,128)}', space=vmem, size = 0x12000, scoped, tag = 'internal scratch']
  %s0 = inlined_call_operand.vmem [shape: bf16[2,2,8,12,64], index: 0, kind: input, shape index: {}]
  %s1 = inlined_call_operand.vmem [shape: bf16[3,192,64], index: 1, kind: input, shape index: {}]
  %s2 = inlined_call_operand.vmem [shape: f32[1,64], index: 2, kind: input, shape index: {}]
  %s3 = inlined_call_operand.vmem [shape: bf16[3,192,64], index: 3, kind: input, shape index: {}]
  %s4 = inlined_call_operand.vmem [shape: f32[1,64], index: 4, kind: input, shape index: {}]
  %s5 = inlined_call_operand.vmem [shape: bf16[2,2,4,8,64], index: 5, kind: output, shape index: {}]
  %s6 = sld [smem:[#allocation0]]
  $region53: #{frvsr_sr_forward.7} parent=0
    _
  %s8 = ssub.s32 1, %s6
  %s9 = scalar_select 0, %s8, %s6
  loop: start=0, step=1, limit=6
  $region2: #{frvsr_sr_forward.7} parent=0 // loop_pre_header
    _
  $region3: #{frvsr_sr_forward.7} parent=0 // loop_header
    %s11 = sphi 0, %s15
    %p12 = scmp.ge.s32.totalorder %s11, 6
    %s18 = sphi 0, %s30
    %s19 = sphi 0, %s26
    %s20 = sphi 0, %s18
    %s21 = sphi 0, %s19
    %s22 = sphi 0, %s20
    %s23 = sphi 0, %s21
    %s35 = sphi 0, %s37
    %s38 = sphi 0, %s35
    %s39 = sphi 0, %s38
    %s55 = sphi 0, %s39
    %s59 = sphi 0, %s59
    %s61 = sphi 0, %s59
    %s62 = sphi 0, %s61
    %s76 = sphi 0, %s62
    %s80 = sphi 0, %s80
    %s82 = sphi 0, %s80
    %s83 = sphi 0, %s82
    %s97 = sphi 0, %s83
    %s101 = sphi 0, %s101
    %s103 = sphi 0, %s101
    %s104 = sphi 0, %s103
    %s118 = sphi 0, %s104
    %s122 = sphi 0, %s122
    %s124 = sphi 0, %s122
    %s125 = sphi 0, %s124
    %s139 = sphi 0, %s125
    %s147 = sphi 0, %s149
    %s150 = sphi 0, %s147
    %s151 = sphi 0, %s150
    %s167 = sphi 0, %s151
  $region4: #{frvsr_sr_forward.7} parent=0 // loop_header_branch
    %14 = sbr.rel (%p12) target = $region8
  $region5: #{frvsr_sr_forward.7} parent=0 // loop_body
    %s16 = ssub.s32 %s11, 1
    %s17 = ssub.s32 %s11, 2
    %s24 = sadd.s32 1, %s19
    %p25 = scmp.ge.s32.totalorder %s24, 2
    %s26 = scalar_select %p25, 0, %s24
    %s27 = sadd.s32 1, %s18
    %s28 = scalar_select %p25, %s27, %s18
    %p29 = scmp.ge.s32.totalorder %s28, 2
    %s30 = scalar_select %p29, 0, %s28
    %s31 = ssub.s32 %s18, %s30
    %s32 = ssub.s32 %s19, %s26
    %s33 = sor.u32 %s31, %s32
    %p34 = scmp.eq.s32.totalorder %s33, 0
    %s36 = sadd.s32 %s35, 1
    %s37 = scalar_select %p34, %s35, %s36
    %p40 = pneg %p34
    %p41 = scmp.eq.s32.totalorder %s11, 3
    %p42 = por %p40, %p41
    %p43 = scmp.ne.s32.totalorder %s35, %s38
    %p44 = scmp.eq.s32.totalorder %s11, 0
    %p45 = por %p43, %p44
    %p46 = scmp.ne.s32.totalorder %s35, %s38
    %p47 = scmp.eq.s32.totalorder %s16, 3
    %p48 = por %p46, %p47
    %p49 = scmp.ne.s32.totalorder %s38, %s39
    %p50 = scmp.eq.s32.totalorder %s16, 0
    %p51 = por %p49, %p50
    %p52 = scmp.ne.s32.totalorder %s38, %s39
    %p53 = scmp.eq.s32.totalorder %s17, 3
    %p54 = por %p52, %p53
    %p56 = scmp.ne.s32.totalorder %s39, %s55
    %p57 = scmp.eq.s32.totalorder %s17, 0
    %p58 = por %p56, %p57
    %s60 = sadd.s32 %s59, 1
    %p63 = scmp.eq.s32.totalorder %s11, 3
    %p64 = scmp.ne.s32.totalorder %s59, %s61
    %p65 = scmp.eq.s32.totalorder %s11, 0
    %p66 = por %p64, %p65
    %p67 = scmp.ne.s32.totalorder %s59, %s61
    %p68 = scmp.eq.s32.totalorder %s16, 3
    %p69 = por %p67, %p68
    %p70 = scmp.ne.s32.totalorder %s61, %s62
    %p71 = scmp.eq.s32.totalorder %s16, 0
    %p72 = por %p70, %p71
    %p73 = scmp.ne.s32.totalorder %s61, %s62
    %p74 = scmp.eq.s32.totalorder %s17, 3
    %p75 = por %p73, %p74
    %p77 = scmp.ne.s32.totalorder %s62, %s76
    %p78 = scmp.eq.s32.totalorder %s17, 0
    %p79 = por %p77, %p78
    %s81 = sadd.s32 %s80, 1
    %p84 = scmp.eq.s32.totalorder %s11, 3
    %p85 = scmp.ne.s32.totalorder %s80, %s82
    %p86 = scmp.eq.s32.totalorder %s11, 0
    %p87 = por %p85, %p86
    %p88 = scmp.ne.s32.totalorder %s80, %s82
    %p89 = scmp.eq.s32.totalorder %s16, 3
    %p90 = por %p88, %p89
    %p91 = scmp.ne.s32.totalorder %s82, %s83
    %p92 = scmp.eq.s32.totalorder %s16, 0
    %p93 = por %p91, %p92
    %p94 = scmp.ne.s32.totalorder %s82, %s83
    %p95 = scmp.eq.s32.totalorder %s17, 3
    %p96 = por %p94, %p95
    %p98 = scmp.ne.s32.totalorder %s83, %s97
    %p99 = scmp.eq.s32.totalorder %s17, 0
    %p100 = por %p98, %p99
    %s102 = sadd.s32 %s101, 1
    %p105 = scmp.eq.s32.totalorder %s11, 3
    %p106 = scmp.ne.s32.totalorder %s101, %s103
    %p107 = scmp.eq.s32.totalorder %s11, 0
    %p108 = por %p106, %p107
    %p109 = scmp.ne.s32.totalorder %s101, %s103
    %p110 = scmp.eq.s32.totalorder %s16, 3
    %p111 = por %p109, %p110
    %p112 = scmp.ne.s32.totalorder %s103, %s104
    %p113 = scmp.eq.s32.totalorder %s16, 0
    %p114 = por %p112, %p113
    %p115 = scmp.ne.s32.totalorder %s103, %s104
    %p116 = scmp.eq.s32.totalorder %s17, 3
    %p117 = por %p115, %p116
    %p119 = scmp.ne.s32.totalorder %s104, %s118
    %p120 = scmp.eq.s32.totalorder %s17, 0
    %p121 = por %p119, %p120
    %s123 = sadd.s32 %s122, 1
    %p126 = scmp.eq.s32.totalorder %s11, 3
    %p127 = scmp.ne.s32.totalorder %s122, %s124
    %p128 = scmp.eq.s32.totalorder %s11, 0
    %p129 = por %p127, %p128
    %p130 = scmp.ne.s32.totalorder %s122, %s124
    %p131 = scmp.eq.s32.totalorder %s16, 3
    %p132 = por %p130, %p131
    %p133 = scmp.ne.s32.totalorder %s124, %s125
    %p134 = scmp.eq.s32.totalorder %s16, 0
    %p135 = por %p133, %p134
    %p136 = scmp.ne.s32.totalorder %s124, %s125
    %p137 = scmp.eq.s32.totalorder %s17, 3
    %p138 = por %p136, %p137
    %p140 = scmp.ne.s32.totalorder %s125, %s139
    %p141 = scmp.eq.s32.totalorder %s17, 0
    %p142 = por %p140, %p141
    %s143 = ssub.s32 %s18, %s30
    %s144 = ssub.s32 %s19, %s26
    %s145 = sor.u32 %s143, %s144
    %p146 = scmp.eq.s32.totalorder %s145, 0
    %s148 = sadd.s32 %s147, 1
    %s149 = scalar_select %p146, %s147, %s148
    %p152 = pneg %p146
    %p153 = scmp.eq.s32.totalorder %s11, 3
    %p154 = por %p152, %p153
    %p155 = scmp.ne.s32.totalorder %s147, %s150
    %p156 = scmp.eq.s32.totalorder %s11, 0
    %p157 = por %p155, %p156
    %p158 = scmp.ne.s32.totalorder %s147, %s150
    %p159 = scmp.eq.s32.totalorder %s16, 3
    %p160 = por %p158, %p159
    %p161 = scmp.ne.s32.totalorder %s150, %s151
    %p162 = scmp.eq.s32.totalorder %s16, 0
    %p163 = por %p161, %p162
    %p164 = scmp.ne.s32.totalorder %s150, %s151
    %p165 = scmp.eq.s32.totalorder %s17, 3
    %p166 = por %p164, %p165
    %p168 = scmp.ne.s32.totalorder %s151, %s167
    %p169 = scmp.eq.s32.totalorder %s17, 0
    %p170 = por %p168, %p169
    %p171 = scmp.le.s32.totalorder 1, %s11
    %p172 = scmp.lt.s32.totalorder %s11, 5
    %p173 = pnand %p171, %p172
    %p174 = pneg %p173
    // Predicated region
    $region9: #{frvsr_sr_forward.7} parent=5 // pred_check
      _
    $region10: #{frvsr_sr_forward.7} parent=5 // pred_check_branch
      %176 = sbr.rel (%p173) target = $region12
    $region11: #{frvsr_sr_forward.7} parent=5 // pred_region
      %s177 = ssub.s32 %s11, 1
      // Predicated region
      $region13: #{frvsr_sr_forward.7} parent=11 // pred_check
        %p178 = pneg %p72
      $region14: #{frvsr_sr_forward.7} parent=11 // pred_check_branch
        %180 = sbr.rel (%p178) target = $region16
      $region15: #{frvsr_sr_forward.7} parent=11 // pred_region
        _
      $region16: #{frvsr_sr_forward.7} parent=11 // pred_fallthru
        _
      // Predicated region
      $region17: #{frvsr_sr_forward.7} parent=11 // pred_check
        %p181 = pneg %p93
      $region18: #{frvsr_sr_forward.7} parent=11 // pred_check_branch
        %183 = sbr.rel (%p181) target = $region20
      $region19: #{frvsr_sr_forward.7} parent=11 // pred_region
        _
      $region20: #{frvsr_sr_forward.7} parent=11 // pred_fallthru
        _
      // Predicated region
      $region21: #{frvsr_sr_forward.7} parent=11 // pred_check
        %p184 = pneg %p114
      $region22: #{frvsr_sr_forward.7} parent=11 // pred_check_branch
        %186 = sbr.rel (%p184) target = $region24
      $region23: #{frvsr_sr_forward.7} parent=11 // pred_region
        _
      $region24: #{frvsr_sr_forward.7} parent=11 // pred_fallthru
        _
      // Predicated region
      $region25: #{frvsr_sr_forward.7} parent=11 // pred_check
        %p187 = pneg %p135
      $region26: #{frvsr_sr_forward.7} parent=11 // pred_check_branch
        %189 = sbr.rel (%p187) target = $region28
      $region27: #{frvsr_sr_forward.7} parent=11 // pred_region
        _
      $region28: #{frvsr_sr_forward.7} parent=11 // pred_fallthru
        _
    $region12: #{frvsr_sr_forward.7} parent=5 // pred_fallthru
      _
    %p190 = scmp.lt.s32.totalorder %s11, 4
    // Predicated region
    $region29: #{frvsr_sr_forward.7} parent=5 // pred_check
      %p191 = pneg %p190
    $region30: #{frvsr_sr_forward.7} parent=5 // pred_check_branch
      %193 = sbr.rel (%p191) target = $region32
    $region31: #{frvsr_sr_forward.7} parent=5 // pred_region
      // Predicated region
      $region33: #{frvsr_sr_forward.7} parent=31 // pred_check
        %p194 = pneg %p45
      $region34: #{frvsr_sr_forward.7} parent=31 // pred_check_branch
        %196 = sbr.rel (%p194) target = $region36
      $region35: #{frvsr_sr_forward.7} parent=31 // pred_region
        %p197 = scmp.lt.s32.totalorder %s18, 1
        %s198 = scalar_select %p197, %s18, 1
        %p199 = scmp.lt.s32.totalorder %s19, 1
        %s200 = scalar_select %p199, %s19, 1
        %s201 = smul.addr %s200, 16
        %s202 = smul.addr %s198, 32
        %s203 = sadd.s32 %s201, %s202
        %s204 = smul.addr %s203, 4
        %s205 = scalar_lea.vmem %s0, %s204
      $region36: #{frvsr_sr_forward.7} parent=31 // pred_fallthru
        _
    $region32: #{frvsr_sr_forward.7} parent=5 // pred_fallthru
      _
    %p206 = scmp.le.s32.totalorder 1, %s11
    %p207 = scmp.lt.s32.totalorder %s11, 5
    %p208 = pnand %p206, %p207
    %p209 = pneg %p208
    // Predicated region
    $region37: #{frvsr_sr_forward.7} parent=5 // pred_check
      _
    $region38: #{frvsr_sr_forward.7} parent=5 // pred_check_branch
      %211 = sbr.rel (%p208) target = $region40
    $region39: #{frvsr_sr_forward.7} parent=5 // pred_region
      %s212 = ssub.s32 %s11, 1
      %p213 = scmp.lt.s32.totalorder %s20, 1
      %s214 = scalar_select %p213, %s20, 1
      %p215 = scmp.lt.s32.totalorder %s21, 1
      %s216 = scalar_select %p215, %s21, 1
      %s217 = smul.addr %s216, 16
      %s218 = smul.addr %s214, 32
      %s219 = sadd.s32 %s217, %s218
      %s220 = smul.addr %s219, 4
      %s221 = scalar_lea.vmem %s0, %s220
      %p222 = pneg %p51
      %p223 = pneg %p48
      %p224 = pneg %p72
      %p225 = pneg %p69
      %p226 = pneg %p93
      %p227 = pneg %p90
      %p228 = pneg %p114
      %p229 = pneg %p111
      %p230 = pneg %p135
      %p231 = pneg %p132
      %p232 = pneg %p163
      %p233 = pneg %p160
      %p234 = scmp.lt.s32.totalorder %s20, 1
      %s235 = scalar_select %p234, %s20, 1
      %p236 = scmp.lt.s32.totalorder %s21, 1
      %s237 = scalar_select %p236, %s21, 1
      %s238 = smul.addr %s237, 4
      %s239 = smul.addr %s235, 8
      %s240 = sadd.s32 %s238, %s239
      %s241 = smul.addr %s240, 4
      %s242 = scalar_lea.vmem %s5, %s241
      %p243 = scmp.lt.s32.totalorder %s20, 1
      %s244 = scalar_select %p243, %s20, 1
      %p245 = scmp.lt.s32.totalorder %s21, 1
      %s246 = scalar_select %p245, %s21, 1
      %s247 = smul.addr %s246, 16
      %s248 = smul.addr %s244, 32
      %s249 = sadd.s32 %s247, %s248
      %s250 = smul.addr %s249, 4
      %s251 = scalar_lea.vmem %s0, %s250
      %p252 = scmp.lt.s32.totalorder %s20, 1
      %s253 = scalar_select %p252, %s20, 1
      %p254 = scmp.lt.s32.totalorder %s21, 1
      %s255 = scalar_select %p254, %s21, 1
      %s256 = smul.addr %s255, 4
      %s257 = smul.addr %s253, 8
      %s258 = sadd.s32 %s256, %s257
      %s259 = smul.addr %s258, 4
      %s260 = scalar_lea.vmem %s5, %s259
      %v262 = vld [vmem:[%s251] sm:$0xf]
      %v263 = vld [vmem:[%s251 + $0x4] sm:$0x3]
      %v264 = vld [vmem:[%s251 + $0x8] sm:$0xf]
      %v265 = vld [vmem:[%s251 + $0xc] sm:$0x3]
      %v266 = vld [vmem:[%s251 + $0x10] sm:$0xf]
      %v267 = vld [vmem:[%s251 + $0x14] sm:$0x3]
      %v268 = vld [vmem:[%s251 + $0x18] sm:$0xf]
      %v269 = vld [vmem:[%s251 + $0x1c] sm:$0x3]
      %v270 = vld [vmem:[%s251 + $0x20] sm:$0xf]
      %v271 = vld [vmem:[%s251 + $0x24] sm:$0x3]
      %v272 = vld [vmem:[%s251 + $0x28] sm:$0xf]
      %v273 = vld [vmem:[%s251 + $0x2c] sm:$0x3]
      %v286 = vunpack.c.l.b16 %v262
      %v287 = vunpack.c.l.b16 %v263
      %v288 = vunpack.c.l.b16 %v264
      %v289 = vunpack.c.l.b16 %v265
      %v290 = vunpack.c.l.b16 %v266
      %v291 = vunpack.c.l.b16 %v267
      %v292 = vunpack.c.l.b16 %v268
      %v293 = vunpack.c.l.b16 %v269
      %v294 = vunpack.c.l.b16 %v270
      %v295 = vunpack.c.l.b16 %v271
      %v296 = vunpack.c.l.b16 %v272
      %v297 = vunpack.c.l.b16 %v273
      %v298 = vpack.c.b16 %v287, %v286
      %v299 = vpack.c.b16 %v289, %v288
      %v300 = vpack.c.b16 %v291, %v290
      %v301 = vpack.c.b16 %v293, %v292
      %v302 = vpack.c.b16 %v295, %v294
      %v303 = vpack.c.b16 %v297, %v296
      %v305 = vshrl.u32 %v298, 16
      %v307 = vshll.u32 %v298, 16
      %v309 = vrot.slane %v307, 1
      %v310 = vor.u32 %v305, %v309
      %v312 = vshrl.u32 %v299, 16
      %v314 = vshll.u32 %v299, 16
      %v316 = vrot.slane %v314, 1
      %v317 = vor.u32 %v312, %v316
      %v319 = vshrl.u32 %v300, 16
      %v321 = vshll.u32 %v300, 16
      %v323 = vrot.slane %v321, 1
      %v324 = vor.u32 %v319, %v323
      %v326 = vshrl.u32 %v301, 16
      %v328 = vshll.u32 %v301, 16
      %v330 = vrot.slane %v328, 1
      %v331 = vor.u32 %v326, %v330
      %v333 = vshrl.u32 %v302, 16
      %v335 = vshll.u32 %v302, 16
      %v337 = vrot.slane %v335, 1
      %v338 = vor.u32 %v333, %v337
      %v340 = vshrl.u32 %v303, 16
      %v342 = vshll.u32 %v303, 16
      %v344 = vrot.slane %v342, 1
      %v345 = vor.u32 %v340, %v344
      %346 = vrot.lane.b32.xlu0 %v310, 64
      %v347 = vpop.permute.xlu0 %346
      %348 = vrot.lane.b32.xlu0 %v317, 64
      %v349 = vpop.permute.xlu0 %348
      %350 = vrot.lane.b32.xlu0 %v324, 64
      %v351 = vpop.permute.xlu0 %350
      %352 = vrot.lane.b32.xlu0 %v331, 64
      %v353 = vpop.permute.xlu0 %352
      %354 = vrot.lane.b32.xlu0 %v338, 64
      %v355 = vpop.permute.xlu0 %354
      %356 = vrot.lane.b32.xlu0 %v345, 64
      %v357 = vpop.permute.xlu0 %356
      %v358 = vrot.slane %v298, 1
      %v359 = vrot.slane %v299, 1
      %v360 = vrot.slane %v300, 1
      %v361 = vrot.slane %v301, 1
      %v362 = vrot.slane %v302, 1
      %v363 = vrot.slane %v303, 1
      %vm364 = vcmask 523264
      %v366 = vsel %vm364, %v298, %v347
      %v368 = vsel %vm364, %v299, %v349
      %v370 = vsel %vm364, %v300, %v351
      %v372 = vsel %vm364, %v301, %v353
      %v374 = vsel %vm364, %v302, %v355
      %v376 = vsel %vm364, %v303, %v357
      %v383 = vcombine.low %v366, %v358
      %v384 = vcombine.high %v366, %v358
      %v386 = vunpack.c.l.s4 1966171168
      %v387 = vunpack.c.0.s8 %v386
      %v388 = vlaneseq
      %v389 = vshrl.u32 %v388, 7
      %v390 = vsub.s32 %v387, %v389
      %v391 = vrot.slane %v383, %v390
      %v393 = vunpack.c.l.s4 1966171168
      %v394 = vunpack.c.0.s8 %v393
      %v395 = vlaneseq
      %v396 = vshrl.u32 %v395, 7
      %v397 = vsub.s32 %v394, %v396
      %v398 = vrot.slane %v384, %v397
      %v399 = vcombine.high %v391, %v391
      %v401 = vunpack.c.l.s4 1966171168
      %v402 = vunpack.c.0.s8 %v401
      %v403 = vlaneseq
      %v404 = vshrl.u32 %v403, 7
      %v405 = vsub.s32 %v402, %v404
      %v406 = vrot.slane %v391, %v405
      %v408 = vunpack.c.l.s4 1966171168
      %v409 = vunpack.c.0.s8 %v408
      %v410 = vlaneseq
      %v411 = vshrl.u32 %v410, 7
      %v412 = vsub.s32 %v409, %v411
      %v413 = vrot.slane %v398, %v412
      %v415 = vunpack.c.l.s4 1966171168
      %v416 = vunpack.c.0.s8 %v415
      %v417 = vlaneseq
      %v418 = vshrl.u32 %v417, 7
      %v419 = vsub.s32 %v416, %v418
      %v420 = vrot.slane %v399, %v419
      %v421 = vcombine.high %v406, %v406
      %v422 = vcombine.high %v420, %v420
      %v423 = vcombine.low %v368, %v359
      %v424 = vcombine.high %v368, %v359
      %v426 = vunpack.c.l.s4 1966171168
      %v427 = vunpack.c.0.s8 %v426
      %v428 = vlaneseq
      %v429 = vshrl.u32 %v428, 7
      %v430 = vsub.s32 %v427, %v429
      %v431 = vrot.slane %v423, %v430
      %v433 = vunpack.c.l.s4 1966171168
      %v434 = vunpack.c.0.s8 %v433
      %v435 = vlaneseq
      %v436 = vshrl.u32 %v435, 7
      %v437 = vsub.s32 %v434, %v436
      %v438 = vrot.slane %v424, %v437
      %v439 = vcombine.high %v431, %v431
      %v441 = vunpack.c.l.s4 1966171168
      %v442 = vunpack.c.0.s8 %v441
      %v443 = vlaneseq
      %v444 = vshrl.u32 %v443, 7
      %v445 = vsub.s32 %v442, %v444
      %v446 = vrot.slane %v431, %v445
      %v448 = vunpack.c.l.s4 1966171168
      %v449 = vunpack.c.0.s8 %v448
      %v450 = vlaneseq
      %v451 = vshrl.u32 %v450, 7
      %v452 = vsub.s32 %v449, %v451
      %v453 = vrot.slane %v438, %v452
      %v455 = vunpack.c.l.s4 1966171168
      %v456 = vunpack.c.0.s8 %v455
      %v457 = vlaneseq
      %v458 = vshrl.u32 %v457, 7
      %v459 = vsub.s32 %v456, %v458
      %v460 = vrot.slane %v439, %v459
      %v461 = vcombine.high %v446, %v446
      %v462 = vcombine.high %v460, %v460
      %v463 = vcombine.low %v370, %v360
      %v464 = vcombine.high %v370, %v360
      %v466 = vunpack.c.l.s4 1966171168
      %v467 = vunpack.c.0.s8 %v466
      %v468 = vlaneseq
      %v469 = vshrl.u32 %v468, 7
      %v470 = vsub.s32 %v467, %v469
      %v471 = vrot.slane %v463, %v470
      %v473 = vunpack.c.l.s4 1966171168
      %v474 = vunpack.c.0.s8 %v473
      %v475 = vlaneseq
      %v476 = vshrl.u32 %v475, 7
      %v477 = vsub.s32 %v474, %v476
      %v478 = vrot.slane %v464, %v477
      %v479 = vcombine.high %v471, %v471
      %v481 = vunpack.c.l.s4 1966171168
      %v482 = vunpack.c.0.s8 %v481
      %v483 = vlaneseq
      %v484 = vshrl.u32 %v483, 7
      %v485 = vsub.s32 %v482, %v484
      %v486 = vrot.slane %v471, %v485
      %v488 = vunpack.c.l.s4 1966171168
      %v489 = vunpack.c.0.s8 %v488
      %v490 = vlaneseq
      %v491 = vshrl.u32 %v490, 7
      %v492 = vsub.s32 %v489, %v491
      %v493 = vrot.slane %v478, %v492
      %v495 = vunpack.c.l.s4 1966171168
      %v496 = vunpack.c.0.s8 %v495
      %v497 = vlaneseq
      %v498 = vshrl.u32 %v497, 7
      %v499 = vsub.s32 %v496, %v498
      %v500 = vrot.slane %v479, %v499
      %v501 = vcombine.high %v486, %v486
      %v502 = vcombine.high %v500, %v500
      %v503 = vcombine.low %v372, %v361
      %v504 = vcombine.high %v372, %v361
      %v506 = vunpack.c.l.s4 1966171168
      %v507 = vunpack.c.0.s8 %v506
      %v508 = vlaneseq
      %v509 = vshrl.u32 %v508, 7
      %v510 = vsub.s32 %v507, %v509
      %v511 = vrot.slane %v503, %v510
      %v513 = vunpack.c.l.s4 1966171168
      %v514 = vunpack.c.0.s8 %v513
      %v515 = vlaneseq
      %v516 = vshrl.u32 %v515, 7
      %v517 = vsub.s32 %v514, %v516
      %v518 = vrot.slane %v504, %v517
      %v519 = vcombine.high %v511, %v511
      %v521 = vunpack.c.l.s4 1966171168
      %v522 = vunpack.c.0.s8 %v521
      %v523 = vlaneseq
      %v524 = vshrl.u32 %v523, 7
      %v525 = vsub.s32 %v522, %v524
      %v526 = vrot.slane %v511, %v525
      %v528 = vunpack.c.l.s4 1966171168
      %v529 = vunpack.c.0.s8 %v528
      %v530 = vlaneseq
      %v531 = vshrl.u32 %v530, 7
      %v532 = vsub.s32 %v529, %v531
      %v533 = vrot.slane %v518, %v532
      %v535 = vunpack.c.l.s4 1966171168
      %v536 = vunpack.c.0.s8 %v535
      %v537 = vlaneseq
      %v538 = vshrl.u32 %v537, 7
      %v539 = vsub.s32 %v536, %v538
      %v540 = vrot.slane %v519, %v539
      %v541 = vcombine.high %v526, %v526
      %v542 = vcombine.high %v540, %v540
      %v543 = vcombine.low %v374, %v362
      %v544 = vcombine.high %v374, %v362
      %v546 = vunpack.c.l.s4 1966171168
      %v547 = vunpack.c.0.s8 %v546
      %v548 = vlaneseq
      %v549 = vshrl.u32 %v548, 7
      %v550 = vsub.s32 %v547, %v549
      %v551 = vrot.slane %v543, %v550
      %v553 = vunpack.c.l.s4 1966171168
      %v554 = vunpack.c.0.s8 %v553
      %v555 = vlaneseq
      %v556 = vshrl.u32 %v555, 7
      %v557 = vsub.s32 %v554, %v556
      %v558 = vrot.slane %v544, %v557
      %v559 = vcombine.high %v551, %v551
      %v561 = vunpack.c.l.s4 1966171168
      %v562 = vunpack.c.0.s8 %v561
      %v563 = vlaneseq
      %v564 = vshrl.u32 %v563, 7
      %v565 = vsub.s32 %v562, %v564
      %v566 = vrot.slane %v551, %v565
      %v568 = vunpack.c.l.s4 1966171168
      %v569 = vunpack.c.0.s8 %v568
      %v570 = vlaneseq
      %v571 = vshrl.u32 %v570, 7
      %v572 = vsub.s32 %v569, %v571
      %v573 = vrot.slane %v558, %v572
      %v575 = vunpack.c.l.s4 1966171168
      %v576 = vunpack.c.0.s8 %v575
      %v577 = vlaneseq
      %v578 = vshrl.u32 %v577, 7
      %v579 = vsub.s32 %v576, %v578
      %v580 = vrot.slane %v559, %v579
      %v581 = vcombine.high %v566, %v566
      %v582 = vcombine.high %v580, %v580
      %v583 = vcombine.low %v376, %v363
      %v584 = vcombine.high %v376, %v363
      %v586 = vunpack.c.l.s4 1966171168
      %v587 = vunpack.c.0.s8 %v586
      %v588 = vlaneseq
      %v589 = vshrl.u32 %v588, 7
      %v590 = vsub.s32 %v587, %v589
      %v591 = vrot.slane %v583, %v590
      %v593 = vunpack.c.l.s4 1966171168
      %v594 = vunpack.c.0.s8 %v593
      %v595 = vlaneseq
      %v596 = vshrl.u32 %v595, 7
      %v597 = vsub.s32 %v594, %v596
      %v598 = vrot.slane %v584, %v597
      %v599 = vcombine.high %v591, %v591
      %v601 = vunpack.c.l.s4 1966171168
      %v602 = vunpack.c.0.s8 %v601
      %v603 = vlaneseq
      %v604 = vshrl.u32 %v603, 7
      %v605 = vsub.s32 %v602, %v604
      %v606 = vrot.slane %v591, %v605
      %v608 = vunpack.c.l.s4 1966171168
      %v609 = vunpack.c.0.s8 %v608
      %v610 = vlaneseq
      %v611 = vshrl.u32 %v610, 7
      %v612 = vsub.s32 %v609, %v611
      %v613 = vrot.slane %v598, %v612
      %v615 = vunpack.c.l.s4 1966171168
      %v616 = vunpack.c.0.s8 %v615
      %v617 = vlaneseq
      %v618 = vshrl.u32 %v617, 7
      %v619 = vsub.s32 %v616, %v618
      %v620 = vrot.slane %v599, %v619
      %v621 = vcombine.high %v606, %v606
      %v622 = vcombine.high %v620, %v620
      %v623 = vld [vmem:[%s1] sm:$0xf]
      %v624 = vld [vmem:[%s1 + $0x4] sm:$0xf]
      %v625 = vld [vmem:[%s1 + $0x8] sm:$0xf]
      %v626 = vld [vmem:[%s1 + $0xc] sm:$0xf]
      %v627 = vld [vmem:[%s1 + $0x10] sm:$0xf]
      %v628 = vld [vmem:[%s1 + $0x14] sm:$0xf]
      %v629 = vld [vmem:[%s1 + $0x18] sm:$0xf]
      %v630 = vld [vmem:[%s1 + $0x1c] sm:$0xf]
      %v631 = vld [vmem:[%s1 + $0x20] sm:$0xf]
      %v632 = vld [vmem:[%s1 + $0x24] sm:$0xf]
      %v633 = vld [vmem:[%s1 + $0x28] sm:$0xf]
      %v634 = vld [vmem:[%s1 + $0x2c] sm:$0xf]
      %v635 = vld [vmem:[%s1 + $0x30] sm:$0xf]
      %v636 = vld [vmem:[%s1 + $0x34] sm:$0xf]
      %v637 = vld [vmem:[%s1 + $0x38] sm:$0xf]
      %v638 = vld [vmem:[%s1 + $0x3c] sm:$0xf]
      %v639 = vld [vmem:[%s1 + $0x40] sm:$0xf]
      %v640 = vld [vmem:[%s1 + $0x44] sm:$0xf]
      %v641 = vld [vmem:[%s1 + $0x48] sm:$0xf]
      %v642 = vld [vmem:[%s1 + $0x4c] sm:$0xf]
      %v643 = vld [vmem:[%s1 + $0x50] sm:$0xf]
      %v644 = vld [vmem:[%s1 + $0x54] sm:$0xf]
      %v645 = vld [vmem:[%s1 + $0x58] sm:$0xf]
      %v646 = vld [vmem:[%s1 + $0x5c] sm:$0xf]
      %s647 = scalar_lea.vmem %s251, 8
      %v648 = vld [vmem:[%s647] sm:$0xf]
      %v649 = vld [vmem:[%s647 + $0x4] sm:$0x3]
      %v650 = vld [vmem:[%s647 + $0x8] sm:$0xf]
      %v651 = vld [vmem:[%s647 + $0xc] sm:$0x3]
      %v652 = vld [vmem:[%s647 + $0x10] sm:$0xf]
      %v653 = vld [vmem:[%s647 + $0x14] sm:$0x3]
      %v654 = vld [vmem:[%s647 + $0x18] sm:$0xf]
      %v655 = vld [vmem:[%s647 + $0x1c] sm:$0x3]
      %v656 = vld [vmem:[%s647 + $0x20] sm:$0xf]
      %v657 = vld [vmem:[%s647 + $0x24] sm:$0x3]
      %v658 = vld [vmem:[%s647 + $0x28] sm:$0xf]
      %v659 = vld [vmem:[%s647 + $0x2c] sm:$0x3]
      %v672 = vunpack.c.l.b16 %v648
      %v673 = vunpack.c.l.b16 %v649
      %v674 = vunpack.c.l.b16 %v650
      %v675 = vunpack.c.l.b16 %v651
      %v676 = vunpack.c.l.b16 %v652
      %v677 = vunpack.c.l.b16 %v653
      %v678 = vunpack.c.l.b16 %v654
      %v679 = vunpack.c.l.b16 %v655
      %v680 = vunpack.c.l.b16 %v656
      %v681 = vunpack.c.l.b16 %v657
      %v682 = vunpack.c.l.b16 %v658
      %v683 = vunpack.c.l.b16 %v659
      %v684 = vpack.c.b16 %v673, %v672
      %v685 = vpack.c.b16 %v675, %v674
      %v686 = vpack.c.b16 %v677, %v676
      %v687 = vpack.c.b16 %v679, %v678
      %v688 = vpack.c.b16 %v681, %v680
      %v689 = vpack.c.b16 %v683, %v682
      %v691 = vshrl.u32 %v684, 16
      %v693 = vshll.u32 %v684, 16
      %v695 = vrot.slane %v693, 1
      %v696 = vor.u32 %v691, %v695
      %v698 = vshrl.u32 %v685, 16
      %v700 = vshll.u32 %v685, 16
      %v702 = vrot.slane %v700, 1
      %v703 = vor.u32 %v698, %v702
      %v705 = vshrl.u32 %v686, 16
      %v707 = vshll.u32 %v686, 16
      %v709 = vrot.slane %v707, 1
      %v710 = vor.u32 %v705, %v709
      %v712 = vshrl.u32 %v687, 16
      %v714 = vshll.u32 %v687, 16
      %v716 = vrot.slane %v714, 1
      %v717 = vor.u32 %v712, %v716
      %v719 = vshrl.u32 %v688, 16
      %v721 = vshll.u32 %v688, 16
      %v723 = vrot.slane %v721, 1
      %v724 = vor.u32 %v719, %v723
      %v726 = vshrl.u32 %v689, 16
      %v728 = vshll.u32 %v689, 16
      %v730 = vrot.slane %v728, 1
      %v731 = vor.u32 %v726, %v730
      %732 = vrot.lane.b32.xlu0 %v696, 64
      %v733 = vpop.permute.xlu0 %732
      %734 = vrot.lane.b32.xlu0 %v703, 64
      %v735 = vpop.permute.xlu0 %734
      %736 = vrot.lane.b32.xlu0 %v710, 64
      %v737 = vpop.permute.xlu0 %736
      %738 = vrot.lane.b32.xlu0 %v717, 64
      %v739 = vpop.permute.xlu0 %738
      %740 = vrot.lane.b32.xlu0 %v724, 64
      %v741 = vpop.permute.xlu0 %740
      %742 = vrot.lane.b32.xlu0 %v731, 64
      %v743 = vpop.permute.xlu0 %742
      %v744 = vrot.slane %v684, 1
      %v745 = vrot.slane %v685, 1
      %v746 = vrot.slane %v686, 1
      %v747 = vrot.slane %v687, 1
      %v748 = vrot.slane %v688, 1
      %v749 = vrot.slane %v689, 1
      %v751 = vsel %vm364, %v684, %v733
      %v753 = vsel %vm364, %v685, %v735
      %v755 = vsel %vm364, %v686, %v737
      %v757 = vsel %vm364, %v687, %v739
      %v759 = vsel %vm364, %v688, %v741
      %v761 = vsel %vm364, %v689, %v743
      %v768 = vcombine.low %v751, %v744
      %v769 = vcombine.high %v751, %v744
      %v771 = vunpack.c.l.s4 1966171168
      %v772 = vunpack.c.0.s8 %v771
      %v773 = vlaneseq
      %v774 = vshrl.u32 %v773, 7
      %v775 = vsub.s32 %v772, %v774
      %v776 = vrot.slane %v768, %v775
      %v778 = vunpack.c.l.s4 1966171168
      %v779 = vunpack.c.0.s8 %v778
      %v780 = vlaneseq
      %v781 = vshrl.u32 %v780, 7
      %v782 = vsub.s32 %v779, %v781
      %v783 = vrot.slane %v769, %v782
      %v784 = vcombine.high %v776, %v776
      %v786 = vunpack.c.l.s4 1966171168
      %v787 = vunpack.c.0.s8 %v786
      %v788 = vlaneseq
      %v789 = vshrl.u32 %v788, 7
      %v790 = vsub.s32 %v787, %v789
      %v791 = vrot.slane %v776, %v790
      %v793 = vunpack.c.l.s4 1966171168
      %v794 = vunpack.c.0.s8 %v793
      %v795 = vlaneseq
      %v796 = vshrl.u32 %v795, 7
      %v797 = vsub.s32 %v794, %v796
      %v798 = vrot.slane %v783, %v797
      %v800 = vunpack.c.l.s4 1966171168
      %v801 = vunpack.c.0.s8 %v800
      %v802 = vlaneseq
      %v803 = vshrl.u32 %v802, 7
      %v804 = vsub.s32 %v801, %v803
      %v805 = vrot.slane %v784, %v804
      %v806 = vcombine.high %v791, %v791
      %v807 = vcombine.high %v805, %v805
      %v808 = vcombine.low %v753, %v745
      %v809 = vcombine.high %v753, %v745
      %v811 = vunpack.c.l.s4 1966171168
      %v812 = vunpack.c.0.s8 %v811
      %v813 = vlaneseq
      %v814 = vshrl.u32 %v813, 7
      %v815 = vsub.s32 %v812, %v814
      %v816 = vrot.slane %v808, %v815
      %v818 = vunpack.c.l.s4 1966171168
      %v819 = vunpack.c.0.s8 %v818
      %v820 = vlaneseq
      %v821 = vshrl.u32 %v820, 7
      %v822 = vsub.s32 %v819, %v821
      %v823 = vrot.slane %v809, %v822
      %v824 = vcombine.high %v816, %v816
      %v826 = vunpack.c.l.s4 1966171168
      %v827 = vunpack.c.0.s8 %v826
      %v828 = vlaneseq
      %v829 = vshrl.u32 %v828, 7
      %v830 = vsub.s32 %v827, %v829
      %v831 = vrot.slane %v816, %v830
      %v833 = vunpack.c.l.s4 1966171168
      %v834 = vunpack.c.0.s8 %v833
      %v835 = vlaneseq
      %v836 = vshrl.u32 %v835, 7
      %v837 = vsub.s32 %v834, %v836
      %v838 = vrot.slane %v823, %v837
      %v840 = vunpack.c.l.s4 1966171168
      %v841 = vunpack.c.0.s8 %v840
      %v842 = vlaneseq
      %v843 = vshrl.u32 %v842, 7
      %v844 = vsub.s32 %v841, %v843
      %v845 = vrot.slane %v824, %v844
      %v846 = vcombine.high %v831, %v831
      %v847 = vcombine.high %v845, %v845
      %v848 = vcombine.low %v755, %v746
      %v849 = vcombine.high %v755, %v746
      %v851 = vunpack.c.l.s4 1966171168
      %v852 = vunpack.c.0.s8 %v851
      %v853 = vlaneseq
      %v854 = vshrl.u32 %v853, 7
      %v855 = vsub.s32 %v852, %v854
      %v856 = vrot.slane %v848, %v855
      %v858 = vunpack.c.l.s4 1966171168
      %v859 = vunpack.c.0.s8 %v858
      %v860 = vlaneseq
      %v861 = vshrl.u32 %v860, 7
      %v862 = vsub.s32 %v859, %v861
      %v863 = vrot.slane %v849, %v862
      %v864 = vcombine.high %v856, %v856
      %v866 = vunpack.c.l.s4 1966171168
      %v867 = vunpack.c.0.s8 %v866
      %v868 = vlaneseq
      %v869 = vshrl.u32 %v868, 7
      %v870 = vsub.s32 %v867, %v869
      %v871 = vrot.slane %v856, %v870
      %v873 = vunpack.c.l.s4 1966171168
      %v874 = vunpack.c.0.s8 %v873
      %v875 = vlaneseq
      %v876 = vshrl.u32 %v875, 7
      %v877 = vsub.s32 %v874, %v876
      %v878 = vrot.slane %v863, %v877
      %v880 = vunpack.c.l.s4 1966171168
      %v881 = vunpack.c.0.s8 %v880
      %v882 = vlaneseq
      %v883 = vshrl.u32 %v882, 7
      %v884 = vsub.s32 %v881, %v883
      %v885 = vrot.slane %v864, %v884
      %v886 = vcombine.high %v871, %v871
      %v887 = vcombine.high %v885, %v885
      %v888 = vcombine.low %v757, %v747
      %v889 = vcombine.high %v757, %v747
      %v891 = vunpack.c.l.s4 1966171168
      %v892 = vunpack.c.0.s8 %v891
      %v893 = vlaneseq
      %v894 = vshrl.u32 %v893, 7
      %v895 = vsub.s32 %v892, %v894
      %v896 = vrot.slane %v888, %v895
      %v898 = vunpack.c.l.s4 1966171168
      %v899 = vunpack.c.0.s8 %v898
      %v900 = vlaneseq
      %v901 = vshrl.u32 %v900, 7
      %v902 = vsub.s32 %v899, %v901
      %v903 = vrot.slane %v889, %v902
      %v904 = vcombine.high %v896, %v896
      %v906 = vunpack.c.l.s4 1966171168
      %v907 = vunpack.c.0.s8 %v906
      %v908 = vlaneseq
      %v909 = vshrl.u32 %v908, 7
      %v910 = vsub.s32 %v907, %v909
      %v911 = vrot.slane %v896, %v910
      %v913 = vunpack.c.l.s4 1966171168
      %v914 = vunpack.c.0.s8 %v913
      %v915 = vlaneseq
      %v916 = vshrl.u32 %v915, 7
      %v917 = vsub.s32 %v914, %v916
      %v918 = vrot.slane %v903, %v917
      %v920 = vunpack.c.l.s4 1966171168
      %v921 = vunpack.c.0.s8 %v920
      %v922 = vlaneseq
      %v923 = vshrl.u32 %v922, 7
      %v924 = vsub.s32 %v921, %v923
      %v925 = vrot.slane %v904, %v924
      %v926 = vcombine.high %v911, %v911
      %v927 = vcombine.high %v925, %v925
      %v928 = vcombine.low %v759, %v748
      %v929 = vcombine.high %v759, %v748
      %v931 = vunpack.c.l.s4 1966171168
      %v932 = vunpack.c.0.s8 %v931
      %v933 = vlaneseq
      %v934 = vshrl.u32 %v933, 7
      %v935 = vsub.s32 %v932, %v934
      %v936 = vrot.slane %v928, %v935
      %v938 = vunpack.c.l.s4 1966171168
      %v939 = vunpack.c.0.s8 %v938
      %v940 = vlaneseq
      %v941 = vshrl.u32 %v940, 7
      %v942 = vsub.s32 %v939, %v941
      %v943 = vrot.slane %v929, %v942
      %v944 = vcombine.high %v936, %v936
      %v946 = vunpack.c.l.s4 1966171168
      %v947 = vunpack.c.0.s8 %v946
      %v948 = vlaneseq
      %v949 = vshrl.u32 %v948, 7
      %v950 = vsub.s32 %v947, %v949
      %v951 = vrot.slane %v936, %v950
      %v953 = vunpack.c.l.s4 1966171168
      %v954 = vunpack.c.0.s8 %v953
      %v955 = vlaneseq
      %v956 = vshrl.u32 %v955, 7
      %v957 = vsub.s32 %v954, %v956
      %v958 = vrot.slane %v943, %v957
      %v960 = vunpack.c.l.s4 1966171168
      %v961 = vunpack.c.0.s8 %v960
      %v962 = vlaneseq
      %v963 = vshrl.u32 %v962, 7
      %v964 = vsub.s32 %v961, %v963
      %v965 = vrot.slane %v944, %v964
      %v966 = vcombine.high %v951, %v951
      %v967 = vcombine.high %v965, %v965
      %v968 = vcombine.low %v761, %v749
      %v969 = vcombine.high %v761, %v749
      %v971 = vunpack.c.l.s4 1966171168
      %v972 = vunpack.c.0.s8 %v971
      %v973 = vlaneseq
      %v974 = vshrl.u32 %v973, 7
      %v975 = vsub.s32 %v972, %v974
      %v976 = vrot.slane %v968, %v975
      %v978 = vunpack.c.l.s4 1966171168
      %v979 = vunpack.c.0.s8 %v978
      %v980 = vlaneseq
      %v981 = vshrl.u32 %v980, 7
      %v982 = vsub.s32 %v979, %v981
      %v983 = vrot.slane %v969, %v982
      %v984 = vcombine.high %v976, %v976
      %v986 = vunpack.c.l.s4 1966171168
      %v987 = vunpack.c.0.s8 %v986
      %v988 = vlaneseq
      %v989 = vshrl.u32 %v988, 7
      %v990 = vsub.s32 %v987, %v989
      %v991 = vrot.slane %v976, %v990
      %v993 = vunpack.c.l.s4 1966171168
      %v994 = vunpack.c.0.s8 %v993
      %v995 = vlaneseq
      %v996 = vshrl.u32 %v995, 7
      %v997 = vsub.s32 %v994, %v996
      %v998 = vrot.slane %v983, %v997
      %v1000 = vunpack.c.l.s4 1966171168
      %v1001 = vunpack.c.0.s8 %v1000
      %v1002 = vlaneseq
      %v1003 = vshrl.u32 %v1002, 7
      %v1004 = vsub.s32 %v1001, %v1003
      %v1005 = vrot.slane %v984, %v1004
      %v1006 = vcombine.high %v991, %v991
      %v1007 = vcombine.high %v1005, %v1005
      %s1008 = scalar_lea.vmem %s1, 96
      %v1009 = vld [vmem:[%s1008] sm:$0xf]
      %v1010 = vld [vmem:[%s1008 + $0x4] sm:$0xf]
      %v1011 = vld [vmem:[%s1008 + $0x8] sm:$0xf]
      %v1012 = vld [vmem:[%s1008 + $0xc] sm:$0xf]
      %v1013 = vld [vmem:[%s1008 + $0x10] sm:$0xf]
      %v1014 = vld [vmem:[%s1008 + $0x14] sm:$0xf]
      %v1015 = vld [vmem:[%s1008 + $0x18] sm:$0xf]
      %v1016 = vld [vmem:[%s1008 + $0x1c] sm:$0xf]
      %v1017 = vld [vmem:[%s1008 + $0x20] sm:$0xf]
      %v1018 = vld [vmem:[%s1008 + $0x24] sm:$0xf]
      %v1019 = vld [vmem:[%s1008 + $0x28] sm:$0xf]
      %v1020 = vld [vmem:[%s1008 + $0x2c] sm:$0xf]
      %v1021 = vld [vmem:[%s1008 + $0x30] sm:$0xf]
      %v1022 = vld [vmem:[%s1008 + $0x34] sm:$0xf]
      %v1023 = vld [vmem:[%s1008 + $0x38] sm:$0xf]
      %v1024 = vld [vmem:[%s1008 + $0x3c] sm:$0xf]
      %v1025 = vld [vmem:[%s1008 + $0x40] sm:$0xf]
      %v1026 = vld [vmem:[%s1008 + $0x44] sm:$0xf]
      %v1027 = vld [vmem:[%s1008 + $0x48] sm:$0xf]
      %v1028 = vld [vmem:[%s1008 + $0x4c] sm:$0xf]
      %v1029 = vld [vmem:[%s1008 + $0x50] sm:$0xf]
      %v1030 = vld [vmem:[%s1008 + $0x54] sm:$0xf]
      %v1031 = vld [vmem:[%s1008 + $0x58] sm:$0xf]
      %v1032 = vld [vmem:[%s1008 + $0x5c] sm:$0xf]
      %v1033 = vcombine.low %v791, %v805
      %v1034 = vcombine.low %v806, %v807
      %v1035 = vcombine.low %v798, %v831
      %v1036 = vcombine.low %v845, %v846
      %v1038 = vunpack.c.l.s4 1966171168
      %v1039 = vunpack.c.0.s8 %v1038
      %v1040 = vlaneseq
      %v1041 = vshrl.u32 %v1040, 7
      %v1042 = vsub.s32 %v1039, %v1041
      %v1043 = vrot.slane %v1033, %v1042
      %v1045 = vunpack.c.l.s4 1966171168
      %v1046 = vunpack.c.0.s8 %v1045
      %v1047 = vlaneseq
      %v1048 = vshrl.u32 %v1047, 7
      %v1049 = vsub.s32 %v1046, %v1048
      %v1050 = vrot.slane %v1034, %v1049
      %v1052 = vunpack.c.l.s4 1966171168
      %v1053 = vunpack.c.0.s8 %v1052
      %v1054 = vlaneseq
      %v1055 = vshrl.u32 %v1054, 7
      %v1056 = vsub.s32 %v1053, %v1055
      %v1057 = vrot.slane %v1035, %v1056
      %v1059 = vunpack.c.l.s4 1966171168
      %v1060 = vunpack.c.0.s8 %v1059
      %v1061 = vlaneseq
      %v1062 = vshrl.u32 %v1061, 7
      %v1063 = vsub.s32 %v1060, %v1062
      %v1064 = vrot.slane %v1036, %v1063
      %v1065 = vcombine.low %v1043, %v1050
      %v1066 = vcombine.high %v1043, %v1050
      %v1067 = vcombine.low %v1057, %v1064
      %v1068 = vcombine.high %v1057, %v1064
      %v1070 = vunpack.c.l.s4 1966171168
      %v1071 = vunpack.c.0.s8 %v1070
      %v1072 = vlaneseq
      %v1073 = vshrl.u32 %v1072, 7
      %v1074 = vsub.s32 %v1071, %v1073
      %v1075 = vrot.slane %v1065, %v1074
      %v1077 = vunpack.c.l.s4 1966171168
      %v1078 = vunpack.c.0.s8 %v1077
      %v1079 = vlaneseq
      %v1080 = vshrl.u32 %v1079, 7
      %v1081 = vsub.s32 %v1078, %v1080
      %v1082 = vrot.slane %v1066, %v1081
      %v1084 = vunpack.c.l.s4 1966171168
      %v1085 = vunpack.c.0.s8 %v1084
      %v1086 = vlaneseq
      %v1087 = vshrl.u32 %v1086, 7
      %v1088 = vsub.s32 %v1085, %v1087
      %v1089 = vrot.slane %v1067, %v1088
      %v1091 = vunpack.c.l.s4 1966171168
      %v1092 = vunpack.c.0.s8 %v1091
      %v1093 = vlaneseq
      %v1094 = vshrl.u32 %v1093, 7
      %v1095 = vsub.s32 %v1092, %v1094
      %v1096 = vrot.slane %v1068, %v1095
      %v1097 = vcombine.low %v1075, %v1089
      %v1098 = vcombine.low %v1082, %v1096
      %v1099 = vcombine.low %v847, %v838
      %v1100 = vcombine.low %v871, %v885
      %v1101 = vcombine.low %v886, %v887
      %v1102 = vcombine.low %v878, %v911
      %v1104 = vunpack.c.l.s4 1966171168
      %v1105 = vunpack.c.0.s8 %v1104
      %v1106 = vlaneseq
      %v1107 = vshrl.u32 %v1106, 7
      %v1108 = vsub.s32 %v1105, %v1107
      %v1109 = vrot.slane %v1099, %v1108
      %v1111 = vunpack.c.l.s4 1966171168
      %v1112 = vunpack.c.0.s8 %v1111
      %v1113 = vlaneseq
      %v1114 = vshrl.u32 %v1113, 7
      %v1115 = vsub.s32 %v1112, %v1114
      %v1116 = vrot.slane %v1100, %v1115
      %v1118 = vunpack.c.l.s4 1966171168
      %v1119 = vunpack.c.0.s8 %v1118
      %v1120 = vlaneseq
      %v1121 = vshrl.u32 %v1120, 7
      %v1122 = vsub.s32 %v1119, %v1121
      %v1123 = vrot.slane %v1101, %v1122
      %v1125 = vunpack.c.l.s4 1966171168
      %v1126 = vunpack.c.0.s8 %v1125
      %v1127 = vlaneseq
      %v1128 = vshrl.u32 %v1127, 7
      %v1129 = vsub.s32 %v1126, %v1128
      %v1130 = vrot.slane %v1102, %v1129
      %v1131 = vcombine.low %v1109, %v1116
      %v1132 = vcombine.high %v1109, %v1116
      %v1133 = vcombine.low %v1123, %v1130
      %v1134 = vcombine.high %v1123, %v1130
      %v1136 = vunpack.c.l.s4 1966171168
      %v1137 = vunpack.c.0.s8 %v1136
      %v1138 = vlaneseq
      %v1139 = vshrl.u32 %v1138, 7
      %v1140 = vsub.s32 %v1137, %v1139
      %v1141 = vrot.slane %v1131, %v1140
      %v1143 = vunpack.c.l.s4 1966171168
      %v1144 = vunpack.c.0.s8 %v1143
      %v1145 = vlaneseq
      %v1146 = vshrl.u32 %v1145, 7
      %v1147 = vsub.s32 %v1144, %v1146
      %v1148 = vrot.slane %v1132, %v1147
      %v1150 = vunpack.c.l.s4 1966171168
      %v1151 = vunpack.c.0.s8 %v1150
      %v1152 = vlaneseq
      %v1153 = vshrl.u32 %v1152, 7
      %v1154 = vsub.s32 %v1151, %v1153
      %v1155 = vrot.slane %v1133, %v1154
      %v1157 = vunpack.c.l.s4 1966171168
      %v1158 = vunpack.c.0.s8 %v1157
      %v1159 = vlaneseq
      %v1160 = vshrl.u32 %v1159, 7
      %v1161 = vsub.s32 %v1158, %v1160
      %v1162 = vrot.slane %v1134, %v1161
      %v1163 = vcombine.low %v1141, %v1155
      %v1164 = vcombine.low %v1148, %v1162
      %v1165 = vcombine.low %v925, %v926
      %v1166 = vcombine.low %v927, %v918
      %v1167 = vcombine.low %v951, %v965
      %v1168 = vcombine.low %v966, %v967
      %v1170 = vunpack.c.l.s4 1966171168
      %v1171 = vunpack.c.0.s8 %v1170
      %v1172 = vlaneseq
      %v1173 = vshrl.u32 %v1172, 7
      %v1174 = vsub.s32 %v1171, %v1173
      %v1175 = vrot.slane %v1165, %v1174
      %v1177 = vunpack.c.l.s4 1966171168
      %v1178 = vunpack.c.0.s8 %v1177
      %v1179 = vlaneseq
      %v1180 = vshrl.u32 %v1179, 7
      %v1181 = vsub.s32 %v1178, %v1180
      %v1182 = vrot.slane %v1166, %v1181
      %v1184 = vunpack.c.l.s4 1966171168
      %v1185 = vunpack.c.0.s8 %v1184
      %v1186 = vlaneseq
      %v1187 = vshrl.u32 %v1186, 7
      %v1188 = vsub.s32 %v1185, %v1187
      %v1189 = vrot.slane %v1167, %v1188
      %v1191 = vunpack.c.l.s4 1966171168
      %v1192 = vunpack.c.0.s8 %v1191
      %v1193 = vlaneseq
      %v1194 = vshrl.u32 %v1193, 7
      %v1195 = vsub.s32 %v1192, %v1194
      %v1196 = vrot.slane %v1168, %v1195
      %v1197 = vcombine.low %v1175, %v1182
      %v1198 = vcombine.high %v1175, %v1182
      %v1199 = vcombine.low %v1189, %v1196
      %v1200 = vcombine.high %v1189, %v1196
      %v1202 = vunpack.c.l.s4 1966171168
      %v1203 = vunpack.c.0.s8 %v1202
      %v1204 = vlaneseq
      %v1205 = vshrl.u32 %v1204, 7
      %v1206 = vsub.s32 %v1203, %v1205
      %v1207 = vrot.slane %v1197, %v1206
      %v1209 = vunpack.c.l.s4 1966171168
      %v1210 = vunpack.c.0.s8 %v1209
      %v1211 = vlaneseq
      %v1212 = vshrl.u32 %v1211, 7
      %v1213 = vsub.s32 %v1210, %v1212
      %v1214 = vrot.slane %v1198, %v1213
      %v1216 = vunpack.c.l.s4 1966171168
      %v1217 = vunpack.c.0.s8 %v1216
      %v1218 = vlaneseq
      %v1219 = vshrl.u32 %v1218, 7
      %v1220 = vsub.s32 %v1217, %v1219
      %v1221 = vrot.slane %v1199, %v1220
      %v1223 = vunpack.c.l.s4 1966171168
      %v1224 = vunpack.c.0.s8 %v1223
      %v1225 = vlaneseq
      %v1226 = vshrl.u32 %v1225, 7
      %v1227 = vsub.s32 %v1224, %v1226
      %v1228 = vrot.slane %v1200, %v1227
      %v1229 = vcombine.low %v1207, %v1221
      %v1230 = vcombine.low %v1214, %v1228
      %v1231 = vcombine.low %v958, %v991
      %v1232 = vcombine.low %v1005, %v1006
      %v1233 = vcombine.low %v1007, %v998
      %v1235 = vunpack.c.l.s4 1966171168
      %v1236 = vunpack.c.0.s8 %v1235
      %v1237 = vlaneseq
      %v1238 = vshrl.u32 %v1237, 7
      %v1239 = vsub.s32 %v1236, %v1238
      %v1240 = vrot.slane %v1231, %v1239
      %v1242 = vunpack.c.l.s4 1966171168
      %v1243 = vunpack.c.0.s8 %v1242
      %v1244 = vlaneseq
      %v1245 = vshrl.u32 %v1244, 7
      %v1246 = vsub.s32 %v1243, %v1245
      %v1247 = vrot.slane %v1232, %v1246
      %v1249 = vunpack.c.l.s4 1966171168
      %v1250 = vunpack.c.0.s8 %v1249
      %v1251 = vlaneseq
      %v1252 = vshrl.u32 %v1251, 7
      %v1253 = vsub.s32 %v1250, %v1252
      %v1254 = vrot.slane %v1233, %v1253
      %v1255 = vcombine.low %v1240, %v1247
      %v1256 = vcombine.high %v1240, %v1247
      %v1257 = vcombine.high %v1254, %v1254
      %v1259 = vunpack.c.l.s4 1966171168
      %v1260 = vunpack.c.0.s8 %v1259
      %v1261 = vlaneseq
      %v1262 = vshrl.u32 %v1261, 7
      %v1263 = vsub.s32 %v1260, %v1262
      %v1264 = vrot.slane %v1255, %v1263
      %v1266 = vunpack.c.l.s4 1966171168
      %v1267 = vunpack.c.0.s8 %v1266
      %v1268 = vlaneseq
      %v1269 = vshrl.u32 %v1268, 7
      %v1270 = vsub.s32 %v1267, %v1269
      %v1271 = vrot.slane %v1256, %v1270
      %v1273 = vunpack.c.l.s4 1966171168
      %v1274 = vunpack.c.0.s8 %v1273
      %v1275 = vlaneseq
      %v1276 = vshrl.u32 %v1275, 7
      %v1277 = vsub.s32 %v1274, %v1276
      %v1278 = vrot.slane %v1254, %v1277
      %v1280 = vunpack.c.l.s4 1966171168
      %v1281 = vunpack.c.0.s8 %v1280
      %v1282 = vlaneseq
      %v1283 = vshrl.u32 %v1282, 7
      %v1284 = vsub.s32 %v1281, %v1283
      %v1285 = vrot.slane %v1257, %v1284
      %v1286 = vcombine.low %v1264, %v1278
      %v1287 = vcombine.low %v1271, %v1285
      %v1316 = vunpack.c.l.b16 %v1009
      %v1317 = vunpack.c.l.b16 %v1010
      %v1318 = vunpack.c.l.b16 %v1011
      %v1319 = vunpack.c.l.b16 %v1012
      %v1320 = vunpack.c.l.b16 %v1013
      %v1321 = vunpack.c.l.b16 %v1014
      %v1322 = vunpack.c.l.b16 %v1015
      %v1323 = vunpack.c.l.b16 %v1016
      %v1324 = vunpack.c.l.b16 %v1017
      %v1325 = vunpack.c.l.b16 %v1018
      %v1326 = vunpack.c.l.b16 %v1019
      %v1327 = vunpack.c.l.b16 %v1020
      %v1328 = vunpack.c.l.b16 %v1021
      %v1329 = vunpack.c.l.b16 %v1022
      %v1330 = vunpack.c.l.b16 %v1023
      %v1331 = vunpack.c.l.b16 %v1024
      %v1332 = vunpack.c.l.b16 %v1025
      %v1333 = vunpack.c.l.b16 %v1026
      %v1334 = vunpack.c.l.b16 %v1027
      %v1335 = vunpack.c.l.b16 %v1028
      %v1336 = vunpack.c.l.b16 %v1029
      %v1337 = vunpack.c.l.b16 %v1030
      %v1338 = vunpack.c.l.b16 %v1031
      %v1339 = vunpack.c.l.b16 %v1032
      %v1340 = vpack.c.b16 %v1317, %v1316
      %v1341 = vpack.c.b16 %v1319, %v1318
      %v1342 = vpack.c.b16 %v1321, %v1320
      %v1343 = vpack.c.b16 %v1323, %v1322
      %v1344 = vpack.c.b16 %v1325, %v1324
      %v1345 = vpack.c.b16 %v1327, %v1326
      %v1346 = vpack.c.b16 %v1329, %v1328
      %v1347 = vpack.c.b16 %v1331, %v1330
      %v1348 = vpack.c.b16 %v1333, %v1332
      %v1349 = vpack.c.b16 %v1335, %v1334
      %v1350 = vpack.c.b16 %v1337, %v1336
      %v1351 = vpack.c.b16 %v1339, %v1338
      %v1365 = vsel %vm364, %v1098, 0
      %v1368 = vsel %vm364, %v1164, 0
      %v1371 = vsel %vm364, %v1230, 0
      %v1374 = vsel %vm364, %v1287, 0
      %1376 = vmatprep.subr.bf16.mxu0 0
      %1377 = vmatpush1.bf16.msra.mxu0 %v1340
      %1378 = vmatprep.subr.bf16.mxu0 0
      %1379 = vmatpush1.bf16.msra.mxu0 %v1341
      %1380 = vmatprep.subr.bf16.mxu0 0
      %1381 = vmatpush1.bf16.msra.mxu0 %v1342
      %1382 = vmatprep.subr.bf16.mxu0 0
      %1383 = vmatpush1.bf16.msra.mxu0 %v1343
      %1384 = vmatprep.subr.bf16.mxu0 0
      %1385 = vmatpush1.bf16.msra.mxu0 %v1344
      %1386 = vmatprep.subr.bf16.mxu0 0
      %1387 = vmatpush1.bf16.msra.mxu0 %v1345
      %1388 = vmatprep.subr.bf16.mxu0 0
      %1389 = vmatpush1.bf16.msra.mxu0 %v1346
      %1390 = vmatprep.subr.bf16.mxu0 0
      %1391 = vmatpush1.bf16.msra.mxu0 %v1347
      %1392 = vmatprep.subr.bf16.mxu0 0
      %1393 = vmatpush1.bf16.msra.mxu0 %v1348
      %1394 = vmatprep.subr.bf16.mxu0 0
      %1395 = vmatpush1.bf16.msra.mxu0 %v1349
      %1396 = vmatprep.subr.bf16.mxu0 0
      %1397 = vmatpush1.bf16.msra.mxu0 %v1350
      %1398 = vmatprep.subr.bf16.mxu0 0
      %1399 = vmatpush1.bf16.msra.mxu0 %v1351
      %1400 = vmatprep.subr.bf16.mxu0 0
      %1401 = vmatpush1.bf16.msra.mxu0 0
      %1402 = vmatprep.subr.bf16.mxu0 0
      %1403 = vmatpush1.bf16.msra.mxu0 0
      %1404 = vmatprep.subr.bf16.mxu0 0
      %1405 = vmatpush1.bf16.msra.mxu0 0
      %1406 = vmatprep.subr.bf16.mxu0 0
      %1407 = vmatpush1.bf16.msra.mxu0 0
      %1408 = vmatprep.mubr.bf16.mxu0 %v1365
      %1409 = vmatmul.mubr.bf16.gmra.mrb[0].mxu0 %v1097
      %v1410 = vpop.f32.mrb[0].mxu0
      %v1411 = vadd.f32 0.0, %v1410
      %v1412 = vpop.f32.mrb[0].mxu0
      %v1413 = vpop.f32.mrb[0].mxu0
      %v1414 = vadd.f32 0.0, %v1413
      %v1415 = vpop.f32.mrb[0].mxu0
      %1416 = vmatprep.mubr.bf16.mxu0 %v1368
      %1417 = vmatmul.mubr.bf16.gmra.mrb[0].mxu0 %v1163
      %v1418 = vpop.f32.mrb[0].mxu0
      %v1419 = vadd.f32 0.0, %v1418
      %v1420 = vpop.f32.mrb[0].mxu0
      %v1421 = vpop.f32.mrb[0].mxu0
      %v1422 = vadd.f32 0.0, %v1421
      %v1423 = vpop.f32.mrb[0].mxu0
      %1424 = vmatprep.mubr.bf16.mxu0 %v1371
      %1425 = vmatmul.mubr.bf16.gmra.mrb[0].mxu0 %v1229
      %v1426 = vpop.f32.mrb[0].mxu0
      %v1427 = vadd.f32 0.0, %v1426
      %v1428 = vpop.f32.mrb[0].mxu0
      %v1429 = vpop.f32.mrb[0].mxu0
      %v1430 = vadd.f32 0.0, %v1429
      %v1431 = vpop.f32.mrb[0].mxu0
      %1432 = vmatprep.mubr.bf16.mxu0 %v1374
      %1433 = vmatmul.mubr.bf16.gmra.mrb[0].mxu0 %v1286
      %v1434 = vpop.f32.mrb[0].mxu0
      %v1435 = vadd.f32 0.0, %v1434
      %v1436 = vpop.f32.mrb[0].mxu0
      %v1437 = vpop.f32.mrb[0].mxu0
      %v1438 = vadd.f32 0.0, %v1437
      %v1439 = vpop.f32.mrb[0].mxu0
      %1440 = vdwg.mxu0
      %v1441 = vcombine.low %v406, %v420
      %v1442 = vcombine.low %v421, %v422
      %v1443 = vcombine.low %v413, %v446
      %v1444 = vcombine.low %v460, %v461
      %v1446 = vunpack.c.l.s4 1966171168
      %v1447 = vunpack.c.0.s8 %v1446
      %v1448 = vlaneseq
      %v1449 = vshrl.u32 %v1448, 7
      %v1450 = vsub.s32 %v1447, %v1449
      %v1451 = vrot.slane %v1441, %v1450
      %v1453 = vunpack.c.l.s4 1966171168
      %v1454 = vunpack.c.0.s8 %v1453
      %v1455 = vlaneseq
      %v1456 = vshrl.u32 %v1455, 7
      %v1457 = vsub.s32 %v1454, %v1456
      %v1458 = vrot.slane %v1442, %v1457
      %v1460 = vunpack.c.l.s4 1966171168
      %v1461 = vunpack.c.0.s8 %v1460
      %v1462 = vlaneseq
      %v1463 = vshrl.u32 %v1462, 7
      %v1464 = vsub.s32 %v1461, %v1463
      %v1465 = vrot.slane %v1443, %v1464
      %v1467 = vunpack.c.l.s4 1966171168
      %v1468 = vunpack.c.0.s8 %v1467
      %v1469 = vlaneseq
      %v1470 = vshrl.u32 %v1469, 7
      %v1471 = vsub.s32 %v1468, %v1470
      %v1472 = vrot.slane %v1444, %v1471
      %v1473 = vcombine.low %v1451, %v1458
      %v1474 = vcombine.high %v1451, %v1458
      %v1475 = vcombine.low %v1465, %v1472
      %v1476 = vcombine.high %v1465, %v1472
      %v1478 = vunpack.c.l.s4 1966171168
      %v1479 = vunpack.c.0.s8 %v1478
      %v1480 = vlaneseq
      %v1481 = vshrl.u32 %v1480, 7
      %v1482 = vsub.s32 %v1479, %v1481
      %v1483 = vrot.slane %v1473, %v1482
      %v1485 = vunpack.c.l.s4 1966171168
      %v1486 = vunpack.c.0.s8 %v1485
      %v1487 = vlaneseq
      %v1488 = vshrl.u32 %v1487, 7
      %v1489 = vsub.s32 %v1486, %v1488
      %v1490 = vrot.slane %v1474, %v1489
      %v1492 = vunpack.c.l.s4 1966171168
      %v1493 = vunpack.c.0.s8 %v1492
      %v1494 = vlaneseq
      %v1495 = vshrl.u32 %v1494, 7
      %v1496 = vsub.s32 %v1493, %v1495
      %v1497 = vrot.slane %v1475, %v1496
      %v1499 = vunpack.c.l.s4 1966171168
      %v1500 = vunpack.c.0.s8 %v1499
      %v1501 = vlaneseq
      %v1502 = vshrl.u32 %v1501, 7
      %v1503 = vsub.s32 %v1500, %v1502
      %v1504 = vrot.slane %v1476, %v1503
      %v1505 = vcombine.low %v1483, %v1497
      %v1506 = vcombine.low %v1490, %v1504
      %v1507 = vcombine.low %v462, %v453
      %v1508 = vcombine.low %v486, %v500
      %v1509 = vcombine.low %v501, %v502
      %v1510 = vcombine.low %v493, %v526
      %v1512 = vunpack.c.l.s4 1966171168
      %v1513 = vunpack.c.0.s8 %v1512
      %v1514 = vlaneseq
      %v1515 = vshrl.u32 %v1514, 7
      %v1516 = vsub.s32 %v1513, %v1515
      %v1517 = vrot.slane %v1507, %v1516
      %v1519 = vunpack.c.l.s4 1966171168
      %v1520 = vunpack.c.0.s8 %v1519
      %v1521 = vlaneseq
      %v1522 = vshrl.u32 %v1521, 7
      %v1523 = vsub.s32 %v1520, %v1522
      %v1524 = vrot.slane %v1508, %v1523
      %v1526 = vunpack.c.l.s4 1966171168
      %v1527 = vunpack.c.0.s8 %v1526
      %v1528 = vlaneseq
      %v1529 = vshrl.u32 %v1528, 7
      %v1530 = vsub.s32 %v1527, %v1529
      %v1531 = vrot.slane %v1509, %v1530
      %v1533 = vunpack.c.l.s4 1966171168
      %v1534 = vunpack.c.0.s8 %v1533
      %v1535 = vlaneseq
      %v1536 = vshrl.u32 %v1535, 7
      %v1537 = vsub.s32 %v1534, %v1536
      %v1538 = vrot.slane %v1510, %v1537
      %v1539 = vcombine.low %v1517, %v1524
      %v1540 = vcombine.high %v1517, %v1524
      %v1541 = vcombine.low %v1531, %v1538
      %v1542 = vcombine.high %v1531, %v1538
      %v1544 = vunpack.c.l.s4 1966171168
      %v1545 = vunpack.c.0.s8 %v1544
      %v1546 = vlaneseq
      %v1547 = vshrl.u32 %v1546, 7
      %v1548 = vsub.s32 %v1545, %v1547
      %v1549 = vrot.slane %v1539, %v1548
      %v1551 = vunpack.c.l.s4 1966171168
      %v1552 = vunpack.c.0.s8 %v1551
      %v1553 = vlaneseq
      %v1554 = vshrl.u32 %v1553, 7
      %v1555 = vsub.s32 %v1552, %v1554
      %v1556 = vrot.slane %v1540, %v1555
      %v1558 = vunpack.c.l.s4 1966171168
      %v1559 = vunpack.c.0.s8 %v1558
      %v1560 = vlaneseq
      %v1561 = vshrl.u32 %v1560, 7
      %v1562 = vsub.s32 %v1559, %v1561
      %v1563 = vrot.slane %v1541, %v1562
      %v1565 = vunpack.c.l.s4 1966171168
      %v1566 = vunpack.c.0.s8 %v1565
      %v1567 = vlaneseq
      %v1568 = vshrl.u32 %v1567, 7
      %v1569 = vsub.s32 %v1566, %v1568
      %v1570 = vrot.slane %v1542, %v1569
      %v1571 = vcombine.low %v1549, %v1563
      %v1572 = vcombine.low %v1556, %v1570
      %v1573 = vcombine.low %v540, %v541
      %v1574 = vcombine.low %v542, %v533
      %v1575 = vcombine.low %v566, %v580
      %v1576 = vcombine.low %v581, %v582
      %v1578 = vunpack.c.l.s4 1966171168
      %v1579 = vunpack.c.0.s8 %v1578
      %v1580 = vlaneseq
      %v1581 = vshrl.u32 %v1580, 7
      %v1582 = vsub.s32 %v1579, %v1581
      %v1583 = vrot.slane %v1573, %v1582
      %v1585 = vunpack.c.l.s4 1966171168
      %v1586 = vunpack.c.0.s8 %v1585
      %v1587 = vlaneseq
      %v1588 = vshrl.u32 %v1587, 7
      %v1589 = vsub.s32 %v1586, %v1588
      %v1590 = vrot.slane %v1574, %v1589
      %v1592 = vunpack.c.l.s4 1966171168
      %v1593 = vunpack.c.0.s8 %v1592
      %v1594 = vlaneseq
      %v1595 = vshrl.u32 %v1594, 7
      %v1596 = vsub.s32 %v1593, %v1595
      %v1597 = vrot.slane %v1575, %v1596
      %v1599 = vunpack.c.l.s4 1966171168
      %v1600 = vunpack.c.0.s8 %v1599
      %v1601 = vlaneseq
      %v1602 = vshrl.u32 %v1601, 7
      %v1603 = vsub.s32 %v1600, %v1602
      %v1604 = vrot.slane %v1576, %v1603
      %v1605 = vcombine.low %v1583, %v1590
      %v1606 = vcombine.high %v1583, %v1590
      %v1607 = vcombine.low %v1597, %v1604
      %v1608 = vcombine.high %v1597, %v1604
      %v1610 = vunpack.c.l.s4 1966171168
      %v1611 = vunpack.c.0.s8 %v1610
      %v1612 = vlaneseq
      %v1613 = vshrl.u32 %v1612, 7
      %v1614 = vsub.s32 %v1611, %v1613
      %v1615 = vrot.slane %v1605, %v1614
      %v1617 = vunpack.c.l.s4 1966171168
      %v1618 = vunpack.c.0.s8 %v1617
      %v1619 = vlaneseq
      %v1620 = vshrl.u32 %v1619, 7
      %v1621 = vsub.s32 %v1618, %v1620
      %v1622 = vrot.slane %v1606, %v1621
      %v1624 = vunpack.c.l.s4 1966171168
      %v1625 = vunpack.c.0.s8 %v1624
      %v1626 = vlaneseq
      %v1627 = vshrl.u32 %v1626, 7
      %v1628 = vsub.s32 %v1625, %v1627
      %v1629 = vrot.slane %v1607, %v1628
      %v1631 = vunpack.c.l.s4 1966171168
      %v1632 = vunpack.c.0.s8 %v1631
      %v1633 = vlaneseq
      %v1634 = vshrl.u32 %v1633, 7
      %v1635 = vsub.s32 %v1632, %v1634
      %v1636 = vrot.slane %v1608, %v1635
      %v1637 = vcombine.low %v1615, %v1629
      %v1638 = vcombine.low %v1622, %v1636
      %v1639 = vcombine.low %v573, %v606
      %v1640 = vcombine.low %v620, %v621
      %v1641 = vcombine.low %v622, %v613
      %v1643 = vunpack.c.l.s4 1966171168
      %v1644 = vunpack.c.0.s8 %v1643
      %v1645 = vlaneseq
      %v1646 = vshrl.u32 %v1645, 7
      %v1647 = vsub.s32 %v1644, %v1646
      %v1648 = vrot.slane %v1639, %v1647
      %v1650 = vunpack.c.l.s4 1966171168
      %v1651 = vunpack.c.0.s8 %v1650
      %v1652 = vlaneseq
      %v1653 = vshrl.u32 %v1652, 7
      %v1654 = vsub.s32 %v1651, %v1653
      %v1655 = vrot.slane %v1640, %v1654
      %v1657 = vunpack.c.l.s4 1966171168
      %v1658 = vunpack.c.0.s8 %v1657
      %v1659 = vlaneseq
      %v1660 = vshrl.u32 %v1659, 7
      %v1661 = vsub.s32 %v1658, %v1660
      %v1662 = vrot.slane %v1641, %v1661
      %v1663 = vcombine.low %v1648, %v1655
      %v1664 = vcombine.high %v1648, %v1655
      %v1665 = vcombine.high %v1662, %v1662
      %v1667 = vunpack.c.l.s4 1966171168
      %v1668 = vunpack.c.0.s8 %v1667
      %v1669 = vlaneseq
      %v1670 = vshrl.u32 %v1669, 7
      %v1671 = vsub.s32 %v1668, %v1670
      %v1672 = vrot.slane %v1663, %v1671
      %v1674 = vunpack.c.l.s4 1966171168
      %v1675 = vunpack.c.0.s8 %v1674
      %v1676 = vlaneseq
      %v1677 = vshrl.u32 %v1676, 7
      %v1678 = vsub.s32 %v1675, %v1677
      %v1679 = vrot.slane %v1664, %v1678
      %v1681 = vunpack.c.l.s4 1966171168
      %v1682 = vunpack.c.0.s8 %v1681
      %v1683 = vlaneseq
      %v1684 = vshrl.u32 %v1683, 7
      %v1685 = vsub.s32 %v1682, %v1684
      %v1686 = vrot.slane %v1662, %v1685
      %v1688 = vunpack.c.l.s4 1966171168
      %v1689 = vunpack.c.0.s8 %v1688
      %v1690 = vlaneseq
      %v1691 = vshrl.u32 %v1690, 7
      %v1692 = vsub.s32 %v1689, %v1691
      %v1693 = vrot.slane %v1665, %v1692
      %v1694 = vcombine.low %v1672, %v1686
      %v1695 = vcombine.low %v1679, %v1693
      %v1724 = vunpack.c.l.b16 %v623
      %v1725 = vunpack.c.l.b16 %v624
      %v1726 = vunpack.c.l.b16 %v625
      %v1727 = vunpack.c.l.b16 %v626
      %v1728 = vunpack.c.l.b16 %v627
      %v1729 = vunpack.c.l.b16 %v628
      %v1730 = vunpack.c.l.b16 %v629
      %v1731 = vunpack.c.l.b16 %v630
      %v1732 = vunpack.c.l.b16 %v631
      %v1733 = vunpack.c.l.b16 %v632
      %v1734 = vunpack.c.l.b16 %v633
      %v1735 = vunpack.c.l.b16 %v634
      %v1736 = vunpack.c.l.b16 %v635
      %v1737 = vunpack.c.l.b16 %v636
      %v1738 = vunpack.c.l.b16 %v637
      %v1739 = vunpack.c.l.b16 %v638
      %v1740 = vunpack.c.l.b16 %v639
      %v1741 = vunpack.c.l.b16 %v640
      %v1742 = vunpack.c.l.b16 %v641
      %v1743 = vunpack.c.l.b16 %v642
      %v1744 = vunpack.c.l.b16 %v643
      %v1745 = vunpack.c.l.b16 %v644
      %v1746 = vunpack.c.l.b16 %v645
      %v1747 = vunpack.c.l.b16 %v646
      %v1748 = vpack.c.b16 %v1725, %v1724
      %v1749 = vpack.c.b16 %v1727, %v1726
      %v1750 = vpack.c.b16 %v1729, %v1728
      %v1751 = vpack.c.b16 %v1731, %v1730
      %v1752 = vpack.c.b16 %v1733, %v1732
      %v1753 = vpack.c.b16 %v1735, %v1734
      %v1754 = vpack.c.b16 %v1737, %v1736
      %v1755 = vpack.c.b16 %v1739, %v1738
      %v1756 = vpack.c.b16 %v1741, %v1740
      %v1757 = vpack.c.b16 %v1743, %v1742
      %v1758 = vpack.c.b16 %v1745, %v1744
      %v1759 = vpack.c.b16 %v1747, %v1746
      %v1773 = vsel %vm364, %v1506, 0
      %v1776 = vsel %vm364, %v1572, 0
      %v1779 = vsel %vm364, %v1638, 0
      %v1782 = vsel %vm364, %v1695, 0
      %1784 = vmatprep.subr.bf16.mxu0 0
      %1785 = vmatpush1.bf16.msra.mxu0 %v1748
      %1786 = vmatprep.subr.bf16.mxu0 0
      %1787 = vmatpush1.bf16.msra.mxu0 %v1749
      %1788 = vmatprep.subr.bf16.mxu0 0
      %1789 = vmatpush1.bf16.msra.mxu0 %v1750
      %1790 = vmatprep.subr.bf16.mxu0 0
      %1791 = vmatpush1.bf16.msra.mxu0 %v1751
      %1792 = vmatprep.subr.bf16.mxu0 0
      %1793 = vmatpush1.bf16.msra.mxu0 %v1752
      %1794 = vmatprep.subr.bf16.mxu0 0
      %1795 = vmatpush1.bf16.msra.mxu0 %v1753
      %1796 = vmatprep.subr.bf16.mxu0 0
      %1797 = vmatpush1.bf16.msra.mxu0 %v1754
      %1798 = vmatprep.subr.bf16.mxu0 0
      %1799 = vmatpush1.bf16.msra.mxu0 %v1755
      %1800 = vmatprep.subr.bf16.mxu0 0
      %1801 = vmatpush1.bf16.msra.mxu0 %v1756
      %1802 = vmatprep.subr.bf16.mxu0 0
      %1803 = vmatpush1.bf16.msra.mxu0 %v1757
      %1804 = vmatprep.subr.bf16.mxu0 0
      %1805 = vmatpush1.bf16.msra.mxu0 %v1758
      %1806 = vmatprep.subr.bf16.mxu0 0
      %1807 = vmatpush1.bf16.msra.mxu0 %v1759
      %1808 = vmatprep.subr.bf16.mxu0 0
      %1809 = vmatpush1.bf16.msra.mxu0 0
      %1810 = vmatprep.subr.bf16.mxu0 0
      %1811 = vmatpush1.bf16.msra.mxu0 0
      %1812 = vmatprep.subr.bf16.mxu0 0
      %1813 = vmatpush1.bf16.msra.mxu0 0
      %1814 = vmatprep.subr.bf16.mxu0 0
      %1815 = vmatpush1.bf16.msra.mxu0 0
      %1816 = vmatprep.mubr.bf16.mxu0 %v1773
      %1817 = vmatmul.mubr.bf16.gmra.mrb[0].mxu0 %v1505
      %v1818 = vpop.f32.mrb[0].mxu0
      %v1819 = vadd.f32 %v1411, %v1818
      %v1820 = vpop.f32.mrb[0].mxu0
      %v1821 = vpop.f32.mrb[0].mxu0
      %v1822 = vadd.f32 %v1414, %v1821
      %v1823 = vpop.f32.mrb[0].mxu0
      %1824 = vmatprep.mubr.bf16.mxu0 %v1776
      %1825 = vmatmul.mubr.bf16.gmra.mrb[0].mxu0 %v1571
      %v1826 = vpop.f32.mrb[0].mxu0
      %v1827 = vadd.f32 %v1419, %v1826
      %v1828 = vpop.f32.mrb[0].mxu0
      %v1829 = vpop.f32.mrb[0].mxu0
      %v1830 = vadd.f32 %v1422, %v1829
      %v1831 = vpop.f32.mrb[0].mxu0
      %1832 = vmatprep.mubr.bf16.mxu0 %v1779
      %1833 = vmatmul.mubr.bf16.gmra.mrb[0].mxu0 %v1637
      %v1834 = vpop.f32.mrb[0].mxu0
      %v1835 = vadd.f32 %v1427, %v1834
      %v1836 = vpop.f32.mrb[0].mxu0
      %v1837 = vpop.f32.mrb[0].mxu0
      %v1838 = vadd.f32 %v1430, %v1837
      %v1839 = vpop.f32.mrb[0].mxu0
      %1840 = vmatprep.mubr.bf16.mxu0 %v1782
      %1841 = vmatmul.mubr.bf16.gmra.mrb[0].mxu0 %v1694
      %v1842 = vpop.f32.mrb[0].mxu0
      %v1843 = vadd.f32 %v1435, %v1842
      %v1844 = vpop.f32.mrb[0].mxu0
      %v1845 = vpop.f32.mrb[0].mxu0
      %v1846 = vadd.f32 %v1438, %v1845
      %v1847 = vpop.f32.mrb[0].mxu0
      %1848 = vdwg.mxu0
      %s1849 = scalar_lea.vmem %s251, 16
      %v1850 = vld [vmem:[%s1849] sm:$0xf]
      %v1851 = vld [vmem:[%s1849 + $0x4] sm:$0x3]
      %v1852 = vld [vmem:[%s1849 + $0x8] sm:$0xf]
      %v1853 = vld [vmem:[%s1849 + $0xc] sm:$0x3]
      %v1854 = vld [vmem:[%s1849 + $0x10] sm:$0xf]
      %v1855 = vld [vmem:[%s1849 + $0x14] sm:$0x3]
      %v1856 = vld [vmem:[%s1849 + $0x18] sm:$0xf]
      %v1857 = vld [vmem:[%s1849 + $0x1c] sm:$0x3]
      %v1858 = vld [vmem:[%s1849 + $0x20] sm:$0xf]
      %v1859 = vld [vmem:[%s1849 + $0x24] sm:$0x3]
      %v1860 = vld [vmem:[%s1849 + $0x28] sm:$0xf]
      %v1861 = vld [vmem:[%s1849 + $0x2c] sm:$0x3]
      %v1874 = vunpack.c.l.b16 %v1850
      %v1875 = vunpack.c.l.b16 %v1851
      %v1876 = vunpack.c.l.b16 %v1852
      %v1877 = vunpack.c.l.b16 %v1853
      %v1878 = vunpack.c.l.b16 %v1854
      %v1879 = vunpack.c.l.b16 %v1855
      %v1880 = vunpack.c.l.b16 %v1856
      %v1881 = vunpack.c.l.b16 %v1857
      %v1882 = vunpack.c.l.b16 %v1858
      %v1883 = vunpack.c.l.b16 %v1859
      %v1884 = vunpack.c.l.b16 %v1860
      %v1885 = vunpack.c.l.b16 %v1861
      %v1886 = vpack.c.b16 %v1875, %v1874
      %v1887 = vpack.c.b16 %v1877, %v1876
      %v1888 = vpack.c.b16 %v1879, %v1878
      %v1889 = vpack.c.b16 %v1881, %v1880
      %v1890 = vpack.c.b16 %v1883, %v1882
      %v1891 = vpack.c.b16 %v1885, %v1884
      %v1893 = vshrl.u32 %v1886, 16
      %v1895 = vshll.u32 %v1886, 16
      %v1897 = vrot.slane %v1895, 1
      %v1898 = vor.u32 %v1893, %v1897
      %v1900 = vshrl.u32 %v1887, 16
      %v1902 = vshll.u32 %v1887, 16
      %v1904 = vrot.slane %v1902, 1
      %v1905 = vor.u32 %v1900, %v1904
      %v1907 = vshrl.u32 %v1888, 16
      %v1909 = vshll.u32 %v1888, 16
      %v1911 = vrot.slane %v1909, 1
      %v1912 = vor.u32 %v1907, %v1911
      %v1914 = vshrl.u32 %v1889, 16
      %v1916 = vshll.u32 %v1889, 16
      %v1918 = vrot.slane %v1916, 1
      %v1919 = vor.u32 %v1914, %v1918
      %v1921 = vshrl.u32 %v1890, 16
      %v1923 = vshll.u32 %v1890, 16
      %v1925 = vrot.slane %v1923, 1
      %v1926 = vor.u32 %v1921, %v1925
      %v1928 = vshrl.u32 %v1891, 16
      %v1930 = vshll.u32 %v1891, 16
      %v1932 = vrot.slane %v1930, 1
      %v1933 = vor.u32 %v1928, %v1932
      %1934 = vrot.lane.b32.xlu0 %v1898, 64
      %v1935 = vpop.permute.xlu0 %1934
      %1936 = vrot.lane.b32.xlu0 %v1905, 64
      %v1937 = vpop.permute.xlu0 %1936
      %1938 = vrot.lane.b32.xlu0 %v1912, 64
      %v1939 = vpop.permute.xlu0 %1938
      %1940 = vrot.lane.b32.xlu0 %v1919, 64
      %v1941 = vpop.permute.xlu0 %1940
      %1942 = vrot.lane.b32.xlu0 %v1926, 64
      %v1943 = vpop.permute.xlu0 %1942
      %1944 = vrot.lane.b32.xlu0 %v1933, 64
      %v1945 = vpop.permute.xlu0 %1944
      %v1946 = vrot.slane %v1886, 1
      %v1947 = vrot.slane %v1887, 1
      %v1948 = vrot.slane %v1888, 1
      %v1949 = vrot.slane %v1889, 1
      %v1950 = vrot.slane %v1890, 1
      %v1951 = vrot.slane %v1891, 1
      %v1953 = vsel %vm364, %v1886, %v1935
      %v1955 = vsel %vm364, %v1887, %v1937
      %v1957 = vsel %vm364, %v1888, %v1939
      %v1959 = vsel %vm364, %v1889, %v1941
      %v1961 = vsel %vm364, %v1890, %v1943
      %v1963 = vsel %vm364, %v1891, %v1945
      %v1970 = vcombine.low %v1953, %v1946
      %v1971 = vcombine.high %v1953, %v1946
      %v1973 = vunpack.c.l.s4 1966171168
      %v1974 = vunpack.c.0.s8 %v1973
      %v1975 = vlaneseq
      %v1976 = vshrl.u32 %v1975, 7
      %v1977 = vsub.s32 %v1974, %v1976
      %v1978 = vrot.slane %v1970, %v1977
      %v1980 = vunpack.c.l.s4 1966171168
      %v1981 = vunpack.c.0.s8 %v1980
      %v1982 = vlaneseq
      %v1983 = vshrl.u32 %v1982, 7
      %v1984 = vsub.s32 %v1981, %v1983
      %v1985 = vrot.slane %v1971, %v1984
      %v1986 = vcombine.high %v1978, %v1978
      %v1988 = vunpack.c.l.s4 1966171168
      %v1989 = vunpack.c.0.s8 %v1988
      %v1990 = vlaneseq
      %v1991 = vshrl.u32 %v1990, 7
      %v1992 = vsub.s32 %v1989, %v1991
      %v1993 = vrot.slane %v1978, %v1992
      %v1995 = vunpack.c.l.s4 1966171168
      %v1996 = vunpack.c.0.s8 %v1995
      %v1997 = vlaneseq
      %v1998 = vshrl.u32 %v1997, 7
      %v1999 = vsub.s32 %v1996, %v1998
      %v2000 = vrot.slane %v1985, %v1999
      %v2002 = vunpack.c.l.s4 1966171168
      %v2003 = vunpack.c.0.s8 %v2002
      %v2004 = vlaneseq
      %v2005 = vshrl.u32 %v2004, 7
      %v2006 = vsub.s32 %v2003, %v2005
      %v2007 = vrot.slane %v1986, %v2006
      %v2008 = vcombine.high %v1993, %v1993
      %v2009 = vcombine.high %v2007, %v2007
      %v2010 = vcombine.low %v1955, %v1947
      %v2011 = vcombine.high %v1955, %v1947
      %v2013 = vunpack.c.l.s4 1966171168
      %v2014 = vunpack.c.0.s8 %v2013
      %v2015 = vlaneseq
      %v2016 = vshrl.u32 %v2015, 7
      %v2017 = vsub.s32 %v2014, %v2016
      %v2018 = vrot.slane %v2010, %v2017
      %v2020 = vunpack.c.l.s4 1966171168
      %v2021 = vunpack.c.0.s8 %v2020
      %v2022 = vlaneseq
      %v2023 = vshrl.u32 %v2022, 7
      %v2024 = vsub.s32 %v2021, %v2023
      %v2025 = vrot.slane %v2011, %v2024
      %v2026 = vcombine.high %v2018, %v2018
      %v2028 = vunpack.c.l.s4 1966171168
      %v2029 = vunpack.c.0.s8 %v2028
      %v2030 = vlaneseq
      %v2031 = vshrl.u32 %v2030, 7
      %v2032 = vsub.s32 %v2029, %v2031
      %v2033 = vrot.slane %v2018, %v2032
      %v2035 = vunpack.c.l.s4 1966171168
      %v2036 = vunpack.c.0.s8 %v2035
      %v2037 = vlaneseq
      %v2038 = vshrl.u32 %v2037, 7
      %v2039 = vsub.s32 %v2036, %v2038
      %v2040 = vrot.slane %v2025, %v2039
      %v2042 = vunpack.c.l.s4 1966171168
      %v2043 = vunpack.c.0.s8 %v2042
      %v2044 = vlaneseq
      %v2045 = vshrl.u32 %v2044, 7
      %v2046 = vsub.s32 %v2043, %v2045
      %v2047 = vrot.slane %v2026, %v2046
      %v2048 = vcombine.high %v2033, %v2033
      %v2049 = vcombine.high %v2047, %v2047
      %v2050 = vcombine.low %v1957, %v1948
      %v2051 = vcombine.high %v1957, %v1948
      %v2053 = vunpack.c.l.s4 1966171168
      %v2054 = vunpack.c.0.s8 %v2053
      %v2055 = vlaneseq
      %v2056 = vshrl.u32 %v2055, 7
      %v2057 = vsub.s32 %v2054, %v2056
      %v2058 = vrot.slane %v2050, %v2057
      %v2060 = vunpack.c.l.s4 1966171168
      %v2061 = vunpack.c.0.s8 %v2060
      %v2062 = vlaneseq
      %v2063 = vshrl.u32 %v2062, 7
      %v2064 = vsub.s32 %v2061, %v2063
      %v2065 = vrot.slane %v2051, %v2064
      %v2066 = vcombine.high %v2058, %v2058
      %v2068 = vunpack.c.l.s4 1966171168
      %v2069 = vunpack.c.0.s8 %v2068
      %v2070 = vlaneseq
      %v2071 = vshrl.u32 %v2070, 7
      %v2072 = vsub.s32 %v2069, %v2071
      %v2073 = vrot.slane %v2058, %v2072
      %v2075 = vunpack.c.l.s4 1966171168
      %v2076 = vunpack.c.0.s8 %v2075
      %v2077 = vlaneseq
      %v2078 = vshrl.u32 %v2077, 7
      %v2079 = vsub.s32 %v2076, %v2078
      %v2080 = vrot.slane %v2065, %v2079
      %v2082 = vunpack.c.l.s4 1966171168
      %v2083 = vunpack.c.0.s8 %v2082
      %v2084 = vlaneseq
      %v2085 = vshrl.u32 %v2084, 7
      %v2086 = vsub.s32 %v2083, %v2085
      %v2087 = vrot.slane %v2066, %v2086
      %v2088 = vcombine.high %v2073, %v2073
      %v2089 = vcombine.high %v2087, %v2087
      %v2090 = vcombine.low %v1959, %v1949
      %v2091 = vcombine.high %v1959, %v1949
      %v2093 = vunpack.c.l.s4 1966171168
      %v2094 = vunpack.c.0.s8 %v2093
      %v2095 = vlaneseq
      %v2096 = vshrl.u32 %v2095, 7
      %v2097 = vsub.s32 %v2094, %v2096
      %v2098 = vrot.slane %v2090, %v2097
      %v2100 = vunpack.c.l.s4 1966171168
      %v2101 = vunpack.c.0.s8 %v2100
      %v2102 = vlaneseq
      %v2103 = vshrl.u32 %v2102, 7
      %v2104 = vsub.s32 %v2101, %v2103
      %v2105 = vrot.slane %v2091, %v2104
      %v2106 = vcombine.high %v2098, %v2098
      %v2108 = vunpack.c.l.s4 1966171168
      %v2109 = vunpack.c.0.s8 %v2108
      %v2110 = vlaneseq
      %v2111 = vshrl.u32 %v2110, 7
      %v2112 = vsub.s32 %v2109, %v2111
      %v2113 = vrot.slane %v2098, %v2112
      %v2115 = vunpack.c.l.s4 1966171168
      %v2116 = vunpack.c.0.s8 %v2115
      %v2117 = vlaneseq
      %v2118 = vshrl.u32 %v2117, 7
      %v2119 = vsub.s32 %v2116, %v2118
      %v2120 = vrot.slane %v2105, %v2119
      %v2122 = vunpack.c.l.s4 1966171168
      %v2123 = vunpack.c.0.s8 %v2122
      %v2124 = vlaneseq
      %v2125 = vshrl.u32 %v2124, 7
      %v2126 = vsub.s32 %v2123, %v2125
      %v2127 = vrot.slane %v2106, %v2126
      %v2128 = vcombine.high %v2113, %v2113
      %v2129 = vcombine.high %v2127, %v2127
      %v2130 = vcombine.low %v1961, %v1950
      %v2131 = vcombine.high %v1961, %v1950
      %v2133 = vunpack.c.l.s4 1966171168
      %v2134 = vunpack.c.0.s8 %v2133
      %v2135 = vlaneseq
      %v2136 = vshrl.u32 %v2135, 7
      %v2137 = vsub.s32 %v2134, %v2136
      %v2138 = vrot.slane %v2130, %v2137
      %v2140 = vunpack.c.l.s4 1966171168
      %v2141 = vunpack.c.0.s8 %v2140
      %v2142 = vlaneseq
      %v2143 = vshrl.u32 %v2142, 7
      %v2144 = vsub.s32 %v2141, %v2143
      %v2145 = vrot.slane %v2131, %v2144
      %v2146 = vcombine.high %v2138, %v2138
      %v2148 = vunpack.c.l.s4 1966171168
      %v2149 = vunpack.c.0.s8 %v2148
      %v2150 = vlaneseq
      %v2151 = vshrl.u32 %v2150, 7
      %v2152 = vsub.s32 %v2149, %v2151
      %v2153 = vrot.slane %v2138, %v2152
      %v2155 = vunpack.c.l.s4 1966171168
      %v2156 = vunpack.c.0.s8 %v2155
      %v2157 = vlaneseq
      %v2158 = vshrl.u32 %v2157, 7
      %v2159 = vsub.s32 %v2156, %v2158
      %v2160 = vrot.slane %v2145, %v2159
      %v2162 = vunpack.c.l.s4 1966171168
      %v2163 = vunpack.c.0.s8 %v2162
      %v2164 = vlaneseq
      %v2165 = vshrl.u32 %v2164, 7
      %v2166 = vsub.s32 %v2163, %v2165
      %v2167 = vrot.slane %v2146, %v2166
      %v2168 = vcombine.high %v2153, %v2153
      %v2169 = vcombine.high %v2167, %v2167
      %v2170 = vcombine.low %v1963, %v1951
      %v2171 = vcombine.high %v1963, %v1951
      %v2173 = vunpack.c.l.s4 1966171168
      %v2174 = vunpack.c.0.s8 %v2173
      %v2175 = vlaneseq
      %v2176 = vshrl.u32 %v2175, 7
      %v2177 = vsub.s32 %v2174, %v2176
      %v2178 = vrot.slane %v2170, %v2177
      %v2180 = vunpack.c.l.s4 1966171168
      %v2181 = vunpack.c.0.s8 %v2180
      %v2182 = vlaneseq
      %v2183 = vshrl.u32 %v2182, 7
      %v2184 = vsub.s32 %v2181, %v2183
      %v2185 = vrot.slane %v2171, %v2184
      %v2186 = vcombine.high %v2178, %v2178
      %v2188 = vunpack.c.l.s4 1966171168
      %v2189 = vunpack.c.0.s8 %v2188
      %v2190 = vlaneseq
      %v2191 = vshrl.u32 %v2190, 7
      %v2192 = vsub.s32 %v2189, %v2191
      %v2193 = vrot.slane %v2178, %v2192
      %v2195 = vunpack.c.l.s4 1966171168
      %v2196 = vunpack.c.0.s8 %v2195
      %v2197 = vlaneseq
      %v2198 = vshrl.u32 %v2197, 7
      %v2199 = vsub.s32 %v2196, %v2198
      %v2200 = vrot.slane %v2185, %v2199
      %v2202 = vunpack.c.l.s4 1966171168
      %v2203 = vunpack.c.0.s8 %v2202
      %v2204 = vlaneseq
      %v2205 = vshrl.u32 %v2204, 7
      %v2206 = vsub.s32 %v2203, %v2205
      %v2207 = vrot.slane %v2186, %v2206
      %v2208 = vcombine.high %v2193, %v2193
      %v2209 = vcombine.high %v2207, %v2207
      %s2210 = scalar_lea.vmem %s1, 192
      %v2211 = vld [vmem:[%s2210] sm:$0xf]
      %v2212 = vld [vmem:[%s2210 + $0x4] sm:$0xf]
      %v2213 = vld [vmem:[%s2210 + $0x8] sm:$0xf]
      %v2214 = vld [vmem:[%s2210 + $0xc] sm:$0xf]
      %v2215 = vld [vmem:[%s2210 + $0x10] sm:$0xf]
      %v2216 = vld [vmem:[%s2210 + $0x14] sm:$0xf]
      %v2217 = vld [vmem:[%s2210 + $0x18] sm:$0xf]
      %v2218 = vld [vmem:[%s2210 + $0x1c] sm:$0xf]
      %v2219 = vld [vmem:[%s2210 + $0x20] sm:$0xf]
      %v2220 = vld [vmem:[%s2210 + $0x24] sm:$0xf]
      %v2221 = vld [vmem:[%s2210 + $0x28] sm:$0xf]
      %v2222 = vld [vmem:[%s2210 + $0x2c] sm:$0xf]
      %v2223 = vld [vmem:[%s2210 + $0x30] sm:$0xf]
      %v2224 = vld [vmem:[%s2210 + $0x34] sm:$0xf]
      %v2225 = vld [vmem:[%s2210 + $0x38] sm:$0xf]
      %v2226 = vld [vmem:[%s2210 + $0x3c] sm:$0xf]
      %v2227 = vld [vmem:[%s2210 + $0x40] sm:$0xf]
      %v2228 = vld [vmem:[%s2210 + $0x44] sm:$0xf]
      %v2229 = vld [vmem:[%s2210 + $0x48] sm:$0xf]
      %v2230 = vld [vmem:[%s2210 + $0x4c] sm:$0xf]
      %v2231 = vld [vmem:[%s2210 + $0x50] sm:$0xf]
      %v2232 = vld [vmem:[%s2210 + $0x54] sm:$0xf]
      %v2233 = vld [vmem:[%s2210 + $0x58] sm:$0xf]
      %v2234 = vld [vmem:[%s2210 + $0x5c] sm:$0xf]
      %v2235 = vcombine.low %v1993, %v2007
      %v2236 = vcombine.low %v2008, %v2009
      %v2237 = vcombine.low %v2000, %v2033
      %v2238 = vcombine.low %v2047, %v2048
      %v2240 = vunpack.c.l.s4 1966171168
      %v2241 = vunpack.c.0.s8 %v2240
      %v2242 = vlaneseq
      %v2243 = vshrl.u32 %v2242, 7
      %v2244 = vsub.s32 %v2241, %v2243
      %v2245 = vrot.slane %v2235, %v2244
      %v2247 = vunpack.c.l.s4 1966171168
      %v2248 = vunpack.c.0.s8 %v2247
      %v2249 = vlaneseq
      %v2250 = vshrl.u32 %v2249, 7
      %v2251 = vsub.s32 %v2248, %v2250
      %v2252 = vrot.slane %v2236, %v2251
      %v2254 = vunpack.c.l.s4 1966171168
      %v2255 = vunpack.c.0.s8 %v2254
      %v2256 = vlaneseq
      %v2257 = vshrl.u32 %v2256, 7
      %v2258 = vsub.s32 %v2255, %v2257
      %v2259 = vrot.slane %v2237, %v2258
      %v2261 = vunpack.c.l.s4 1966171168
      %v2262 = vunpack.c.0.s8 %v2261
      %v2263 = vlaneseq
      %v2264 = vshrl.u32 %v2263, 7
      %v2265 = vsub.s32 %v2262, %v2264
      %v2266 = vrot.slane %v2238, %v2265
      %v2267 = vcombine.low %v2245, %v2252
      %v2268 = vcombine.high %v2245, %v2252
      %v2269 = vcombine.low %v2259, %v2266
      %v2270 = vcombine.high %v2259, %v2266
      %v2272 = vunpack.c.l.s4 1966171168
      %v2273 = vunpack.c.0.s8 %v2272
      %v2274 = vlaneseq
      %v2275 = vshrl.u32 %v2274, 7
      %v2276 = vsub.s32 %v2273, %v2275
      %v2277 = vrot.slane %v2267, %v2276
      %v2279 = vunpack.c.l.s4 1966171168
      %v2280 = vunpack.c.0.s8 %v2279
      %v2281 = vlaneseq
      %v2282 = vshrl.u32 %v2281, 7
      %v2283 = vsub.s32 %v2280, %v2282
      %v2284 = vrot.slane %v2268, %v2283
      %v2286 = vunpack.c.l.s4 1966171168
      %v2287 = vunpack.c.0.s8 %v2286
      %v2288 = vlaneseq
      %v2289 = vshrl.u32 %v2288, 7
      %v2290 = vsub.s32 %v2287, %v2289
      %v2291 = vrot.slane %v2269, %v2290
      %v2293 = vunpack.c.l.s4 1966171168
      %v2294 = vunpack.c.0.s8 %v2293
      %v2295 = vlaneseq
      %v2296 = vshrl.u32 %v2295, 7
      %v2297 = vsub.s32 %v2294, %v2296
      %v2298 = vrot.slane %v2270, %v2297
      %v2299 = vcombine.low %v2277, %v2291
      %v2300 = vcombine.low %v2284, %v2298
      %v2301 = vcombine.low %v2049, %v2040
      %v2302 = vcombine.low %v2073, %v2087
      %v2303 = vcombine.low %v2088, %v2089
      %v2304 = vcombine.low %v2080, %v2113
      %v2306 = vunpack.c.l.s4 1966171168
      %v2307 = vunpack.c.0.s8 %v2306
      %v2308 = vlaneseq
      %v2309 = vshrl.u32 %v2308, 7
      %v2310 = vsub.s32 %v2307, %v2309
      %v2311 = vrot.slane %v2301, %v2310
      %v2313 = vunpack.c.l.s4 1966171168
      %v2314 = vunpack.c.0.s8 %v2313
      %v2315 = vlaneseq
      %v2316 = vshrl.u32 %v2315, 7
      %v2317 = vsub.s32 %v2314, %v2316
      %v2318 = vrot.slane %v2302, %v2317
      %v2320 = vunpack.c.l.s4 1966171168
      %v2321 = vunpack.c.0.s8 %v2320
      %v2322 = vlaneseq
      %v2323 = vshrl.u32 %v2322, 7
      %v2324 = vsub.s32 %v2321, %v2323
      %v2325 = vrot.slane %v2303, %v2324
      %v2327 = vunpack.c.l.s4 1966171168
      %v2328 = vunpack.c.0.s8 %v2327
      %v2329 = vlaneseq
      %v2330 = vshrl.u32 %v2329, 7
      %v2331 = vsub.s32 %v2328, %v2330
      %v2332 = vrot.slane %v2304, %v2331
      %v2333 = vcombine.low %v2311, %v2318
      %v2334 = vcombine.high %v2311, %v2318
      %v2335 = vcombine.low %v2325, %v2332
      %v2336 = vcombine.high %v2325, %v2332
      %v2338 = vunpack.c.l.s4 1966171168
      %v2339 = vunpack.c.0.s8 %v2338
      %v2340 = vlaneseq
      %v2341 = vshrl.u32 %v2340, 7
      %v2342 = vsub.s32 %v2339, %v2341
      %v2343 = vrot.slane %v2333, %v2342
      %v2345 = vunpack.c.l.s4 1966171168
      %v2346 = vunpack.c.0.s8 %v2345
      %v2347 = vlaneseq
      %v2348 = vshrl.u32 %v2347, 7
      %v2349 = vsub.s32 %v2346, %v2348
      %v2350 = vrot.slane %v2334, %v2349
      %v2352 = vunpack.c.l.s4 1966171168
      %v2353 = vunpack.c.0.s8 %v2352
      %v2354 = vlaneseq
      %v2355 = vshrl.u32 %v2354, 7
      %v2356 = vsub.s32 %v2353, %v2355
      %v2357 = vrot.slane %v2335, %v2356
      %v2359 = vunpack.c.l.s4 1966171168
      %v2360 = vunpack.c.0.s8 %v2359
      %v2361 = vlaneseq
      %v2362 = vshrl.u32 %v2361, 7
      %v2363 = vsub.s32 %v2360, %v2362
      %v2364 = vrot.slane %v2336, %v2363
      %v2365 = vcombine.low %v2343, %v2357
      %v2366 = vcombine.low %v2350, %v2364
      %v2367 = vcombine.low %v2127, %v2128
      %v2368 = vcombine.low %v2129, %v2120
      %v2369 = vcombine.low %v2153, %v2167
      %v2370 = vcombine.low %v2168, %v2169
      %v2372 = vunpack.c.l.s4 1966171168
      %v2373 = vunpack.c.0.s8 %v2372
      %v2374 = vlaneseq
      %v2375 = vshrl.u32 %v2374, 7
      %v2376 = vsub.s32 %v2373, %v2375
      %v2377 = vrot.slane %v2367, %v2376
      %v2379 = vunpack.c.l.s4 1966171168
      %v2380 = vunpack.c.0.s8 %v2379
      %v2381 = vlaneseq
      %v2382 = vshrl.u32 %v2381, 7
      %v2383 = vsub.s32 %v2380, %v2382
      %v2384 = vrot.slane %v2368, %v2383
      %v2386 = vunpack.c.l.s4 1966171168
      %v2387 = vunpack.c.0.s8 %v2386
      %v2388 = vlaneseq
      %v2389 = vshrl.u32 %v2388, 7
      %v2390 = vsub.s32 %v2387, %v2389
      %v2391 = vrot.slane %v2369, %v2390
      %v2393 = vunpack.c.l.s4 1966171168
      %v2394 = vunpack.c.0.s8 %v2393
      %v2395 = vlaneseq
      %v2396 = vshrl.u32 %v2395, 7
      %v2397 = vsub.s32 %v2394, %v2396
      %v2398 = vrot.slane %v2370, %v2397
      %v2399 = vcombine.low %v2377, %v2384
      %v2400 = vcombine.high %v2377, %v2384
      %v2401 = vcombine.low %v2391, %v2398
      %v2402 = vcombine.high %v2391, %v2398
      %v2404 = vunpack.c.l.s4 1966171168
      %v2405 = vunpack.c.0.s8 %v2404
      %v2406 = vlaneseq
      %v2407 = vshrl.u32 %v2406, 7
      %v2408 = vsub.s32 %v2405, %v2407
      %v2409 = vrot.slane %v2399, %v2408
      %v2411 = vunpack.c.l.s4 1966171168
      %v2412 = vunpack.c.0.s8 %v2411
      %v2413 = vlaneseq
      %v2414 = vshrl.u32 %v2413, 7
      %v2415 = vsub.s32 %v2412, %v2414
      %v2416 = vrot.slane %v2400, %v2415
      %v2418 = vunpack.c.l.s4 1966171168
      %v2419 = vunpack.c.0.s8 %v2418
      %v2420 = vlaneseq
      %v2421 = vshrl.u32 %v2420, 7
      %v2422 = vsub.s32 %v2419, %v2421
      %v2423 = vrot.slane %v2401, %v2422
      %v2425 = vunpack.c.l.s4 1966171168
      %v2426 = vunpack.c.0.s8 %v2425
      %v2427 = vlaneseq
      %v2428 = vshrl.u32 %v2427, 7
      %v2429 = vsub.s32 %v2426, %v2428
      %v2430 = vrot.slane %v2402, %v2429
      %v2431 = vcombine.low %v2409, %v2423
      %v2432 = vcombine.low %v2416, %v2430
      %v2433 = vcombine.low %v2160, %v2193
      %v2434 = vcombine.low %v2207, %v2208
      %v2435 = vcombine.low %v2209, %v2200
      %v2437 = vunpack.c.l.s4 1966171168
      %v2438 = vunpack.c.0.s8 %v2437
      %v2439 = vlaneseq
      %v2440 = vshrl.u32 %v2439, 7
      %v2441 = vsub.s32 %v2438, %v2440
      %v2442 = vrot.slane %v2433, %v2441
      %v2444 = vunpack.c.l.s4 1966171168
      %v2445 = vunpack.c.0.s8 %v2444
      %v2446 = vlaneseq
      %v2447 = vshrl.u32 %v2446, 7
      %v2448 = vsub.s32 %v2445, %v2447
      %v2449 = vrot.slane %v2434, %v2448
      %v2451 = vunpack.c.l.s4 1966171168
      %v2452 = vunpack.c.0.s8 %v2451
      %v2453 = vlaneseq
      %v2454 = vshrl.u32 %v2453, 7
      %v2455 = vsub.s32 %v2452, %v2454
      %v2456 = vrot.slane %v2435, %v2455
      %v2457 = vcombine.low %v2442, %v2449
      %v2458 = vcombine.high %v2442, %v2449
      %v2459 = vcombine.high %v2456, %v2456
      %v2461 = vunpack.c.l.s4 1966171168
      %v2462 = vunpack.c.0.s8 %v2461
      %v2463 = vlaneseq
      %v2464 = vshrl.u32 %v2463, 7
      %v2465 = vsub.s32 %v2462, %v2464
      %v2466 = vrot.slane %v2457, %v2465
      %v2468 = vunpack.c.l.s4 1966171168
      %v2469 = vunpack.c.0.s8 %v2468
      %v2470 = vlaneseq
      %v2471 = vshrl.u32 %v2470, 7
      %v2472 = vsub.s32 %v2469, %v2471
      %v2473 = vrot.slane %v2458, %v2472
      %v2475 = vunpack.c.l.s4 1966171168
      %v2476 = vunpack.c.0.s8 %v2475
      %v2477 = vlaneseq
      %v2478 = vshrl.u32 %v2477, 7
      %v2479 = vsub.s32 %v2476, %v2478
      %v2480 = vrot.slane %v2456, %v2479
      %v2482 = vunpack.c.l.s4 1966171168
      %v2483 = vunpack.c.0.s8 %v2482
      %v2484 = vlaneseq
      %v2485 = vshrl.u32 %v2484, 7
      %v2486 = vsub.s32 %v2483, %v2485
      %v2487 = vrot.slane %v2459, %v2486
      %v2488 = vcombine.low %v2466, %v2480
      %v2489 = vcombine.low %v2473, %v2487
      %v2518 = vunpack.c.l.b16 %v2211
      %v2519 = vunpack.c.l.b16 %v2212
      %v2520 = vunpack.c.l.b16 %v2213
      %v2521 = vunpack.c.l.b16 %v2214
      %v2522 = vunpack.c.l.b16 %v2215
      %v2523 = vunpack.c.l.b16 %v2216
      %v2524 = vunpack.c.l.b16 %v2217
      %v2525 = vunpack.c.l.b16 %v2218
      %v2526 = vunpack.c.l.b16 %v2219
      %v2527 = vunpack.c.l.b16 %v2220
      %v2528 = vunpack.c.l.b16 %v2221
      %v2529 = vunpack.c.l.b16 %v2222
      %v2530 = vunpack.c.l.b16 %v2223
      %v2531 = vunpack.c.l.b16 %v2224
      %v2532 = vunpack.c.l.b16 %v2225
      %v2533 = vunpack.c.l.b16 %v2226
      %v2534 = vunpack.c.l.b16 %v2227
      %v2535 = vunpack.c.l.b16 %v2228
      %v2536 = vunpack.c.l.b16 %v2229
      %v2537 = vunpack.c.l.b16 %v2230
      %v2538 = vunpack.c.l.b16 %v2231
      %v2539 = vunpack.c.l.b16 %v2232
      %v2540 = vunpack.c.l.b16 %v2233
      %v2541 = vunpack.c.l.b16 %v2234
      %v2542 = vpack.c.b16 %v2519, %v2518
      %v2543 = vpack.c.b16 %v2521, %v2520
      %v2544 = vpack.c.b16 %v2523, %v2522
      %v2545 = vpack.c.b16 %v2525, %v2524
      %v2546 = vpack.c.b16 %v2527, %v2526
      %v2547 = vpack.c.b16 %v2529, %v2528
      %v2548 = vpack.c.b16 %v2531, %v2530
      %v2549 = vpack.c.b16 %v2533, %v2532
      %v2550 = vpack.c.b16 %v2535, %v2534
      %v2551 = vpack.c.b16 %v2537, %v2536
      %v2552 = vpack.c.b16 %v2539, %v2538
      %v2553 = vpack.c.b16 %v2541, %v2540
      %v2567 = vsel %vm364, %v2300, 0
      %v2570 = vsel %vm364, %v2366, 0
      %v2573 = vsel %vm364, %v2432, 0
      %v2576 = vsel %vm364, %v2489, 0
      %2578 = vmatprep.subr.bf16.mxu0 0
      %2579 = vmatpush1.bf16.msra.mxu0 %v2542
      %2580 = vmatprep.subr.bf16.mxu0 0
      %2581 = vmatpush1.bf16.msra.mxu0 %v2543
      %2582 = vmatprep.subr.bf16.mxu0 0
      %2583 = vmatpush1.bf16.msra.mxu0 %v2544
      %2584 = vmatprep.subr.bf16.mxu0 0
      %2585 = vmatpush1.bf16.msra.mxu0 %v2545
      %2586 = vmatprep.subr.bf16.mxu0 0
      %2587 = vmatpush1.bf16.msra.mxu0 %v2546
      %2588 = vmatprep.subr.bf16.mxu0 0
      %2589 = vmatpush1.bf16.msra.mxu0 %v2547
      %2590 = vmatprep.subr.bf16.mxu0 0
      %2591 = vmatpush1.bf16.msra.mxu0 %v2548
      %2592 = vmatprep.subr.bf16.mxu0 0
      %2593 = vmatpush1.bf16.msra.mxu0 %v2549
      %2594 = vmatprep.subr.bf16.mxu0 0
      %2595 = vmatpush1.bf16.msra.mxu0 %v2550
      %2596 = vmatprep.subr.bf16.mxu0 0
      %2597 = vmatpush1.bf16.msra.mxu0 %v2551
      %2598 = vmatprep.subr.bf16.mxu0 0
      %2599 = vmatpush1.bf16.msra.mxu0 %v2552
      %2600 = vmatprep.subr.bf16.mxu0 0
      %2601 = vmatpush1.bf16.msra.mxu0 %v2553
      %2602 = vmatprep.subr.bf16.mxu0 0
      %2603 = vmatpush1.bf16.msra.mxu0 0
      %2604 = vmatprep.subr.bf16.mxu0 0
      %2605 = vmatpush1.bf16.msra.mxu0 0
      %2606 = vmatprep.subr.bf16.mxu0 0
      %2607 = vmatpush1.bf16.msra.mxu0 0
      %2608 = vmatprep.subr.bf16.mxu0 0
      %2609 = vmatpush1.bf16.msra.mxu0 0
      %2610 = vmatprep.mubr.bf16.mxu0 %v2567
      %2611 = vmatmul.mubr.bf16.gmra.mrb[0].mxu0 %v2299
      %v2612 = vpop.f32.mrb[0].mxu0
      %v2613 = vadd.f32 0.0, %v2612
      %v2614 = vpop.f32.mrb[0].mxu0
      %v2615 = vpop.f32.mrb[0].mxu0
      %v2616 = vadd.f32 0.0, %v2615
      %v2617 = vpop.f32.mrb[0].mxu0
      %2618 = vmatprep.mubr.bf16.mxu0 %v2570
      %2619 = vmatmul.mubr.bf16.gmra.mrb[0].mxu0 %v2365
      %v2620 = vpop.f32.mrb[0].mxu0
      %v2621 = vadd.f32 0.0, %v2620
      %v2622 = vpop.f32.mrb[0].mxu0
      %v2623 = vpop.f32.mrb[0].mxu0
      %v2624 = vadd.f32 0.0, %v2623
      %v2625 = vpop.f32.mrb[0].mxu0
      %2626 = vmatprep.mubr.bf16.mxu0 %v2573
      %2627 = vmatmul.mubr.bf16.gmra.mrb[0].mxu0 %v2431
      %v2628 = vpop.f32.mrb[0].mxu0
      %v2629 = vadd.f32 0.0, %v2628
      %v2630 = vpop.f32.mrb[0].mxu0
      %v2631 = vpop.f32.mrb[0].mxu0
      %v2632 = vadd.f32 0.0, %v2631
      %v2633 = vpop.f32.mrb[0].mxu0
      %2634 = vmatprep.mubr.bf16.mxu0 %v2576
      %2635 = vmatmul.mubr.bf16.gmra.mrb[0].mxu0 %v2488
      %v2636 = vpop.f32.mrb[0].mxu0
      %v2637 = vadd.f32 0.0, %v2636
      %v2638 = vpop.f32.mrb[0].mxu0
      %v2639 = vpop.f32.mrb[0].mxu0
      %v2640 = vadd.f32 0.0, %v2639
      %v2641 = vpop.f32.mrb[0].mxu0
      %2642 = vdwg.mxu0
      %v2643 = vadd.f32 %v1819, %v2613
      %v2644 = vadd.f32 %v1822, %v2616
      %v2645 = vadd.f32 %v1827, %v2621
      %v2646 = vadd.f32 %v1830, %v2624
      %v2647 = vadd.f32 %v1835, %v2629
      %v2648 = vadd.f32 %v1838, %v2632
      %v2649 = vadd.f32 %v1843, %v2637
      %v2650 = vadd.f32 %v1846, %v2640
      %v2659 = vcombine.high %v2643, %v2643
      %v2661 = vunpack.c.l.s4 1983009808
      %v2662 = vunpack.c.0.s8 %v2661
      %v2663 = vlaneseq
      %v2664 = vshrl.u32 %v2663, 7
      %v2665 = vsub.s32 %v2662, %v2664
      %v2666 = vrot.slane %v2643, %v2665
      %v2668 = vunpack.c.l.s4 1983009808
      %v2669 = vunpack.c.0.s8 %v2668
      %v2670 = vlaneseq
      %v2671 = vshrl.u32 %v2670, 7
      %v2672 = vsub.s32 %v2669, %v2671
      %v2673 = vrot.slane %v2659, %v2672
      %v2674 = vcombine.high %v2666, %v2666
      %v2675 = vcombine.high %v2673, %v2673
      %v2676 = vcombine.high %v2644, %v2644
      %v2678 = vunpack.c.l.s4 1983009808
      %v2679 = vunpack.c.0.s8 %v2678
      %v2680 = vlaneseq
      %v2681 = vshrl.u32 %v2680, 7
      %v2682 = vsub.s32 %v2679, %v2681
      %v2683 = vrot.slane %v2644, %v2682
      %v2685 = vunpack.c.l.s4 1983009808
      %v2686 = vunpack.c.0.s8 %v2685
      %v2687 = vlaneseq
      %v2688 = vshrl.u32 %v2687, 7
      %v2689 = vsub.s32 %v2686, %v2688
      %v2690 = vrot.slane %v2676, %v2689
      %v2691 = vcombine.high %v2683, %v2683
      %v2692 = vcombine.high %v2690, %v2690
      %v2693 = vcombine.high %v2645, %v2645
      %v2695 = vunpack.c.l.s4 1983009808
      %v2696 = vunpack.c.0.s8 %v2695
      %v2697 = vlaneseq
      %v2698 = vshrl.u32 %v2697, 7
      %v2699 = vsub.s32 %v2696, %v2698
      %v2700 = vrot.slane %v2645, %v2699
      %v2702 = vunpack.c.l.s4 1983009808
      %v2703 = vunpack.c.0.s8 %v2702
      %v2704 = vlaneseq
      %v2705 = vshrl.u32 %v2704, 7
      %v2706 = vsub.s32 %v2703, %v2705
      %v2707 = vrot.slane %v2693, %v2706
      %v2708 = vcombine.high %v2700, %v2700
      %v2709 = vcombine.high %v2707, %v2707
      %v2710 = vcombine.high %v2646, %v2646
      %v2712 = vunpack.c.l.s4 1983009808
      %v2713 = vunpack.c.0.s8 %v2712
      %v2714 = vlaneseq
      %v2715 = vshrl.u32 %v2714, 7
      %v2716 = vsub.s32 %v2713, %v2715
      %v2717 = vrot.slane %v2646, %v2716
      %v2719 = vunpack.c.l.s4 1983009808
      %v2720 = vunpack.c.0.s8 %v2719
      %v2721 = vlaneseq
      %v2722 = vshrl.u32 %v2721, 7
      %v2723 = vsub.s32 %v2720, %v2722
      %v2724 = vrot.slane %v2710, %v2723
      %v2725 = vcombine.high %v2717, %v2717
      %v2726 = vcombine.high %v2724, %v2724
      %v2727 = vcombine.high %v2647, %v2647
      %v2729 = vunpack.c.l.s4 1983009808
      %v2730 = vunpack.c.0.s8 %v2729
      %v2731 = vlaneseq
      %v2732 = vshrl.u32 %v2731, 7
      %v2733 = vsub.s32 %v2730, %v2732
      %v2734 = vrot.slane %v2647, %v2733
      %v2736 = vunpack.c.l.s4 1983009808
      %v2737 = vunpack.c.0.s8 %v2736
      %v2738 = vlaneseq
      %v2739 = vshrl.u32 %v2738, 7
      %v2740 = vsub.s32 %v2737, %v2739
      %v2741 = vrot.slane %v2727, %v2740
      %v2742 = vcombine.high %v2734, %v2734
      %v2743 = vcombine.high %v2741, %v2741
      %v2744 = vcombine.high %v2648, %v2648
      %v2746 = vunpack.c.l.s4 1983009808
      %v2747 = vunpack.c.0.s8 %v2746
      %v2748 = vlaneseq
      %v2749 = vshrl.u32 %v2748, 7
      %v2750 = vsub.s32 %v2747, %v2749
      %v2751 = vrot.slane %v2648, %v2750
      %v2753 = vunpack.c.l.s4 1983009808
      %v2754 = vunpack.c.0.s8 %v2753
      %v2755 = vlaneseq
      %v2756 = vshrl.u32 %v2755, 7
      %v2757 = vsub.s32 %v2754, %v2756
      %v2758 = vrot.slane %v2744, %v2757
      %v2759 = vcombine.high %v2751, %v2751
      %v2760 = vcombine.high %v2758, %v2758
      %v2761 = vcombine.high %v2649, %v2649
      %v2763 = vunpack.c.l.s4 1983009808
      %v2764 = vunpack.c.0.s8 %v2763
      %v2765 = vlaneseq
      %v2766 = vshrl.u32 %v2765, 7
      %v2767 = vsub.s32 %v2764, %v2766
      %v2768 = vrot.slane %v2649, %v2767
      %v2770 = vunpack.c.l.s4 1983009808
      %v2771 = vunpack.c.0.s8 %v2770
      %v2772 = vlaneseq
      %v2773 = vshrl.u32 %v2772, 7
      %v2774 = vsub.s32 %v2771, %v2773
      %v2775 = vrot.slane %v2761, %v2774
      %v2776 = vcombine.high %v2768, %v2768
      %v2777 = vcombine.high %v2775, %v2775
      %v2779 = vunpack.c.l.s4 1983009808
      %v2780 = vunpack.c.0.s8 %v2779
      %v2781 = vlaneseq
      %v2782 = vshrl.u32 %v2781, 7
      %v2783 = vsub.s32 %v2780, %v2782
      %v2784 = vrot.slane %v2650, %v2783
      %v2785 = vcombine.high %v2784, %v2784
      %v2816 = vld [vmem:[%s2] sm:$0x1]
      %v2818 = vlaneseq
      %v2819 = vshrl.u32 %v2818, 7
      %v2820 = vsub.s32 0, %v2819
      %v2821 = vrot.slane %v2816, %v2820
      %v2822 = vcombine.high %v2821, %v2821
      %v2824 = vunpack.c.l.s4 1983009808
      %v2825 = vunpack.c.0.s8 %v2824
      %v2826 = vlaneseq
      %v2827 = vshrl.u32 %v2826, 7
      %v2828 = vsub.s32 %v2825, %v2827
      %v2829 = vrot.slane %v2821, %v2828
      %v2831 = vunpack.c.l.s4 1983009808
      %v2832 = vunpack.c.0.s8 %v2831
      %v2833 = vlaneseq
      %v2834 = vshrl.u32 %v2833, 7
      %v2835 = vsub.s32 %v2832, %v2834
      %v2836 = vrot.slane %v2822, %v2835
      %v2837 = vcombine.high %v2829, %v2829
      %v2838 = vcombine.high %v2836, %v2836
      %v2843 = vadd.f32 %v2666, %v2829
      %v2844 = vadd.f32 %v2674, %v2837
      %v2845 = vadd.f32 %v2673, %v2836
      %v2846 = vadd.f32 %v2675, %v2838
      %v2847 = vadd.f32 %v2683, %v2829
      %v2848 = vadd.f32 %v2691, %v2829
      %v2849 = vadd.f32 %v2690, %v2837
      %v2850 = vadd.f32 %v2692, %v2836
      %v2851 = vadd.f32 %v2700, %v2838
      %v2852 = vadd.f32 %v2708, %v2829
      %v2853 = vadd.f32 %v2707, %v2829
      %v2854 = vadd.f32 %v2709, %v2837
      %v2855 = vadd.f32 %v2717, %v2836
      %v2856 = vadd.f32 %v2725, %v2838
      %v2857 = vadd.f32 %v2724, %v2829
      %v2858 = vadd.f32 %v2726, %v2829
      %v2859 = vadd.f32 %v2734, %v2837
      %v2860 = vadd.f32 %v2742, %v2836
      %v2861 = vadd.f32 %v2741, %v2838
      %v2862 = vadd.f32 %v2743, %v2829
      %v2863 = vadd.f32 %v2751, %v2829
      %v2864 = vadd.f32 %v2759, %v2837
      %v2865 = vadd.f32 %v2758, %v2836
      %v2866 = vadd.f32 %v2760, %v2838
      %v2867 = vadd.f32 %v2768, %v2829
      %v2868 = vadd.f32 %v2776, %v2829
      %v2869 = vadd.f32 %v2775, %v2837
      %v2870 = vadd.f32 %v2777, %v2836
      %v2871 = vadd.f32 %v2784, %v2838
      %v2872 = vadd.f32 %v2785, %v2829
      %v2873 = vmax.f32 %v2843, 0.0
      %v2874 = vmax.f32 %v2844, 0.0
      %v2875 = vmax.f32 %v2845, 0.0
      %v2876 = vmax.f32 %v2846, 0.0
      %v2877 = vmax.f32 %v2847, 0.0
      %v2878 = vmax.f32 %v2848, 0.0
      %v2879 = vmax.f32 %v2849, 0.0
      %v2880 = vmax.f32 %v2850, 0.0
      %v2881 = vmax.f32 %v2851, 0.0
      %v2882 = vmax.f32 %v2852, 0.0
      %v2883 = vmax.f32 %v2853, 0.0
      %v2884 = vmax.f32 %v2854, 0.0
      %v2885 = vmax.f32 %v2855, 0.0
      %v2886 = vmax.f32 %v2856, 0.0
      %v2887 = vmax.f32 %v2857, 0.0
      %v2888 = vmax.f32 %v2858, 0.0
      %v2889 = vmax.f32 %v2859, 0.0
      %v2890 = vmax.f32 %v2860, 0.0
      %v2891 = vmax.f32 %v2861, 0.0
      %v2892 = vmax.f32 %v2862, 0.0
      %v2893 = vmax.f32 %v2863, 0.0
      %v2894 = vmax.f32 %v2864, 0.0
      %v2895 = vmax.f32 %v2865, 0.0
      %v2896 = vmax.f32 %v2866, 0.0
      %v2897 = vmax.f32 %v2867, 0.0
      %v2898 = vmax.f32 %v2868, 0.0
      %v2899 = vmax.f32 %v2869, 0.0
      %v2900 = vmax.f32 %v2870, 0.0
      %v2901 = vmax.f32 %v2871, 0.0
      %v2902 = vmax.f32 %v2872, 0.0
      %s2903 = smul.u32 %s21, 4
      %s2904 = ssub.s32 %s2903, 1
      %v2905 = vstv %s2904
      %v2906 = vadd.s32 %v2905, 1
      %v2907 = vadd.s32 %v2905, 2
      %v2908 = vadd.s32 %v2905, 3
      %v2909 = vadd.s32 %v2905, 4
      %v2910 = vadd.s32 %v2905, 5
      %v2911 = vlaneseq
      %v2912 = vshrl.u32 %v2911, 7
      %v2913 = vadd.s32 %v2912, 8
      %v2914 = vadd.s32 %v2912, 4294967295
      %v2915 = vadd.s32 %v2913, 4294967295
      %vm2916 = vcmp.ge.s32.totalorder %v2905, 0
      %vm2917 = vcmp.ge.s32.totalorder %v2906, 0
      %vm2918 = vcmp.ge.s32.totalorder %v2907, 0
      %vm2919 = vcmp.ge.s32.totalorder %v2908, 0
      %vm2920 = vcmp.ge.s32.totalorder %v2909, 0
      %vm2921 = vcmp.ge.s32.totalorder %v2910, 0
      %vm2922 = vcmp.lt.s32.totalorder %v2905, 8
      %vm2923 = vcmp.lt.s32.totalorder %v2906, 8
      %vm2924 = vcmp.lt.s32.totalorder %v2907, 8
      %vm2925 = vcmp.lt.s32.totalorder %v2908, 8
      %vm2926 = vcmp.lt.s32.totalorder %v2909, 8
      %vm2927 = vcmp.lt.s32.totalorder %v2910, 8
      %vm2928 = vmand %vm2916, %vm2922
      %vm2929 = vmand %vm2917, %vm2923
      %vm2930 = vmand %vm2918, %vm2924
      %vm2931 = vmand %vm2919, %vm2925
      %vm2932 = vmand %vm2920, %vm2926
      %vm2933 = vmand %vm2921, %vm2927
      %vm2934 = vcmp.ge.s32.totalorder %v2914, 0
      %vm2935 = vcmp.ge.s32.totalorder %v2915, 0
      %vm2936 = vmand %vm2928, %vm2934
      %vm2937 = vmand %vm2928, %vm2935
      %vm2938 = vmand %vm2929, %vm2934
      %vm2939 = vmand %vm2929, %vm2935
      %vm2940 = vmand %vm2930, %vm2934
      %vm2941 = vmand %vm2930, %vm2935
      %vm2942 = vmand %vm2931, %vm2934
      %vm2943 = vmand %vm2931, %vm2935
      %vm2944 = vmand %vm2932, %vm2934
      %vm2945 = vmand %vm2932, %vm2935
      %vm2946 = vmand %vm2933, %vm2934
      %vm2947 = vmand %vm2933, %vm2935
      %vm2948 = vcmp.lt.s32.totalorder %v2914, 8
      %vm2949 = vcmp.lt.s32.totalorder %v2915, 8
      %vm2950 = vmand %vm2936, %vm2948
      %vm2951 = vmand %vm2937, %vm2949
      %vm2952 = vmand %vm2938, %vm2948
      %vm2953 = vmand %vm2939, %vm2949
      %vm2954 = vmand %vm2940, %vm2948
      %vm2955 = vmand %vm2941, %vm2949
      %vm2956 = vmand %vm2942, %vm2948
      %vm2957 = vmand %vm2943, %vm2949
      %vm2958 = vmand %vm2944, %vm2948
      %vm2959 = vmand %vm2945, %vm2949
      %vm2960 = vmand %vm2946, %vm2948
      %vm2961 = vmand %vm2947, %vm2949
      %v2962 = vsel %vm2950, 1, 0
      %v2963 = vsel %vm2951, 1, 0
      %v2964 = vsel %vm2952, 1, 0
      %v2965 = vsel %vm2953, 1, 0
      %v2966 = vsel %vm2954, 1, 0
      %v2967 = vsel %vm2955, 1, 0
      %v2968 = vsel %vm2956, 1, 0
      %v2969 = vsel %vm2957, 1, 0
      %v2970 = vsel %vm2958, 1, 0
      %v2971 = vsel %vm2959, 1, 0
      %v2972 = vsel %vm2960, 1, 0
      %v2973 = vsel %vm2961, 1, 0
      %vm2974 = vcmp.eq.s32.totalorder %v2962, 1
      %vm2975 = vcmp.eq.s32.totalorder %v2963, 1
      %vm2976 = vcmp.eq.s32.totalorder %v2964, 1
      %vm2977 = vcmp.eq.s32.totalorder %v2965, 1
      %vm2978 = vcmp.eq.s32.totalorder %v2966, 1
      %vm2979 = vcmp.eq.s32.totalorder %v2967, 1
      %vm2980 = vcmp.eq.s32.totalorder %v2968, 1
      %vm2981 = vcmp.eq.s32.totalorder %v2969, 1
      %vm2982 = vcmp.eq.s32.totalorder %v2970, 1
      %vm2983 = vcmp.eq.s32.totalorder %v2971, 1
      %vm2984 = vcmp.eq.s32.totalorder %v2972, 1
      %vm2985 = vcmp.eq.s32.totalorder %v2973, 1
      %v3016 = vcombine.low %v2873, %v2874
      %v3017 = vcombine.low %v2875, %v2876
      %v3019 = vunpack.c.l.s4 1983009808
      %v3020 = vunpack.c.0.s8 %v3019
      %v3021 = vlaneseq
      %v3022 = vshrl.u32 %v3021, 7
      %v3023 = vsub.s32 %v3020, %v3022
      %v3024 = vrot.slane %v3016, %v3023
      %v3026 = vunpack.c.l.s4 1983009808
      %v3027 = vunpack.c.0.s8 %v3026
      %v3028 = vlaneseq
      %v3029 = vshrl.u32 %v3028, 7
      %v3030 = vsub.s32 %v3027, %v3029
      %v3031 = vrot.slane %v3017, %v3030
      %v3032 = vcombine.low %v3024, %v3031
      %v3034 = vunpack.c.l.s4 1983009808
      %v3035 = vunpack.c.0.s8 %v3034
      %v3036 = vlaneseq
      %v3037 = vshrl.u32 %v3036, 7
      %v3038 = vsub.s32 %v3035, %v3037
      %v3039 = vrot.slane %v2877, %v3038
      %v3040 = vcombine.low %v2878, %v2879
      %v3041 = vcombine.low %v2880, %v2881
      %v3043 = vunpack.c.l.s4 1983009808
      %v3044 = vunpack.c.0.s8 %v3043
      %v3045 = vlaneseq
      %v3046 = vshrl.u32 %v3045, 7
      %v3047 = vsub.s32 %v3044, %v3046
      %v3048 = vrot.slane %v3040, %v3047
      %v3050 = vunpack.c.l.s4 1983009808
      %v3051 = vunpack.c.0.s8 %v3050
      %v3052 = vlaneseq
      %v3053 = vshrl.u32 %v3052, 7
      %v3054 = vsub.s32 %v3051, %v3053
      %v3055 = vrot.slane %v3041, %v3054
      %v3056 = vcombine.low %v3048, %v3055
      %v3058 = vunpack.c.l.s4 1983009808
      %v3059 = vunpack.c.0.s8 %v3058
      %v3060 = vlaneseq
      %v3061 = vshrl.u32 %v3060, 7
      %v3062 = vsub.s32 %v3059, %v3061
      %v3063 = vrot.slane %v2882, %v3062
      %v3064 = vcombine.low %v2883, %v2884
      %v3065 = vcombine.low %v2885, %v2886
      %v3067 = vunpack.c.l.s4 1983009808
      %v3068 = vunpack.c.0.s8 %v3067
      %v3069 = vlaneseq
      %v3070 = vshrl.u32 %v3069, 7
      %v3071 = vsub.s32 %v3068, %v3070
      %v3072 = vrot.slane %v3064, %v3071
      %v3074 = vunpack.c.l.s4 1983009808
      %v3075 = vunpack.c.0.s8 %v3074
      %v3076 = vlaneseq
      %v3077 = vshrl.u32 %v3076, 7
      %v3078 = vsub.s32 %v3075, %v3077
      %v3079 = vrot.slane %v3065, %v3078
      %v3080 = vcombine.low %v3072, %v3079
      %v3082 = vunpack.c.l.s4 1983009808
      %v3083 = vunpack.c.0.s8 %v3082
      %v3084 = vlaneseq
      %v3085 = vshrl.u32 %v3084, 7
      %v3086 = vsub.s32 %v3083, %v3085
      %v3087 = vrot.slane %v2887, %v3086
      %v3088 = vcombine.low %v2888, %v2889
      %v3089 = vcombine.low %v2890, %v2891
      %v3091 = vunpack.c.l.s4 1983009808
      %v3092 = vunpack.c.0.s8 %v3091
      %v3093 = vlaneseq
      %v3094 = vshrl.u32 %v3093, 7
      %v3095 = vsub.s32 %v3092, %v3094
      %v3096 = vrot.slane %v3088, %v3095
      %v3098 = vunpack.c.l.s4 1983009808
      %v3099 = vunpack.c.0.s8 %v3098
      %v3100 = vlaneseq
      %v3101 = vshrl.u32 %v3100, 7
      %v3102 = vsub.s32 %v3099, %v3101
      %v3103 = vrot.slane %v3089, %v3102
      %v3104 = vcombine.low %v3096, %v3103
      %v3106 = vunpack.c.l.s4 1983009808
      %v3107 = vunpack.c.0.s8 %v3106
      %v3108 = vlaneseq
      %v3109 = vshrl.u32 %v3108, 7
      %v3110 = vsub.s32 %v3107, %v3109
      %v3111 = vrot.slane %v2892, %v3110
      %v3112 = vcombine.low %v2893, %v2894
      %v3113 = vcombine.low %v2895, %v2896
      %v3115 = vunpack.c.l.s4 1983009808
      %v3116 = vunpack.c.0.s8 %v3115
      %v3117 = vlaneseq
      %v3118 = vshrl.u32 %v3117, 7
      %v3119 = vsub.s32 %v3116, %v3118
      %v3120 = vrot.slane %v3112, %v3119
      %v3122 = vunpack.c.l.s4 1983009808
      %v3123 = vunpack.c.0.s8 %v3122
      %v3124 = vlaneseq
      %v3125 = vshrl.u32 %v3124, 7
      %v3126 = vsub.s32 %v3123, %v3125
      %v3127 = vrot.slane %v3113, %v3126
      %v3128 = vcombine.low %v3120, %v3127
      %v3130 = vunpack.c.l.s4 1983009808
      %v3131 = vunpack.c.0.s8 %v3130
      %v3132 = vlaneseq
      %v3133 = vshrl.u32 %v3132, 7
      %v3134 = vsub.s32 %v3131, %v3133
      %v3135 = vrot.slane %v2897, %v3134
      %v3136 = vcombine.low %v2898, %v2899
      %v3137 = vcombine.low %v2900, %v2901
      %v3139 = vunpack.c.l.s4 1983009808
      %v3140 = vunpack.c.0.s8 %v3139
      %v3141 = vlaneseq
      %v3142 = vshrl.u32 %v3141, 7
      %v3143 = vsub.s32 %v3140, %v3142
      %v3144 = vrot.slane %v3136, %v3143
      %v3146 = vunpack.c.l.s4 1983009808
      %v3147 = vunpack.c.0.s8 %v3146
      %v3148 = vlaneseq
      %v3149 = vshrl.u32 %v3148, 7
      %v3150 = vsub.s32 %v3147, %v3149
      %v3151 = vrot.slane %v3137, %v3150
      %v3152 = vcombine.low %v3144, %v3151
      %v3154 = vunpack.c.l.s4 1983009808
      %v3155 = vunpack.c.0.s8 %v3154
      %v3156 = vlaneseq
      %v3157 = vshrl.u32 %v3156, 7
      %v3158 = vsub.s32 %v3155, %v3157
      %v3159 = vrot.slane %v2902, %v3158
      %v3172 = vsel %vm2974, %v3032, 0.0
      %v3173 = vsel %vm2975, %v3039, 0.0
      %v3174 = vsel %vm2976, %v3056, 0.0
      %v3175 = vsel %vm2977, %v3063, 0.0
      %v3176 = vsel %vm2978, %v3080, 0.0
      %v3177 = vsel %vm2979, %v3087, 0.0
      %v3178 = vsel %vm2980, %v3104, 0.0
      %v3179 = vsel %vm2981, %v3111, 0.0
      %v3180 = vsel %vm2982, %v3128, 0.0
      %v3181 = vsel %vm2983, %v3135, 0.0
      %v3182 = vsel %vm2984, %v3152, 0.0
      %v3183 = vsel %vm2985, %v3159, 0.0
      %v3184 = vpack.c.bf16 %v3173, %v3172
      %v3185 = vpack.c.bf16 %v3175, %v3174
      %v3186 = vpack.c.bf16 %v3177, %v3176
      %v3187 = vpack.c.bf16 %v3179, %v3178
      %v3188 = vpack.c.bf16 %v3181, %v3180
      %v3189 = vpack.c.bf16 %v3183, %v3182
      %v3191 = vshrl.u32 %v3184, 16
      %v3193 = vshll.u32 %v3184, 16
      %v3195 = vrot.slane %v3193, 1
      %v3196 = vor.u32 %v3191, %v3195
      %v3198 = vshrl.u32 %v3185, 16
      %v3200 = vshll.u32 %v3185, 16
      %v3202 = vrot.slane %v3200, 1
      %v3203 = vor.u32 %v3198, %v3202
      %v3205 = vshrl.u32 %v3186, 16
      %v3207 = vshll.u32 %v3186, 16
      %v3209 = vrot.slane %v3207, 1
      %v3210 = vor.u32 %v3205, %v3209
      %v3212 = vshrl.u32 %v3187, 16
      %v3214 = vshll.u32 %v3187, 16
      %v3216 = vrot.slane %v3214, 1
      %v3217 = vor.u32 %v3212, %v3216
      %3218 = vrot.lane.b32.xlu0 %v3196, 64
      %v3219 = vpop.permute.xlu0 %3218
      %3220 = vrot.lane.b32.xlu0 %v3203, 64
      %v3221 = vpop.permute.xlu0 %3220
      %3222 = vrot.lane.b32.xlu0 %v3210, 64
      %v3223 = vpop.permute.xlu0 %3222
      %3224 = vrot.lane.b32.xlu0 %v3217, 64
      %v3225 = vpop.permute.xlu0 %3224
      %v3230 = vrot.slane %v3184, 1
      %v3231 = vrot.slane %v3185, 1
      %v3232 = vrot.slane %v3186, 1
      %v3233 = vrot.slane %v3187, 1
      %v3235 = vsel %vm364, %v3184, %v3219
      %v3237 = vsel %vm364, %v3185, %v3221
      %v3239 = vsel %vm364, %v3186, %v3223
      %v3241 = vsel %vm364, %v3187, %v3225
      %v3246 = vunpack.c.l.b16 %v3235
      %v3247 = vunpack.c.l.b16 %v3230
      %v3248 = vunpack.c.l.b16 %v3237
      %v3249 = vunpack.c.l.b16 %v3231
      %v3250 = vunpack.c.l.b16 %v3239
      %v3251 = vunpack.c.l.b16 %v3232
      %v3252 = vunpack.c.l.b16 %v3241
      %v3253 = vunpack.c.l.b16 %v3233
      %v3254 = vld [vmem:[%s3] sm:$0xf]
      %v3255 = vld [vmem:[%s3 + $0x4] sm:$0xf]
      %v3256 = vld [vmem:[%s3 + $0x8] sm:$0xf]
      %v3257 = vld [vmem:[%s3 + $0xc] sm:$0xf]
      %v3258 = vld [vmem:[%s3 + $0x10] sm:$0xf]
      %v3259 = vld [vmem:[%s3 + $0x14] sm:$0xf]
      %v3260 = vld [vmem:[%s3 + $0x18] sm:$0xf]
      %v3261 = vld [vmem:[%s3 + $0x1c] sm:$0xf]
      %v3262 = vld [vmem:[%s3 + $0x20] sm:$0xf]
      %v3263 = vld [vmem:[%s3 + $0x24] sm:$0xf]
      %v3264 = vld [vmem:[%s3 + $0x28] sm:$0xf]
      %v3265 = vld [vmem:[%s3 + $0x2c] sm:$0xf]
      %v3266 = vld [vmem:[%s3 + $0x30] sm:$0xf]
      %v3267 = vld [vmem:[%s3 + $0x34] sm:$0xf]
      %v3268 = vld [vmem:[%s3 + $0x38] sm:$0xf]
      %v3269 = vld [vmem:[%s3 + $0x3c] sm:$0xf]
      %v3270 = vld [vmem:[%s3 + $0x40] sm:$0xf]
      %v3271 = vld [vmem:[%s3 + $0x44] sm:$0xf]
      %v3272 = vld [vmem:[%s3 + $0x48] sm:$0xf]
      %v3273 = vld [vmem:[%s3 + $0x4c] sm:$0xf]
      %v3274 = vld [vmem:[%s3 + $0x50] sm:$0xf]
      %v3275 = vld [vmem:[%s3 + $0x54] sm:$0xf]
      %v3276 = vld [vmem:[%s3 + $0x58] sm:$0xf]
      %v3277 = vld [vmem:[%s3 + $0x5c] sm:$0xf]
      %v3279 = vshrl.u32 %v3188, 16
      %v3281 = vshll.u32 %v3188, 16
      %v3283 = vrot.slane %v3281, 1
      %v3284 = vor.u32 %v3279, %v3283
      %3285 = vrot.lane.b32.xlu0 %v3284, 64
      %v3286 = vpop.permute.xlu0 %3285
      %v3288 = vrot.slane %v3188, 1
      %v3290 = vsel %vm364, %v3188, %v3286
      %v3292 = vunpack.c.l.b16 %v3290
      %v3293 = vunpack.c.l.b16 %v3288
      %s3294 = scalar_lea.vmem %s3, 96
      %v3295 = vld [vmem:[%s3294] sm:$0xf]
      %v3296 = vld [vmem:[%s3294 + $0x4] sm:$0xf]
      %v3297 = vld [vmem:[%s3294 + $0x8] sm:$0xf]
      %v3298 = vld [vmem:[%s3294 + $0xc] sm:$0xf]
      %v3299 = vld [vmem:[%s3294 + $0x10] sm:$0xf]
      %v3300 = vld [vmem:[%s3294 + $0x14] sm:$0xf]
      %v3301 = vld [vmem:[%s3294 + $0x18] sm:$0xf]
      %v3302 = vld [vmem:[%s3294 + $0x1c] sm:$0xf]
      %v3303 = vld [vmem:[%s3294 + $0x20] sm:$0xf]
      %v3304 = vld [vmem:[%s3294 + $0x24] sm:$0xf]
      %v3305 = vld [vmem:[%s3294 + $0x28] sm:$0xf]
      %v3306 = vld [vmem:[%s3294 + $0x2c] sm:$0xf]
      %v3307 = vld [vmem:[%s3294 + $0x30] sm:$0xf]
      %v3308 = vld [vmem:[%s3294 + $0x34] sm:$0xf]
      %v3309 = vld [vmem:[%s3294 + $0x38] sm:$0xf]
      %v3310 = vld [vmem:[%s3294 + $0x3c] sm:$0xf]
      %v3311 = vld [vmem:[%s3294 + $0x40] sm:$0xf]
      %v3312 = vld [vmem:[%s3294 + $0x44] sm:$0xf]
      %v3313 = vld [vmem:[%s3294 + $0x48] sm:$0xf]
      %v3314 = vld [vmem:[%s3294 + $0x4c] sm:$0xf]
      %v3315 = vld [vmem:[%s3294 + $0x50] sm:$0xf]
      %v3316 = vld [vmem:[%s3294 + $0x54] sm:$0xf]
      %v3317 = vld [vmem:[%s3294 + $0x58] sm:$0xf]
      %v3318 = vld [vmem:[%s3294 + $0x5c] sm:$0xf]
      %v3319 = vpack.c.b16 %v3250, %v3248
      %v3320 = vpack.c.b16 %v3251, %v3249
      %v3321 = vpack.c.b16 %v3292, %v3252
      %v3322 = vpack.c.b16 %v3293, %v3253
      %v3349 = vunpack.c.l.b16 %v3295
      %v3350 = vunpack.c.l.b16 %v3296
      %v3351 = vunpack.c.l.b16 %v3297
      %v3352 = vunpack.c.l.b16 %v3298
      %v3353 = vunpack.c.l.b16 %v3299
      %v3354 = vunpack.c.l.b16 %v3300
      %v3355 = vunpack.c.l.b16 %v3301
      %v3356 = vunpack.c.l.b16 %v3302
      %v3357 = vunpack.c.l.b16 %v3303
      %v3358 = vunpack.c.l.b16 %v3304
      %v3359 = vunpack.c.l.b16 %v3305
      %v3360 = vunpack.c.l.b16 %v3306
      %v3361 = vunpack.c.l.b16 %v3307
      %v3362 = vunpack.c.l.b16 %v3308
      %v3363 = vunpack.c.l.b16 %v3309
      %v3364 = vunpack.c.l.b16 %v3310
      %v3365 = vunpack.c.l.b16 %v3311
      %v3366 = vunpack.c.l.b16 %v3312
      %v3367 = vunpack.c.l.b16 %v3313
      %v3368 = vunpack.c.l.b16 %v3314
      %v3369 = vunpack.c.l.b16 %v3315
      %v3370 = vunpack.c.l.b16 %v3316
      %v3371 = vunpack.c.l.b16 %v3317
      %v3372 = vunpack.c.l.b16 %v3318
      %v3373 = vpack.c.b16 %v3350, %v3349
      %v3374 = vpack.c.b16 %v3352, %v3351
      %v3375 = vpack.c.b16 %v3354, %v3353
      %v3376 = vpack.c.b16 %v3356, %v3355
      %v3377 = vpack.c.b16 %v3358, %v3357
      %v3378 = vpack.c.b16 %v3360, %v3359
      %v3379 = vpack.c.b16 %v3362, %v3361
      %v3380 = vpack.c.b16 %v3364, %v3363
      %v3381 = vpack.c.b16 %v3366, %v3365
      %v3382 = vpack.c.b16 %v3368, %v3367
      %v3383 = vpack.c.b16 %v3370, %v3369
      %v3384 = vpack.c.b16 %v3372, %v3371
      %v3398 = vsel %vm364, %v3320, 0
      %v3401 = vsel %vm364, %v3322, 0
      %3403 = vmatprep.subr.bf16.mxu0 0
      %3404 = vmatpush1.bf16.msra.mxu0 %v3373
      %3405 = vmatprep.subr.bf16.mxu0 0
      %3406 = vmatpush1.bf16.msra.mxu0 %v3374
      %3407 = vmatprep.subr.bf16.mxu0 0
      %3408 = vmatpush1.bf16.msra.mxu0 %v3375
      %3409 = vmatprep.subr.bf16.mxu0 0
      %3410 = vmatpush1.bf16.msra.mxu0 %v3376
      %3411 = vmatprep.subr.bf16.mxu0 0
      %3412 = vmatpush1.bf16.msra.mxu0 %v3377
      %3413 = vmatprep.subr.bf16.mxu0 0
      %3414 = vmatpush1.bf16.msra.mxu0 %v3378
      %3415 = vmatprep.subr.bf16.mxu0 0
      %3416 = vmatpush1.bf16.msra.mxu0 %v3379
      %3417 = vmatprep.subr.bf16.mxu0 0
      %3418 = vmatpush1.bf16.msra.mxu0 %v3380
      %3419 = vmatprep.subr.bf16.mxu0 0
      %3420 = vmatpush1.bf16.msra.mxu0 %v3381
      %3421 = vmatprep.subr.bf16.mxu0 0
      %3422 = vmatpush1.bf16.msra.mxu0 %v3382
      %3423 = vmatprep.subr.bf16.mxu0 0
      %3424 = vmatpush1.bf16.msra.mxu0 %v3383
      %3425 = vmatprep.subr.bf16.mxu0 0
      %3426 = vmatpush1.bf16.msra.mxu0 %v3384
      %3427 = vmatprep.subr.bf16.mxu0 0
      %3428 = vmatpush1.bf16.msra.mxu0 0
      %3429 = vmatprep.subr.bf16.mxu0 0
      %3430 = vmatpush1.bf16.msra.mxu0 0
      %3431 = vmatprep.subr.bf16.mxu0 0
      %3432 = vmatpush1.bf16.msra.mxu0 0
      %3433 = vmatprep.subr.bf16.mxu0 0
      %3434 = vmatpush1.bf16.msra.mxu0 0
      %3435 = vmatprep.mubr.bf16.mxu0 %v3398
      %3436 = vmatmul.mubr.bf16.gmra.mrb[0].mxu0 %v3319
      %v3437 = vpop.f32.mrb[0].mxu0
      %v3438 = vadd.f32 0.0, %v3437
      %v3439 = vpop.f32.mrb[0].mxu0
      %v3440 = vpop.f32.mrb[0].mxu0
      %v3441 = vadd.f32 0.0, %v3440
      %v3442 = vpop.f32.mrb[0].mxu0
      %3443 = vmatprep.mubr.bf16.mxu0 %v3401
      %3444 = vmatmul.mubr.bf16.gmra.mrb[0].mxu0 %v3321
      %v3445 = vpop.f32.mrb[0].mxu0
      %v3446 = vadd.f32 0.0, %v3445
      %v3447 = vpop.f32.mrb[0].mxu0
      %v3448 = vpop.f32.mrb[0].mxu0
      %v3449 = vadd.f32 0.0, %v3448
      %v3450 = vpop.f32.mrb[0].mxu0
      %3451 = vdwg.mxu0
      %v3452 = vpack.c.b16 %v3248, %v3246
      %v3453 = vpack.c.b16 %v3249, %v3247
      %v3454 = vpack.c.b16 %v3252, %v3250
      %v3455 = vpack.c.b16 %v3253, %v3251
      %v3482 = vunpack.c.l.b16 %v3254
      %v3483 = vunpack.c.l.b16 %v3255
      %v3484 = vunpack.c.l.b16 %v3256
      %v3485 = vunpack.c.l.b16 %v3257
      %v3486 = vunpack.c.l.b16 %v3258
      %v3487 = vunpack.c.l.b16 %v3259
      %v3488 = vunpack.c.l.b16 %v3260
      %v3489 = vunpack.c.l.b16 %v3261
      %v3490 = vunpack.c.l.b16 %v3262
      %v3491 = vunpack.c.l.b16 %v3263
      %v3492 = vunpack.c.l.b16 %v3264
      %v3493 = vunpack.c.l.b16 %v3265
      %v3494 = vunpack.c.l.b16 %v3266
      %v3495 = vunpack.c.l.b16 %v3267
      %v3496 = vunpack.c.l.b16 %v3268
      %v3497 = vunpack.c.l.b16 %v3269
      %v3498 = vunpack.c.l.b16 %v3270
      %v3499 = vunpack.c.l.b16 %v3271
      %v3500 = vunpack.c.l.b16 %v3272
      %v3501 = vunpack.c.l.b16 %v3273
      %v3502 = vunpack.c.l.b16 %v3274
      %v3503 = vunpack.c.l.b16 %v3275
      %v3504 = vunpack.c.l.b16 %v3276
      %v3505 = vunpack.c.l.b16 %v3277
      %v3506 = vpack.c.b16 %v3483, %v3482
      %v3507 = vpack.c.b16 %v3485, %v3484
      %v3508 = vpack.c.b16 %v3487, %v3486
      %v3509 = vpack.c.b16 %v3489, %v3488
      %v3510 = vpack.c.b16 %v3491, %v3490
      %v3511 = vpack.c.b16 %v3493, %v3492
      %v3512 = vpack.c.b16 %v3495, %v3494
      %v3513 = vpack.c.b16 %v3497, %v3496
      %v3514 = vpack.c.b16 %v3499, %v3498
      %v3515 = vpack.c.b16 %v3501, %v3500
      %v3516 = vpack.c.b16 %v3503, %v3502
      %v3517 = vpack.c.b16 %v3505, %v3504
      %v3531 = vsel %vm364, %v3453, 0
      %v3534 = vsel %vm364, %v3455, 0
      %3536 = vmatprep.subr.bf16.mxu0 0
      %3537 = vmatpush1.bf16.msra.mxu0 %v3506
      %3538 = vmatprep.subr.bf16.mxu0 0
      %3539 = vmatpush1.bf16.msra.mxu0 %v3507
      %3540 = vmatprep.subr.bf16.mxu0 0
      %3541 = vmatpush1.bf16.msra.mxu0 %v3508
      %3542 = vmatprep.subr.bf16.mxu0 0
      %3543 = vmatpush1.bf16.msra.mxu0 %v3509
      %3544 = vmatprep.subr.bf16.mxu0 0
      %3545 = vmatpush1.bf16.msra.mxu0 %v3510
      %3546 = vmatprep.subr.bf16.mxu0 0
      %3547 = vmatpush1.bf16.msra.mxu0 %v3511
      %3548 = vmatprep.subr.bf16.mxu0 0
      %3549 = vmatpush1.bf16.msra.mxu0 %v3512
      %3550 = vmatprep.subr.bf16.mxu0 0
      %3551 = vmatpush1.bf16.msra.mxu0 %v3513
      %3552 = vmatprep.subr.bf16.mxu0 0
      %3553 = vmatpush1.bf16.msra.mxu0 %v3514
      %3554 = vmatprep.subr.bf16.mxu0 0
      %3555 = vmatpush1.bf16.msra.mxu0 %v3515
      %3556 = vmatprep.subr.bf16.mxu0 0
      %3557 = vmatpush1.bf16.msra.mxu0 %v3516
      %3558 = vmatprep.subr.bf16.mxu0 0
      %3559 = vmatpush1.bf16.msra.mxu0 %v3517
      %3560 = vmatprep.subr.bf16.mxu0 0
      %3561 = vmatpush1.bf16.msra.mxu0 0
      %3562 = vmatprep.subr.bf16.mxu0 0
      %3563 = vmatpush1.bf16.msra.mxu0 0
      %3564 = vmatprep.subr.bf16.mxu0 0
      %3565 = vmatpush1.bf16.msra.mxu0 0
      %3566 = vmatprep.subr.bf16.mxu0 0
      %3567 = vmatpush1.bf16.msra.mxu0 0
      %3568 = vmatprep.mubr.bf16.mxu0 %v3531
      %3569 = vmatmul.mubr.bf16.gmra.mrb[0].mxu0 %v3452
      %v3570 = vpop.f32.mrb[0].mxu0
      %v3571 = vadd.f32 %v3438, %v3570
      %v3572 = vpop.f32.mrb[0].mxu0
      %v3573 = vpop.f32.mrb[0].mxu0
      %v3574 = vadd.f32 %v3441, %v3573
      %v3575 = vpop.f32.mrb[0].mxu0
      %3576 = vmatprep.mubr.bf16.mxu0 %v3534
      %3577 = vmatmul.mubr.bf16.gmra.mrb[0].mxu0 %v3454
      %v3578 = vpop.f32.mrb[0].mxu0
      %v3579 = vadd.f32 %v3446, %v3578
      %v3580 = vpop.f32.mrb[0].mxu0
      %v3581 = vpop.f32.mrb[0].mxu0
      %v3582 = vadd.f32 %v3449, %v3581
      %v3583 = vpop.f32.mrb[0].mxu0
      %3584 = vdwg.mxu0
      %v3586 = vshrl.u32 %v3189, 16
      %v3588 = vshll.u32 %v3189, 16
      %v3590 = vrot.slane %v3588, 1
      %v3591 = vor.u32 %v3586, %v3590
      %3592 = vrot.lane.b32.xlu0 %v3591, 64
      %v3593 = vpop.permute.xlu0 %3592
      %v3595 = vrot.slane %v3189, 1
      %v3597 = vsel %vm364, %v3189, %v3593
      %v3599 = vunpack.c.l.b16 %v3597
      %v3600 = vunpack.c.l.b16 %v3595
      %s3601 = scalar_lea.vmem %s3, 192
      %v3602 = vld [vmem:[%s3601] sm:$0xf]
      %v3603 = vld [vmem:[%s3601 + $0x4] sm:$0xf]
      %v3604 = vld [vmem:[%s3601 + $0x8] sm:$0xf]
      %v3605 = vld [vmem:[%s3601 + $0xc] sm:$0xf]
      %v3606 = vld [vmem:[%s3601 + $0x10] sm:$0xf]
      %v3607 = vld [vmem:[%s3601 + $0x14] sm:$0xf]
      %v3608 = vld [vmem:[%s3601 + $0x18] sm:$0xf]
      %v3609 = vld [vmem:[%s3601 + $0x1c] sm:$0xf]
      %v3610 = vld [vmem:[%s3601 + $0x20] sm:$0xf]
      %v3611 = vld [vmem:[%s3601 + $0x24] sm:$0xf]
      %v3612 = vld [vmem:[%s3601 + $0x28] sm:$0xf]
      %v3613 = vld [vmem:[%s3601 + $0x2c] sm:$0xf]
      %v3614 = vld [vmem:[%s3601 + $0x30] sm:$0xf]
      %v3615 = vld [vmem:[%s3601 + $0x34] sm:$0xf]
      %v3616 = vld [vmem:[%s3601 + $0x38] sm:$0xf]
      %v3617 = vld [vmem:[%s3601 + $0x3c] sm:$0xf]
      %v3618 = vld [vmem:[%s3601 + $0x40] sm:$0xf]
      %v3619 = vld [vmem:[%s3601 + $0x44] sm:$0xf]
      %v3620 = vld [vmem:[%s3601 + $0x48] sm:$0xf]
      %v3621 = vld [vmem:[%s3601 + $0x4c] sm:$0xf]
      %v3622 = vld [vmem:[%s3601 + $0x50] sm:$0xf]
      %v3623 = vld [vmem:[%s3601 + $0x54] sm:$0xf]
      %v3624 = vld [vmem:[%s3601 + $0x58] sm:$0xf]
      %v3625 = vld [vmem:[%s3601 + $0x5c] sm:$0xf]
      %v3626 = vpack.c.b16 %v3599, %v3292
      %v3627 = vpack.c.b16 %v3600, %v3293
      %v3653 = vunpack.c.l.b16 %v3602
      %v3654 = vunpack.c.l.b16 %v3603
      %v3655 = vunpack.c.l.b16 %v3604
      %v3656 = vunpack.c.l.b16 %v3605
      %v3657 = vunpack.c.l.b16 %v3606
      %v3658 = vunpack.c.l.b16 %v3607
      %v3659 = vunpack.c.l.b16 %v3608
      %v3660 = vunpack.c.l.b16 %v3609
      %v3661 = vunpack.c.l.b16 %v3610
      %v3662 = vunpack.c.l.b16 %v3611
      %v3663 = vunpack.c.l.b16 %v3612
      %v3664 = vunpack.c.l.b16 %v3613
      %v3665 = vunpack.c.l.b16 %v3614
      %v3666 = vunpack.c.l.b16 %v3615
      %v3667 = vunpack.c.l.b16 %v3616
      %v3668 = vunpack.c.l.b16 %v3617
      %v3669 = vunpack.c.l.b16 %v3618
      %v3670 = vunpack.c.l.b16 %v3619
      %v3671 = vunpack.c.l.b16 %v3620
      %v3672 = vunpack.c.l.b16 %v3621
      %v3673 = vunpack.c.l.b16 %v3622
      %v3674 = vunpack.c.l.b16 %v3623
      %v3675 = vunpack.c.l.b16 %v3624
      %v3676 = vunpack.c.l.b16 %v3625
      %v3677 = vpack.c.b16 %v3654, %v3653
      %v3678 = vpack.c.b16 %v3656, %v3655
      %v3679 = vpack.c.b16 %v3658, %v3657
      %v3680 = vpack.c.b16 %v3660, %v3659
      %v3681 = vpack.c.b16 %v3662, %v3661
      %v3682 = vpack.c.b16 %v3664, %v3663
      %v3683 = vpack.c.b16 %v3666, %v3665
      %v3684 = vpack.c.b16 %v3668, %v3667
      %v3685 = vpack.c.b16 %v3670, %v3669
      %v3686 = vpack.c.b16 %v3672, %v3671
      %v3687 = vpack.c.b16 %v3674, %v3673
      %v3688 = vpack.c.b16 %v3676, %v3675
      %v3702 = vsel %vm364, %v3627, 0
      %3704 = vmatprep.subr.bf16.mxu0 0
      %3705 = vmatpush1.bf16.msra.mxu0 %v3677
      %3706 = vmatprep.subr.bf16.mxu0 0
      %3707 = vmatpush1.bf16.msra.mxu0 %v3678
      %3708 = vmatprep.subr.bf16.mxu0 0
      %3709 = vmatpush1.bf16.msra.mxu0 %v3679
      %3710 = vmatprep.subr.bf16.mxu0 0
      %3711 = vmatpush1.bf16.msra.mxu0 %v3680
      %3712 = vmatprep.subr.bf16.mxu0 0
      %3713 = vmatpush1.bf16.msra.mxu0 %v3681
      %3714 = vmatprep.subr.bf16.mxu0 0
      %3715 = vmatpush1.bf16.msra.mxu0 %v3682
      %3716 = vmatprep.subr.bf16.mxu0 0
      %3717 = vmatpush1.bf16.msra.mxu0 %v3683
      %3718 = vmatprep.subr.bf16.mxu0 0
      %3719 = vmatpush1.bf16.msra.mxu0 %v3684
      %3720 = vmatprep.subr.bf16.mxu0 0
      %3721 = vmatpush1.bf16.msra.mxu0 %v3685
      %3722 = vmatprep.subr.bf16.mxu0 0
      %3723 = vmatpush1.bf16.msra.mxu0 %v3686
      %3724 = vmatprep.subr.bf16.mxu0 0
      %3725 = vmatpush1.bf16.msra.mxu0 %v3687
      %3726 = vmatprep.subr.bf16.mxu0 0
      %3727 = vmatpush1.bf16.msra.mxu0 %v3688
      %3728 = vmatprep.subr.bf16.mxu0 0
      %3729 = vmatpush1.bf16.msra.mxu0 0
      %3730 = vmatprep.subr.bf16.mxu0 0
      %3731 = vmatpush1.bf16.msra.mxu0 0
      %3732 = vmatprep.subr.bf16.mxu0 0
      %3733 = vmatpush1.bf16.msra.mxu0 0
      %3734 = vmatprep.subr.bf16.mxu0 0
      %3735 = vmatpush1.bf16.msra.mxu0 0
      %3736 = vmatprep.mubr.bf16.mxu0 %v3534
      %3737 = vmatmul.mubr.bf16.gmra.mrb[0].mxu0 %v3454
      %v3738 = vpop.f32.mrb[0].mxu0
      %v3739 = vadd.f32 0.0, %v3738
      %v3740 = vpop.f32.mrb[0].mxu0
      %v3741 = vpop.f32.mrb[0].mxu0
      %v3742 = vadd.f32 0.0, %v3741
      %v3743 = vpop.f32.mrb[0].mxu0
      %3744 = vmatprep.mubr.bf16.mxu0 %v3702
      %3745 = vmatmul.mubr.bf16.gmra.mrb[0].mxu0 %v3626
      %v3746 = vpop.f32.mrb[0].mxu0
      %v3747 = vadd.f32 0.0, %v3746
      %v3748 = vpop.f32.mrb[0].mxu0
      %v3749 = vpop.f32.mrb[0].mxu0
      %v3750 = vadd.f32 0.0, %v3749
      %v3751 = vpop.f32.mrb[0].mxu0
      %3752 = vdwg.mxu0
      %v3753 = vadd.f32 %v3571, %v3739
      %v3754 = vadd.f32 %v3574, %v3742
      %v3755 = vadd.f32 %v3579, %v3747
      %v3756 = vadd.f32 %v3582, %v3750
      %v3757 = vld [vmem:[%s1849] sm:$0xe]
      %v3758 = vld [vmem:[%s1849 + $0x4] sm:$0x1]
      %v3759 = vld [vmem:[%s1849 + $0x8] sm:$0xe]
      %v3760 = vld [vmem:[%s1849 + $0xc] sm:$0x1]
      %v3761 = vld [vmem:[%s1849 + $0x10] sm:$0xe]
      %v3762 = vld [vmem:[%s1849 + $0x14] sm:$0x1]
      %v3763 = vld [vmem:[%s1849 + $0x18] sm:$0xe]
      %v3764 = vld [vmem:[%s1849 + $0x1c] sm:$0x1]
      %v3765 = vunpack.c.l.bf16 %v3757
      %v3766 = vunpack.c.l.bf16 %v3758
      %v3767 = vunpack.c.l.bf16 %v3759
      %v3768 = vunpack.c.l.bf16 %v3760
      %v3769 = vunpack.c.l.bf16 %v3761
      %v3770 = vunpack.c.l.bf16 %v3762
      %v3771 = vunpack.c.l.bf16 %v3763
      %v3772 = vunpack.c.l.bf16 %v3764
      %v3773 = vld [vmem:[%s4] sm:$0x1]
      %v3775 = vlaneseq
      %v3776 = vshrl.u32 %v3775, 7
      %v3777 = vsub.s32 0, %v3776
      %v3778 = vrot.slane %v3773, %v3777
      %v3780 = vadd.f32 %v3753, %v3778
      %v3781 = vadd.f32 %v3754, %v3778
      %v3782 = vadd.f32 %v3755, %v3778
      %v3783 = vadd.f32 %v3756, %v3778
      %vm3792 = vcmask 1045504
      %v3793 = vrot.slane %v3765, 2
      %v3794 = vrot.slane %v3766, 2
      %v3795 = vsel %vm3792, %v3793, %v3794
      %v3796 = vrot.slane %v3767, 2
      %v3797 = vrot.slane %v3768, 2
      %v3798 = vsel %vm3792, %v3796, %v3797
      %v3799 = vrot.slane %v3769, 2
      %v3800 = vrot.slane %v3770, 2
      %v3801 = vsel %vm3792, %v3799, %v3800
      %v3802 = vrot.slane %v3771, 2
      %v3803 = vrot.slane %v3772, 2
      %v3804 = vsel %vm3792, %v3802, %v3803
      %v3809 = vadd.f32 %v3780, %v3795
      %v3810 = vadd.f32 %v3781, %v3798
      %v3811 = vadd.f32 %v3782, %v3801
      %v3812 = vadd.f32 %v3783, %v3804
      %v3813 = vpack.c.bf16 %v3809, %v3809
      %v3814 = vpack.c.bf16 %v3810, %v3810
      %v3815 = vpack.c.bf16 %v3811, %v3811
      %v3816 = vpack.c.bf16 %v3812, %v3812
      %vm3817 = vcmask 519168
      %3818 = vst.msk [vmem:[%s260] sm:$0xf] %vm3817, %v3813
      %3819 = vst.msk [vmem:[%s260 + $0x4] sm:$0xf] %vm3817, %v3814
      %3820 = vst.msk [vmem:[%s260 + $0x8] sm:$0xf] %vm3817, %v3815
      %3821 = vst.msk [vmem:[%s260 + $0xc] sm:$0xf] %vm3817, %v3816
      %p3822 = scmp.lt.s32.totalorder %s20, 1
      %s3823 = scalar_select %p3822, %s20, 1
      %p3824 = scmp.lt.s32.totalorder %s21, 1
      %s3825 = scalar_select %p3824, %s21, 1
      %s3826 = smul.addr %s3825, 4
      %s3827 = smul.addr %s3823, 8
      %s3828 = sadd.s32 %s3826, %s3827
      %s3829 = smul.addr %s3828, 4
      %s3830 = scalar_lea.vmem %s5, %s3829
      // Predicated region
      $region41: #{frvsr_sr_forward.7} parent=39 // pred_check
        %p3831 = pneg %p160
      $region42: #{frvsr_sr_forward.7} parent=39 // pred_check_branch
        %3833 = sbr.rel (%p3831) target = $region44
      $region43: #{frvsr_sr_forward.7} parent=39 // pred_region
        _
      $region44: #{frvsr_sr_forward.7} parent=39 // pred_fallthru
        _
    $region40: #{frvsr_sr_forward.7} parent=5 // pred_fallthru
      _
    %p3834 = scmp.le.s32.totalorder 2, %s11
    // Predicated region
    $region45: #{frvsr_sr_forward.7} parent=5 // pred_check
      %p3835 = pneg %p3834
    $region46: #{frvsr_sr_forward.7} parent=5 // pred_check_branch
      %3837 = sbr.rel (%p3835) target = $region48
    $region47: #{frvsr_sr_forward.7} parent=5 // pred_region
      %s3838 = ssub.s32 %s11, 2
      // Predicated region
      $region49: #{frvsr_sr_forward.7} parent=47 // pred_check
        %p3839 = pneg %p166
      $region50: #{frvsr_sr_forward.7} parent=47 // pred_check_branch
        %3841 = sbr.rel (%p3839) target = $region52
      $region51: #{frvsr_sr_forward.7} parent=47 // pred_region
        %p3842 = scmp.lt.s32.totalorder %s22, 1
        %s3843 = scalar_select %p3842, %s22, 1
        %p3844 = scmp.lt.s32.totalorder %s23, 1
        %s3845 = scalar_select %p3844, %s23, 1
        %s3846 = smul.addr %s3845, 4
        %s3847 = smul.addr %s3843, 8
        %s3848 = sadd.s32 %s3846, %s3847
        %s3849 = smul.addr %s3848, 4
        %s3850 = scalar_lea.vmem %s5, %s3849
      $region52: #{frvsr_sr_forward.7} parent=47 // pred_fallthru
        _
    $region48: #{frvsr_sr_forward.7} parent=5 // pred_fallthru
      _
  $region6: #{frvsr_sr_forward.7} parent=0 // loop_footer
    %s15 = sadd.s32 1, %s11
  $region7: #{frvsr_sr_forward.7} parent=0 // loop_footer_branch
    %10 = sbr.rel target = $region3
  $region8: #{frvsr_sr_forward.7} parent=0 // loop_exit
    _

// kernel: frvsr_sr_forward.10
$region0: #{frvsr_sr_forward.10}
  #allocation0 [shape = 'u32[]', space=smem, size = 0x4, offset = 0x4, fixed_abs, tag = 'smem constant byte address 0x4 - core index']
  #allocation1 [shape = 'u32[144,128]{1,0:T(1,128)}', space=vmem, size = 0x12000, scoped, tag = 'internal scratch']
  %s0 = inlined_call_operand.vmem [shape: bf16[2,4,5,17,64], index: 0, kind: input, shape index: {}]
  %s1 = inlined_call_operand.vmem [shape: bf16[256,256], index: 1, kind: input, shape index: {}]
  %s2 = inlined_call_operand.vmem [shape: f32[1,256], index: 2, kind: input, shape index: {}]
  %s3 = inlined_call_operand.vmem [shape: bf16[2,4,8,16,128], index: 3, kind: output, shape index: {}]
  %s4 = sld [smem:[#allocation0]]
  $region45: #{frvsr_sr_forward.10} parent=0
    _
  %s6 = ssub.s32 1, %s4
  %s7 = scalar_select 0, %s6, %s4
  loop: start=0, step=1, limit=10
  $region2: #{frvsr_sr_forward.10} parent=0 // loop_pre_header
    _
  $region3: #{frvsr_sr_forward.10} parent=0 // loop_header
    %s9 = sphi 0, %s13
    %p10 = scmp.ge.s32.totalorder %s9, 10
    %s16 = sphi 0, %s28
    %s17 = sphi 0, %s24
    %s18 = sphi 0, %s16
    %s19 = sphi 0, %s17
    %s20 = sphi 0, %s18
    %s21 = sphi 0, %s19
    %s33 = sphi 0, %s35
    %s36 = sphi 0, %s33
    %s37 = sphi 0, %s36
    %s53 = sphi 0, %s37
    %s57 = sphi 0, %s57
    %s59 = sphi 0, %s57
    %s60 = sphi 0, %s59
    %s74 = sphi 0, %s60
    %s78 = sphi 0, %s78
    %s80 = sphi 0, %s78
    %s81 = sphi 0, %s80
    %s95 = sphi 0, %s81
    %s103 = sphi 0, %s105
    %s106 = sphi 0, %s103
    %s107 = sphi 0, %s106
    %s123 = sphi 0, %s107
  $region4: #{frvsr_sr_forward.10} parent=0 // loop_header_branch
    %12 = sbr.rel (%p10) target = $region8
  $region5: #{frvsr_sr_forward.10} parent=0 // loop_body
    %s14 = ssub.s32 %s9, 1
    %s15 = ssub.s32 %s9, 2
    %s22 = sadd.s32 1, %s17
    %p23 = scmp.ge.s32.totalorder %s22, 4
    %s24 = scalar_select %p23, 0, %s22
    %s25 = sadd.s32 1, %s16
    %s26 = scalar_select %p23, %s25, %s16
    %p27 = scmp.ge.s32.totalorder %s26, 2
    %s28 = scalar_select %p27, 0, %s26
    %s29 = ssub.s32 %s16, %s28
    %s30 = ssub.s32 %s17, %s24
    %s31 = sor.u32 %s29, %s30
    %p32 = scmp.eq.s32.totalorder %s31, 0
    %s34 = sadd.s32 %s33, 1
    %s35 = scalar_select %p32, %s33, %s34
    %p38 = pneg %p32
    %p39 = scmp.eq.s32.totalorder %s9, 7
    %p40 = por %p38, %p39
    %p41 = scmp.ne.s32.totalorder %s33, %s36
    %p42 = scmp.eq.s32.totalorder %s9, 0
    %p43 = por %p41, %p42
    %p44 = scmp.ne.s32.totalorder %s33, %s36
    %p45 = scmp.eq.s32.totalorder %s14, 7
    %p46 = por %p44, %p45
    %p47 = scmp.ne.s32.totalorder %s36, %s37
    %p48 = scmp.eq.s32.totalorder %s14, 0
    %p49 = por %p47, %p48
    %p50 = scmp.ne.s32.totalorder %s36, %s37
    %p51 = scmp.eq.s32.totalorder %s15, 7
    %p52 = por %p50, %p51
    %p54 = scmp.ne.s32.totalorder %s37, %s53
    %p55 = scmp.eq.s32.totalorder %s15, 0
    %p56 = por %p54, %p55
    %s58 = sadd.s32 %s57, 1
    %p61 = scmp.eq.s32.totalorder %s9, 7
    %p62 = scmp.ne.s32.totalorder %s57, %s59
    %p63 = scmp.eq.s32.totalorder %s9, 0
    %p64 = por %p62, %p63
    %p65 = scmp.ne.s32.totalorder %s57, %s59
    %p66 = scmp.eq.s32.totalorder %s14, 7
    %p67 = por %p65, %p66
    %p68 = scmp.ne.s32.totalorder %s59, %s60
    %p69 = scmp.eq.s32.totalorder %s14, 0
    %p70 = por %p68, %p69
    %p71 = scmp.ne.s32.totalorder %s59, %s60
    %p72 = scmp.eq.s32.totalorder %s15, 7
    %p73 = por %p71, %p72
    %p75 = scmp.ne.s32.totalorder %s60, %s74
    %p76 = scmp.eq.s32.totalorder %s15, 0
    %p77 = por %p75, %p76
    %s79 = sadd.s32 %s78, 1
    %p82 = scmp.eq.s32.totalorder %s9, 7
    %p83 = scmp.ne.s32.totalorder %s78, %s80
    %p84 = scmp.eq.s32.totalorder %s9, 0
    %p85 = por %p83, %p84
    %p86 = scmp.ne.s32.totalorder %s78, %s80
    %p87 = scmp.eq.s32.totalorder %s14, 7
    %p88 = por %p86, %p87
    %p89 = scmp.ne.s32.totalorder %s80, %s81
    %p90 = scmp.eq.s32.totalorder %s14, 0
    %p91 = por %p89, %p90
    %p92 = scmp.ne.s32.totalorder %s80, %s81
    %p93 = scmp.eq.s32.totalorder %s15, 7
    %p94 = por %p92, %p93
    %p96 = scmp.ne.s32.totalorder %s81, %s95
    %p97 = scmp.eq.s32.totalorder %s15, 0
    %p98 = por %p96, %p97
    %s99 = ssub.s32 %s16, %s28
    %s100 = ssub.s32 %s17, %s24
    %s101 = sor.u32 %s99, %s100
    %p102 = scmp.eq.s32.totalorder %s101, 0
    %s104 = sadd.s32 %s103, 1
    %s105 = scalar_select %p102, %s103, %s104
    %p108 = pneg %p102
    %p109 = scmp.eq.s32.totalorder %s9, 7
    %p110 = por %p108, %p109
    %p111 = scmp.ne.s32.totalorder %s103, %s106
    %p112 = scmp.eq.s32.totalorder %s9, 0
    %p113 = por %p111, %p112
    %p114 = scmp.ne.s32.totalorder %s103, %s106
    %p115 = scmp.eq.s32.totalorder %s14, 7
    %p116 = por %p114, %p115
    %p117 = scmp.ne.s32.totalorder %s106, %s107
    %p118 = scmp.eq.s32.totalorder %s14, 0
    %p119 = por %p117, %p118
    %p120 = scmp.ne.s32.totalorder %s106, %s107
    %p121 = scmp.eq.s32.totalorder %s15, 7
    %p122 = por %p120, %p121
    %p124 = scmp.ne.s32.totalorder %s107, %s123
    %p125 = scmp.eq.s32.totalorder %s15, 0
    %p126 = por %p124, %p125
    %p127 = scmp.le.s32.totalorder 1, %s9
    %p128 = scmp.lt.s32.totalorder %s9, 9
    %p129 = pnand %p127, %p128
    %p130 = pneg %p129
    // Predicated region
    $region9: #{frvsr_sr_forward.10} parent=5 // pred_check
      _
    $region10: #{frvsr_sr_forward.10} parent=5 // pred_check_branch
      %132 = sbr.rel (%p129) target = $region12
    $region11: #{frvsr_sr_forward.10} parent=5 // pred_region
      %s133 = ssub.s32 %s9, 1
      // Predicated region
      $region13: #{frvsr_sr_forward.10} parent=11 // pred_check
        %p134 = pneg %p70
      $region14: #{frvsr_sr_forward.10} parent=11 // pred_check_branch
        %136 = sbr.rel (%p134) target = $region16
      $region15: #{frvsr_sr_forward.10} parent=11 // pred_region
        _
      $region16: #{frvsr_sr_forward.10} parent=11 // pred_fallthru
        _
      // Predicated region
      $region17: #{frvsr_sr_forward.10} parent=11 // pred_check
        %p137 = pneg %p91
      $region18: #{frvsr_sr_forward.10} parent=11 // pred_check_branch
        %139 = sbr.rel (%p137) target = $region20
      $region19: #{frvsr_sr_forward.10} parent=11 // pred_region
        _
      $region20: #{frvsr_sr_forward.10} parent=11 // pred_fallthru
        _
    $region12: #{frvsr_sr_forward.10} parent=5 // pred_fallthru
      _
    %p140 = scmp.lt.s32.totalorder %s9, 8
    // Predicated region
    $region21: #{frvsr_sr_forward.10} parent=5 // pred_check
      %p141 = pneg %p140
    $region22: #{frvsr_sr_forward.10} parent=5 // pred_check_branch
      %143 = sbr.rel (%p141) target = $region24
    $region23: #{frvsr_sr_forward.10} parent=5 // pred_region
      // Predicated region
      $region25: #{frvsr_sr_forward.10} parent=23 // pred_check
        %p144 = pneg %p43
      $region26: #{frvsr_sr_forward.10} parent=23 // pred_check_branch
        %146 = sbr.rel (%p144) target = $region28
      $region27: #{frvsr_sr_forward.10} parent=23 // pred_region
        %p147 = scmp.lt.s32.totalorder %s16, 1
        %s148 = scalar_select %p147, %s16, 1
        %p149 = scmp.lt.s32.totalorder %s17, 3
        %s150 = scalar_select %p149, %s17, 3
        %s151 = smul.addr %s150, 15
        %s152 = smul.addr %s148, 60
        %s153 = sadd.s32 %s151, %s152
        %s154 = smul.addr %s153, 4
        %s155 = scalar_lea.vmem %s0, %s154
      $region28: #{frvsr_sr_forward.10} parent=23 // pred_fallthru
        _
    $region24: #{frvsr_sr_forward.10} parent=5 // pred_fallthru
      _
    %p156 = scmp.le.s32.totalorder 1, %s9
    %p157 = scmp.lt.s32.totalorder %s9, 9
    %p158 = pnand %p156, %p157
    %p159 = pneg %p158
    // Predicated region
    $region29: #{frvsr_sr_forward.10} parent=5 // pred_check
      _
    $region30: #{frvsr_sr_forward.10} parent=5 // pred_check_branch
      %161 = sbr.rel (%p158) target = $region32
    $region31: #{frvsr_sr_forward.10} parent=5 // pred_region
      %s162 = ssub.s32 %s9, 1
      %p163 = scmp.lt.s32.totalorder %s18, 1
      %s164 = scalar_select %p163, %s18, 1
      %p165 = scmp.lt.s32.totalorder %s19, 3
      %s166 = scalar_select %p165, %s19, 3
      %s167 = smul.addr %s166, 15
      %s168 = smul.addr %s164, 60
      %s169 = sadd.s32 %s167, %s168
      %s170 = smul.addr %s169, 4
      %s171 = scalar_lea.vmem %s0, %s170
      %p172 = pneg %p49
      %p173 = pneg %p46
      %p174 = pneg %p70
      %p175 = pneg %p67
      %p176 = pneg %p91
      %p177 = pneg %p88
      %p178 = pneg %p119
      %p179 = pneg %p116
      %p180 = scmp.lt.s32.totalorder %s18, 1
      %s181 = scalar_select %p180, %s18, 1
      %p182 = scmp.lt.s32.totalorder %s19, 3
      %s183 = scalar_select %p182, %s19, 3
      %s184 = smul.addr %s183, 16
      %s185 = smul.addr %s181, 64
      %s186 = sadd.s32 %s184, %s185
      %s187 = smul.addr %s186, 4
      %s188 = scalar_lea.vmem %s3, %s187
      %p189 = scmp.lt.s32.totalorder %s18, 1
      %s190 = scalar_select %p189, %s18, 1
      %p191 = scmp.lt.s32.totalorder %s19, 3
      %s192 = scalar_select %p191, %s19, 3
      %s193 = smul.addr %s192, 15
      %s194 = smul.addr %s190, 60
      %s195 = sadd.s32 %s193, %s194
      %s196 = smul.addr %s195, 4
      %s197 = scalar_lea.vmem %s0, %s196
      %p198 = scmp.lt.s32.totalorder %s18, 1
      %s199 = scalar_select %p198, %s18, 1
      %p200 = scmp.lt.s32.totalorder %s19, 3
      %s201 = scalar_select %p200, %s19, 3
      %s202 = smul.addr %s201, 16
      %s203 = smul.addr %s199, 64
      %s204 = sadd.s32 %s202, %s203
      %s205 = smul.addr %s204, 4
      %s206 = scalar_lea.vmem %s3, %s205
      %v207 = vld [vmem:[%s197] sm:$0xf]
      %v208 = vld [vmem:[%s197 + $0x4] sm:$0xf]
      %v209 = vld [vmem:[%s197 + $0x8] sm:$0x1]
      %v210 = vld [vmem:[%s197 + $0xc] sm:$0xf]
      %v211 = vld [vmem:[%s197 + $0x10] sm:$0xf]
      %v212 = vld [vmem:[%s197 + $0x14] sm:$0x1]
      %v213 = vld [vmem:[%s197 + $0x18] sm:$0xf]
      %v214 = vld [vmem:[%s197 + $0x1c] sm:$0xf]
      %v215 = vld [vmem:[%s197 + $0x20] sm:$0x1]
      %v216 = vld [vmem:[%s197 + $0x24] sm:$0xf]
      %v217 = vld [vmem:[%s197 + $0x28] sm:$0xf]
      %v218 = vld [vmem:[%s197 + $0x2c] sm:$0x1]
      %s219 = scalar_lea.vmem %s197, 12
      %v220 = vld [vmem:[%s219] sm:$0xf]
      %v221 = vld [vmem:[%s219 + $0x4] sm:$0xf]
      %v222 = vld [vmem:[%s219 + $0x8] sm:$0x1]
      %v223 = vld [vmem:[%s219 + $0xc] sm:$0xf]
      %v224 = vld [vmem:[%s219 + $0x10] sm:$0xf]
      %v225 = vld [vmem:[%s219 + $0x14] sm:$0x1]
      %v226 = vld [vmem:[%s219 + $0x18] sm:$0xf]
      %v227 = vld [vmem:[%s219 + $0x1c] sm:$0xf]
      %v228 = vld [vmem:[%s219 + $0x20] sm:$0x1]
      %v229 = vld [vmem:[%s219 + $0x24] sm:$0xf]
      %v230 = vld [vmem:[%s219 + $0x28] sm:$0xf]
      %v231 = vld [vmem:[%s219 + $0x2c] sm:$0x1]
      %v240 = vunpack.c.l.b16 %v207
      %v241 = vunpack.c.l.b16 %v208
      %v242 = vunpack.c.l.b16 %v210
      %v243 = vunpack.c.l.b16 %v211
      %v244 = vunpack.c.l.b16 %v213
      %v245 = vunpack.c.l.b16 %v214
      %v246 = vunpack.c.l.b16 %v216
      %v247 = vunpack.c.l.b16 %v217
      %v248 = vpack.c.b16 %v241, %v240
      %v249 = vpack.c.b16 %v243, %v242
      %v250 = vpack.c.b16 %v245, %v244
      %v251 = vpack.c.b16 %v247, %v246
      %v256 = vunpack.c.l.b16 %v209
      %v257 = vunpack.c.l.b16 %v212
      %v258 = vunpack.c.l.b16 %v215
      %v259 = vunpack.c.l.b16 %v218
      %v260 = vpack.c.b16 %v256, %v256
      %v261 = vpack.c.b16 %v257, %v257
      %v262 = vpack.c.b16 %v258, %v258
      %v263 = vpack.c.b16 %v259, %v259
      %vm264 = vsmask.f32 7424
      %v266 = vshrl.u32 %v248, 16
      %v268 = vshll.u32 %v248, 16
      %v270 = vrot.slane %v268, 1
      %v271 = vor.u32 %v266, %v270
      %v273 = vshll.u32 %v260, 16
      %v275 = vrot.slane %v273, 1
      %v276 = vsel %vm264, %v271, %v275
      %v278 = vshrl.u32 %v249, 16
      %v280 = vshll.u32 %v249, 16
      %v282 = vrot.slane %v280, 1
      %v283 = vor.u32 %v278, %v282
      %v285 = vshll.u32 %v261, 16
      %v287 = vrot.slane %v285, 1
      %v288 = vsel %vm264, %v283, %v287
      %v290 = vshrl.u32 %v250, 16
      %v292 = vshll.u32 %v250, 16
      %v294 = vrot.slane %v292, 1
      %v295 = vor.u32 %v290, %v294
      %v297 = vshll.u32 %v262, 16
      %v299 = vrot.slane %v297, 1
      %v300 = vsel %vm264, %v295, %v299
      %v302 = vshrl.u32 %v251, 16
      %v304 = vshll.u32 %v251, 16
      %v306 = vrot.slane %v304, 1
      %v307 = vor.u32 %v302, %v306
      %v309 = vshll.u32 %v263, 16
      %v311 = vrot.slane %v309, 1
      %v312 = vsel %vm264, %v307, %v311
      %313 = vrot.lane.b32.xlu0 %v276, 64
      %v314 = vpop.permute.xlu0 %313
      %315 = vrot.lane.b32.xlu0 %v288, 64
      %v316 = vpop.permute.xlu0 %315
      %317 = vrot.lane.b32.xlu0 %v300, 64
      %v318 = vpop.permute.xlu0 %317
      %319 = vrot.lane.b32.xlu0 %v312, 64
      %v320 = vpop.permute.xlu0 %319
      %v329 = vunpack.c.l.b16 %v220
      %v330 = vunpack.c.l.b16 %v221
      %v331 = vunpack.c.l.b16 %v223
      %v332 = vunpack.c.l.b16 %v224
      %v333 = vunpack.c.l.b16 %v226
      %v334 = vunpack.c.l.b16 %v227
      %v335 = vunpack.c.l.b16 %v229
      %v336 = vunpack.c.l.b16 %v230
      %v337 = vpack.c.b16 %v330, %v329
      %v338 = vpack.c.b16 %v332, %v331
      %v339 = vpack.c.b16 %v334, %v333
      %v340 = vpack.c.b16 %v336, %v335
      %v345 = vunpack.c.l.b16 %v222
      %v346 = vunpack.c.l.b16 %v225
      %v347 = vunpack.c.l.b16 %v228
      %v348 = vunpack.c.l.b16 %v231
      %v349 = vpack.c.b16 %v345, %v345
      %v350 = vpack.c.b16 %v346, %v346
      %v351 = vpack.c.b16 %v347, %v347
      %v352 = vpack.c.b16 %v348, %v348
      %v354 = vshrl.u32 %v337, 16
      %v356 = vshll.u32 %v337, 16
      %v358 = vrot.slane %v356, 1
      %v359 = vor.u32 %v354, %v358
      %v361 = vshll.u32 %v349, 16
      %v363 = vrot.slane %v361, 1
      %v364 = vsel %vm264, %v359, %v363
      %v366 = vshrl.u32 %v338, 16
      %v368 = vshll.u32 %v338, 16
      %v370 = vrot.slane %v368, 1
      %v371 = vor.u32 %v366, %v370
      %v373 = vshll.u32 %v350, 16
      %v375 = vrot.slane %v373, 1
      %v376 = vsel %vm264, %v371, %v375
      %v378 = vshrl.u32 %v339, 16
      %v380 = vshll.u32 %v339, 16
      %v382 = vrot.slane %v380, 1
      %v383 = vor.u32 %v378, %v382
      %v385 = vshll.u32 %v351, 16
      %v387 = vrot.slane %v385, 1
      %v388 = vsel %vm264, %v383, %v387
      %v390 = vshrl.u32 %v340, 16
      %v392 = vshll.u32 %v340, 16
      %v394 = vrot.slane %v392, 1
      %v395 = vor.u32 %v390, %v394
      %v397 = vshll.u32 %v352, 16
      %v399 = vrot.slane %v397, 1
      %v400 = vsel %vm264, %v395, %v399
      %401 = vrot.lane.b32.xlu0 %v364, 64
      %v402 = vpop.permute.xlu0 %401
      %403 = vrot.lane.b32.xlu0 %v376, 64
      %v404 = vpop.permute.xlu0 %403
      %405 = vrot.lane.b32.xlu0 %v388, 64
      %v406 = vpop.permute.xlu0 %405
      %407 = vrot.lane.b32.xlu0 %v400, 64
      %v408 = vpop.permute.xlu0 %407
      %vm409 = vcmask 523264
      %v411 = vsel %vm409, %v248, %v314
      %v414 = vsel %vm409, %v249, %v316
      %v417 = vsel %vm409, %v250, %v318
      %v420 = vsel %vm409, %v251, %v320
      %v423 = vsel %vm409, %v337, %v402
      %v426 = vsel %vm409, %v338, %v404
      %v429 = vsel %vm409, %v339, %v406
      %v432 = vsel %vm409, %v340, %v408
      %v434 = vld [vmem:[%s1] sm:$0xff]
      %v435 = vld [vmem:[%s1 + $0x8] sm:$0xff]
      %v436 = vld [vmem:[%s1 + $0x10] sm:$0xff]
      %v437 = vld [vmem:[%s1 + $0x18] sm:$0xff]
      %v438 = vld [vmem:[%s1 + $0x20] sm:$0xff]
      %v439 = vld [vmem:[%s1 + $0x28] sm:$0xff]
      %v440 = vld [vmem:[%s1 + $0x30] sm:$0xff]
      %v441 = vld [vmem:[%s1 + $0x38] sm:$0xff]
      %v442 = vld [vmem:[%s1 + $0x40] sm:$0xff]
      %v443 = vld [vmem:[%s1 + $0x48] sm:$0xff]
      %v444 = vld [vmem:[%s1 + $0x50] sm:$0xff]
      %v445 = vld [vmem:[%s1 + $0x58] sm:$0xff]
      %v446 = vld [vmem:[%s1 + $0x60] sm:$0xff]
      %v447 = vld [vmem:[%s1 + $0x68] sm:$0xff]
      %v448 = vld [vmem:[%s1 + $0x70] sm:$0xff]
      %v449 = vld [vmem:[%s1 + $0x78] sm:$0xff]
      %v450 = vld [vmem:[%s1 + $0x80] sm:$0xff]
      %v451 = vld [vmem:[%s1 + $0x88] sm:$0xff]
      %v452 = vld [vmem:[%s1 + $0x90] sm:$0xff]
      %v453 = vld [vmem:[%s1 + $0x98] sm:$0xff]
      %v454 = vld [vmem:[%s1 + $0xa0] sm:$0xff]
      %v455 = vld [vmem:[%s1 + $0xa8] sm:$0xff]
      %v456 = vld [vmem:[%s1 + $0xb0] sm:$0xff]
      %v457 = vld [vmem:[%s1 + $0xb8] sm:$0xff]
      %v458 = vld [vmem:[%s1 + $0xc0] sm:$0xff]
      %v459 = vld [vmem:[%s1 + $0xc8] sm:$0xff]
      %v460 = vld [vmem:[%s1 + $0xd0] sm:$0xff]
      %v461 = vld [vmem:[%s1 + $0xd8] sm:$0xff]
      %v462 = vld [vmem:[%s1 + $0xe0] sm:$0xff]
      %v463 = vld [vmem:[%s1 + $0xe8] sm:$0xff]
      %v464 = vld [vmem:[%s1 + $0xf0] sm:$0xff]
      %v465 = vld [vmem:[%s1 + $0xf8] sm:$0xff]
      %v466 = vld [vmem:[%s2] sm:$0x3]
      %v468 = vlaneseq
      %v469 = vshrl.u32 %v468, 7
      %v470 = vsub.s32 0, %v469
      %v471 = vrot.slane %v466, %v470
      %v472 = vlaneseq
      %v473 = vshrl.u32 %v472, 7
      %v474 = vsub.s32 1, %v473
      %v475 = vrot.slane %v466, %v474
      %v510 = vunpack.c.l.b16 %v434
      %v511 = vunpack.c.h.b16 %v434
      %v512 = vunpack.c.l.b16 %v435
      %v513 = vunpack.c.h.b16 %v435
      %v514 = vunpack.c.l.b16 %v436
      %v515 = vunpack.c.h.b16 %v436
      %v516 = vunpack.c.l.b16 %v437
      %v517 = vunpack.c.h.b16 %v437
      %v518 = vunpack.c.l.b16 %v438
      %v519 = vunpack.c.h.b16 %v438
      %v520 = vunpack.c.l.b16 %v439
      %v521 = vunpack.c.h.b16 %v439
      %v522 = vunpack.c.l.b16 %v440
      %v523 = vunpack.c.h.b16 %v440
      %v524 = vunpack.c.l.b16 %v441
      %v525 = vunpack.c.h.b16 %v441
      %v526 = vunpack.c.l.b16 %v442
      %v527 = vunpack.c.h.b16 %v442
      %v528 = vunpack.c.l.b16 %v443
      %v529 = vunpack.c.h.b16 %v443
      %v530 = vunpack.c.l.b16 %v444
      %v531 = vunpack.c.h.b16 %v444
      %v532 = vunpack.c.l.b16 %v445
      %v533 = vunpack.c.h.b16 %v445
      %v534 = vunpack.c.l.b16 %v446
      %v535 = vunpack.c.h.b16 %v446
      %v536 = vunpack.c.l.b16 %v447
      %v537 = vunpack.c.h.b16 %v447
      %v538 = vunpack.c.l.b16 %v448
      %v539 = vunpack.c.h.b16 %v448
      %v540 = vunpack.c.l.b16 %v449
      %v541 = vunpack.c.h.b16 %v449
      %v542 = vunpack.c.l.b16 %v450
      %v543 = vunpack.c.h.b16 %v450
      %v544 = vunpack.c.l.b16 %v451
      %v545 = vunpack.c.h.b16 %v451
      %v546 = vunpack.c.l.b16 %v452
      %v547 = vunpack.c.h.b16 %v452
      %v548 = vunpack.c.l.b16 %v453
      %v549 = vunpack.c.h.b16 %v453
      %v550 = vunpack.c.l.b16 %v454
      %v551 = vunpack.c.h.b16 %v454
      %v552 = vunpack.c.l.b16 %v455
      %v553 = vunpack.c.h.b16 %v455
      %v554 = vunpack.c.l.b16 %v456
      %v555 = vunpack.c.h.b16 %v456
      %v556 = vunpack.c.l.b16 %v457
      %v557 = vunpack.c.h.b16 %v457
      %v558 = vunpack.c.l.b16 %v458
      %v559 = vunpack.c.h.b16 %v458
      %v560 = vunpack.c.l.b16 %v459
      %v561 = vunpack.c.h.b16 %v459
      %v562 = vunpack.c.l.b16 %v460
      %v563 = vunpack.c.h.b16 %v460
      %v564 = vunpack.c.l.b16 %v461
      %v565 = vunpack.c.h.b16 %v461
      %v566 = vunpack.c.l.b16 %v462
      %v567 = vunpack.c.h.b16 %v462
      %v568 = vunpack.c.l.b16 %v463
      %v569 = vunpack.c.h.b16 %v463
      %v570 = vunpack.c.l.b16 %v464
      %v571 = vunpack.c.h.b16 %v464
      %v572 = vunpack.c.l.b16 %v465
      %v573 = vunpack.c.h.b16 %v465
      %v574 = vpack.c.b16 %v512, %v510
      %v575 = vpack.c.b16 %v513, %v511
      %v576 = vpack.c.b16 %v516, %v514
      %v577 = vpack.c.b16 %v517, %v515
      %v578 = vpack.c.b16 %v520, %v518
      %v579 = vpack.c.b16 %v521, %v519
      %v580 = vpack.c.b16 %v524, %v522
      %v581 = vpack.c.b16 %v525, %v523
      %v582 = vpack.c.b16 %v528, %v526
      %v583 = vpack.c.b16 %v529, %v527
      %v584 = vpack.c.b16 %v532, %v530
      %v585 = vpack.c.b16 %v533, %v531
      %v586 = vpack.c.b16 %v536, %v534
      %v587 = vpack.c.b16 %v537, %v535
      %v588 = vpack.c.b16 %v540, %v538
      %v589 = vpack.c.b16 %v541, %v539
      %v590 = vpack.c.b16 %v544, %v542
      %v591 = vpack.c.b16 %v545, %v543
      %v592 = vpack.c.b16 %v548, %v546
      %v593 = vpack.c.b16 %v549, %v547
      %v594 = vpack.c.b16 %v552, %v550
      %v595 = vpack.c.b16 %v553, %v551
      %v596 = vpack.c.b16 %v556, %v554
      %v597 = vpack.c.b16 %v557, %v555
      %v598 = vpack.c.b16 %v560, %v558
      %v599 = vpack.c.b16 %v561, %v559
      %v600 = vpack.c.b16 %v564, %v562
      %v601 = vpack.c.b16 %v565, %v563
      %v602 = vpack.c.b16 %v568, %v566
      %v603 = vpack.c.b16 %v569, %v567
      %v604 = vpack.c.b16 %v572, %v570
      %v605 = vpack.c.b16 %v573, %v571
      %638 = vmatprep.subr.bf16.mxu0 %v575
      %639 = vmatpush1.bf16.msra.mxu0 %v574
      %640 = vmatprep.subr.bf16.mxu0 %v577
      %641 = vmatpush1.bf16.msra.mxu0 %v576
      %642 = vmatprep.subr.bf16.mxu0 %v579
      %643 = vmatpush1.bf16.msra.mxu0 %v578
      %644 = vmatprep.subr.bf16.mxu0 %v581
      %645 = vmatpush1.bf16.msra.mxu0 %v580
      %646 = vmatprep.subr.bf16.mxu0 %v583
      %647 = vmatpush1.bf16.msra.mxu0 %v582
      %648 = vmatprep.subr.bf16.mxu0 %v585
      %649 = vmatpush1.bf16.msra.mxu0 %v584
      %650 = vmatprep.subr.bf16.mxu0 %v587
      %651 = vmatpush1.bf16.msra.mxu0 %v586
      %652 = vmatprep.subr.bf16.mxu0 %v589
      %653 = vmatpush1.bf16.msra.mxu0 %v588
      %654 = vmatprep.subr.bf16.mxu0 %v591
      %655 = vmatpush1.bf16.msra.mxu0 %v590
      %656 = vmatprep.subr.bf16.mxu0 %v593
      %657 = vmatpush1.bf16.msra.mxu0 %v592
      %658 = vmatprep.subr.bf16.mxu0 %v595
      %659 = vmatpush1.bf16.msra.mxu0 %v594
      %660 = vmatprep.subr.bf16.mxu0 %v597
      %661 = vmatpush1.bf16.msra.mxu0 %v596
      %662 = vmatprep.subr.bf16.mxu0 %v599
      %663 = vmatpush1.bf16.msra.mxu0 %v598
      %664 = vmatprep.subr.bf16.mxu0 %v601
      %665 = vmatpush1.bf16.msra.mxu0 %v600
      %666 = vmatprep.subr.bf16.mxu0 %v603
      %667 = vmatpush1.bf16.msra.mxu0 %v602
      %668 = vmatprep.subr.bf16.mxu0 %v605
      %669 = vmatpush1.bf16.msra.mxu0 %v604
      %670 = vmatprep.mubr.bf16.mxu0 %v423
      %671 = vmatmul.mubr.bf16.gmra.mrb[0].mxu0 %v411
      %v672 = vpop.f32.mrb[0].mxu0
      %v673 = vadd.f32 %v471, %v672
      %v674 = vpop.f32.mrb[0].mxu0
      %v675 = vadd.f32 %v475, %v674
      %v676 = vpop.f32.mrb[0].mxu0
      %v677 = vadd.f32 %v471, %v676
      %v678 = vpop.f32.mrb[0].mxu0
      %v679 = vadd.f32 %v475, %v678
      %680 = vmatprep.mubr.bf16.mxu0 %v426
      %681 = vmatmul.mubr.bf16.gmra.mrb[0].mxu0 %v414
      %v682 = vpop.f32.mrb[0].mxu0
      %v683 = vadd.f32 %v471, %v682
      %v684 = vpop.f32.mrb[0].mxu0
      %v685 = vadd.f32 %v475, %v684
      %v686 = vpop.f32.mrb[0].mxu0
      %v687 = vadd.f32 %v471, %v686
      %v688 = vpop.f32.mrb[0].mxu0
      %v689 = vadd.f32 %v475, %v688
      %690 = vmatprep.mubr.bf16.mxu0 %v429
      %691 = vmatmul.mubr.bf16.gmra.mrb[0].mxu0 %v417
      %v692 = vpop.f32.mrb[0].mxu0
      %v693 = vadd.f32 %v471, %v692
      %v694 = vpop.f32.mrb[0].mxu0
      %v695 = vadd.f32 %v475, %v694
      %v696 = vpop.f32.mrb[0].mxu0
      %v697 = vadd.f32 %v471, %v696
      %v698 = vpop.f32.mrb[0].mxu0
      %v699 = vadd.f32 %v475, %v698
      %700 = vmatprep.mubr.bf16.mxu0 %v432
      %701 = vmatmul.mubr.bf16.gmra.mrb[0].mxu0 %v420
      %v702 = vpop.f32.mrb[0].mxu0
      %v703 = vadd.f32 %v471, %v702
      %v704 = vpop.f32.mrb[0].mxu0
      %v705 = vadd.f32 %v475, %v704
      %v706 = vpop.f32.mrb[0].mxu0
      %v707 = vadd.f32 %v471, %v706
      %v708 = vpop.f32.mrb[0].mxu0
      %v709 = vadd.f32 %v475, %v708
      %710 = vdwg.mxu0
      %v711 = vmax.f32 %v673, 0.0
      %v712 = vmax.f32 %v675, 0.0
      %v713 = vmax.f32 %v677, 0.0
      %v714 = vmax.f32 %v679, 0.0
      %v715 = vmax.f32 %v683, 0.0
      %v716 = vmax.f32 %v685, 0.0
      %v717 = vmax.f32 %v687, 0.0
      %v718 = vmax.f32 %v689, 0.0
      %v719 = vmax.f32 %v693, 0.0
      %v720 = vmax.f32 %v695, 0.0
      %v721 = vmax.f32 %v697, 0.0
      %v722 = vmax.f32 %v699, 0.0
      %v723 = vmax.f32 %v703, 0.0
      %v724 = vmax.f32 %v705, 0.0
      %v725 = vmax.f32 %v707, 0.0
      %v726 = vmax.f32 %v709, 0.0
      %v727 = vpack.c.bf16 %v713, %v711
      %v728 = vpack.c.bf16 %v714, %v712
      %v729 = vpack.c.bf16 %v717, %v715
      %v730 = vpack.c.bf16 %v718, %v716
      %v731 = vpack.c.bf16 %v721, %v719
      %v732 = vpack.c.bf16 %v722, %v720
      %v733 = vpack.c.bf16 %v725, %v723
      %v734 = vpack.c.bf16 %v726, %v724
      %v743 = vunpack.c.l.b16 %v727
      %v744 = vunpack.c.h.b16 %v727
      %v745 = vunpack.c.l.b16 %v728
      %v746 = vunpack.c.h.b16 %v728
      %v747 = vunpack.c.l.b16 %v729
      %v748 = vunpack.c.h.b16 %v729
      %v749 = vunpack.c.l.b16 %v730
      %v750 = vunpack.c.h.b16 %v730
      %v751 = vunpack.c.l.b16 %v731
      %v752 = vunpack.c.h.b16 %v731
      %v753 = vunpack.c.l.b16 %v732
      %v754 = vunpack.c.h.b16 %v732
      %v755 = vunpack.c.l.b16 %v733
      %v756 = vunpack.c.h.b16 %v733
      %v757 = vunpack.c.l.b16 %v734
      %v758 = vunpack.c.h.b16 %v734
      %v759 = vpack.c.b16 %v743, %v743
      %v760 = vpack.c.b16 %v744, %v744
      %v761 = vpack.c.b16 %v745, %v745
      %v762 = vpack.c.b16 %v746, %v746
      %v763 = vpack.c.b16 %v747, %v747
      %v764 = vpack.c.b16 %v748, %v748
      %v765 = vpack.c.b16 %v749, %v749
      %v766 = vpack.c.b16 %v750, %v750
      %v767 = vpack.c.b16 %v751, %v751
      %v768 = vpack.c.b16 %v752, %v752
      %v769 = vpack.c.b16 %v753, %v753
      %v770 = vpack.c.b16 %v754, %v754
      %v771 = vpack.c.b16 %v755, %v755
      %v772 = vpack.c.b16 %v756, %v756
      %v773 = vpack.c.b16 %v757, %v757
      %v774 = vpack.c.b16 %v758, %v758
      %791 = vst [vmem:[%s206] sm:$0xf] %v759
      %792 = vst [vmem:[%s206 + $0x4] sm:$0xf] %v760
      %793 = vst [vmem:[%s206 + $0x8] sm:$0xf] %v761
      %794 = vst [vmem:[%s206 + $0xc] sm:$0xf] %v762
      %795 = vst [vmem:[%s206 + $0x10] sm:$0xf] %v763
      %796 = vst [vmem:[%s206 + $0x14] sm:$0xf] %v764
      %797 = vst [vmem:[%s206 + $0x18] sm:$0xf] %v765
      %798 = vst [vmem:[%s206 + $0x1c] sm:$0xf] %v766
      %799 = vst [vmem:[%s206 + $0x20] sm:$0xf] %v767
      %800 = vst [vmem:[%s206 + $0x24] sm:$0xf] %v768
      %801 = vst [vmem:[%s206 + $0x28] sm:$0xf] %v769
      %802 = vst [vmem:[%s206 + $0x2c] sm:$0xf] %v770
      %803 = vst [vmem:[%s206 + $0x30] sm:$0xf] %v771
      %804 = vst [vmem:[%s206 + $0x34] sm:$0xf] %v772
      %805 = vst [vmem:[%s206 + $0x38] sm:$0xf] %v773
      %806 = vst [vmem:[%s206 + $0x3c] sm:$0xf] %v774
      %p807 = scmp.lt.s32.totalorder %s18, 1
      %s808 = scalar_select %p807, %s18, 1
      %p809 = scmp.lt.s32.totalorder %s19, 3
      %s810 = scalar_select %p809, %s19, 3
      %s811 = smul.addr %s810, 16
      %s812 = smul.addr %s808, 64
      %s813 = sadd.s32 %s811, %s812
      %s814 = smul.addr %s813, 4
      %s815 = scalar_lea.vmem %s3, %s814
      // Predicated region
      $region33: #{frvsr_sr_forward.10} parent=31 // pred_check
        %p816 = pneg %p116
      $region34: #{frvsr_sr_forward.10} parent=31 // pred_check_branch
        %818 = sbr.rel (%p816) target = $region36
      $region35: #{frvsr_sr_forward.10} parent=31 // pred_region
        _
      $region36: #{frvsr_sr_forward.10} parent=31 // pred_fallthru
        _
    $region32: #{frvsr_sr_forward.10} parent=5 // pred_fallthru
      _
    %p819 = scmp.le.s32.totalorder 2, %s9
    // Predicated region
    $region37: #{frvsr_sr_forward.10} parent=5 // pred_check
      %p820 = pneg %p819
    $region38: #{frvsr_sr_forward.10} parent=5 // pred_check_branch
      %822 = sbr.rel (%p820) target = $region40
    $region39: #{frvsr_sr_forward.10} parent=5 // pred_region
      %s823 = ssub.s32 %s9, 2
      // Predicated region
      $region41: #{frvsr_sr_forward.10} parent=39 // pred_check
        %p824 = pneg %p122
      $region42: #{frvsr_sr_forward.10} parent=39 // pred_check_branch
        %826 = sbr.rel (%p824) target = $region44
      $region43: #{frvsr_sr_forward.10} parent=39 // pred_region
        %p827 = scmp.lt.s32.totalorder %s20, 1
        %s828 = scalar_select %p827, %s20, 1
        %p829 = scmp.lt.s32.totalorder %s21, 3
        %s830 = scalar_select %p829, %s21, 3
        %s831 = smul.addr %s830, 16
        %s832 = smul.addr %s828, 64
        %s833 = sadd.s32 %s831, %s832
        %s834 = smul.addr %s833, 4
        %s835 = scalar_lea.vmem %s3, %s834
      $region44: #{frvsr_sr_forward.10} parent=39 // pred_fallthru
        _
    $region40: #{frvsr_sr_forward.10} parent=5 // pred_fallthru
      _
  $region6: #{frvsr_sr_forward.10} parent=0 // loop_footer
    %s13 = sadd.s32 1, %s9
  $region7: #{frvsr_sr_forward.10} parent=0 // loop_footer_branch
    %8 = sbr.rel target = $region3
  $region8: #{frvsr_sr_forward.10} parent=0 // loop_exit
    _

// kernel: frvsr_sr_forward.11
$region0: #{frvsr_sr_forward.11}
  #allocation0 [shape = 'u32[]', space=smem, size = 0x4, offset = 0x4, fixed_abs, tag = 'smem constant byte address 0x4 - core index']
  #allocation1 [shape = 'u32[144,128]{1,0:T(1,128)}', space=vmem, size = 0x12000, scoped, tag = 'internal scratch']
  %s0 = inlined_call_operand.vmem [shape: bf16[2,8,6,34,64], index: 0, kind: input, shape index: {}]
  %s1 = inlined_call_operand.vmem [shape: bf16[3,192,3], index: 1, kind: input, shape index: {}]
  %s2 = inlined_call_operand.vmem [shape: f32[1,3], index: 2, kind: input, shape index: {}]
  %s3 = inlined_call_operand.vmem [shape: f32[2,8,4,32,3], index: 3, kind: input, shape index: {}]
  %s4 = inlined_call_operand.vmem [shape: f32[2,8,4,32,3], index: 4, kind: output, shape index: {}]
  %s5 = sld [smem:[#allocation0]]
  $region49: #{frvsr_sr_forward.11} parent=0
    _
  %s7 = ssub.s32 1, %s5
  %s8 = scalar_select 0, %s7, %s5
  loop: start=0, step=1, limit=18
  $region2: #{frvsr_sr_forward.11} parent=0 // loop_pre_header
    _
  $region3: #{frvsr_sr_forward.11} parent=0 // loop_header
    %s10 = sphi 0, %s14
    %p11 = scmp.ge.s32.totalorder %s10, 18
    %s17 = sphi 0, %s29
    %s18 = sphi 0, %s25
    %s19 = sphi 0, %s17
    %s20 = sphi 0, %s18
    %s21 = sphi 0, %s19
    %s22 = sphi 0, %s20
    %s34 = sphi 0, %s36
    %s37 = sphi 0, %s34
    %s38 = sphi 0, %s37
    %s54 = sphi 0, %s38
    %s58 = sphi 0, %s58
    %s60 = sphi 0, %s58
    %s61 = sphi 0, %s60
    %s75 = sphi 0, %s61
    %s79 = sphi 0, %s79
    %s81 = sphi 0, %s79
    %s82 = sphi 0, %s81
    %s96 = sphi 0, %s82
    %s104 = sphi 0, %s106
    %s107 = sphi 0, %s104
    %s108 = sphi 0, %s107
    %s124 = sphi 0, %s108
    %s132 = sphi 0, %s134
    %s135 = sphi 0, %s132
    %s136 = sphi 0, %s135
    %s152 = sphi 0, %s136
  $region4: #{frvsr_sr_forward.11} parent=0 // loop_header_branch
    %13 = sbr.rel (%p11) target = $region8
  $region5: #{frvsr_sr_forward.11} parent=0 // loop_body
    %s15 = ssub.s32 %s10, 1
    %s16 = ssub.s32 %s10, 2
    %s23 = sadd.s32 1, %s18
    %p24 = scmp.ge.s32.totalorder %s23, 8
    %s25 = scalar_select %p24, 0, %s23
    %s26 = sadd.s32 1, %s17
    %s27 = scalar_select %p24, %s26, %s17
    %p28 = scmp.ge.s32.totalorder %s27, 2
    %s29 = scalar_select %p28, 0, %s27
    %s30 = ssub.s32 %s17, %s29
    %s31 = ssub.s32 %s18, %s25
    %s32 = sor.u32 %s30, %s31
    %p33 = scmp.eq.s32.totalorder %s32, 0
    %s35 = sadd.s32 %s34, 1
    %s36 = scalar_select %p33, %s34, %s35
    %p39 = pneg %p33
    %p40 = scmp.eq.s32.totalorder %s10, 15
    %p41 = por %p39, %p40
    %p42 = scmp.ne.s32.totalorder %s34, %s37
    %p43 = scmp.eq.s32.totalorder %s10, 0
    %p44 = por %p42, %p43
    %p45 = scmp.ne.s32.totalorder %s34, %s37
    %p46 = scmp.eq.s32.totalorder %s15, 15
    %p47 = por %p45, %p46
    %p48 = scmp.ne.s32.totalorder %s37, %s38
    %p49 = scmp.eq.s32.totalorder %s15, 0
    %p50 = por %p48, %p49
    %p51 = scmp.ne.s32.totalorder %s37, %s38
    %p52 = scmp.eq.s32.totalorder %s16, 15
    %p53 = por %p51, %p52
    %p55 = scmp.ne.s32.totalorder %s38, %s54
    %p56 = scmp.eq.s32.totalorder %s16, 0
    %p57 = por %p55, %p56
    %s59 = sadd.s32 %s58, 1
    %p62 = scmp.eq.s32.totalorder %s10, 15
    %p63 = scmp.ne.s32.totalorder %s58, %s60
    %p64 = scmp.eq.s32.totalorder %s10, 0
    %p65 = por %p63, %p64
    %p66 = scmp.ne.s32.totalorder %s58, %s60
    %p67 = scmp.eq.s32.totalorder %s15, 15
    %p68 = por %p66, %p67
    %p69 = scmp.ne.s32.totalorder %s60, %s61
    %p70 = scmp.eq.s32.totalorder %s15, 0
    %p71 = por %p69, %p70
    %p72 = scmp.ne.s32.totalorder %s60, %s61
    %p73 = scmp.eq.s32.totalorder %s16, 15
    %p74 = por %p72, %p73
    %p76 = scmp.ne.s32.totalorder %s61, %s75
    %p77 = scmp.eq.s32.totalorder %s16, 0
    %p78 = por %p76, %p77
    %s80 = sadd.s32 %s79, 1
    %p83 = scmp.eq.s32.totalorder %s10, 15
    %p84 = scmp.ne.s32.totalorder %s79, %s81
    %p85 = scmp.eq.s32.totalorder %s10, 0
    %p86 = por %p84, %p85
    %p87 = scmp.ne.s32.totalorder %s79, %s81
    %p88 = scmp.eq.s32.totalorder %s15, 15
    %p89 = por %p87, %p88
    %p90 = scmp.ne.s32.totalorder %s81, %s82
    %p91 = scmp.eq.s32.totalorder %s15, 0
    %p92 = por %p90, %p91
    %p93 = scmp.ne.s32.totalorder %s81, %s82
    %p94 = scmp.eq.s32.totalorder %s16, 15
    %p95 = por %p93, %p94
    %p97 = scmp.ne.s32.totalorder %s82, %s96
    %p98 = scmp.eq.s32.totalorder %s16, 0
    %p99 = por %p97, %p98
    %s100 = ssub.s32 %s17, %s29
    %s101 = ssub.s32 %s18, %s25
    %s102 = sor.u32 %s100, %s101
    %p103 = scmp.eq.s32.totalorder %s102, 0
    %s105 = sadd.s32 %s104, 1
    %s106 = scalar_select %p103, %s104, %s105
    %p109 = pneg %p103
    %p110 = scmp.eq.s32.totalorder %s10, 15
    %p111 = por %p109, %p110
    %p112 = scmp.ne.s32.totalorder %s104, %s107
    %p113 = scmp.eq.s32.totalorder %s10, 0
    %p114 = por %p112, %p113
    %p115 = scmp.ne.s32.totalorder %s104, %s107
    %p116 = scmp.eq.s32.totalorder %s15, 15
    %p117 = por %p115, %p116
    %p118 = scmp.ne.s32.totalorder %s107, %s108
    %p119 = scmp.eq.s32.totalorder %s15, 0
    %p120 = por %p118, %p119
    %p121 = scmp.ne.s32.totalorder %s107, %s108
    %p122 = scmp.eq.s32.totalorder %s16, 15
    %p123 = por %p121, %p122
    %p125 = scmp.ne.s32.totalorder %s108, %s124
    %p126 = scmp.eq.s32.totalorder %s16, 0
    %p127 = por %p125, %p126
    %s128 = ssub.s32 %s17, %s29
    %s129 = ssub.s32 %s18, %s25
    %s130 = sor.u32 %s128, %s129
    %p131 = scmp.eq.s32.totalorder %s130, 0
    %s133 = sadd.s32 %s132, 1
    %s134 = scalar_select %p131, %s132, %s133
    %p137 = pneg %p131
    %p138 = scmp.eq.s32.totalorder %s10, 15
    %p139 = por %p137, %p138
    %p140 = scmp.ne.s32.totalorder %s132, %s135
    %p141 = scmp.eq.s32.totalorder %s10, 0
    %p142 = por %p140, %p141
    %p143 = scmp.ne.s32.totalorder %s132, %s135
    %p144 = scmp.eq.s32.totalorder %s15, 15
    %p145 = por %p143, %p144
    %p146 = scmp.ne.s32.totalorder %s135, %s136
    %p147 = scmp.eq.s32.totalorder %s15, 0
    %p148 = por %p146, %p147
    %p149 = scmp.ne.s32.totalorder %s135, %s136
    %p150 = scmp.eq.s32.totalorder %s16, 15
    %p151 = por %p149, %p150
    %p153 = scmp.ne.s32.totalorder %s136, %s152
    %p154 = scmp.eq.s32.totalorder %s16, 0
    %p155 = por %p153, %p154
    %p156 = scmp.le.s32.totalorder 1, %s10
    %p157 = scmp.lt.s32.totalorder %s10, 17
    %p158 = pnand %p156, %p157
    %p159 = pneg %p158
    // Predicated region
    $region9: #{frvsr_sr_forward.11} parent=5 // pred_check
      _
    $region10: #{frvsr_sr_forward.11} parent=5 // pred_check_branch
      %161 = sbr.rel (%p158) target = $region12
    $region11: #{frvsr_sr_forward.11} parent=5 // pred_region
      %s162 = ssub.s32 %s10, 1
      // Predicated region
      $region13: #{frvsr_sr_forward.11} parent=11 // pred_check
        %p163 = pneg %p71
      $region14: #{frvsr_sr_forward.11} parent=11 // pred_check_branch
        %165 = sbr.rel (%p163) target = $region16
      $region15: #{frvsr_sr_forward.11} parent=11 // pred_region
        _
      $region16: #{frvsr_sr_forward.11} parent=11 // pred_fallthru
        _
      // Predicated region
      $region17: #{frvsr_sr_forward.11} parent=11 // pred_check
        %p166 = pneg %p92
      $region18: #{frvsr_sr_forward.11} parent=11 // pred_check_branch
        %168 = sbr.rel (%p166) target = $region20
      $region19: #{frvsr_sr_forward.11} parent=11 // pred_region
        _
      $region20: #{frvsr_sr_forward.11} parent=11 // pred_fallthru
        _
    $region12: #{frvsr_sr_forward.11} parent=5 // pred_fallthru
      _
    %p169 = scmp.lt.s32.totalorder %s10, 16
    // Predicated region
    $region21: #{frvsr_sr_forward.11} parent=5 // pred_check
      %p170 = pneg %p169
    $region22: #{frvsr_sr_forward.11} parent=5 // pred_check_branch
      %172 = sbr.rel (%p170) target = $region24
    $region23: #{frvsr_sr_forward.11} parent=5 // pred_region
      // Predicated region
      $region25: #{frvsr_sr_forward.11} parent=23 // pred_check
        %p173 = pneg %p44
      $region26: #{frvsr_sr_forward.11} parent=23 // pred_check_branch
        %175 = sbr.rel (%p173) target = $region28
      $region27: #{frvsr_sr_forward.11} parent=23 // pred_region
        %p176 = scmp.lt.s32.totalorder %s17, 1
        %s177 = scalar_select %p176, %s17, 1
        %p178 = scmp.lt.s32.totalorder %s18, 7
        %s179 = scalar_select %p178, %s18, 7
        %s180 = smul.addr %s179, 30
        %s181 = smul.addr %s177, 240
        %s182 = sadd.s32 %s180, %s181
        %s183 = smul.addr %s182, 4
        %s184 = scalar_lea.vmem %s0, %s183
      $region28: #{frvsr_sr_forward.11} parent=23 // pred_fallthru
        _
      // Predicated region
      $region29: #{frvsr_sr_forward.11} parent=23 // pred_check
        %p185 = pneg %p114
      $region30: #{frvsr_sr_forward.11} parent=23 // pred_check_branch
        %187 = sbr.rel (%p185) target = $region32
      $region31: #{frvsr_sr_forward.11} parent=23 // pred_region
        %p188 = scmp.lt.s32.totalorder %s17, 1
        %s189 = scalar_select %p188, %s17, 1
        %p190 = scmp.lt.s32.totalorder %s18, 7
        %s191 = scalar_select %p190, %s18, 7
        %s192 = smul.addr %s191, 16
        %s193 = smul.addr %s189, 128
        %s194 = sadd.s32 %s192, %s193
        %s195 = smul.addr %s194, 8
        %s196 = scalar_lea.vmem %s3, %s195
      $region32: #{frvsr_sr_forward.11} parent=23 // pred_fallthru
        _
    $region24: #{frvsr_sr_forward.11} parent=5 // pred_fallthru
      _
    %p197 = scmp.le.s32.totalorder 1, %s10
    %p198 = scmp.lt.s32.totalorder %s10, 17
    %p199 = pnand %p197, %p198
    %p200 = pneg %p199
    // Predicated region
    $region33: #{frvsr_sr_forward.11} parent=5 // pred_check
      _
    $region34: #{frvsr_sr_forward.11} parent=5 // pred_check_branch
      %202 = sbr.rel (%p199) target = $region36
    $region35: #{frvsr_sr_forward.11} parent=5 // pred_region
      %s203 = ssub.s32 %s10, 1
      %p204 = scmp.lt.s32.totalorder %s19, 1
      %s205 = scalar_select %p204, %s19, 1
      %p206 = scmp.lt.s32.totalorder %s20, 7
      %s207 = scalar_select %p206, %s20, 7
      %s208 = smul.addr %s207, 30
      %s209 = smul.addr %s205, 240
      %s210 = sadd.s32 %s208, %s209
      %s211 = smul.addr %s210, 4
      %s212 = scalar_lea.vmem %s0, %s211
      %p213 = pneg %p50
      %p214 = pneg %p47
      %p215 = pneg %p71
      %p216 = pneg %p68
      %p217 = pneg %p92
      %p218 = pneg %p89
      %p219 = scmp.lt.s32.totalorder %s19, 1
      %s220 = scalar_select %p219, %s19, 1
      %p221 = scmp.lt.s32.totalorder %s20, 7
      %s222 = scalar_select %p221, %s20, 7
      %s223 = smul.addr %s222, 16
      %s224 = smul.addr %s220, 128
      %s225 = sadd.s32 %s223, %s224
      %s226 = smul.addr %s225, 8
      %s227 = scalar_lea.vmem %s3, %s226
      %p228 = pneg %p120
      %p229 = pneg %p117
      %p230 = pneg %p148
      %p231 = pneg %p145
      %p232 = scmp.lt.s32.totalorder %s19, 1
      %s233 = scalar_select %p232, %s19, 1
      %p234 = scmp.lt.s32.totalorder %s20, 7
      %s235 = scalar_select %p234, %s20, 7
      %s236 = smul.addr %s235, 16
      %s237 = smul.addr %s233, 128
      %s238 = sadd.s32 %s236, %s237
      %s239 = smul.addr %s238, 8
      %s240 = scalar_lea.vmem %s4, %s239
      %p241 = scmp.lt.s32.totalorder %s19, 1
      %s242 = scalar_select %p241, %s19, 1
      %p243 = scmp.lt.s32.totalorder %s20, 7
      %s244 = scalar_select %p243, %s20, 7
      %s245 = smul.addr %s244, 30
      %s246 = smul.addr %s242, 240
      %s247 = sadd.s32 %s245, %s246
      %s248 = smul.addr %s247, 4
      %s249 = scalar_lea.vmem %s0, %s248
      %p250 = scmp.lt.s32.totalorder %s19, 1
      %s251 = scalar_select %p250, %s19, 1
      %p252 = scmp.lt.s32.totalorder %s20, 7
      %s253 = scalar_select %p252, %s20, 7
      %s254 = smul.addr %s253, 16
      %s255 = smul.addr %s251, 128
      %s256 = sadd.s32 %s254, %s255
      %s257 = smul.addr %s256, 8
      %s258 = scalar_lea.vmem %s3, %s257
      %p259 = scmp.lt.s32.totalorder %s19, 1
      %s260 = scalar_select %p259, %s19, 1
      %p261 = scmp.lt.s32.totalorder %s20, 7
      %s262 = scalar_select %p261, %s20, 7
      %s263 = smul.addr %s262, 16
      %s264 = smul.addr %s260, 128
      %s265 = sadd.s32 %s263, %s264
      %s266 = smul.addr %s265, 8
      %s267 = scalar_lea.vmem %s4, %s266
      %v269 = vld [vmem:[%s249] sm:$0xf]
      %v270 = vld [vmem:[%s249 + $0x4] sm:$0xf]
      %v271 = vld [vmem:[%s249 + $0x8] sm:$0xf]
      %v272 = vld [vmem:[%s249 + $0xc] sm:$0xf]
      %v273 = vld [vmem:[%s249 + $0x10] sm:$0x1]
      %v274 = vld [vmem:[%s249 + $0x14] sm:$0xf]
      %v275 = vld [vmem:[%s249 + $0x18] sm:$0xf]
      %v276 = vld [vmem:[%s249 + $0x1c] sm:$0xf]
      %v277 = vld [vmem:[%s249 + $0x20] sm:$0xf]
      %v278 = vld [vmem:[%s249 + $0x24] sm:$0x1]
      %v279 = vld [vmem:[%s249 + $0x28] sm:$0xf]
      %v280 = vld [vmem:[%s249 + $0x2c] sm:$0xf]
      %v281 = vld [vmem:[%s249 + $0x30] sm:$0xf]
      %v282 = vld [vmem:[%s249 + $0x34] sm:$0xf]
      %v283 = vld [vmem:[%s249 + $0x38] sm:$0x1]
      %v284 = vld [vmem:[%s249 + $0x3c] sm:$0xf]
      %v285 = vld [vmem:[%s249 + $0x40] sm:$0xf]
      %v286 = vld [vmem:[%s249 + $0x44] sm:$0xf]
      %v287 = vld [vmem:[%s249 + $0x48] sm:$0xf]
      %v288 = vld [vmem:[%s249 + $0x4c] sm:$0x1]
      %v305 = vunpack.c.l.b16 %v269
      %v306 = vunpack.c.l.b16 %v270
      %v307 = vunpack.c.l.b16 %v271
      %v308 = vunpack.c.l.b16 %v272
      %v309 = vunpack.c.l.b16 %v274
      %v310 = vunpack.c.l.b16 %v275
      %v311 = vunpack.c.l.b16 %v276
      %v312 = vunpack.c.l.b16 %v277
      %v313 = vunpack.c.l.b16 %v279
      %v314 = vunpack.c.l.b16 %v280
      %v315 = vunpack.c.l.b16 %v281
      %v316 = vunpack.c.l.b16 %v282
      %v317 = vunpack.c.l.b16 %v284
      %v318 = vunpack.c.l.b16 %v285
      %v319 = vunpack.c.l.b16 %v286
      %v320 = vunpack.c.l.b16 %v287
      %v321 = vpack.c.b16 %v306, %v305
      %v322 = vpack.c.b16 %v308, %v307
      %v323 = vpack.c.b16 %v310, %v309
      %v324 = vpack.c.b16 %v312, %v311
      %v325 = vpack.c.b16 %v314, %v313
      %v326 = vpack.c.b16 %v316, %v315
      %v327 = vpack.c.b16 %v318, %v317
      %v328 = vpack.c.b16 %v320, %v319
      %v333 = vunpack.c.l.b16 %v273
      %v334 = vunpack.c.l.b16 %v278
      %v335 = vunpack.c.l.b16 %v283
      %v336 = vunpack.c.l.b16 %v288
      %v337 = vpack.c.b16 %v333, %v333
      %v338 = vpack.c.b16 %v334, %v334
      %v339 = vpack.c.b16 %v335, %v335
      %v340 = vpack.c.b16 %v336, %v336
      %vm341 = vsmask.f32 7424
      %v343 = vshrl.u32 %v321, 16
      %v345 = vshll.u32 %v321, 16
      %v347 = vrot.slane %v345, 1
      %v348 = vor.u32 %v343, %v347
      %v350 = vshll.u32 %v322, 16
      %v352 = vrot.slane %v350, 1
      %v353 = vsel %vm341, %v348, %v352
      %v354 = vshrl.u32 %v322, 16
      %v356 = vor.u32 %v354, %v352
      %v358 = vshll.u32 %v337, 16
      %v360 = vrot.slane %v358, 1
      %v361 = vsel %vm341, %v356, %v360
      %v363 = vshrl.u32 %v323, 16
      %v365 = vshll.u32 %v323, 16
      %v367 = vrot.slane %v365, 1
      %v368 = vor.u32 %v363, %v367
      %v370 = vshll.u32 %v324, 16
      %v372 = vrot.slane %v370, 1
      %v373 = vsel %vm341, %v368, %v372
      %v374 = vshrl.u32 %v324, 16
      %v376 = vor.u32 %v374, %v372
      %v378 = vshll.u32 %v338, 16
      %v380 = vrot.slane %v378, 1
      %v381 = vsel %vm341, %v376, %v380
      %v383 = vshrl.u32 %v325, 16
      %v385 = vshll.u32 %v325, 16
      %v387 = vrot.slane %v385, 1
      %v388 = vor.u32 %v383, %v387
      %v390 = vshll.u32 %v326, 16
      %v392 = vrot.slane %v390, 1
      %v393 = vsel %vm341, %v388, %v392
      %v394 = vshrl.u32 %v326, 16
      %v396 = vor.u32 %v394, %v392
      %v398 = vshll.u32 %v339, 16
      %v400 = vrot.slane %v398, 1
      %v401 = vsel %vm341, %v396, %v400
      %v403 = vshrl.u32 %v327, 16
      %v405 = vshll.u32 %v327, 16
      %v407 = vrot.slane %v405, 1
      %v408 = vor.u32 %v403, %v407
      %v410 = vshll.u32 %v328, 16
      %v412 = vrot.slane %v410, 1
      %v413 = vsel %vm341, %v408, %v412
      %v414 = vshrl.u32 %v328, 16
      %v416 = vor.u32 %v414, %v412
      %v418 = vshll.u32 %v340, 16
      %v420 = vrot.slane %v418, 1
      %v421 = vsel %vm341, %v416, %v420
      %422 = vrot.lane.b32.xlu0 %v353, 64
      %v423 = vpop.permute.xlu0 %422
      %424 = vrot.lane.b32.xlu0 %v361, 64
      %v425 = vpop.permute.xlu0 %424
      %426 = vrot.lane.b32.xlu0 %v373, 64
      %v427 = vpop.permute.xlu0 %426
      %428 = vrot.lane.b32.xlu0 %v381, 64
      %v429 = vpop.permute.xlu0 %428
      %430 = vrot.lane.b32.xlu0 %v393, 64
      %v431 = vpop.permute.xlu0 %430
      %432 = vrot.lane.b32.xlu0 %v401, 64
      %v433 = vpop.permute.xlu0 %432
      %434 = vrot.lane.b32.xlu0 %v413, 64
      %v435 = vpop.permute.xlu0 %434
      %436 = vrot.lane.b32.xlu0 %v421, 64
      %v437 = vpop.permute.xlu0 %436
      %vm438 = vcmask 1046528
      %v439 = vrot.slane %v321, 1
      %v440 = vrot.slane %v322, 1
      %v441 = vsel %vm438, %v439, %v440
      %v442 = vrot.slane %v337, 1
      %v443 = vsel %vm438, %v440, %v442
      %v444 = vrot.slane %v323, 1
      %v445 = vrot.slane %v324, 1
      %v446 = vsel %vm438, %v444, %v445
      %v447 = vrot.slane %v338, 1
      %v448 = vsel %vm438, %v445, %v447
      %v449 = vrot.slane %v325, 1
      %v450 = vrot.slane %v326, 1
      %v451 = vsel %vm438, %v449, %v450
      %v452 = vrot.slane %v339, 1
      %v453 = vsel %vm438, %v450, %v452
      %v454 = vrot.slane %v327, 1
      %v455 = vrot.slane %v328, 1
      %v456 = vsel %vm438, %v454, %v455
      %v457 = vrot.slane %v340, 1
      %v458 = vsel %vm438, %v455, %v457
      %vm459 = vcmask 523264
      %v461 = vsel %vm459, %v321, %v423
      %v464 = vsel %vm459, %v322, %v425
      %v467 = vsel %vm459, %v323, %v427
      %v470 = vsel %vm459, %v324, %v429
      %v473 = vsel %vm459, %v325, %v431
      %v476 = vsel %vm459, %v326, %v433
      %v479 = vsel %vm459, %v327, %v435
      %v482 = vsel %vm459, %v328, %v437
      %v484 = vld [vmem:[%s1] sm:$0xf]
      %v485 = vld [vmem:[%s1 + $0x4] sm:$0xf]
      %v486 = vld [vmem:[%s1 + $0x8] sm:$0xf]
      %v487 = vld [vmem:[%s1 + $0xc] sm:$0xf]
      %v488 = vld [vmem:[%s1 + $0x10] sm:$0xf]
      %v489 = vld [vmem:[%s1 + $0x14] sm:$0xf]
      %v490 = vld [vmem:[%s1 + $0x18] sm:$0xf]
      %v491 = vld [vmem:[%s1 + $0x1c] sm:$0xf]
      %v492 = vld [vmem:[%s1 + $0x20] sm:$0xf]
      %v493 = vld [vmem:[%s1 + $0x24] sm:$0xf]
      %v494 = vld [vmem:[%s1 + $0x28] sm:$0xf]
      %v495 = vld [vmem:[%s1 + $0x2c] sm:$0xf]
      %v496 = vld [vmem:[%s1 + $0x30] sm:$0xf]
      %v497 = vld [vmem:[%s1 + $0x34] sm:$0xf]
      %v498 = vld [vmem:[%s1 + $0x38] sm:$0xf]
      %v499 = vld [vmem:[%s1 + $0x3c] sm:$0xf]
      %v500 = vld [vmem:[%s1 + $0x40] sm:$0xf]
      %v501 = vld [vmem:[%s1 + $0x44] sm:$0xf]
      %v502 = vld [vmem:[%s1 + $0x48] sm:$0xf]
      %v503 = vld [vmem:[%s1 + $0x4c] sm:$0xf]
      %v504 = vld [vmem:[%s1 + $0x50] sm:$0xf]
      %v505 = vld [vmem:[%s1 + $0x54] sm:$0xf]
      %v506 = vld [vmem:[%s1 + $0x58] sm:$0xf]
      %v507 = vld [vmem:[%s1 + $0x5c] sm:$0xf]
      %s508 = scalar_lea.vmem %s249, 20
      %v509 = vld [vmem:[%s508] sm:$0xf]
      %v510 = vld [vmem:[%s508 + $0x4] sm:$0xf]
      %v511 = vld [vmem:[%s508 + $0x8] sm:$0xf]
      %v512 = vld [vmem:[%s508 + $0xc] sm:$0xf]
      %v513 = vld [vmem:[%s508 + $0x10] sm:$0x1]
      %v514 = vld [vmem:[%s508 + $0x14] sm:$0xf]
      %v515 = vld [vmem:[%s508 + $0x18] sm:$0xf]
      %v516 = vld [vmem:[%s508 + $0x1c] sm:$0xf]
      %v517 = vld [vmem:[%s508 + $0x20] sm:$0xf]
      %v518 = vld [vmem:[%s508 + $0x24] sm:$0x1]
      %v519 = vld [vmem:[%s508 + $0x28] sm:$0xf]
      %v520 = vld [vmem:[%s508 + $0x2c] sm:$0xf]
      %v521 = vld [vmem:[%s508 + $0x30] sm:$0xf]
      %v522 = vld [vmem:[%s508 + $0x34] sm:$0xf]
      %v523 = vld [vmem:[%s508 + $0x38] sm:$0x1]
      %v524 = vld [vmem:[%s508 + $0x3c] sm:$0xf]
      %v525 = vld [vmem:[%s508 + $0x40] sm:$0xf]
      %v526 = vld [vmem:[%s508 + $0x44] sm:$0xf]
      %v527 = vld [vmem:[%s508 + $0x48] sm:$0xf]
      %v528 = vld [vmem:[%s508 + $0x4c] sm:$0x1]
      %v545 = vunpack.c.l.b16 %v509
      %v546 = vunpack.c.l.b16 %v510
      %v547 = vunpack.c.l.b16 %v511
      %v548 = vunpack.c.l.b16 %v512
      %v549 = vunpack.c.l.b16 %v514
      %v550 = vunpack.c.l.b16 %v515
      %v551 = vunpack.c.l.b16 %v516
      %v552 = vunpack.c.l.b16 %v517
      %v553 = vunpack.c.l.b16 %v519
      %v554 = vunpack.c.l.b16 %v520
      %v555 = vunpack.c.l.b16 %v521
      %v556 = vunpack.c.l.b16 %v522
      %v557 = vunpack.c.l.b16 %v524
      %v558 = vunpack.c.l.b16 %v525
      %v559 = vunpack.c.l.b16 %v526
      %v560 = vunpack.c.l.b16 %v527
      %v561 = vpack.c.b16 %v546, %v545
      %v562 = vpack.c.b16 %v548, %v547
      %v563 = vpack.c.b16 %v550, %v549
      %v564 = vpack.c.b16 %v552, %v551
      %v565 = vpack.c.b16 %v554, %v553
      %v566 = vpack.c.b16 %v556, %v555
      %v567 = vpack.c.b16 %v558, %v557
      %v568 = vpack.c.b16 %v560, %v559
      %v573 = vunpack.c.l.b16 %v513
      %v574 = vunpack.c.l.b16 %v518
      %v575 = vunpack.c.l.b16 %v523
      %v576 = vunpack.c.l.b16 %v528
      %v577 = vpack.c.b16 %v573, %v573
      %v578 = vpack.c.b16 %v574, %v574
      %v579 = vpack.c.b16 %v575, %v575
      %v580 = vpack.c.b16 %v576, %v576
      %v582 = vshrl.u32 %v561, 16
      %v584 = vshll.u32 %v561, 16
      %v586 = vrot.slane %v584, 1
      %v587 = vor.u32 %v582, %v586
      %v589 = vshll.u32 %v562, 16
      %v591 = vrot.slane %v589, 1
      %v592 = vsel %vm341, %v587, %v591
      %v593 = vshrl.u32 %v562, 16
      %v595 = vor.u32 %v593, %v591
      %v597 = vshll.u32 %v577, 16
      %v599 = vrot.slane %v597, 1
      %v600 = vsel %vm341, %v595, %v599
      %v602 = vshrl.u32 %v563, 16
      %v604 = vshll.u32 %v563, 16
      %v606 = vrot.slane %v604, 1
      %v607 = vor.u32 %v602, %v606
      %v609 = vshll.u32 %v564, 16
      %v611 = vrot.slane %v609, 1
      %v612 = vsel %vm341, %v607, %v611
      %v613 = vshrl.u32 %v564, 16
      %v615 = vor.u32 %v613, %v611
      %v617 = vshll.u32 %v578, 16
      %v619 = vrot.slane %v617, 1
      %v620 = vsel %vm341, %v615, %v619
      %v622 = vshrl.u32 %v565, 16
      %v624 = vshll.u32 %v565, 16
      %v626 = vrot.slane %v624, 1
      %v627 = vor.u32 %v622, %v626
      %v629 = vshll.u32 %v566, 16
      %v631 = vrot.slane %v629, 1
      %v632 = vsel %vm341, %v627, %v631
      %v633 = vshrl.u32 %v566, 16
      %v635 = vor.u32 %v633, %v631
      %v637 = vshll.u32 %v579, 16
      %v639 = vrot.slane %v637, 1
      %v640 = vsel %vm341, %v635, %v639
      %v642 = vshrl.u32 %v567, 16
      %v644 = vshll.u32 %v567, 16
      %v646 = vrot.slane %v644, 1
      %v647 = vor.u32 %v642, %v646
      %v649 = vshll.u32 %v568, 16
      %v651 = vrot.slane %v649, 1
      %v652 = vsel %vm341, %v647, %v651
      %v653 = vshrl.u32 %v568, 16
      %v655 = vor.u32 %v653, %v651
      %v657 = vshll.u32 %v580, 16
      %v659 = vrot.slane %v657, 1
      %v660 = vsel %vm341, %v655, %v659
      %661 = vrot.lane.b32.xlu0 %v592, 64
      %v662 = vpop.permute.xlu0 %661
      %663 = vrot.lane.b32.xlu0 %v600, 64
      %v664 = vpop.permute.xlu0 %663
      %665 = vrot.lane.b32.xlu0 %v612, 64
      %v666 = vpop.permute.xlu0 %665
      %667 = vrot.lane.b32.xlu0 %v620, 64
      %v668 = vpop.permute.xlu0 %667
      %669 = vrot.lane.b32.xlu0 %v632, 64
      %v670 = vpop.permute.xlu0 %669
      %671 = vrot.lane.b32.xlu0 %v640, 64
      %v672 = vpop.permute.xlu0 %671
      %673 = vrot.lane.b32.xlu0 %v652, 64
      %v674 = vpop.permute.xlu0 %673
      %675 = vrot.lane.b32.xlu0 %v660, 64
      %v676 = vpop.permute.xlu0 %675
      %v677 = vrot.slane %v561, 1
      %v678 = vrot.slane %v562, 1
      %v679 = vsel %vm438, %v677, %v678
      %v680 = vrot.slane %v577, 1
      %v681 = vsel %vm438, %v678, %v680
      %v682 = vrot.slane %v563, 1
      %v683 = vrot.slane %v564, 1
      %v684 = vsel %vm438, %v682, %v683
      %v685 = vrot.slane %v578, 1
      %v686 = vsel %vm438, %v683, %v685
      %v687 = vrot.slane %v565, 1
      %v688 = vrot.slane %v566, 1
      %v689 = vsel %vm438, %v687, %v688
      %v690 = vrot.slane %v579, 1
      %v691 = vsel %vm438, %v688, %v690
      %v692 = vrot.slane %v567, 1
      %v693 = vrot.slane %v568, 1
      %v694 = vsel %vm438, %v692, %v693
      %v695 = vrot.slane %v580, 1
      %v696 = vsel %vm438, %v693, %v695
      %v698 = vsel %vm459, %v561, %v662
      %v701 = vsel %vm459, %v562, %v664
      %v704 = vsel %vm459, %v563, %v666
      %v707 = vsel %vm459, %v564, %v668
      %v710 = vsel %vm459, %v565, %v670
      %v713 = vsel %vm459, %v566, %v672
      %v716 = vsel %vm459, %v567, %v674
      %v719 = vsel %vm459, %v568, %v676
      %s721 = scalar_lea.vmem %s1, 96
      %v722 = vld [vmem:[%s721] sm:$0xf]
      %v723 = vld [vmem:[%s721 + $0x4] sm:$0xf]
      %v724 = vld [vmem:[%s721 + $0x8] sm:$0xf]
      %v725 = vld [vmem:[%s721 + $0xc] sm:$0xf]
      %v726 = vld [vmem:[%s721 + $0x10] sm:$0xf]
      %v727 = vld [vmem:[%s721 + $0x14] sm:$0xf]
      %v728 = vld [vmem:[%s721 + $0x18] sm:$0xf]
      %v729 = vld [vmem:[%s721 + $0x1c] sm:$0xf]
      %v730 = vld [vmem:[%s721 + $0x20] sm:$0xf]
      %v731 = vld [vmem:[%s721 + $0x24] sm:$0xf]
      %v732 = vld [vmem:[%s721 + $0x28] sm:$0xf]
      %v733 = vld [vmem:[%s721 + $0x2c] sm:$0xf]
      %v734 = vld [vmem:[%s721 + $0x30] sm:$0xf]
      %v735 = vld [vmem:[%s721 + $0x34] sm:$0xf]
      %v736 = vld [vmem:[%s721 + $0x38] sm:$0xf]
      %v737 = vld [vmem:[%s721 + $0x3c] sm:$0xf]
      %v738 = vld [vmem:[%s721 + $0x40] sm:$0xf]
      %v739 = vld [vmem:[%s721 + $0x44] sm:$0xf]
      %v740 = vld [vmem:[%s721 + $0x48] sm:$0xf]
      %v741 = vld [vmem:[%s721 + $0x4c] sm:$0xf]
      %v742 = vld [vmem:[%s721 + $0x50] sm:$0xf]
      %v743 = vld [vmem:[%s721 + $0x54] sm:$0xf]
      %v744 = vld [vmem:[%s721 + $0x58] sm:$0xf]
      %v745 = vld [vmem:[%s721 + $0x5c] sm:$0xf]
      %v770 = vunpack.c.l.b16 %v722
      %v771 = vunpack.c.l.b16 %v723
      %v772 = vunpack.c.l.b16 %v724
      %v773 = vunpack.c.l.b16 %v725
      %v774 = vunpack.c.l.b16 %v726
      %v775 = vunpack.c.l.b16 %v727
      %v776 = vunpack.c.l.b16 %v728
      %v777 = vunpack.c.l.b16 %v729
      %v778 = vunpack.c.l.b16 %v730
      %v779 = vunpack.c.l.b16 %v731
      %v780 = vunpack.c.l.b16 %v732
      %v781 = vunpack.c.l.b16 %v733
      %v782 = vunpack.c.l.b16 %v734
      %v783 = vunpack.c.l.b16 %v735
      %v784 = vunpack.c.l.b16 %v736
      %v785 = vunpack.c.l.b16 %v737
      %v786 = vunpack.c.l.b16 %v738
      %v787 = vunpack.c.l.b16 %v739
      %v788 = vunpack.c.l.b16 %v740
      %v789 = vunpack.c.l.b16 %v741
      %v790 = vunpack.c.l.b16 %v742
      %v791 = vunpack.c.l.b16 %v743
      %v792 = vunpack.c.l.b16 %v744
      %v793 = vunpack.c.l.b16 %v745
      %v794 = vpack.c.b16 %v771, %v770
      %v795 = vpack.c.b16 %v773, %v772
      %v796 = vpack.c.b16 %v775, %v774
      %v797 = vpack.c.b16 %v777, %v776
      %v798 = vpack.c.b16 %v779, %v778
      %v799 = vpack.c.b16 %v781, %v780
      %v800 = vpack.c.b16 %v783, %v782
      %v801 = vpack.c.b16 %v785, %v784
      %v802 = vpack.c.b16 %v787, %v786
      %v803 = vpack.c.b16 %v789, %v788
      %v804 = vpack.c.b16 %v791, %v790
      %v805 = vpack.c.b16 %v793, %v792
      %v819 = vsel %vm459, %v679, 0
      %v822 = vsel %vm459, %v681, 0
      %v825 = vsel %vm459, %v684, 0
      %v828 = vsel %vm459, %v686, 0
      %v831 = vsel %vm459, %v689, 0
      %v834 = vsel %vm459, %v691, 0
      %v837 = vsel %vm459, %v694, 0
      %v840 = vsel %vm459, %v696, 0
      %842 = vmatprep.subr.bf16.mxu0 0
      %843 = vmatpush1.bf16.msra.mxu0 %v794
      %844 = vmatprep.subr.bf16.mxu0 0
      %845 = vmatpush1.bf16.msra.mxu0 %v795
      %846 = vmatprep.subr.bf16.mxu0 0
      %847 = vmatpush1.bf16.msra.mxu0 %v796
      %848 = vmatprep.subr.bf16.mxu0 0
      %849 = vmatpush1.bf16.msra.mxu0 %v797
      %850 = vmatprep.subr.bf16.mxu0 0
      %851 = vmatpush1.bf16.msra.mxu0 %v798
      %852 = vmatprep.subr.bf16.mxu0 0
      %853 = vmatpush1.bf16.msra.mxu0 %v799
      %854 = vmatprep.subr.bf16.mxu0 0
      %855 = vmatpush1.bf16.msra.mxu0 %v800
      %856 = vmatprep.subr.bf16.mxu0 0
      %857 = vmatpush1.bf16.msra.mxu0 %v801
      %858 = vmatprep.subr.bf16.mxu0 0
      %859 = vmatpush1.bf16.msra.mxu0 %v802
      %860 = vmatprep.subr.bf16.mxu0 0
      %861 = vmatpush1.bf16.msra.mxu0 %v803
      %862 = vmatprep.subr.bf16.mxu0 0
      %863 = vmatpush1.bf16.msra.mxu0 %v804
      %864 = vmatprep.subr.bf16.mxu0 0
      %865 = vmatpush1.bf16.msra.mxu0 %v805
      %866 = vmatprep.subr.bf16.mxu0 0
      %867 = vmatpush1.bf16.msra.mxu0 0
      %868 = vmatprep.subr.bf16.mxu0 0
      %869 = vmatpush1.bf16.msra.mxu0 0
      %870 = vmatprep.subr.bf16.mxu0 0
      %871 = vmatpush1.bf16.msra.mxu0 0
      %872 = vmatprep.subr.bf16.mxu0 0
      %873 = vmatpush1.bf16.msra.mxu0 0
      %874 = vmatprep.mubr.bf16.mxu0 %v819
      %875 = vmatmul.mubr.bf16.gmra.mrb[0].mxu0 %v698
      %v876 = vpop.f32.mrb[0].mxu0
      %v877 = vadd.f32 0.0, %v876
      %v878 = vpop.f32.mrb[0].mxu0
      %v879 = vpop.f32.mrb[0].mxu0
      %v880 = vadd.f32 0.0, %v879
      %v881 = vpop.f32.mrb[0].mxu0
      %882 = vmatprep.mubr.bf16.mxu0 %v822
      %883 = vmatmul.mubr.bf16.gmra.mrb[0].mxu0 %v701
      %v884 = vpop.f32.mrb[0].mxu0
      %v885 = vadd.f32 0.0, %v884
      %v886 = vpop.f32.mrb[0].mxu0
      %v887 = vpop.f32.mrb[0].mxu0
      %v888 = vadd.f32 0.0, %v887
      %v889 = vpop.f32.mrb[0].mxu0
      %890 = vmatprep.mubr.bf16.mxu0 %v825
      %891 = vmatmul.mubr.bf16.gmra.mrb[0].mxu0 %v704
      %v892 = vpop.f32.mrb[0].mxu0
      %v893 = vadd.f32 0.0, %v892
      %v894 = vpop.f32.mrb[0].mxu0
      %v895 = vpop.f32.mrb[0].mxu0
      %v896 = vadd.f32 0.0, %v895
      %v897 = vpop.f32.mrb[0].mxu0
      %898 = vmatprep.mubr.bf16.mxu0 %v828
      %899 = vmatmul.mubr.bf16.gmra.mrb[0].mxu0 %v707
      %v900 = vpop.f32.mrb[0].mxu0
      %v901 = vadd.f32 0.0, %v900
      %v902 = vpop.f32.mrb[0].mxu0
      %v903 = vpop.f32.mrb[0].mxu0
      %v904 = vadd.f32 0.0, %v903
      %v905 = vpop.f32.mrb[0].mxu0
      %906 = vmatprep.mubr.bf16.mxu0 %v831
      %907 = vmatmul.mubr.bf16.gmra.mrb[0].mxu0 %v710
      %v908 = vpop.f32.mrb[0].mxu0
      %v909 = vadd.f32 0.0, %v908
      %v910 = vpop.f32.mrb[0].mxu0
      %v911 = vpop.f32.mrb[0].mxu0
      %v912 = vadd.f32 0.0, %v911
      %v913 = vpop.f32.mrb[0].mxu0
      %914 = vmatprep.mubr.bf16.mxu0 %v834
      %915 = vmatmul.mubr.bf16.gmra.mrb[0].mxu0 %v713
      %v916 = vpop.f32.mrb[0].mxu0
      %v917 = vadd.f32 0.0, %v916
      %v918 = vpop.f32.mrb[0].mxu0
      %v919 = vpop.f32.mrb[0].mxu0
      %v920 = vadd.f32 0.0, %v919
      %v921 = vpop.f32.mrb[0].mxu0
      %922 = vmatprep.mubr.bf16.mxu0 %v837
      %923 = vmatmul.mubr.bf16.gmra.mrb[0].mxu0 %v716
      %v924 = vpop.f32.mrb[0].mxu0
      %v925 = vadd.f32 0.0, %v924
      %v926 = vpop.f32.mrb[0].mxu0
      %v927 = vpop.f32.mrb[0].mxu0
      %v928 = vadd.f32 0.0, %v927
      %v929 = vpop.f32.mrb[0].mxu0
      %930 = vmatprep.mubr.bf16.mxu0 %v840
      %931 = vmatmul.mubr.bf16.gmra.mrb[0].mxu0 %v719
      %v932 = vpop.f32.mrb[0].mxu0
      %v933 = vadd.f32 0.0, %v932
      %v934 = vpop.f32.mrb[0].mxu0
      %v935 = vpop.f32.mrb[0].mxu0
      %v936 = vadd.f32 0.0, %v935
      %v937 = vpop.f32.mrb[0].mxu0
      %938 = vdwg.mxu0
      %v963 = vunpack.c.l.b16 %v484
      %v964 = vunpack.c.l.b16 %v485
      %v965 = vunpack.c.l.b16 %v486
      %v966 = vunpack.c.l.b16 %v487
      %v967 = vunpack.c.l.b16 %v488
      %v968 = vunpack.c.l.b16 %v489
      %v969 = vunpack.c.l.b16 %v490
      %v970 = vunpack.c.l.b16 %v491
      %v971 = vunpack.c.l.b16 %v492
      %v972 = vunpack.c.l.b16 %v493
      %v973 = vunpack.c.l.b16 %v494
      %v974 = vunpack.c.l.b16 %v495
      %v975 = vunpack.c.l.b16 %v496
      %v976 = vunpack.c.l.b16 %v497
      %v977 = vunpack.c.l.b16 %v498
      %v978 = vunpack.c.l.b16 %v499
      %v979 = vunpack.c.l.b16 %v500
      %v980 = vunpack.c.l.b16 %v501
      %v981 = vunpack.c.l.b16 %v502
      %v982 = vunpack.c.l.b16 %v503
      %v983 = vunpack.c.l.b16 %v504
      %v984 = vunpack.c.l.b16 %v505
      %v985 = vunpack.c.l.b16 %v506
      %v986 = vunpack.c.l.b16 %v507
      %v987 = vpack.c.b16 %v964, %v963
      %v988 = vpack.c.b16 %v966, %v965
      %v989 = vpack.c.b16 %v968, %v967
      %v990 = vpack.c.b16 %v970, %v969
      %v991 = vpack.c.b16 %v972, %v971
      %v992 = vpack.c.b16 %v974, %v973
      %v993 = vpack.c.b16 %v976, %v975
      %v994 = vpack.c.b16 %v978, %v977
      %v995 = vpack.c.b16 %v980, %v979
      %v996 = vpack.c.b16 %v982, %v981
      %v997 = vpack.c.b16 %v984, %v983
      %v998 = vpack.c.b16 %v986, %v985
      %v1012 = vsel %vm459, %v441, 0
      %v1015 = vsel %vm459, %v443, 0
      %v1018 = vsel %vm459, %v446, 0
      %v1021 = vsel %vm459, %v448, 0
      %v1024 = vsel %vm459, %v451, 0
      %v1027 = vsel %vm459, %v453, 0
      %v1030 = vsel %vm459, %v456, 0
      %v1033 = vsel %vm459, %v458, 0
      %1035 = vmatprep.subr.bf16.mxu0 0
      %1036 = vmatpush1.bf16.msra.mxu0 %v987
      %1037 = vmatprep.subr.bf16.mxu0 0
      %1038 = vmatpush1.bf16.msra.mxu0 %v988
      %1039 = vmatprep.subr.bf16.mxu0 0
      %1040 = vmatpush1.bf16.msra.mxu0 %v989
      %1041 = vmatprep.subr.bf16.mxu0 0
      %1042 = vmatpush1.bf16.msra.mxu0 %v990
      %1043 = vmatprep.subr.bf16.mxu0 0
      %1044 = vmatpush1.bf16.msra.mxu0 %v991
      %1045 = vmatprep.subr.bf16.mxu0 0
      %1046 = vmatpush1.bf16.msra.mxu0 %v992
      %1047 = vmatprep.subr.bf16.mxu0 0
      %1048 = vmatpush1.bf16.msra.mxu0 %v993
      %1049 = vmatprep.subr.bf16.mxu0 0
      %1050 = vmatpush1.bf16.msra.mxu0 %v994
      %1051 = vmatprep.subr.bf16.mxu0 0
      %1052 = vmatpush1.bf16.msra.mxu0 %v995
      %1053 = vmatprep.subr.bf16.mxu0 0
      %1054 = vmatpush1.bf16.msra.mxu0 %v996
      %1055 = vmatprep.subr.bf16.mxu0 0
      %1056 = vmatpush1.bf16.msra.mxu0 %v997
      %1057 = vmatprep.subr.bf16.mxu0 0
      %1058 = vmatpush1.bf16.msra.mxu0 %v998
      %1059 = vmatprep.subr.bf16.mxu0 0
      %1060 = vmatpush1.bf16.msra.mxu0 0
      %1061 = vmatprep.subr.bf16.mxu0 0
      %1062 = vmatpush1.bf16.msra.mxu0 0
      %1063 = vmatprep.subr.bf16.mxu0 0
      %1064 = vmatpush1.bf16.msra.mxu0 0
      %1065 = vmatprep.subr.bf16.mxu0 0
      %1066 = vmatpush1.bf16.msra.mxu0 0
      %1067 = vmatprep.mubr.bf16.mxu0 %v1012
      %1068 = vmatmul.mubr.bf16.gmra.mrb[0].mxu0 %v461
      %v1069 = vpop.f32.mrb[0].mxu0
      %v1070 = vadd.f32 %v877, %v1069
      %v1071 = vpop.f32.mrb[0].mxu0
      %v1072 = vpop.f32.mrb[0].mxu0
      %v1073 = vadd.f32 %v880, %v1072
      %v1074 = vpop.f32.mrb[0].mxu0
      %1075 = vmatprep.mubr.bf16.mxu0 %v1015
      %1076 = vmatmul.mubr.bf16.gmra.mrb[0].mxu0 %v464
      %v1077 = vpop.f32.mrb[0].mxu0
      %v1078 = vadd.f32 %v885, %v1077
      %v1079 = vpop.f32.mrb[0].mxu0
      %v1080 = vpop.f32.mrb[0].mxu0
      %v1081 = vadd.f32 %v888, %v1080
      %v1082 = vpop.f32.mrb[0].mxu0
      %1083 = vmatprep.mubr.bf16.mxu0 %v1018
      %1084 = vmatmul.mubr.bf16.gmra.mrb[0].mxu0 %v467
      %v1085 = vpop.f32.mrb[0].mxu0
      %v1086 = vadd.f32 %v893, %v1085
      %v1087 = vpop.f32.mrb[0].mxu0
      %v1088 = vpop.f32.mrb[0].mxu0
      %v1089 = vadd.f32 %v896, %v1088
      %v1090 = vpop.f32.mrb[0].mxu0
      %1091 = vmatprep.mubr.bf16.mxu0 %v1021
      %1092 = vmatmul.mubr.bf16.gmra.mrb[0].mxu0 %v470
      %v1093 = vpop.f32.mrb[0].mxu0
      %v1094 = vadd.f32 %v901, %v1093
      %v1095 = vpop.f32.mrb[0].mxu0
      %v1096 = vpop.f32.mrb[0].mxu0
      %v1097 = vadd.f32 %v904, %v1096
      %v1098 = vpop.f32.mrb[0].mxu0
      %1099 = vmatprep.mubr.bf16.mxu0 %v1024
      %1100 = vmatmul.mubr.bf16.gmra.mrb[0].mxu0 %v473
      %v1101 = vpop.f32.mrb[0].mxu0
      %v1102 = vadd.f32 %v909, %v1101
      %v1103 = vpop.f32.mrb[0].mxu0
      %v1104 = vpop.f32.mrb[0].mxu0
      %v1105 = vadd.f32 %v912, %v1104
      %v1106 = vpop.f32.mrb[0].mxu0
      %1107 = vmatprep.mubr.bf16.mxu0 %v1027
      %1108 = vmatmul.mubr.bf16.gmra.mrb[0].mxu0 %v476
      %v1109 = vpop.f32.mrb[0].mxu0
      %v1110 = vadd.f32 %v917, %v1109
      %v1111 = vpop.f32.mrb[0].mxu0
      %v1112 = vpop.f32.mrb[0].mxu0
      %v1113 = vadd.f32 %v920, %v1112
      %v1114 = vpop.f32.mrb[0].mxu0
      %1115 = vmatprep.mubr.bf16.mxu0 %v1030
      %1116 = vmatmul.mubr.bf16.gmra.mrb[0].mxu0 %v479
      %v1117 = vpop.f32.mrb[0].mxu0
      %v1118 = vadd.f32 %v925, %v1117
      %v1119 = vpop.f32.mrb[0].mxu0
      %v1120 = vpop.f32.mrb[0].mxu0
      %v1121 = vadd.f32 %v928, %v1120
      %v1122 = vpop.f32.mrb[0].mxu0
      %1123 = vmatprep.mubr.bf16.mxu0 %v1033
      %1124 = vmatmul.mubr.bf16.gmra.mrb[0].mxu0 %v482
      %v1125 = vpop.f32.mrb[0].mxu0
      %v1126 = vadd.f32 %v933, %v1125
      %v1127 = vpop.f32.mrb[0].mxu0
      %v1128 = vpop.f32.mrb[0].mxu0
      %v1129 = vadd.f32 %v936, %v1128
      %v1130 = vpop.f32.mrb[0].mxu0
      %1131 = vdwg.mxu0
      %s1132 = scalar_lea.vmem %s249, 40
      %v1133 = vld [vmem:[%s1132] sm:$0xf]
      %v1134 = vld [vmem:[%s1132 + $0x4] sm:$0xf]
      %v1135 = vld [vmem:[%s1132 + $0x8] sm:$0xf]
      %v1136 = vld [vmem:[%s1132 + $0xc] sm:$0xf]
      %v1137 = vld [vmem:[%s1132 + $0x10] sm:$0x1]
      %v1138 = vld [vmem:[%s1132 + $0x14] sm:$0xf]
      %v1139 = vld [vmem:[%s1132 + $0x18] sm:$0xf]
      %v1140 = vld [vmem:[%s1132 + $0x1c] sm:$0xf]
      %v1141 = vld [vmem:[%s1132 + $0x20] sm:$0xf]
      %v1142 = vld [vmem:[%s1132 + $0x24] sm:$0x1]
      %v1143 = vld [vmem:[%s1132 + $0x28] sm:$0xf]
      %v1144 = vld [vmem:[%s1132 + $0x2c] sm:$0xf]
      %v1145 = vld [vmem:[%s1132 + $0x30] sm:$0xf]
      %v1146 = vld [vmem:[%s1132 + $0x34] sm:$0xf]
      %v1147 = vld [vmem:[%s1132 + $0x38] sm:$0x1]
      %v1148 = vld [vmem:[%s1132 + $0x3c] sm:$0xf]
      %v1149 = vld [vmem:[%s1132 + $0x40] sm:$0xf]
      %v1150 = vld [vmem:[%s1132 + $0x44] sm:$0xf]
      %v1151 = vld [vmem:[%s1132 + $0x48] sm:$0xf]
      %v1152 = vld [vmem:[%s1132 + $0x4c] sm:$0x1]
      %v1169 = vunpack.c.l.b16 %v1133
      %v1170 = vunpack.c.l.b16 %v1134
      %v1171 = vunpack.c.l.b16 %v1135
      %v1172 = vunpack.c.l.b16 %v1136
      %v1173 = vunpack.c.l.b16 %v1138
      %v1174 = vunpack.c.l.b16 %v1139
      %v1175 = vunpack.c.l.b16 %v1140
      %v1176 = vunpack.c.l.b16 %v1141
      %v1177 = vunpack.c.l.b16 %v1143
      %v1178 = vunpack.c.l.b16 %v1144
      %v1179 = vunpack.c.l.b16 %v1145
      %v1180 = vunpack.c.l.b16 %v1146
      %v1181 = vunpack.c.l.b16 %v1148
      %v1182 = vunpack.c.l.b16 %v1149
      %v1183 = vunpack.c.l.b16 %v1150
      %v1184 = vunpack.c.l.b16 %v1151
      %v1185 = vpack.c.b16 %v1170, %v1169
      %v1186 = vpack.c.b16 %v1172, %v1171
      %v1187 = vpack.c.b16 %v1174, %v1173
      %v1188 = vpack.c.b16 %v1176, %v1175
      %v1189 = vpack.c.b16 %v1178, %v1177
      %v1190 = vpack.c.b16 %v1180, %v1179
      %v1191 = vpack.c.b16 %v1182, %v1181
      %v1192 = vpack.c.b16 %v1184, %v1183
      %v1197 = vunpack.c.l.b16 %v1137
      %v1198 = vunpack.c.l.b16 %v1142
      %v1199 = vunpack.c.l.b16 %v1147
      %v1200 = vunpack.c.l.b16 %v1152
      %v1201 = vpack.c.b16 %v1197, %v1197
      %v1202 = vpack.c.b16 %v1198, %v1198
      %v1203 = vpack.c.b16 %v1199, %v1199
      %v1204 = vpack.c.b16 %v1200, %v1200
      %v1206 = vshrl.u32 %v1185, 16
      %v1208 = vshll.u32 %v1185, 16
      %v1210 = vrot.slane %v1208, 1
      %v1211 = vor.u32 %v1206, %v1210
      %v1213 = vshll.u32 %v1186, 16
      %v1215 = vrot.slane %v1213, 1
      %v1216 = vsel %vm341, %v1211, %v1215
      %v1217 = vshrl.u32 %v1186, 16
      %v1219 = vor.u32 %v1217, %v1215
      %v1221 = vshll.u32 %v1201, 16
      %v1223 = vrot.slane %v1221, 1
      %v1224 = vsel %vm341, %v1219, %v1223
      %v1226 = vshrl.u32 %v1187, 16
      %v1228 = vshll.u32 %v1187, 16
      %v1230 = vrot.slane %v1228, 1
      %v1231 = vor.u32 %v1226, %v1230
      %v1233 = vshll.u32 %v1188, 16
      %v1235 = vrot.slane %v1233, 1
      %v1236 = vsel %vm341, %v1231, %v1235
      %v1237 = vshrl.u32 %v1188, 16
      %v1239 = vor.u32 %v1237, %v1235
      %v1241 = vshll.u32 %v1202, 16
      %v1243 = vrot.slane %v1241, 1
      %v1244 = vsel %vm341, %v1239, %v1243
      %v1246 = vshrl.u32 %v1189, 16
      %v1248 = vshll.u32 %v1189, 16
      %v1250 = vrot.slane %v1248, 1
      %v1251 = vor.u32 %v1246, %v1250
      %v1253 = vshll.u32 %v1190, 16
      %v1255 = vrot.slane %v1253, 1
      %v1256 = vsel %vm341, %v1251, %v1255
      %v1257 = vshrl.u32 %v1190, 16
      %v1259 = vor.u32 %v1257, %v1255
      %v1261 = vshll.u32 %v1203, 16
      %v1263 = vrot.slane %v1261, 1
      %v1264 = vsel %vm341, %v1259, %v1263
      %v1266 = vshrl.u32 %v1191, 16
      %v1268 = vshll.u32 %v1191, 16
      %v1270 = vrot.slane %v1268, 1
      %v1271 = vor.u32 %v1266, %v1270
      %v1273 = vshll.u32 %v1192, 16
      %v1275 = vrot.slane %v1273, 1
      %v1276 = vsel %vm341, %v1271, %v1275
      %v1277 = vshrl.u32 %v1192, 16
      %v1279 = vor.u32 %v1277, %v1275
      %v1281 = vshll.u32 %v1204, 16
      %v1283 = vrot.slane %v1281, 1
      %v1284 = vsel %vm341, %v1279, %v1283
      %1285 = vrot.lane.b32.xlu0 %v1216, 64
      %v1286 = vpop.permute.xlu0 %1285
      %1287 = vrot.lane.b32.xlu0 %v1224, 64
      %v1288 = vpop.permute.xlu0 %1287
      %1289 = vrot.lane.b32.xlu0 %v1236, 64
      %v1290 = vpop.permute.xlu0 %1289
      %1291 = vrot.lane.b32.xlu0 %v1244, 64
      %v1292 = vpop.permute.xlu0 %1291
      %1293 = vrot.lane.b32.xlu0 %v1256, 64
      %v1294 = vpop.permute.xlu0 %1293
      %1295 = vrot.lane.b32.xlu0 %v1264, 64
      %v1296 = vpop.permute.xlu0 %1295
      %1297 = vrot.lane.b32.xlu0 %v1276, 64
      %v1298 = vpop.permute.xlu0 %1297
      %1299 = vrot.lane.b32.xlu0 %v1284, 64
      %v1300 = vpop.permute.xlu0 %1299
      %v1301 = vrot.slane %v1185, 1
      %v1302 = vrot.slane %v1186, 1
      %v1303 = vsel %vm438, %v1301, %v1302
      %v1304 = vrot.slane %v1201, 1
      %v1305 = vsel %vm438, %v1302, %v1304
      %v1306 = vrot.slane %v1187, 1
      %v1307 = vrot.slane %v1188, 1
      %v1308 = vsel %vm438, %v1306, %v1307
      %v1309 = vrot.slane %v1202, 1
      %v1310 = vsel %vm438, %v1307, %v1309
      %v1311 = vrot.slane %v1189, 1
      %v1312 = vrot.slane %v1190, 1
      %v1313 = vsel %vm438, %v1311, %v1312
      %v1314 = vrot.slane %v1203, 1
      %v1315 = vsel %vm438, %v1312, %v1314
      %v1316 = vrot.slane %v1191, 1
      %v1317 = vrot.slane %v1192, 1
      %v1318 = vsel %vm438, %v1316, %v1317
      %v1319 = vrot.slane %v1204, 1
      %v1320 = vsel %vm438, %v1317, %v1319
      %v1322 = vsel %vm459, %v1185, %v1286
      %v1325 = vsel %vm459, %v1186, %v1288
      %v1328 = vsel %vm459, %v1187, %v1290
      %v1331 = vsel %vm459, %v1188, %v1292
      %v1334 = vsel %vm459, %v1189, %v1294
      %v1337 = vsel %vm459, %v1190, %v1296
      %v1340 = vsel %vm459, %v1191, %v1298
      %v1343 = vsel %vm459, %v1192, %v1300
      %s1345 = scalar_lea.vmem %s1, 192
      %v1346 = vld [vmem:[%s1345] sm:$0xf]
      %v1347 = vld [vmem:[%s1345 + $0x4] sm:$0xf]
      %v1348 = vld [vmem:[%s1345 + $0x8] sm:$0xf]
      %v1349 = vld [vmem:[%s1345 + $0xc] sm:$0xf]
      %v1350 = vld [vmem:[%s1345 + $0x10] sm:$0xf]
      %v1351 = vld [vmem:[%s1345 + $0x14] sm:$0xf]
      %v1352 = vld [vmem:[%s1345 + $0x18] sm:$0xf]
      %v1353 = vld [vmem:[%s1345 + $0x1c] sm:$0xf]
      %v1354 = vld [vmem:[%s1345 + $0x20] sm:$0xf]
      %v1355 = vld [vmem:[%s1345 + $0x24] sm:$0xf]
      %v1356 = vld [vmem:[%s1345 + $0x28] sm:$0xf]
      %v1357 = vld [vmem:[%s1345 + $0x2c] sm:$0xf]
      %v1358 = vld [vmem:[%s1345 + $0x30] sm:$0xf]
      %v1359 = vld [vmem:[%s1345 + $0x34] sm:$0xf]
      %v1360 = vld [vmem:[%s1345 + $0x38] sm:$0xf]
      %v1361 = vld [vmem:[%s1345 + $0x3c] sm:$0xf]
      %v1362 = vld [vmem:[%s1345 + $0x40] sm:$0xf]
      %v1363 = vld [vmem:[%s1345 + $0x44] sm:$0xf]
      %v1364 = vld [vmem:[%s1345 + $0x48] sm:$0xf]
      %v1365 = vld [vmem:[%s1345 + $0x4c] sm:$0xf]
      %v1366 = vld [vmem:[%s1345 + $0x50] sm:$0xf]
      %v1367 = vld [vmem:[%s1345 + $0x54] sm:$0xf]
      %v1368 = vld [vmem:[%s1345 + $0x58] sm:$0xf]
      %v1369 = vld [vmem:[%s1345 + $0x5c] sm:$0xf]
      %v1394 = vunpack.c.l.b16 %v1346
      %v1395 = vunpack.c.l.b16 %v1347
      %v1396 = vunpack.c.l.b16 %v1348
      %v1397 = vunpack.c.l.b16 %v1349
      %v1398 = vunpack.c.l.b16 %v1350
      %v1399 = vunpack.c.l.b16 %v1351
      %v1400 = vunpack.c.l.b16 %v1352
      %v1401 = vunpack.c.l.b16 %v1353
      %v1402 = vunpack.c.l.b16 %v1354
      %v1403 = vunpack.c.l.b16 %v1355
      %v1404 = vunpack.c.l.b16 %v1356
      %v1405 = vunpack.c.l.b16 %v1357
      %v1406 = vunpack.c.l.b16 %v1358
      %v1407 = vunpack.c.l.b16 %v1359
      %v1408 = vunpack.c.l.b16 %v1360
      %v1409 = vunpack.c.l.b16 %v1361
      %v1410 = vunpack.c.l.b16 %v1362
      %v1411 = vunpack.c.l.b16 %v1363
      %v1412 = vunpack.c.l.b16 %v1364
      %v1413 = vunpack.c.l.b16 %v1365
      %v1414 = vunpack.c.l.b16 %v1366
      %v1415 = vunpack.c.l.b16 %v1367
      %v1416 = vunpack.c.l.b16 %v1368
      %v1417 = vunpack.c.l.b16 %v1369
      %v1418 = vpack.c.b16 %v1395, %v1394
      %v1419 = vpack.c.b16 %v1397, %v1396
      %v1420 = vpack.c.b16 %v1399, %v1398
      %v1421 = vpack.c.b16 %v1401, %v1400
      %v1422 = vpack.c.b16 %v1403, %v1402
      %v1423 = vpack.c.b16 %v1405, %v1404
      %v1424 = vpack.c.b16 %v1407, %v1406
      %v1425 = vpack.c.b16 %v1409, %v1408
      %v1426 = vpack.c.b16 %v1411, %v1410
      %v1427 = vpack.c.b16 %v1413, %v1412
      %v1428 = vpack.c.b16 %v1415, %v1414
      %v1429 = vpack.c.b16 %v1417, %v1416
      %v1443 = vsel %vm459, %v1303, 0
      %v1446 = vsel %vm459, %v1305, 0
      %v1449 = vsel %vm459, %v1308, 0
      %v1452 = vsel %vm459, %v1310, 0
      %v1455 = vsel %vm459, %v1313, 0
      %v1458 = vsel %vm459, %v1315, 0
      %v1461 = vsel %vm459, %v1318, 0
      %v1464 = vsel %vm459, %v1320, 0
      %1466 = vmatprep.subr.bf16.mxu0 0
      %1467 = vmatpush1.bf16.msra.mxu0 %v1418
      %1468 = vmatprep.subr.bf16.mxu0 0
      %1469 = vmatpush1.bf16.msra.mxu0 %v1419
      %1470 = vmatprep.subr.bf16.mxu0 0
      %1471 = vmatpush1.bf16.msra.mxu0 %v1420
      %1472 = vmatprep.subr.bf16.mxu0 0
      %1473 = vmatpush1.bf16.msra.mxu0 %v1421
      %1474 = vmatprep.subr.bf16.mxu0 0
      %1475 = vmatpush1.bf16.msra.mxu0 %v1422
      %1476 = vmatprep.subr.bf16.mxu0 0
      %1477 = vmatpush1.bf16.msra.mxu0 %v1423
      %1478 = vmatprep.subr.bf16.mxu0 0
      %1479 = vmatpush1.bf16.msra.mxu0 %v1424
      %1480 = vmatprep.subr.bf16.mxu0 0
      %1481 = vmatpush1.bf16.msra.mxu0 %v1425
      %1482 = vmatprep.subr.bf16.mxu0 0
      %1483 = vmatpush1.bf16.msra.mxu0 %v1426
      %1484 = vmatprep.subr.bf16.mxu0 0
      %1485 = vmatpush1.bf16.msra.mxu0 %v1427
      %1486 = vmatprep.subr.bf16.mxu0 0
      %1487 = vmatpush1.bf16.msra.mxu0 %v1428
      %1488 = vmatprep.subr.bf16.mxu0 0
      %1489 = vmatpush1.bf16.msra.mxu0 %v1429
      %1490 = vmatprep.subr.bf16.mxu0 0
      %1491 = vmatpush1.bf16.msra.mxu0 0
      %1492 = vmatprep.subr.bf16.mxu0 0
      %1493 = vmatpush1.bf16.msra.mxu0 0
      %1494 = vmatprep.subr.bf16.mxu0 0
      %1495 = vmatpush1.bf16.msra.mxu0 0
      %1496 = vmatprep.subr.bf16.mxu0 0
      %1497 = vmatpush1.bf16.msra.mxu0 0
      %1498 = vmatprep.mubr.bf16.mxu0 %v1443
      %1499 = vmatmul.mubr.bf16.gmra.mrb[0].mxu0 %v1322
      %v1500 = vpop.f32.mrb[0].mxu0
      %v1501 = vadd.f32 0.0, %v1500
      %v1502 = vpop.f32.mrb[0].mxu0
      %v1503 = vpop.f32.mrb[0].mxu0
      %v1504 = vadd.f32 0.0, %v1503
      %v1505 = vpop.f32.mrb[0].mxu0
      %1506 = vmatprep.mubr.bf16.mxu0 %v1446
      %1507 = vmatmul.mubr.bf16.gmra.mrb[0].mxu0 %v1325
      %v1508 = vpop.f32.mrb[0].mxu0
      %v1509 = vadd.f32 0.0, %v1508
      %v1510 = vpop.f32.mrb[0].mxu0
      %v1511 = vpop.f32.mrb[0].mxu0
      %v1512 = vadd.f32 0.0, %v1511
      %v1513 = vpop.f32.mrb[0].mxu0
      %1514 = vmatprep.mubr.bf16.mxu0 %v1449
      %1515 = vmatmul.mubr.bf16.gmra.mrb[0].mxu0 %v1328
      %v1516 = vpop.f32.mrb[0].mxu0
      %v1517 = vadd.f32 0.0, %v1516
      %v1518 = vpop.f32.mrb[0].mxu0
      %v1519 = vpop.f32.mrb[0].mxu0
      %v1520 = vadd.f32 0.0, %v1519
      %v1521 = vpop.f32.mrb[0].mxu0
      %1522 = vmatprep.mubr.bf16.mxu0 %v1452
      %1523 = vmatmul.mubr.bf16.gmra.mrb[0].mxu0 %v1331
      %v1524 = vpop.f32.mrb[0].mxu0
      %v1525 = vadd.f32 0.0, %v1524
      %v1526 = vpop.f32.mrb[0].mxu0
      %v1527 = vpop.f32.mrb[0].mxu0
      %v1528 = vadd.f32 0.0, %v1527
      %v1529 = vpop.f32.mrb[0].mxu0
      %1530 = vmatprep.mubr.bf16.mxu0 %v1455
      %1531 = vmatmul.mubr.bf16.gmra.mrb[0].mxu0 %v1334
      %v1532 = vpop.f32.mrb[0].mxu0
      %v1533 = vadd.f32 0.0, %v1532
      %v1534 = vpop.f32.mrb[0].mxu0
      %v1535 = vpop.f32.mrb[0].mxu0
      %v1536 = vadd.f32 0.0, %v1535
      %v1537 = vpop.f32.mrb[0].mxu0
      %1538 = vmatprep.mubr.bf16.mxu0 %v1458
      %1539 = vmatmul.mubr.bf16.gmra.mrb[0].mxu0 %v1337
      %v1540 = vpop.f32.mrb[0].mxu0
      %v1541 = vadd.f32 0.0, %v1540
      %v1542 = vpop.f32.mrb[0].mxu0
      %v1543 = vpop.f32.mrb[0].mxu0
      %v1544 = vadd.f32 0.0, %v1543
      %v1545 = vpop.f32.mrb[0].mxu0
      %1546 = vmatprep.mubr.bf16.mxu0 %v1461
      %1547 = vmatmul.mubr.bf16.gmra.mrb[0].mxu0 %v1340
      %v1548 = vpop.f32.mrb[0].mxu0
      %v1549 = vadd.f32 0.0, %v1548
      %v1550 = vpop.f32.mrb[0].mxu0
      %v1551 = vpop.f32.mrb[0].mxu0
      %v1552 = vadd.f32 0.0, %v1551
      %v1553 = vpop.f32.mrb[0].mxu0
      %1554 = vmatprep.mubr.bf16.mxu0 %v1464
      %1555 = vmatmul.mubr.bf16.gmra.mrb[0].mxu0 %v1343
      %v1556 = vpop.f32.mrb[0].mxu0
      %v1557 = vadd.f32 0.0, %v1556
      %v1558 = vpop.f32.mrb[0].mxu0
      %v1559 = vpop.f32.mrb[0].mxu0
      %v1560 = vadd.f32 0.0, %v1559
      %v1561 = vpop.f32.mrb[0].mxu0
      %1562 = vdwg.mxu0
      %v1563 = vadd.f32 %v1070, %v1501
      %v1564 = vadd.f32 %v1073, %v1504
      %v1565 = vadd.f32 %v1078, %v1509
      %v1566 = vadd.f32 %v1081, %v1512
      %v1567 = vadd.f32 %v1086, %v1517
      %v1568 = vadd.f32 %v1089, %v1520
      %v1569 = vadd.f32 %v1094, %v1525
      %v1570 = vadd.f32 %v1097, %v1528
      %v1571 = vadd.f32 %v1102, %v1533
      %v1572 = vadd.f32 %v1105, %v1536
      %v1573 = vadd.f32 %v1110, %v1541
      %v1574 = vadd.f32 %v1113, %v1544
      %v1575 = vadd.f32 %v1118, %v1549
      %v1576 = vadd.f32 %v1121, %v1552
      %v1577 = vadd.f32 %v1126, %v1557
      %v1578 = vadd.f32 %v1129, %v1560
      %v1579 = vld [vmem:[%s2] sm:$0x1]
      %v1581 = vlaneseq
      %v1582 = vshrl.u32 %v1581, 7
      %v1583 = vsub.s32 0, %v1582
      %v1584 = vrot.slane %v1579, %v1583
      %v1586 = vadd.f32 %v1563, %v1584
      %v1587 = vadd.f32 %v1564, %v1584
      %v1588 = vadd.f32 %v1565, %v1584
      %v1589 = vadd.f32 %v1566, %v1584
      %v1590 = vadd.f32 %v1567, %v1584
      %v1591 = vadd.f32 %v1568, %v1584
      %v1592 = vadd.f32 %v1569, %v1584
      %v1593 = vadd.f32 %v1570, %v1584
      %v1594 = vadd.f32 %v1571, %v1584
      %v1595 = vadd.f32 %v1572, %v1584
      %v1596 = vadd.f32 %v1573, %v1584
      %v1597 = vadd.f32 %v1574, %v1584
      %v1598 = vadd.f32 %v1575, %v1584
      %v1599 = vadd.f32 %v1576, %v1584
      %v1600 = vadd.f32 %v1577, %v1584
      %v1601 = vadd.f32 %v1578, %v1584
      %v1602 = vld [vmem:[%s258] sm:$0xff]
      %v1603 = vld [vmem:[%s258 + $0x8] sm:$0xff]
      %v1604 = vld [vmem:[%s258 + $0x10] sm:$0xff]
      %v1605 = vld [vmem:[%s258 + $0x18] sm:$0xff]
      %v1606 = vld [vmem:[%s258 + $0x20] sm:$0xff]
      %v1607 = vld [vmem:[%s258 + $0x28] sm:$0xff]
      %v1608 = vld [vmem:[%s258 + $0x30] sm:$0xff]
      %v1609 = vld [vmem:[%s258 + $0x38] sm:$0xff]
      %v1610 = vld [vmem:[%s258 + $0x40] sm:$0xff]
      %v1611 = vld [vmem:[%s258 + $0x48] sm:$0xff]
      %v1612 = vld [vmem:[%s258 + $0x50] sm:$0xff]
      %v1613 = vld [vmem:[%s258 + $0x58] sm:$0xff]
      %v1614 = vld [vmem:[%s258 + $0x60] sm:$0xff]
      %v1615 = vld [vmem:[%s258 + $0x68] sm:$0xff]
      %v1616 = vld [vmem:[%s258 + $0x70] sm:$0xff]
      %v1617 = vld [vmem:[%s258 + $0x78] sm:$0xff]
      %v1618 = vadd.f32 %v1586, %v1602
      %v1619 = vadd.f32 %v1587, %v1603
      %v1620 = vadd.f32 %v1588, %v1604
      %v1621 = vadd.f32 %v1589, %v1605
      %v1622 = vadd.f32 %v1590, %v1606
      %v1623 = vadd.f32 %v1591, %v1607
      %v1624 = vadd.f32 %v1592, %v1608
      %v1625 = vadd.f32 %v1593, %v1609
      %v1626 = vadd.f32 %v1594, %v1610
      %v1627 = vadd.f32 %v1595, %v1611
      %v1628 = vadd.f32 %v1596, %v1612
      %v1629 = vadd.f32 %v1597, %v1613
      %v1630 = vadd.f32 %v1598, %v1614
      %v1631 = vadd.f32 %v1599, %v1615
      %v1632 = vadd.f32 %v1600, %v1616
      %v1633 = vadd.f32 %v1601, %v1617
      %vm1634 = vcmask 23552
      %1635 = vst.msk [vmem:[%s267] sm:$0xff] %vm1634, %v1618
      %1636 = vst.msk [vmem:[%s267 + $0x8] sm:$0xff] %vm1634, %v1619
      %1637 = vst.msk [vmem:[%s267 + $0x10] sm:$0xff] %vm1634, %v1620
      %1638 = vst.msk [vmem:[%s267 + $0x18] sm:$0xff] %vm1634, %v1621
      %1639 = vst.msk [vmem:[%s267 + $0x20] sm:$0xff] %vm1634, %v1622
      %1640 = vst.msk [vmem:[%s267 + $0x28] sm:$0xff] %vm1634, %v1623
      %1641 = vst.msk [vmem:[%s267 + $0x30] sm:$0xff] %vm1634, %v1624
      %1642 = vst.msk [vmem:[%s267 + $0x38] sm:$0xff] %vm1634, %v1625
      %1643 = vst.msk [vmem:[%s267 + $0x40] sm:$0xff] %vm1634, %v1626
      %1644 = vst.msk [vmem:[%s267 + $0x48] sm:$0xff] %vm1634, %v1627
      %1645 = vst.msk [vmem:[%s267 + $0x50] sm:$0xff] %vm1634, %v1628
      %1646 = vst.msk [vmem:[%s267 + $0x58] sm:$0xff] %vm1634, %v1629
      %1647 = vst.msk [vmem:[%s267 + $0x60] sm:$0xff] %vm1634, %v1630
      %1648 = vst.msk [vmem:[%s267 + $0x68] sm:$0xff] %vm1634, %v1631
      %1649 = vst.msk [vmem:[%s267 + $0x70] sm:$0xff] %vm1634, %v1632
      %1650 = vst.msk [vmem:[%s267 + $0x78] sm:$0xff] %vm1634, %v1633
      %p1651 = scmp.lt.s32.totalorder %s19, 1
      %s1652 = scalar_select %p1651, %s19, 1
      %p1653 = scmp.lt.s32.totalorder %s20, 7
      %s1654 = scalar_select %p1653, %s20, 7
      %s1655 = smul.addr %s1654, 16
      %s1656 = smul.addr %s1652, 128
      %s1657 = sadd.s32 %s1655, %s1656
      %s1658 = smul.addr %s1657, 8
      %s1659 = scalar_lea.vmem %s4, %s1658
      // Predicated region
      $region37: #{frvsr_sr_forward.11} parent=35 // pred_check
        %p1660 = pneg %p145
      $region38: #{frvsr_sr_forward.11} parent=35 // pred_check_branch
        %1662 = sbr.rel (%p1660) target = $region40
      $region39: #{frvsr_sr_forward.11} parent=35 // pred_region
        _
      $region40: #{frvsr_sr_forward.11} parent=35 // pred_fallthru
        _
    $region36: #{frvsr_sr_forward.11} parent=5 // pred_fallthru
      _
    %p1663 = scmp.le.s32.totalorder 2, %s10
    // Predicated region
    $region41: #{frvsr_sr_forward.11} parent=5 // pred_check
      %p1664 = pneg %p1663
    $region42: #{frvsr_sr_forward.11} parent=5 // pred_check_branch
      %1666 = sbr.rel (%p1664) target = $region44
    $region43: #{frvsr_sr_forward.11} parent=5 // pred_region
      %s1667 = ssub.s32 %s10, 2
      // Predicated region
      $region45: #{frvsr_sr_forward.11} parent=43 // pred_check
        %p1668 = pneg %p151
      $region46: #{frvsr_sr_forward.11} parent=43 // pred_check_branch
        %1670 = sbr.rel (%p1668) target = $region48
      $region47: #{frvsr_sr_forward.11} parent=43 // pred_region
        %p1671 = scmp.lt.s32.totalorder %s21, 1
        %s1672 = scalar_select %p1671, %s21, 1
        %p1673 = scmp.lt.s32.totalorder %s22, 7
        %s1674 = scalar_select %p1673, %s22, 7
        %s1675 = smul.addr %s1674, 16
        %s1676 = smul.addr %s1672, 128
        %s1677 = sadd.s32 %s1675, %s1676
        %s1678 = smul.addr %s1677, 8
        %s1679 = scalar_lea.vmem %s4, %s1678
      $region48: #{frvsr_sr_forward.11} parent=43 // pred_fallthru
        _
    $region44: #{frvsr_sr_forward.11} parent=5 // pred_fallthru
      _
  $region6: #{frvsr_sr_forward.11} parent=0 // loop_footer
    %s14 = sadd.s32 1, %s10
  $region7: #{frvsr_sr_forward.11} parent=0 // loop_footer_branch
    %9 = sbr.rel target = $region3
  $region8: #{frvsr_sr_forward.11} parent=0 // loop_exit
    _

</llo_original>
